<compile_context>
chip_gen: v7x
topology: tpu7x:2x2x1
jax: 0.10.0
libtpu: 0.0.40
codegen_flags: <defaults>
</compile_context>

<pallas_src>
import functools

import jax
import jax.numpy as jnp
from jax import lax
from jax.experimental import pallas as pl
from jax.experimental.pallas import tpu as pltpu


# ----------------------------------------------------------------------------
# Pallas kernels
# ----------------------------------------------------------------------------

def _conv3x3_bn_relu_kernel(xf_ref, w_ref, scale_ref, shift_ref, o_ref, *,
                            H, W, Cout):
    """Fused 3x3 conv (stride 1, pad 1) + BatchNorm(eval) + ReLU for one batch.

    xf_ref : (1, L, Cin) bf16, L = H*W + 2*W + 2 — input zero-padded by one
             image row top/bottom, spatially flattened, with one-element guards.
    w_ref  : (9, Cin, Cout) bf16, tap index k = 3*ki + kj.
    o_ref  : (1, H*W, Cout) bf16.
    """
    N = H * W
    Cin = w_ref.shape[1]

    # Output-column index of every flattened output row (for edge masking of
    # the horizontal wrap-around that the flattened-shift trick introduces).
    col = lax.broadcasted_iota(jnp.int32, (N, Cout), 0)
    if (W & (W - 1)) == 0:                   # power-of-two fast path
        col = col & (W - 1)
    else:
        col = col % W
    left_edge = col == 0                     # invalid contribution for kj == 0
    right_edge = col == (W - 1)              # invalid contribution for kj == 2

    acc = jnp.zeros((N, Cout), jnp.float32)
    for ki in range(3):
        for kj in range(3):
            s = ki * W + kj                  # static window offset
            win = xf_ref[0, s:s + N, :]      # (N, Cin) bf16, shifted view
            wt = w_ref[3 * ki + kj]          # (Cin, Cout) bf16
            if Cin == 1:
                # K=1 contraction: keep it off the MXU (VPU broadcast multiply).
                p = win.astype(jnp.float32) * wt.astype(jnp.float32)
            else:
                p = jnp.dot(win, wt, preferred_element_type=jnp.float32)
            if kj == 0:
                p = jnp.where(left_edge, 0.0, p)
            elif kj == 2:
                p = jnp.where(right_edge, 0.0, p)
            acc = acc + p

    y = jnp.maximum(acc * scale_ref[...] + shift_ref[...], 0.0)
    o_ref[0] = y.astype(o_ref.dtype)


def _maxpool2x2_kernel(x_ref, o_ref):
    """MaxPool2d(2) for one batch.  x_ref: (1, H2, 2, W2, 2C) -> o: (1, H2, W2, C)."""
    C = o_ref.shape[-1]
    v = x_ref[0]
    o_ref[0] = jnp.maximum(
        jnp.maximum(v[:, 0, :, 0:C], v[:, 0, :, C:]),
        jnp.maximum(v[:, 1, :, 0:C], v[:, 1, :, C:]))


def _avgpool_h_kernel(x_ref, o_ref):
    """AdaptiveAvgPool2d((1, None)) == mean over H.  (1, H, W, C) -> (1, W, C)."""
    o_ref[0] = jnp.mean(x_ref[0].astype(jnp.float32), axis=0).astype(o_ref.dtype)


def _proj_bias_kernel(x_ref, w_ref, b_ref, o_ref):
    """o = x @ w + b  (GRU input projection, both directions' gates at once)."""
    o_ref[...] = (jnp.dot(x_ref[...], w_ref[...],
                          preferred_element_type=jnp.float32) + b_ref[...])


def _dual_proj_bias_kernel(xa_ref, xb_ref, wa_ref, wb_ref, b_ref, o_ref):
    """o = xa @ wa + xb @ wb + b  (layer-2 projection without concatenating
    the fwd/bwd halves of the previous layer's output)."""
    o_ref[...] = (
        jnp.dot(xa_ref[...], wa_ref[...], preferred_element_type=jnp.float32)
        + jnp.dot(xb_ref[...], wb_ref[...], preferred_element_type=jnp.float32)
        + b_ref[...])


def _bigru_kernel(gi_ref, whf_ref, whb_ref, bhf_ref, bhb_ref,
                  outf_ref, outb_ref, hlast_ref):
    """Fused forward + backward GRU recurrence over the whole sequence.

    gi_ref   : (T, B, 6H) f32 — precomputed x @ W_ih + b_ih; fwd gates in
               [..., :3H], bwd gates in [..., 3H:].
    out*_ref : (T, B, H) per-direction outputs (backward already time-aligned).
    hlast_ref: (2, B, H) final hidden states (0 = fwd, 1 = bwd).
    """
    T, B, _ = gi_ref.shape
    Hn = whf_ref.shape[0]

    def gru_cell(gi, gh, h_prev):
        r = jax.nn.sigmoid(gi[:, 0:Hn] + gh[:, 0:Hn])
        z = jax.nn.sigmoid(gi[:, Hn:2 * Hn] + gh[:, Hn:2 * Hn])
        n = jnp.tanh(gi[:, 2 * Hn:3 * Hn] + r * gh[:, 2 * Hn:3 * Hn])
        return (1.0 - z) * n + z * h_prev

    def step(t, carry):
        h_f, h_b = carry
        g_f = gi_ref[t][:, 0:3 * Hn]
        g_b = gi_ref[T - 1 - t][:, 3 * Hn:]
        gh_f = jnp.dot(h_f, whf_ref[...],
                       preferred_element_type=jnp.float32) + bhf_ref[...]
        gh_b = jnp.dot(h_b, whb_ref[...],
                       preferred_element_type=jnp.float32) + bhb_ref[...]
        h_f = gru_cell(g_f, gh_f, h_f)
        h_b = gru_cell(g_b, gh_b, h_b)
        outf_ref[t] = h_f.astype(outf_ref.dtype)
        outb_ref[T - 1 - t] = h_b.astype(outb_ref.dtype)
        return h_f, h_b

    h0 = jnp.zeros((B, Hn), jnp.float32)
    h_f, h_b = lax.fori_loop(0, T, step, (h0, h0))
    hlast_ref[0] = h_f
    hlast_ref[1] = h_b


# ----------------------------------------------------------------------------
# Wrappers
# ----------------------------------------------------------------------------

def conv_bn_relu(x_nhwc, w9, scale, shift):
    """3x3 conv + BN(eval) + ReLU.  (B, H, W, Cin) -> (B, H, W, Cout) bf16."""
    B, H, W, Cin = x_nhwc.shape
    Cout = w9.shape[-1]
    N = H * W
    L = N + 2 * W + 2
    # One cheap (1x) host-side pad: W+1 zero guard elements on each side of the
    # flattened (H*W) axis ≡ one zero image row top & bottom plus 1-elem guards.
    xf = jnp.pad(x_nhwc.reshape(B, N, Cin).astype(jnp.bfloat16),
                 ((0, 0), (W + 1, W + 1), (0, 0)))
    out = pl.pallas_call(
        functools.partial(_conv3x3_bn_relu_kernel, H=H, W=W, Cout=Cout),
        out_shape=jax.ShapeDtypeStruct((B, N, Cout), jnp.bfloat16),
        grid_spec=pltpu.PrefetchScalarGridSpec(
            num_scalar_prefetch=0,
            grid=(B,),
            in_specs=[
                pl.BlockSpec((1, L, Cin), lambda b: (b, 0, 0)),
                pl.BlockSpec((9, Cin, Cout), lambda b: (0, 0, 0)),
                pl.BlockSpec((1, Cout), lambda b: (0, 0)),
                pl.BlockSpec((1, Cout), lambda b: (0, 0)),
            ],
            out_specs=pl.BlockSpec((1, N, Cout), lambda b: (b, 0, 0)),
        ),
        compiler_params=pltpu.CompilerParams(
            dimension_semantics=("parallel",)),
        cost_estimate=pl.CostEstimate(
            flops=2 * B * N * 9 * Cin * Cout,
            transcendentals=0,
            bytes_accessed=xf.size * 2 + w9.size * 2 + B * N * Cout * 2),
    )(xf, w9, scale, shift)
    return out.reshape(B, H, W, Cout)
    # TODO(synk): for very long audio, additionally tile the flattened spatial
    # axis (halo'd row blocks) instead of whole-plane-per-batch blocks.


def maxpool2x2(x_nhwc):
    """MaxPool2d(2).  (B, H, W, C) -> (B, H//2, W//2, C).

    TODO(synk): assumes even H and W (PyTorch silently floors odd sizes)."""
    B, H, W, C = x_nhwc.shape
    H2, W2 = H // 2, W // 2
    xr = x_nhwc.reshape(B, H2, 2, W2, 2 * C)          # free, contiguous reshape
    return pl.pallas_call(
        _maxpool2x2_kernel,
        out_shape=jax.ShapeDtypeStruct((B, H2, W2, C), x_nhwc.dtype),
        grid_spec=pltpu.PrefetchScalarGridSpec(
            num_scalar_prefetch=0,
            grid=(B,),
            in_specs=[pl.BlockSpec((1, H2, 2, W2, 2 * C),
                                   lambda b: (b, 0, 0, 0, 0))],
            out_specs=pl.BlockSpec((1, H2, W2, C), lambda b: (b, 0, 0, 0)),
        ),
        compiler_params=pltpu.CompilerParams(
            dimension_semantics=("parallel",)),
    )(xr)


def avgpool_height(x_nhwc):
    """AdaptiveAvgPool2d((1, None)): mean over H.  (B, H, W, C) -> (B, W, C)."""
    B, H, W, C = x_nhwc.shape
    return pl.pallas_call(
        _avgpool_h_kernel,
        out_shape=jax.ShapeDtypeStruct((B, W, C), x_nhwc.dtype),
        grid_spec=pltpu.PrefetchScalarGridSpec(
            num_scalar_prefetch=0,
            grid=(B,),
            in_specs=[pl.BlockSpec((1, H, W, C), lambda b: (b, 0, 0, 0))],
            out_specs=pl.BlockSpec((1, W, C), lambda b: (b, 0, 0)),
        ),
        compiler_params=pltpu.CompilerParams(
            dimension_semantics=("parallel",)),
    )(x_nhwc)


def _gru_input_proj(x_flat, w, b):
    rows = x_flat.shape[0]
    return pl.pallas_call(
        _proj_bias_kernel,
        out_shape=jax.ShapeDtypeStruct((rows, w.shape[-1]), jnp.float32),
    )(x_flat, w, b)


def _gru_input_proj2(xa, xb, wa, wb, b):
    rows = xa.shape[0]
    return pl.pallas_call(
        _dual_proj_bias_kernel,
        out_shape=jax.ShapeDtypeStruct((rows, wa.shape[-1]), jnp.float32),
    )(xa, xb, wa, wb, b)


def _bigru_recurrence(gi_tbg, whf, whb, bhf, bhb, hidden, out_dtype):
    T, B, _ = gi_tbg.shape
    return pl.pallas_call(
        _bigru_kernel,
        out_shape=(jax.ShapeDtypeStruct((T, B, hidden), out_dtype),
                   jax.ShapeDtypeStruct((T, B, hidden), out_dtype),
                   jax.ShapeDtypeStruct((2, B, hidden), jnp.float32)),
    )(gi_tbg, whf, whb, bhf, bhb)


# ----------------------------------------------------------------------------
# Parameters (deterministic synthetic init, PyTorch layouts pre-folded for TPU)
# ----------------------------------------------------------------------------

def init_params(key, n_mels=16, d_model=32):
    hidden = d_model // 2
    keys = iter(jax.random.split(key, 32))
    eps = 1e-5

    def conv_block(cin, cout):
        w = jax.random.normal(next(keys), (cout, cin, 3, 3), jnp.float32) * 0.1
        b = jax.random.normal(next(keys), (cout,), jnp.float32) * 0.1
        gamma = jnp.ones((cout,), jnp.float32)
        beta = jnp.zeros((cout,), jnp.float32)
        mean = jnp.zeros((cout,), jnp.float32)
        var = jnp.ones((cout,), jnp.float32)
        scale = gamma / jnp.sqrt(var + eps)
        shift = (b - mean) * scale + beta
        # (Cout, Cin, kh, kw) -> (9, Cin, Cout), tap index k = 3*ki + kj.
        w9 = jnp.transpose(w, (2, 3, 1, 0)).reshape(9, cin, cout)
        return (w9.astype(jnp.bfloat16),
                scale[None, :].astype(jnp.float32),
                shift[None, :].astype(jnp.float32))

    def gru_dir(d_in):
        w_ih = jax.random.normal(next(keys), (3 * hidden, d_in), jnp.float32) * 0.1
        w_hh = jax.random.normal(next(keys), (3 * hidden, hidden), jnp.float32) * 0.1
        b_ih = jax.random.normal(next(keys), (3 * hidden,), jnp.float32) * 0.1
        b_hh = jax.random.normal(next(keys), (3 * hidden,), jnp.float32) * 0.1
        return w_ih, w_hh, b_ih, b_hh

    def gru_layer(d_in, split_input):
        wi_f, wh_f, bi_f, bh_f = gru_dir(d_in)
        wi_b, wh_b, bi_b, bh_b = gru_dir(d_in)
        wi = jnp.concatenate([wi_f.T, wi_b.T], axis=1).astype(jnp.bfloat16)  # (d_in, 6H)
        bi = jnp.concatenate([bi_f, bi_b])[None, :].astype(jnp.float32)      # (1, 6H)
        layer = {
            "bi": bi,
            "whf": wh_f.T.astype(jnp.float32),        # (H, 3H)
            "whb": wh_b.T.astype(jnp.float32),
            "bhf": bh_f[None, :].astype(jnp.float32),  # (1, 3H)
            "bhb": bh_b[None, :].astype(jnp.float32),
        }
        if split_input:
            layer["wia"] = wi[:hidden]                 # rows for fwd features
            layer["wib"] = wi[hidden:]                 # rows for bwd features
        else:
            layer["wi"] = wi
        return layer

    return {
        "conv1": conv_block(1, 32),
        "conv2": conv_block(32, 64),
        "conv3": conv_block(64, 128),
        "gru0": gru_layer(128, split_input=False),
        "gru1": gru_layer(2 * hidden, split_input=True),
        "hidden": hidden,
    }


# ----------------------------------------------------------------------------
# Full forward (eval mode)
# ----------------------------------------------------------------------------

@functools.partial(jax.jit, static_argnames=("hidden",))
def _forward_impl(mel_spec, params, hidden):
    # ---- CNN feature extractor (NHWC: H = n_mels, W = time) ----
    x = mel_spec[:, :, :, None]                        # (B, n_mels, T, 1)
    x = conv_bn_relu(x, *params["conv1"])              # (B, H, T, 32)
    x = maxpool2x2(x)
    x = conv_bn_relu(x, *params["conv2"])              # (B, H/2, T/2, 64)
    x = maxpool2x2(x)
    x = conv_bn_relu(x, *params["conv3"])              # (B, H/4, T/4, 128)
    x = avgpool_height(x)                              # (B, T/4, 128) bf16

    # ---- 2-layer bidirectional GRU (inter-layer dropout is a no-op in eval) ----
    x_tbc = jnp.transpose(x, (1, 0, 2))                # (T', B, 128), single small transpose
    Tp, B, Din = x_tbc.shape
    Hn = hidden

    g0 = params["gru0"]
    gi0 = _gru_input_proj(x_tbc.reshape(Tp * B, Din), g0["wi"], g0["bi"])
    gi0 = gi0.reshape(Tp, B, 6 * Hn)
    of0, ob0, _ = _bigru_recurrence(gi0, g0["whf"], g0["whb"],
                                    g0["bhf"], g0["bhb"], Hn, jnp.bfloat16)

    g1 = params["gru1"]
    gi1 = _gru_input_proj2(of0.reshape(Tp * B, Hn), ob0.reshape(Tp * B, Hn),
                           g1["wia"], g1["wib"], g1["bi"])
    gi1 = gi1.reshape(Tp, B, 6 * Hn)
    of1, ob1, hlast = _bigru_recurrence(gi1, g1["whf"], g1["whb"],
                                        g1["bhf"], g1["bhb"], Hn, jnp.float32)

    sequence = jnp.transpose(jnp.concatenate([of1, ob1], axis=-1), (1, 0, 2))
    features = jnp.concatenate([hlast[0], hlast[1]], axis=-1)
    return features, sequence                          # (B, d_model), (B, T/4, d_model)


def audio_encoder_forward(mel_spec, params):
    return _forward_impl(mel_spec, params, params["hidden"])


# TODO(synk): training-mode BatchNorm statistics and GRU dropout(0.1) are not
# modeled; this implements the eval-mode forward pass only.

if __name__ == "__main__":
    key = jax.random.PRNGKey(0)
    k_in, k_p = jax.random.split(key)

    B, n_mels, T = 2, 16, 16
    d_model = 32

    mel_spec = jax.random.normal(k_in, (B, n_mels, T), jnp.float32)
    params = init_params(k_p, n_mels=n_mels, d_model=d_model)

    features, sequence = audio_encoder_forward(mel_spec, params)
    jax.block_until_ready((features, sequence))

    assert features.shape == (B, d_model), features.shape
    assert sequence.shape == (B, T // 4, d_model), sequence.shape
    assert bool(jnp.all(jnp.isfinite(features)))
    assert bool(jnp.all(jnp.isfinite(sequence)))

    print("KERNEL_OK")
</pallas_src>

<mosaic_0001>
module attributes {stable_mosaic.version = 11 : i64} {
  func.func @_conv3x3_bn_relu_kernel(%arg0: i32, %arg1: memref<1x290x1xbf16, #tpu.memory_space<vmem>>, %arg2: memref<9x1x32xbf16, #tpu.memory_space<vmem>>, %arg3: memref<1x32xf32, #tpu.memory_space<vmem>>, %arg4: memref<1x32xf32, #tpu.memory_space<vmem>>, %arg5: memref<1x256x32xbf16, #tpu.memory_space<vmem>>) attributes {dimension_semantics = [#tpu.dimension_semantics<parallel>], iteration_bounds = array<i64: 2>, scalar_prefetch = 0 : i64, scratch_operands = 0 : i64, tpu.core_type = #tpu.core_type<tc>, window_params = [{transform_indices = @transform_0, window_bounds = array<i64: 1, 290, 1>}, {pipeline_mode = #tpu.pipeline_mode<synchronous>, transform_indices = @transform_1, window_bounds = array<i64: 9, 1, 32>}, {pipeline_mode = #tpu.pipeline_mode<synchronous>, transform_indices = @transform_2, window_bounds = array<i64: 1, 32>}, {pipeline_mode = #tpu.pipeline_mode<synchronous>, transform_indices = @transform_3, window_bounds = array<i64: 1, 32>}, {transform_indices = @transform_4, window_bounds = array<i64: 1, 256, 32>}]} {
    %0 = tpu.iota {dimensions = array<i32: 0>} : vector<256x32xi32>
    %c15_i32 = arith.constant 15 : i32
    %1 = vector.broadcast %c15_i32 : i32 to vector<256x32xi32>
    %2 = arith.andi %0, %1 : vector<256x32xi32>
    %c0_i32 = arith.constant 0 : i32
    %3 = vector.broadcast %c0_i32 : i32 to vector<256x32xi32>
    %4 = arith.cmpi eq, %2, %3 : vector<256x32xi32>
    %c15_i32_0 = arith.constant 15 : i32
    %5 = vector.broadcast %c15_i32_0 : i32 to vector<256x32xi32>
    %6 = arith.cmpi eq, %2, %5 : vector<256x32xi32>
    %cst = arith.constant 0.000000e+00 : f32
    %7 = vector.broadcast %cst : f32 to vector<256x32xf32>
    %c0 = arith.constant 0 : index
    %c0_1 = arith.constant 0 : index
    %c0_2 = arith.constant 0 : index
    %8 = vector.load %arg1[%c0, %c0_1, %c0_2] : memref<1x290x1xbf16, #tpu.memory_space<vmem>>, vector<1x256x1xbf16>
    %9 = vector.shape_cast %8 : vector<1x256x1xbf16> to vector<256x1xbf16>
    %c0_3 = arith.constant 0 : index
    %c0_4 = arith.constant 0 : index
    %c0_5 = arith.constant 0 : index
    %10 = vector.load %arg2[%c0_3, %c0_4, %c0_5] : memref<9x1x32xbf16, #tpu.memory_space<vmem>>, vector<1x1x32xbf16>
    %11 = vector.shape_cast %10 : vector<1x1x32xbf16> to vector<1x32xbf16>
    %12 = arith.extf %9 : vector<256x1xbf16> to vector<256x1xf32>
    %13 = arith.extf %11 : vector<1x32xbf16> to vector<1x32xf32>
    %14 = vector.broadcast %12 : vector<256x1xf32> to vector<256x32xf32>
    %15 = vector.broadcast %13 : vector<1x32xf32> to vector<256x32xf32>
    %16 = arith.mulf %14, %15 : vector<256x32xf32>
    %cst_6 = arith.constant 0.000000e+00 : f32
    %17 = vector.broadcast %cst_6 : f32 to vector<256x32xf32>
    %18 = arith.select %4, %17, %16 : vector<256x32xi1>, vector<256x32xf32>
    %19 = arith.addf %7, %18 : vector<256x32xf32>
    %c0_7 = arith.constant 0 : index
    %c1 = arith.constant 1 : index
    %c0_8 = arith.constant 0 : index
    %20 = vector.load %arg1[%c0_7, %c1, %c0_8] : memref<1x290x1xbf16, #tpu.memory_space<vmem>>, vector<1x256x1xbf16>
    %21 = vector.shape_cast %20 : vector<1x256x1xbf16> to vector<256x1xbf16>
    %c1_9 = arith.constant 1 : index
    %c0_10 = arith.constant 0 : index
    %c0_11 = arith.constant 0 : index
    %22 = vector.load %arg2[%c1_9, %c0_10, %c0_11] : memref<9x1x32xbf16, #tpu.memory_space<vmem>>, vector<1x1x32xbf16>
    %23 = vector.shape_cast %22 : vector<1x1x32xbf16> to vector<1x32xbf16>
    %24 = arith.extf %21 : vector<256x1xbf16> to vector<256x1xf32>
    %25 = arith.extf %23 : vector<1x32xbf16> to vector<1x32xf32>
    %26 = vector.broadcast %24 : vector<256x1xf32> to vector<256x32xf32>
    %27 = vector.broadcast %25 : vector<1x32xf32> to vector<256x32xf32>
    %28 = arith.mulf %26, %27 : vector<256x32xf32>
    %29 = arith.addf %19, %28 : vector<256x32xf32>
    %c0_12 = arith.constant 0 : index
    %c2 = arith.constant 2 : index
    %c0_13 = arith.constant 0 : index
    %30 = vector.load %arg1[%c0_12, %c2, %c0_13] : memref<1x290x1xbf16, #tpu.memory_space<vmem>>, vector<1x256x1xbf16>
    %31 = vector.shape_cast %30 : vector<1x256x1xbf16> to vector<256x1xbf16>
    %c2_14 = arith.constant 2 : index
    %c0_15 = arith.constant 0 : index
    %c0_16 = arith.constant 0 : index
    %32 = vector.load %arg2[%c2_14, %c0_15, %c0_16] : memref<9x1x32xbf16, #tpu.memory_space<vmem>>, vector<1x1x32xbf16>
    %33 = vector.shape_cast %32 : vector<1x1x32xbf16> to vector<1x32xbf16>
    %34 = arith.extf %31 : vector<256x1xbf16> to vector<256x1xf32>
    %35 = arith.extf %33 : vector<1x32xbf16> to vector<1x32xf32>
    %36 = vector.broadcast %34 : vector<256x1xf32> to vector<256x32xf32>
    %37 = vector.broadcast %35 : vector<1x32xf32> to vector<256x32xf32>
    %38 = arith.mulf %36, %37 : vector<256x32xf32>
    %cst_17 = arith.constant 0.000000e+00 : f32
    %39 = vector.broadcast %cst_17 : f32 to vector<256x32xf32>
    %40 = arith.select %6, %39, %38 : vector<256x32xi1>, vector<256x32xf32>
    %41 = arith.addf %29, %40 : vector<256x32xf32>
    %c0_18 = arith.constant 0 : index
    %c16 = arith.constant 16 : index
    %c0_19 = arith.constant 0 : index
    %42 = vector.load %arg1[%c0_18, %c16, %c0_19] : memref<1x290x1xbf16, #tpu.memory_space<vmem>>, vector<1x256x1xbf16>
    %43 = vector.shape_cast %42 : vector<1x256x1xbf16> to vector<256x1xbf16>
    %c3 = arith.constant 3 : index
    %c0_20 = arith.constant 0 : index
    %c0_21 = arith.constant 0 : index
    %44 = vector.load %arg2[%c3, %c0_20, %c0_21] : memref<9x1x32xbf16, #tpu.memory_space<vmem>>, vector<1x1x32xbf16>
    %45 = vector.shape_cast %44 : vector<1x1x32xbf16> to vector<1x32xbf16>
    %46 = arith.extf %43 : vector<256x1xbf16> to vector<256x1xf32>
    %47 = arith.extf %45 : vector<1x32xbf16> to vector<1x32xf32>
    %48 = vector.broadcast %46 : vector<256x1xf32> to vector<256x32xf32>
    %49 = vector.broadcast %47 : vector<1x32xf32> to vector<256x32xf32>
    %50 = arith.mulf %48, %49 : vector<256x32xf32>
    %cst_22 = arith.constant 0.000000e+00 : f32
    %51 = vector.broadcast %cst_22 : f32 to vector<256x32xf32>
    %52 = arith.select %4, %51, %50 : vector<256x32xi1>, vector<256x32xf32>
    %53 = arith.addf %41, %52 : vector<256x32xf32>
    %c0_23 = arith.constant 0 : index
    %c17 = arith.constant 17 : index
    %c0_24 = arith.constant 0 : index
    %54 = vector.load %arg1[%c0_23, %c17, %c0_24] : memref<1x290x1xbf16, #tpu.memory_space<vmem>>, vector<1x256x1xbf16>
    %55 = vector.shape_cast %54 : vector<1x256x1xbf16> to vector<256x1xbf16>
    %c4 = arith.constant 4 : index
    %c0_25 = arith.constant 0 : index
    %c0_26 = arith.constant 0 : index
    %56 = vector.load %arg2[%c4, %c0_25, %c0_26] : memref<9x1x32xbf16, #tpu.memory_space<vmem>>, vector<1x1x32xbf16>
    %57 = vector.shape_cast %56 : vector<1x1x32xbf16> to vector<1x32xbf16>
    %58 = arith.extf %55 : vector<256x1xbf16> to vector<256x1xf32>
    %59 = arith.extf %57 : vector<1x32xbf16> to vector<1x32xf32>
    %60 = vector.broadcast %58 : vector<256x1xf32> to vector<256x32xf32>
    %61 = vector.broadcast %59 : vector<1x32xf32> to vector<256x32xf32>
    %62 = arith.mulf %60, %61 : vector<256x32xf32>
    %63 = arith.addf %53, %62 : vector<256x32xf32>
    %c0_27 = arith.constant 0 : index
    %c18 = arith.constant 18 : index
    %c0_28 = arith.constant 0 : index
    %64 = vector.load %arg1[%c0_27, %c18, %c0_28] : memref<1x290x1xbf16, #tpu.memory_space<vmem>>, vector<1x256x1xbf16>
    %65 = vector.shape_cast %64 : vector<1x256x1xbf16> to vector<256x1xbf16>
    %c5 = arith.constant 5 : index
    %c0_29 = arith.constant 0 : index
    %c0_30 = arith.constant 0 : index
    %66 = vector.load %arg2[%c5, %c0_29, %c0_30] : memref<9x1x32xbf16, #tpu.memory_space<vmem>>, vector<1x1x32xbf16>
    %67 = vector.shape_cast %66 : vector<1x1x32xbf16> to vector<1x32xbf16>
    %68 = arith.extf %65 : vector<256x1xbf16> to vector<256x1xf32>
    %69 = arith.extf %67 : vector<1x32xbf16> to vector<1x32xf32>
    %70 = vector.broadcast %68 : vector<256x1xf32> to vector<256x32xf32>
    %71 = vector.broadcast %69 : vector<1x32xf32> to vector<256x32xf32>
    %72 = arith.mulf %70, %71 : vector<256x32xf32>
    %cst_31 = arith.constant 0.000000e+00 : f32
    %73 = vector.broadcast %cst_31 : f32 to vector<256x32xf32>
    %74 = arith.select %6, %73, %72 : vector<256x32xi1>, vector<256x32xf32>
    %75 = arith.addf %63, %74 : vector<256x32xf32>
    %c0_32 = arith.constant 0 : index
    %c32 = arith.constant 32 : index
    %c0_33 = arith.constant 0 : index
    %76 = vector.load %arg1[%c0_32, %c32, %c0_33] : memref<1x290x1xbf16, #tpu.memory_space<vmem>>, vector<1x256x1xbf16>
    %77 = vector.shape_cast %76 : vector<1x256x1xbf16> to vector<256x1xbf16>
    %c6 = arith.constant 6 : index
    %c0_34 = arith.constant 0 : index
    %c0_35 = arith.constant 0 : index
    %78 = vector.load %arg2[%c6, %c0_34, %c0_35] : memref<9x1x32xbf16, #tpu.memory_space<vmem>>, vector<1x1x32xbf16>
    %79 = vector.shape_cast %78 : vector<1x1x32xbf16> to vector<1x32xbf16>
    %80 = arith.extf %77 : vector<256x1xbf16> to vector<256x1xf32>
    %81 = arith.extf %79 : vector<1x32xbf16> to vector<1x32xf32>
    %82 = vector.broadcast %80 : vector<256x1xf32> to vector<256x32xf32>
    %83 = vector.broadcast %81 : vector<1x32xf32> to vector<256x32xf32>
    %84 = arith.mulf %82, %83 : vector<256x32xf32>
    %cst_36 = arith.constant 0.000000e+00 : f32
    %85 = vector.broadcast %cst_36 : f32 to vector<256x32xf32>
    %86 = arith.select %4, %85, %84 : vector<256x32xi1>, vector<256x32xf32>
    %87 = arith.addf %75, %86 : vector<256x32xf32>
    %c0_37 = arith.constant 0 : index
    %c33 = arith.constant 33 : index
    %c0_38 = arith.constant 0 : index
    %88 = vector.load %arg1[%c0_37, %c33, %c0_38] : memref<1x290x1xbf16, #tpu.memory_space<vmem>>, vector<1x256x1xbf16>
    %89 = vector.shape_cast %88 : vector<1x256x1xbf16> to vector<256x1xbf16>
    %c7 = arith.constant 7 : index
    %c0_39 = arith.constant 0 : index
    %c0_40 = arith.constant 0 : index
    %90 = vector.load %arg2[%c7, %c0_39, %c0_40] : memref<9x1x32xbf16, #tpu.memory_space<vmem>>, vector<1x1x32xbf16>
    %91 = vector.shape_cast %90 : vector<1x1x32xbf16> to vector<1x32xbf16>
    %92 = arith.extf %89 : vector<256x1xbf16> to vector<256x1xf32>
    %93 = arith.extf %91 : vector<1x32xbf16> to vector<1x32xf32>
    %94 = vector.broadcast %92 : vector<256x1xf32> to vector<256x32xf32>
    %95 = vector.broadcast %93 : vector<1x32xf32> to vector<256x32xf32>
    %96 = arith.mulf %94, %95 : vector<256x32xf32>
    %97 = arith.addf %87, %96 : vector<256x32xf32>
    %c0_41 = arith.constant 0 : index
    %c34 = arith.constant 34 : index
    %c0_42 = arith.constant 0 : index
    %98 = vector.load %arg1[%c0_41, %c34, %c0_42] : memref<1x290x1xbf16, #tpu.memory_space<vmem>>, vector<1x256x1xbf16>
    %99 = vector.shape_cast %98 : vector<1x256x1xbf16> to vector<256x1xbf16>
    %c8 = arith.constant 8 : index
    %c0_43 = arith.constant 0 : index
    %c0_44 = arith.constant 0 : index
    %100 = vector.load %arg2[%c8, %c0_43, %c0_44] : memref<9x1x32xbf16, #tpu.memory_space<vmem>>, vector<1x1x32xbf16>
    %101 = vector.shape_cast %100 : vector<1x1x32xbf16> to vector<1x32xbf16>
    %102 = arith.extf %99 : vector<256x1xbf16> to vector<256x1xf32>
    %103 = arith.extf %101 : vector<1x32xbf16> to vector<1x32xf32>
    %104 = vector.broadcast %102 : vector<256x1xf32> to vector<256x32xf32>
    %105 = vector.broadcast %103 : vector<1x32xf32> to vector<256x32xf32>
    %106 = arith.mulf %104, %105 : vector<256x32xf32>
    %cst_45 = arith.constant 0.000000e+00 : f32
    %107 = vector.broadcast %cst_45 : f32 to vector<256x32xf32>
    %108 = arith.select %6, %107, %106 : vector<256x32xi1>, vector<256x32xf32>
    %109 = arith.addf %97, %108 : vector<256x32xf32>
    %c0_46 = arith.constant 0 : index
    %c0_47 = arith.constant 0 : index
    %110 = vector.load %arg3[%c0_46, %c0_47] : memref<1x32xf32, #tpu.memory_space<vmem>>, vector<1x32xf32>
    %111 = vector.broadcast %110 : vector<1x32xf32> to vector<256x32xf32>
    %112 = arith.mulf %109, %111 : vector<256x32xf32>
    %c0_48 = arith.constant 0 : index
    %c0_49 = arith.constant 0 : index
    %113 = vector.load %arg4[%c0_48, %c0_49] : memref<1x32xf32, #tpu.memory_space<vmem>>, vector<1x32xf32>
    %114 = vector.broadcast %113 : vector<1x32xf32> to vector<256x32xf32>
    %115 = arith.addf %112, %114 : vector<256x32xf32>
    %cst_50 = arith.constant 0.000000e+00 : f32
    %116 = vector.broadcast %cst_50 : f32 to vector<256x32xf32>
    %117 = arith.maximumf %115, %116 : vector<256x32xf32>
    %118 = arith.truncf %117 : vector<256x32xf32> to vector<256x32xbf16>
    %c0_51 = arith.constant 0 : index
    %c0_52 = arith.constant 0 : index
    %c0_53 = arith.constant 0 : index
    %119 = vector.load %arg5[%c0_51, %c0_52, %c0_53] : memref<1x256x32xbf16, #tpu.memory_space<vmem>>, vector<1x256x32xbf16>
    %120 = vector.shape_cast %119 : vector<1x256x32xbf16> to vector<256x32xbf16>
    %121 = vector.shape_cast %118 : vector<256x32xbf16> to vector<1x256x32xbf16>
    tpu.vector_store %arg5[%c0_51, %c0_52, %c0_53], %121 {strides = array<i32>} : memref<1x256x32xbf16, #tpu.memory_space<vmem>>, vector<1x256x32xbf16>,
    return
  }
  func.func @transform_0(%arg0: i32) -> (i32, i32, i32) {
    %c0_i32 = arith.constant 0 : i32
    %c0_i32_0 = arith.constant 0 : i32
    %c0_i32_1 = arith.constant 0 : i32
    return %arg0, %c0_i32, %c0_i32_0 : i32, i32, i32
  }
  func.func @transform_1(%arg0: i32) -> (i32, i32, i32) {
    %c0_i32 = arith.constant 0 : i32
    %c0_i32_0 = arith.constant 0 : i32
    %c0_i32_1 = arith.constant 0 : i32
    %c0_i32_2 = arith.constant 0 : i32
    return %c0_i32, %c0_i32_0, %c0_i32_1 : i32, i32, i32
  }
  func.func @transform_2(%arg0: i32) -> (i32, i32) {
    %c0_i32 = arith.constant 0 : i32
    %c0_i32_0 = arith.constant 0 : i32
    %c0_i32_1 = arith.constant 0 : i32
    return %c0_i32, %c0_i32_0 : i32, i32
  }
  func.func @transform_3(%arg0: i32) -> (i32, i32) {
    %c0_i32 = arith.constant 0 : i32
    %c0_i32_0 = arith.constant 0 : i32
    %c0_i32_1 = arith.constant 0 : i32
    return %c0_i32, %c0_i32_0 : i32, i32
  }
  func.func @transform_4(%arg0: i32) -> (i32, i32, i32) {
    %c0_i32 = arith.constant 0 : i32
    %c0_i32_0 = arith.constant 0 : i32
    %c0_i32_1 = arith.constant 0 : i32
    return %arg0, %c0_i32, %c0_i32_0 : i32, i32, i32
  }
}

module attributes {stable_mosaic.version = 11 : i64} {
  func.func @_maxpool2x2_kernel(%arg0: i32, %arg1: memref<1x8x2x8x64xbf16, #tpu.memory_space<vmem>>, %arg2: memref<1x8x8x32xbf16, #tpu.memory_space<vmem>>) attributes {dimension_semantics = [#tpu.dimension_semantics<parallel>], iteration_bounds = array<i64: 2>, scalar_prefetch = 0 : i64, scratch_operands = 0 : i64, tpu.core_type = #tpu.core_type<tc>, window_params = [{transform_indices = @transform_0, window_bounds = array<i64: 1, 8, 2, 8, 64>}, {transform_indices = @transform_1, window_bounds = array<i64: 1, 8, 8, 32>}]} {
    %c0 = arith.constant 0 : index
    %c0_0 = arith.constant 0 : index
    %c0_1 = arith.constant 0 : index
    %c0_2 = arith.constant 0 : index
    %c0_3 = arith.constant 0 : index
    %0 = vector.load %arg1[%c0, %c0_0, %c0_1, %c0_2, %c0_3] : memref<1x8x2x8x64xbf16, #tpu.memory_space<vmem>>, vector<1x8x2x8x64xbf16>
    %1 = vector.shape_cast %0 : vector<1x8x2x8x64xbf16> to vector<8x2x8x64xbf16>
    %2 = vector.extract_strided_slice %1 {offsets = [0, 0, 0, 0], sizes = [8, 1, 8, 32], strides = [1, 1, 1, 1]} : vector<8x2x8x64xbf16> to vector<8x1x8x32xbf16>
    %3 = vector.shape_cast %2 : vector<8x1x8x32xbf16> to vector<8x8x32xbf16>
    %4 = vector.extract_strided_slice %1 {offsets = [0, 0, 0, 32], sizes = [8, 1, 8, 32], strides = [1, 1, 1, 1]} : vector<8x2x8x64xbf16> to vector<8x1x8x32xbf16>
    %5 = vector.shape_cast %4 : vector<8x1x8x32xbf16> to vector<8x8x32xbf16>
    %6 = arith.maximumf %3, %5 : vector<8x8x32xbf16>
    %7 = vector.extract_strided_slice %1 {offsets = [0, 1, 0, 0], sizes = [8, 1, 8, 32], strides = [1, 1, 1, 1]} : vector<8x2x8x64xbf16> to vector<8x1x8x32xbf16>
    %8 = vector.shape_cast %7 : vector<8x1x8x32xbf16> to vector<8x8x32xbf16>
    %9 = vector.extract_strided_slice %1 {offsets = [0, 1, 0, 32], sizes = [8, 1, 8, 32], strides = [1, 1, 1, 1]} : vector<8x2x8x64xbf16> to vector<8x1x8x32xbf16>
    %10 = vector.shape_cast %9 : vector<8x1x8x32xbf16> to vector<8x8x32xbf16>
    %11 = arith.maximumf %8, %10 : vector<8x8x32xbf16>
    %12 = arith.maximumf %6, %11 : vector<8x8x32xbf16>
    %c0_4 = arith.constant 0 : index
    %c0_5 = arith.constant 0 : index
    %c0_6 = arith.constant 0 : index
    %c0_7 = arith.constant 0 : index
    %13 = vector.load %arg2[%c0_4, %c0_5, %c0_6, %c0_7] : memref<1x8x8x32xbf16, #tpu.memory_space<vmem>>, vector<1x8x8x32xbf16>
    %14 = vector.shape_cast %13 : vector<1x8x8x32xbf16> to vector<8x8x32xbf16>
    %15 = vector.shape_cast %12 : vector<8x8x32xbf16> to vector<1x8x8x32xbf16>
    tpu.vector_store %arg2[%c0_4, %c0_5, %c0_6, %c0_7], %15 {strides = array<i32>} : memref<1x8x8x32xbf16, #tpu.memory_space<vmem>>, vector<1x8x8x32xbf16>,
    return
  }
  func.func @transform_0(%arg0: i32) -> (i32, i32, i32, i32, i32) {
    %c0_i32 = arith.constant 0 : i32
    %c0_i32_0 = arith.constant 0 : i32
    %c0_i32_1 = arith.constant 0 : i32
    %c0_i32_2 = arith.constant 0 : i32
    %c0_i32_3 = arith.constant 0 : i32
    return %arg0, %c0_i32, %c0_i32_0, %c0_i32_1, %c0_i32_2 : i32, i32, i32, i32, i32
  }
  func.func @transform_1(%arg0: i32) -> (i32, i32, i32, i32) {
    %c0_i32 = arith.constant 0 : i32
    %c0_i32_0 = arith.constant 0 : i32
    %c0_i32_1 = arith.constant 0 : i32
    %c0_i32_2 = arith.constant 0 : i32
    return %arg0, %c0_i32, %c0_i32_0, %c0_i32_1 : i32, i32, i32, i32
  }
}

module attributes {stable_mosaic.version = 11 : i64} {
  func.func @_conv3x3_bn_relu_kernel(%arg0: i32, %arg1: memref<1x82x32xbf16, #tpu.memory_space<vmem>>, %arg2: memref<9x32x64xbf16, #tpu.memory_space<vmem>>, %arg3: memref<1x64xf32, #tpu.memory_space<vmem>>, %arg4: memref<1x64xf32, #tpu.memory_space<vmem>>, %arg5: memref<1x64x64xbf16, #tpu.memory_space<vmem>>) attributes {dimension_semantics = [#tpu.dimension_semantics<parallel>], iteration_bounds = array<i64: 2>, scalar_prefetch = 0 : i64, scratch_operands = 0 : i64, tpu.core_type = #tpu.core_type<tc>, window_params = [{transform_indices = @transform_0, window_bounds = array<i64: 1, 82, 32>}, {pipeline_mode = #tpu.pipeline_mode<synchronous>, transform_indices = @transform_1, window_bounds = array<i64: 9, 32, 64>}, {pipeline_mode = #tpu.pipeline_mode<synchronous>, transform_indices = @transform_2, window_bounds = array<i64: 1, 64>}, {pipeline_mode = #tpu.pipeline_mode<synchronous>, transform_indices = @transform_3, window_bounds = array<i64: 1, 64>}, {transform_indices = @transform_4, window_bounds = array<i64: 1, 64, 64>}]} {
    %0 = tpu.iota {dimensions = array<i32: 0>} : vector<64x64xi32>
    %c7_i32 = arith.constant 7 : i32
    %1 = vector.broadcast %c7_i32 : i32 to vector<64x64xi32>
    %2 = arith.andi %0, %1 : vector<64x64xi32>
    %c0_i32 = arith.constant 0 : i32
    %3 = vector.broadcast %c0_i32 : i32 to vector<64x64xi32>
    %4 = arith.cmpi eq, %2, %3 : vector<64x64xi32>
    %c7_i32_0 = arith.constant 7 : i32
    %5 = vector.broadcast %c7_i32_0 : i32 to vector<64x64xi32>
    %6 = arith.cmpi eq, %2, %5 : vector<64x64xi32>
    %cst = arith.constant 0.000000e+00 : f32
    %7 = vector.broadcast %cst : f32 to vector<64x64xf32>
    %c0 = arith.constant 0 : index
    %c0_1 = arith.constant 0 : index
    %c0_2 = arith.constant 0 : index
    %8 = vector.load %arg1[%c0, %c0_1, %c0_2] : memref<1x82x32xbf16, #tpu.memory_space<vmem>>, vector<1x64x32xbf16>
    %9 = vector.shape_cast %8 : vector<1x64x32xbf16> to vector<64x32xbf16>
    %c0_3 = arith.constant 0 : index
    %c0_4 = arith.constant 0 : index
    %c0_5 = arith.constant 0 : index
    %10 = vector.load %arg2[%c0_3, %c0_4, %c0_5] : memref<9x32x64xbf16, #tpu.memory_space<vmem>>, vector<1x32x64xbf16>
    %11 = vector.shape_cast %10 : vector<1x32x64xbf16> to vector<32x64xbf16>
    %cst_6 = arith.constant dense<0.000000e+00> : vector<64x64xf32>
    %12 = tpu.matmul %9, %11, %cst_6 {dimension_numbers = #tpu.dot_dimension_numbers<[1], [0], [0], [1], [0, 0, 1, 1], [], []>} : vector<64x32xbf16>, vector<32x64xbf16>, vector<64x64xf32> -> vector<64x64xf32>
    %cst_7 = arith.constant 0.000000e+00 : f32
    %13 = vector.broadcast %cst_7 : f32 to vector<64x64xf32>
    %14 = arith.select %4, %13, %12 : vector<64x64xi1>, vector<64x64xf32>
    %15 = arith.addf %7, %14 : vector<64x64xf32>
    %c0_8 = arith.constant 0 : index
    %c1 = arith.constant 1 : index
    %c0_9 = arith.constant 0 : index
    %16 = vector.load %arg1[%c0_8, %c1, %c0_9] : memref<1x82x32xbf16, #tpu.memory_space<vmem>>, vector<1x64x32xbf16>
    %17 = vector.shape_cast %16 : vector<1x64x32xbf16> to vector<64x32xbf16>
    %c1_10 = arith.constant 1 : index
    %c0_11 = arith.constant 0 : index
    %c0_12 = arith.constant 0 : index
    %18 = vector.load %arg2[%c1_10, %c0_11, %c0_12] : memref<9x32x64xbf16, #tpu.memory_space<vmem>>, vector<1x32x64xbf16>
    %19 = vector.shape_cast %18 : vector<1x32x64xbf16> to vector<32x64xbf16>
    %cst_13 = arith.constant dense<0.000000e+00> : vector<64x64xf32>
    %20 = tpu.matmul %17, %19, %cst_13 {dimension_numbers = #tpu.dot_dimension_numbers<[1], [0], [0], [1], [0, 0, 1, 1], [], []>} : vector<64x32xbf16>, vector<32x64xbf16>, vector<64x64xf32> -> vector<64x64xf32>
    %21 = arith.addf %15, %20 : vector<64x64xf32>
    %c0_14 = arith.constant 0 : index
    %c2 = arith.constant 2 : index
    %c0_15 = arith.constant 0 : index
    %22 = vector.load %arg1[%c0_14, %c2, %c0_15] : memref<1x82x32xbf16, #tpu.memory_space<vmem>>, vector<1x64x32xbf16>
    %23 = vector.shape_cast %22 : vector<1x64x32xbf16> to vector<64x32xbf16>
    %c2_16 = arith.constant 2 : index
    %c0_17 = arith.constant 0 : index
    %c0_18 = arith.constant 0 : index
    %24 = vector.load %arg2[%c2_16, %c0_17, %c0_18] : memref<9x32x64xbf16, #tpu.memory_space<vmem>>, vector<1x32x64xbf16>
    %25 = vector.shape_cast %24 : vector<1x32x64xbf16> to vector<32x64xbf16>
    %cst_19 = arith.constant dense<0.000000e+00> : vector<64x64xf32>
    %26 = tpu.matmul %23, %25, %cst_19 {dimension_numbers = #tpu.dot_dimension_numbers<[1], [0], [0], [1], [0, 0, 1, 1], [], []>} : vector<64x32xbf16>, vector<32x64xbf16>, vector<64x64xf32> -> vector<64x64xf32>
    %cst_20 = arith.constant 0.000000e+00 : f32
    %27 = vector.broadcast %cst_20 : f32 to vector<64x64xf32>
    %28 = arith.select %6, %27, %26 : vector<64x64xi1>, vector<64x64xf32>
    %29 = arith.addf %21, %28 : vector<64x64xf32>
    %c0_21 = arith.constant 0 : index
    %c8 = arith.constant 8 : index
    %c0_22 = arith.constant 0 : index
    %30 = vector.load %arg1[%c0_21, %c8, %c0_22] : memref<1x82x32xbf16, #tpu.memory_space<vmem>>, vector<1x64x32xbf16>
    %31 = vector.shape_cast %30 : vector<1x64x32xbf16> to vector<64x32xbf16>
    %c3 = arith.constant 3 : index
    %c0_23 = arith.constant 0 : index
    %c0_24 = arith.constant 0 : index
    %32 = vector.load %arg2[%c3, %c0_23, %c0_24] : memref<9x32x64xbf16, #tpu.memory_space<vmem>>, vector<1x32x64xbf16>
    %33 = vector.shape_cast %32 : vector<1x32x64xbf16> to vector<32x64xbf16>
    %cst_25 = arith.constant dense<0.000000e+00> : vector<64x64xf32>
    %34 = tpu.matmul %31, %33, %cst_25 {dimension_numbers = #tpu.dot_dimension_numbers<[1], [0], [0], [1], [0, 0, 1, 1], [], []>} : vector<64x32xbf16>, vector<32x64xbf16>, vector<64x64xf32> -> vector<64x64xf32>
    %cst_26 = arith.constant 0.000000e+00 : f32
    %35 = vector.broadcast %cst_26 : f32 to vector<64x64xf32>
    %36 = arith.select %4, %35, %34 : vector<64x64xi1>, vector<64x64xf32>
    %37 = arith.addf %29, %36 : vector<64x64xf32>
    %c0_27 = arith.constant 0 : index
    %c9 = arith.constant 9 : index
    %c0_28 = arith.constant 0 : index
    %38 = vector.load %arg1[%c0_27, %c9, %c0_28] : memref<1x82x32xbf16, #tpu.memory_space<vmem>>, vector<1x64x32xbf16>
    %39 = vector.shape_cast %38 : vector<1x64x32xbf16> to vector<64x32xbf16>
    %c4 = arith.constant 4 : index
    %c0_29 = arith.constant 0 : index
    %c0_30 = arith.constant 0 : index
    %40 = vector.load %arg2[%c4, %c0_29, %c0_30] : memref<9x32x64xbf16, #tpu.memory_space<vmem>>, vector<1x32x64xbf16>
    %41 = vector.shape_cast %40 : vector<1x32x64xbf16> to vector<32x64xbf16>
    %cst_31 = arith.constant dense<0.000000e+00> : vector<64x64xf32>
    %42 = tpu.matmul %39, %41, %cst_31 {dimension_numbers = #tpu.dot_dimension_numbers<[1], [0], [0], [1], [0, 0, 1, 1], [], []>} : vector<64x32xbf16>, vector<32x64xbf16>, vector<64x64xf32> -> vector<64x64xf32>
    %43 = arith.addf %37, %42 : vector<64x64xf32>
    %c0_32 = arith.constant 0 : index
    %c10 = arith.constant 10 : index
    %c0_33 = arith.constant 0 : index
    %44 = vector.load %arg1[%c0_32, %c10, %c0_33] : memref<1x82x32xbf16, #tpu.memory_space<vmem>>, vector<1x64x32xbf16>
    %45 = vector.shape_cast %44 : vector<1x64x32xbf16> to vector<64x32xbf16>
    %c5 = arith.constant 5 : index
    %c0_34 = arith.constant 0 : index
    %c0_35 = arith.constant 0 : index
    %46 = vector.load %arg2[%c5, %c0_34, %c0_35] : memref<9x32x64xbf16, #tpu.memory_space<vmem>>, vector<1x32x64xbf16>
    %47 = vector.shape_cast %46 : vector<1x32x64xbf16> to vector<32x64xbf16>
    %cst_36 = arith.constant dense<0.000000e+00> : vector<64x64xf32>
    %48 = tpu.matmul %45, %47, %cst_36 {dimension_numbers = #tpu.dot_dimension_numbers<[1], [0], [0], [1], [0, 0, 1, 1], [], []>} : vector<64x32xbf16>, vector<32x64xbf16>, vector<64x64xf32> -> vector<64x64xf32>
    %cst_37 = arith.constant 0.000000e+00 : f32
    %49 = vector.broadcast %cst_37 : f32 to vector<64x64xf32>
    %50 = arith.select %6, %49, %48 : vector<64x64xi1>, vector<64x64xf32>
    %51 = arith.addf %43, %50 : vector<64x64xf32>
    %c0_38 = arith.constant 0 : index
    %c16 = arith.constant 16 : index
    %c0_39 = arith.constant 0 : index
    %52 = vector.load %arg1[%c0_38, %c16, %c0_39] : memref<1x82x32xbf16, #tpu.memory_space<vmem>>, vector<1x64x32xbf16>
    %53 = vector.shape_cast %52 : vector<1x64x32xbf16> to vector<64x32xbf16>
    %c6 = arith.constant 6 : index
    %c0_40 = arith.constant 0 : index
    %c0_41 = arith.constant 0 : index
    %54 = vector.load %arg2[%c6, %c0_40, %c0_41] : memref<9x32x64xbf16, #tpu.memory_space<vmem>>, vector<1x32x64xbf16>
    %55 = vector.shape_cast %54 : vector<1x32x64xbf16> to vector<32x64xbf16>
    %cst_42 = arith.constant dense<0.000000e+00> : vector<64x64xf32>
    %56 = tpu.matmul %53, %55, %cst_42 {dimension_numbers = #tpu.dot_dimension_numbers<[1], [0], [0], [1], [0, 0, 1, 1], [], []>} : vector<64x32xbf16>, vector<32x64xbf16>, vector<64x64xf32> -> vector<64x64xf32>
    %cst_43 = arith.constant 0.000000e+00 : f32
    %57 = vector.broadcast %cst_43 : f32 to vector<64x64xf32>
    %58 = arith.select %4, %57, %56 : vector<64x64xi1>, vector<64x64xf32>
    %59 = arith.addf %51, %58 : vector<64x64xf32>
    %c0_44 = arith.constant 0 : index
    %c17 = arith.constant 17 : index
    %c0_45 = arith.constant 0 : index
    %60 = vector.load %arg1[%c0_44, %c17, %c0_45] : memref<1x82x32xbf16, #tpu.memory_space<vmem>>, vector<1x64x32xbf16>
    %61 = vector.shape_cast %60 : vector<1x64x32xbf16> to vector<64x32xbf16>
    %c7 = arith.constant 7 : index
    %c0_46 = arith.constant 0 : index
    %c0_47 = arith.constant 0 : index
    %62 = vector.load %arg2[%c7, %c0_46, %c0_47] : memref<9x32x64xbf16, #tpu.memory_space<vmem>>, vector<1x32x64xbf16>
    %63 = vector.shape_cast %62 : vector<1x32x64xbf16> to vector<32x64xbf16>
    %cst_48 = arith.constant dense<0.000000e+00> : vector<64x64xf32>
    %64 = tpu.matmul %61, %63, %cst_48 {dimension_numbers = #tpu.dot_dimension_numbers<[1], [0], [0], [1], [0, 0, 1, 1], [], []>} : vector<64x32xbf16>, vector<32x64xbf16>, vector<64x64xf32> -> vector<64x64xf32>
    %65 = arith.addf %59, %64 : vector<64x64xf32>
    %c0_49 = arith.constant 0 : index
    %c18 = arith.constant 18 : index
    %c0_50 = arith.constant 0 : index
    %66 = vector.load %arg1[%c0_49, %c18, %c0_50] : memref<1x82x32xbf16, #tpu.memory_space<vmem>>, vector<1x64x32xbf16>
    %67 = vector.shape_cast %66 : vector<1x64x32xbf16> to vector<64x32xbf16>
    %c8_51 = arith.constant 8 : index
    %c0_52 = arith.constant 0 : index
    %c0_53 = arith.constant 0 : index
    %68 = vector.load %arg2[%c8_51, %c0_52, %c0_53] : memref<9x32x64xbf16, #tpu.memory_space<vmem>>, vector<1x32x64xbf16>
    %69 = vector.shape_cast %68 : vector<1x32x64xbf16> to vector<32x64xbf16>
    %cst_54 = arith.constant dense<0.000000e+00> : vector<64x64xf32>
    %70 = tpu.matmul %67, %69, %cst_54 {dimension_numbers = #tpu.dot_dimension_numbers<[1], [0], [0], [1], [0, 0, 1, 1], [], []>} : vector<64x32xbf16>, vector<32x64xbf16>, vector<64x64xf32> -> vector<64x64xf32>
    %cst_55 = arith.constant 0.000000e+00 : f32
    %71 = vector.broadcast %cst_55 : f32 to vector<64x64xf32>
    %72 = arith.select %6, %71, %70 : vector<64x64xi1>, vector<64x64xf32>
    %73 = arith.addf %65, %72 : vector<64x64xf32>
    %c0_56 = arith.constant 0 : index
    %c0_57 = arith.constant 0 : index
    %74 = vector.load %arg3[%c0_56, %c0_57] : memref<1x64xf32, #tpu.memory_space<vmem>>, vector<1x64xf32>
    %75 = vector.broadcast %74 : vector<1x64xf32> to vector<64x64xf32>
    %76 = arith.mulf %73, %75 : vector<64x64xf32>
    %c0_58 = arith.constant 0 : index
    %c0_59 = arith.constant 0 : index
    %77 = vector.load %arg4[%c0_58, %c0_59] : memref<1x64xf32, #tpu.memory_space<vmem>>, vector<1x64xf32>
    %78 = vector.broadcast %77 : vector<1x64xf32> to vector<64x64xf32>
    %79 = arith.addf %76, %78 : vector<64x64xf32>
    %cst_60 = arith.constant 0.000000e+00 : f32
    %80 = vector.broadcast %cst_60 : f32 to vector<64x64xf32>
    %81 = arith.maximumf %79, %80 : vector<64x64xf32>
    %82 = arith.truncf %81 : vector<64x64xf32> to vector<64x64xbf16>
    %c0_61 = arith.constant 0 : index
    %c0_62 = arith.constant 0 : index
    %c0_63 = arith.constant 0 : index
    %83 = vector.load %arg5[%c0_61, %c0_62, %c0_63] : memref<1x64x64xbf16, #tpu.memory_space<vmem>>, vector<1x64x64xbf16>
    %84 = vector.shape_cast %83 : vector<1x64x64xbf16> to vector<64x64xbf16>
    %85 = vector.shape_cast %82 : vector<64x64xbf16> to vector<1x64x64xbf16>
    tpu.vector_store %arg5[%c0_61, %c0_62, %c0_63], %85 {strides = array<i32>} : memref<1x64x64xbf16, #tpu.memory_space<vmem>>, vector<1x64x64xbf16>,
    return
  }
  func.func @transform_0(%arg0: i32) -> (i32, i32, i32) {
    %c0_i32 = arith.constant 0 : i32
    %c0_i32_0 = arith.constant 0 : i32
    %c0_i32_1 = arith.constant 0 : i32
    return %arg0, %c0_i32, %c0_i32_0 : i32, i32, i32
  }
  func.func @transform_1(%arg0: i32) -> (i32, i32, i32) {
    %c0_i32 = arith.constant 0 : i32
    %c0_i32_0 = arith.constant 0 : i32
    %c0_i32_1 = arith.constant 0 : i32
    %c0_i32_2 = arith.constant 0 : i32
    return %c0_i32, %c0_i32_0, %c0_i32_1 : i32, i32, i32
  }
  func.func @transform_2(%arg0: i32) -> (i32, i32) {
    %c0_i32 = arith.constant 0 : i32
    %c0_i32_0 = arith.constant 0 : i32
    %c0_i32_1 = arith.constant 0 : i32
    return %c0_i32, %c0_i32_0 : i32, i32
  }
  func.func @transform_3(%arg0: i32) -> (i32, i32) {
    %c0_i32 = arith.constant 0 : i32
    %c0_i32_0 = arith.constant 0 : i32
    %c0_i32_1 = arith.constant 0 : i32
    return %c0_i32, %c0_i32_0 : i32, i32
  }
  func.func @transform_4(%arg0: i32) -> (i32, i32, i32) {
    %c0_i32 = arith.constant 0 : i32
    %c0_i32_0 = arith.constant 0 : i32
    %c0_i32_1 = arith.constant 0 : i32
    return %arg0, %c0_i32, %c0_i32_0 : i32, i32, i32
  }
}

module attributes {stable_mosaic.version = 11 : i64} {
  func.func @_maxpool2x2_kernel(%arg0: i32, %arg1: memref<1x4x2x4x128xbf16, #tpu.memory_space<vmem>>, %arg2: memref<1x4x4x64xbf16, #tpu.memory_space<vmem>>) attributes {dimension_semantics = [#tpu.dimension_semantics<parallel>], iteration_bounds = array<i64: 2>, scalar_prefetch = 0 : i64, scratch_operands = 0 : i64, tpu.core_type = #tpu.core_type<tc>, window_params = [{transform_indices = @transform_0, window_bounds = array<i64: 1, 4, 2, 4, 128>}, {transform_indices = @transform_1, window_bounds = array<i64: 1, 4, 4, 64>}]} {
    %c0 = arith.constant 0 : index
    %c0_0 = arith.constant 0 : index
    %c0_1 = arith.constant 0 : index
    %c0_2 = arith.constant 0 : index
    %c0_3 = arith.constant 0 : index
    %0 = vector.load %arg1[%c0, %c0_0, %c0_1, %c0_2, %c0_3] : memref<1x4x2x4x128xbf16, #tpu.memory_space<vmem>>, vector<1x4x2x4x128xbf16>
    %1 = vector.shape_cast %0 : vector<1x4x2x4x128xbf16> to vector<4x2x4x128xbf16>
    %2 = vector.extract_strided_slice %1 {offsets = [0, 0, 0, 0], sizes = [4, 1, 4, 64], strides = [1, 1, 1, 1]} : vector<4x2x4x128xbf16> to vector<4x1x4x64xbf16>
    %3 = vector.shape_cast %2 : vector<4x1x4x64xbf16> to vector<4x4x64xbf16>
    %4 = vector.extract_strided_slice %1 {offsets = [0, 0, 0, 64], sizes = [4, 1, 4, 64], strides = [1, 1, 1, 1]} : vector<4x2x4x128xbf16> to vector<4x1x4x64xbf16>
    %5 = vector.shape_cast %4 : vector<4x1x4x64xbf16> to vector<4x4x64xbf16>
    %6 = arith.maximumf %3, %5 : vector<4x4x64xbf16>
    %7 = vector.extract_strided_slice %1 {offsets = [0, 1, 0, 0], sizes = [4, 1, 4, 64], strides = [1, 1, 1, 1]} : vector<4x2x4x128xbf16> to vector<4x1x4x64xbf16>
    %8 = vector.shape_cast %7 : vector<4x1x4x64xbf16> to vector<4x4x64xbf16>
    %9 = vector.extract_strided_slice %1 {offsets = [0, 1, 0, 64], sizes = [4, 1, 4, 64], strides = [1, 1, 1, 1]} : vector<4x2x4x128xbf16> to vector<4x1x4x64xbf16>
    %10 = vector.shape_cast %9 : vector<4x1x4x64xbf16> to vector<4x4x64xbf16>
    %11 = arith.maximumf %8, %10 : vector<4x4x64xbf16>
    %12 = arith.maximumf %6, %11 : vector<4x4x64xbf16>
    %c0_4 = arith.constant 0 : index
    %c0_5 = arith.constant 0 : index
    %c0_6 = arith.constant 0 : index
    %c0_7 = arith.constant 0 : index
    %13 = vector.load %arg2[%c0_4, %c0_5, %c0_6, %c0_7] : memref<1x4x4x64xbf16, #tpu.memory_space<vmem>>, vector<1x4x4x64xbf16>
    %14 = vector.shape_cast %13 : vector<1x4x4x64xbf16> to vector<4x4x64xbf16>
    %15 = vector.shape_cast %12 : vector<4x4x64xbf16> to vector<1x4x4x64xbf16>
    tpu.vector_store %arg2[%c0_4, %c0_5, %c0_6, %c0_7], %15 {strides = array<i32>} : memref<1x4x4x64xbf16, #tpu.memory_space<vmem>>, vector<1x4x4x64xbf16>,
    return
  }
  func.func @transform_0(%arg0: i32) -> (i32, i32, i32, i32, i32) {
    %c0_i32 = arith.constant 0 : i32
    %c0_i32_0 = arith.constant 0 : i32
    %c0_i32_1 = arith.constant 0 : i32
    %c0_i32_2 = arith.constant 0 : i32
    %c0_i32_3 = arith.constant 0 : i32
    return %arg0, %c0_i32, %c0_i32_0, %c0_i32_1, %c0_i32_2 : i32, i32, i32, i32, i32
  }
  func.func @transform_1(%arg0: i32) -> (i32, i32, i32, i32) {
    %c0_i32 = arith.constant 0 : i32
    %c0_i32_0 = arith.constant 0 : i32
    %c0_i32_1 = arith.constant 0 : i32
    %c0_i32_2 = arith.constant 0 : i32
    return %arg0, %c0_i32, %c0_i32_0, %c0_i32_1 : i32, i32, i32, i32
  }
}

module attributes {stable_mosaic.version = 11 : i64} {
  func.func @_conv3x3_bn_relu_kernel(%arg0: i32, %arg1: memref<1x26x64xbf16, #tpu.memory_space<vmem>>, %arg2: memref<9x64x128xbf16, #tpu.memory_space<vmem>>, %arg3: memref<1x128xf32, #tpu.memory_space<vmem>>, %arg4: memref<1x128xf32, #tpu.memory_space<vmem>>, %arg5: memref<1x16x128xbf16, #tpu.memory_space<vmem>>) attributes {dimension_semantics = [#tpu.dimension_semantics<parallel>], iteration_bounds = array<i64: 2>, scalar_prefetch = 0 : i64, scratch_operands = 0 : i64, tpu.core_type = #tpu.core_type<tc>, window_params = [{transform_indices = @transform_0, window_bounds = array<i64: 1, 26, 64>}, {pipeline_mode = #tpu.pipeline_mode<synchronous>, transform_indices = @transform_1, window_bounds = array<i64: 9, 64, 128>}, {pipeline_mode = #tpu.pipeline_mode<synchronous>, transform_indices = @transform_2, window_bounds = array<i64: 1, 128>}, {pipeline_mode = #tpu.pipeline_mode<synchronous>, transform_indices = @transform_3, window_bounds = array<i64: 1, 128>}, {transform_indices = @transform_4, window_bounds = array<i64: 1, 16, 128>}]} {
    %0 = tpu.iota {dimensions = array<i32: 0>} : vector<16x128xi32>
    %c3_i32 = arith.constant 3 : i32
    %1 = vector.broadcast %c3_i32 : i32 to vector<16x128xi32>
    %2 = arith.andi %0, %1 : vector<16x128xi32>
    %c0_i32 = arith.constant 0 : i32
    %3 = vector.broadcast %c0_i32 : i32 to vector<16x128xi32>
    %4 = arith.cmpi eq, %2, %3 : vector<16x128xi32>
    %c3_i32_0 = arith.constant 3 : i32
    %5 = vector.broadcast %c3_i32_0 : i32 to vector<16x128xi32>
    %6 = arith.cmpi eq, %2, %5 : vector<16x128xi32>
    %cst = arith.constant 0.000000e+00 : f32
    %7 = vector.broadcast %cst : f32 to vector<16x128xf32>
    %c0 = arith.constant 0 : index
    %c0_1 = arith.constant 0 : index
    %c0_2 = arith.constant 0 : index
    %8 = vector.load %arg1[%c0, %c0_1, %c0_2] : memref<1x26x64xbf16, #tpu.memory_space<vmem>>, vector<1x16x64xbf16>
    %9 = vector.shape_cast %8 : vector<1x16x64xbf16> to vector<16x64xbf16>
    %c0_3 = arith.constant 0 : index
    %c0_4 = arith.constant 0 : index
    %c0_5 = arith.constant 0 : index
    %10 = vector.load %arg2[%c0_3, %c0_4, %c0_5] : memref<9x64x128xbf16, #tpu.memory_space<vmem>>, vector<1x64x128xbf16>
    %11 = vector.shape_cast %10 : vector<1x64x128xbf16> to vector<64x128xbf16>
    %cst_6 = arith.constant dense<0.000000e+00> : vector<16x128xf32>
    %12 = tpu.matmul %9, %11, %cst_6 {dimension_numbers = #tpu.dot_dimension_numbers<[1], [0], [0], [1], [0, 0, 1, 1], [], []>} : vector<16x64xbf16>, vector<64x128xbf16>, vector<16x128xf32> -> vector<16x128xf32>
    %cst_7 = arith.constant 0.000000e+00 : f32
    %13 = vector.broadcast %cst_7 : f32 to vector<16x128xf32>
    %14 = arith.select %4, %13, %12 : vector<16x128xi1>, vector<16x128xf32>
    %15 = arith.addf %7, %14 : vector<16x128xf32>
    %c0_8 = arith.constant 0 : index
    %c1 = arith.constant 1 : index
    %c0_9 = arith.constant 0 : index
    %16 = vector.load %arg1[%c0_8, %c1, %c0_9] : memref<1x26x64xbf16, #tpu.memory_space<vmem>>, vector<1x16x64xbf16>
    %17 = vector.shape_cast %16 : vector<1x16x64xbf16> to vector<16x64xbf16>
    %c1_10 = arith.constant 1 : index
    %c0_11 = arith.constant 0 : index
    %c0_12 = arith.constant 0 : index
    %18 = vector.load %arg2[%c1_10, %c0_11, %c0_12] : memref<9x64x128xbf16, #tpu.memory_space<vmem>>, vector<1x64x128xbf16>
    %19 = vector.shape_cast %18 : vector<1x64x128xbf16> to vector<64x128xbf16>
    %cst_13 = arith.constant dense<0.000000e+00> : vector<16x128xf32>
    %20 = tpu.matmul %17, %19, %cst_13 {dimension_numbers = #tpu.dot_dimension_numbers<[1], [0], [0], [1], [0, 0, 1, 1], [], []>} : vector<16x64xbf16>, vector<64x128xbf16>, vector<16x128xf32> -> vector<16x128xf32>
    %21 = arith.addf %15, %20 : vector<16x128xf32>
    %c0_14 = arith.constant 0 : index
    %c2 = arith.constant 2 : index
    %c0_15 = arith.constant 0 : index
    %22 = vector.load %arg1[%c0_14, %c2, %c0_15] : memref<1x26x64xbf16, #tpu.memory_space<vmem>>, vector<1x16x64xbf16>
    %23 = vector.shape_cast %22 : vector<1x16x64xbf16> to vector<16x64xbf16>
    %c2_16 = arith.constant 2 : index
    %c0_17 = arith.constant 0 : index
    %c0_18 = arith.constant 0 : index
    %24 = vector.load %arg2[%c2_16, %c0_17, %c0_18] : memref<9x64x128xbf16, #tpu.memory_space<vmem>>, vector<1x64x128xbf16>
    %25 = vector.shape_cast %24 : vector<1x64x128xbf16> to vector<64x128xbf16>
    %cst_19 = arith.constant dense<0.000000e+00> : vector<16x128xf32>
    %26 = tpu.matmul %23, %25, %cst_19 {dimension_numbers = #tpu.dot_dimension_numbers<[1], [0], [0], [1], [0, 0, 1, 1], [], []>} : vector<16x64xbf16>, vector<64x128xbf16>, vector<16x128xf32> -> vector<16x128xf32>
    %cst_20 = arith.constant 0.000000e+00 : f32
    %27 = vector.broadcast %cst_20 : f32 to vector<16x128xf32>
    %28 = arith.select %6, %27, %26 : vector<16x128xi1>, vector<16x128xf32>
    %29 = arith.addf %21, %28 : vector<16x128xf32>
    %c0_21 = arith.constant 0 : index
    %c4 = arith.constant 4 : index
    %c0_22 = arith.constant 0 : index
    %30 = vector.load %arg1[%c0_21, %c4, %c0_22] : memref<1x26x64xbf16, #tpu.memory_space<vmem>>, vector<1x16x64xbf16>
    %31 = vector.shape_cast %30 : vector<1x16x64xbf16> to vector<16x64xbf16>
    %c3 = arith.constant 3 : index
    %c0_23 = arith.constant 0 : index
    %c0_24 = arith.constant 0 : index
    %32 = vector.load %arg2[%c3, %c0_23, %c0_24] : memref<9x64x128xbf16, #tpu.memory_space<vmem>>, vector<1x64x128xbf16>
    %33 = vector.shape_cast %32 : vector<1x64x128xbf16> to vector<64x128xbf16>
    %cst_25 = arith.constant dense<0.000000e+00> : vector<16x128xf32>
    %34 = tpu.matmul %31, %33, %cst_25 {dimension_numbers = #tpu.dot_dimension_numbers<[1], [0], [0], [1], [0, 0, 1, 1], [], []>} : vector<16x64xbf16>, vector<64x128xbf16>, vector<16x128xf32> -> vector<16x128xf32>
    %cst_26 = arith.constant 0.000000e+00 : f32
    %35 = vector.broadcast %cst_26 : f32 to vector<16x128xf32>
    %36 = arith.select %4, %35, %34 : vector<16x128xi1>, vector<16x128xf32>
    %37 = arith.addf %29, %36 : vector<16x128xf32>
    %c0_27 = arith.constant 0 : index
    %c5 = arith.constant 5 : index
    %c0_28 = arith.constant 0 : index
    %38 = vector.load %arg1[%c0_27, %c5, %c0_28] : memref<1x26x64xbf16, #tpu.memory_space<vmem>>, vector<1x16x64xbf16>
    %39 = vector.shape_cast %38 : vector<1x16x64xbf16> to vector<16x64xbf16>
    %c4_29 = arith.constant 4 : index
    %c0_30 = arith.constant 0 : index
    %c0_31 = arith.constant 0 : index
    %40 = vector.load %arg2[%c4_29, %c0_30, %c0_31] : memref<9x64x128xbf16, #tpu.memory_space<vmem>>, vector<1x64x128xbf16>
    %41 = vector.shape_cast %40 : vector<1x64x128xbf16> to vector<64x128xbf16>
    %cst_32 = arith.constant dense<0.000000e+00> : vector<16x128xf32>
    %42 = tpu.matmul %39, %41, %cst_32 {dimension_numbers = #tpu.dot_dimension_numbers<[1], [0], [0], [1], [0, 0, 1, 1], [], []>} : vector<16x64xbf16>, vector<64x128xbf16>, vector<16x128xf32> -> vector<16x128xf32>
    %43 = arith.addf %37, %42 : vector<16x128xf32>
    %c0_33 = arith.constant 0 : index
    %c6 = arith.constant 6 : index
    %c0_34 = arith.constant 0 : index
    %44 = vector.load %arg1[%c0_33, %c6, %c0_34] : memref<1x26x64xbf16, #tpu.memory_space<vmem>>, vector<1x16x64xbf16>
    %45 = vector.shape_cast %44 : vector<1x16x64xbf16> to vector<16x64xbf16>
    %c5_35 = arith.constant 5 : index
    %c0_36 = arith.constant 0 : index
    %c0_37 = arith.constant 0 : index
    %46 = vector.load %arg2[%c5_35, %c0_36, %c0_37] : memref<9x64x128xbf16, #tpu.memory_space<vmem>>, vector<1x64x128xbf16>
    %47 = vector.shape_cast %46 : vector<1x64x128xbf16> to vector<64x128xbf16>
    %cst_38 = arith.constant dense<0.000000e+00> : vector<16x128xf32>
    %48 = tpu.matmul %45, %47, %cst_38 {dimension_numbers = #tpu.dot_dimension_numbers<[1], [0], [0], [1], [0, 0, 1, 1], [], []>} : vector<16x64xbf16>, vector<64x128xbf16>, vector<16x128xf32> -> vector<16x128xf32>
    %cst_39 = arith.constant 0.000000e+00 : f32
    %49 = vector.broadcast %cst_39 : f32 to vector<16x128xf32>
    %50 = arith.select %6, %49, %48 : vector<16x128xi1>, vector<16x128xf32>
    %51 = arith.addf %43, %50 : vector<16x128xf32>
    %c0_40 = arith.constant 0 : index
    %c8 = arith.constant 8 : index
    %c0_41 = arith.constant 0 : index
    %52 = vector.load %arg1[%c0_40, %c8, %c0_41] : memref<1x26x64xbf16, #tpu.memory_space<vmem>>, vector<1x16x64xbf16>
    %53 = vector.shape_cast %52 : vector<1x16x64xbf16> to vector<16x64xbf16>
    %c6_42 = arith.constant 6 : index
    %c0_43 = arith.constant 0 : index
    %c0_44 = arith.constant 0 : index
    %54 = vector.load %arg2[%c6_42, %c0_43, %c0_44] : memref<9x64x128xbf16, #tpu.memory_space<vmem>>, vector<1x64x128xbf16>
    %55 = vector.shape_cast %54 : vector<1x64x128xbf16> to vector<64x128xbf16>
    %cst_45 = arith.constant dense<0.000000e+00> : vector<16x128xf32>
    %56 = tpu.matmul %53, %55, %cst_45 {dimension_numbers = #tpu.dot_dimension_numbers<[1], [0], [0], [1], [0, 0, 1, 1], [], []>} : vector<16x64xbf16>, vector<64x128xbf16>, vector<16x128xf32> -> vector<16x128xf32>
    %cst_46 = arith.constant 0.000000e+00 : f32
    %57 = vector.broadcast %cst_46 : f32 to vector<16x128xf32>
    %58 = arith.select %4, %57, %56 : vector<16x128xi1>, vector<16x128xf32>
    %59 = arith.addf %51, %58 : vector<16x128xf32>
    %c0_47 = arith.constant 0 : index
    %c9 = arith.constant 9 : index
    %c0_48 = arith.constant 0 : index
    %60 = vector.load %arg1[%c0_47, %c9, %c0_48] : memref<1x26x64xbf16, #tpu.memory_space<vmem>>, vector<1x16x64xbf16>
    %61 = vector.shape_cast %60 : vector<1x16x64xbf16> to vector<16x64xbf16>
    %c7 = arith.constant 7 : index
    %c0_49 = arith.constant 0 : index
    %c0_50 = arith.constant 0 : index
    %62 = vector.load %arg2[%c7, %c0_49, %c0_50] : memref<9x64x128xbf16, #tpu.memory_space<vmem>>, vector<1x64x128xbf16>
    %63 = vector.shape_cast %62 : vector<1x64x128xbf16> to vector<64x128xbf16>
    %cst_51 = arith.constant dense<0.000000e+00> : vector<16x128xf32>
    %64 = tpu.matmul %61, %63, %cst_51 {dimension_numbers = #tpu.dot_dimension_numbers<[1], [0], [0], [1], [0, 0, 1, 1], [], []>} : vector<16x64xbf16>, vector<64x128xbf16>, vector<16x128xf32> -> vector<16x128xf32>
    %65 = arith.addf %59, %64 : vector<16x128xf32>
    %c0_52 = arith.constant 0 : index
    %c10 = arith.constant 10 : index
    %c0_53 = arith.constant 0 : index
    %66 = vector.load %arg1[%c0_52, %c10, %c0_53] : memref<1x26x64xbf16, #tpu.memory_space<vmem>>, vector<1x16x64xbf16>
    %67 = vector.shape_cast %66 : vector<1x16x64xbf16> to vector<16x64xbf16>
    %c8_54 = arith.constant 8 : index
    %c0_55 = arith.constant 0 : index
    %c0_56 = arith.constant 0 : index
    %68 = vector.load %arg2[%c8_54, %c0_55, %c0_56] : memref<9x64x128xbf16, #tpu.memory_space<vmem>>, vector<1x64x128xbf16>
    %69 = vector.shape_cast %68 : vector<1x64x128xbf16> to vector<64x128xbf16>
    %cst_57 = arith.constant dense<0.000000e+00> : vector<16x128xf32>
    %70 = tpu.matmul %67, %69, %cst_57 {dimension_numbers = #tpu.dot_dimension_numbers<[1], [0], [0], [1], [0, 0, 1, 1], [], []>} : vector<16x64xbf16>, vector<64x128xbf16>, vector<16x128xf32> -> vector<16x128xf32>
    %cst_58 = arith.constant 0.000000e+00 : f32
    %71 = vector.broadcast %cst_58 : f32 to vector<16x128xf32>
    %72 = arith.select %6, %71, %70 : vector<16x128xi1>, vector<16x128xf32>
    %73 = arith.addf %65, %72 : vector<16x128xf32>
    %c0_59 = arith.constant 0 : index
    %c0_60 = arith.constant 0 : index
    %74 = vector.load %arg3[%c0_59, %c0_60] : memref<1x128xf32, #tpu.memory_space<vmem>>, vector<1x128xf32>
    %75 = vector.broadcast %74 : vector<1x128xf32> to vector<16x128xf32>
    %76 = arith.mulf %73, %75 : vector<16x128xf32>
    %c0_61 = arith.constant 0 : index
    %c0_62 = arith.constant 0 : index
    %77 = vector.load %arg4[%c0_61, %c0_62] : memref<1x128xf32, #tpu.memory_space<vmem>>, vector<1x128xf32>
    %78 = vector.broadcast %77 : vector<1x128xf32> to vector<16x128xf32>
    %79 = arith.addf %76, %78 : vector<16x128xf32>
    %cst_63 = arith.constant 0.000000e+00 : f32
    %80 = vector.broadcast %cst_63 : f32 to vector<16x128xf32>
    %81 = arith.maximumf %79, %80 : vector<16x128xf32>
    %82 = arith.truncf %81 : vector<16x128xf32> to vector<16x128xbf16>
    %c0_64 = arith.constant 0 : index
    %c0_65 = arith.constant 0 : index
    %c0_66 = arith.constant 0 : index
    %83 = vector.load %arg5[%c0_64, %c0_65, %c0_66] : memref<1x16x128xbf16, #tpu.memory_space<vmem>>, vector<1x16x128xbf16>
    %84 = vector.shape_cast %83 : vector<1x16x128xbf16> to vector<16x128xbf16>
    %85 = vector.shape_cast %82 : vector<16x128xbf16> to vector<1x16x128xbf16>
    tpu.vector_store %arg5[%c0_64, %c0_65, %c0_66], %85 {strides = array<i32>} : memref<1x16x128xbf16, #tpu.memory_space<vmem>>, vector<1x16x128xbf16>,
    return
  }
  func.func @transform_0(%arg0: i32) -> (i32, i32, i32) {
    %c0_i32 = arith.constant 0 : i32
    %c0_i32_0 = arith.constant 0 : i32
    %c0_i32_1 = arith.constant 0 : i32
    return %arg0, %c0_i32, %c0_i32_0 : i32, i32, i32
  }
  func.func @transform_1(%arg0: i32) -> (i32, i32, i32) {
    %c0_i32 = arith.constant 0 : i32
    %c0_i32_0 = arith.constant 0 : i32
    %c0_i32_1 = arith.constant 0 : i32
    %c0_i32_2 = arith.constant 0 : i32
    return %c0_i32, %c0_i32_0, %c0_i32_1 : i32, i32, i32
  }
  func.func @transform_2(%arg0: i32) -> (i32, i32) {
    %c0_i32 = arith.constant 0 : i32
    %c0_i32_0 = arith.constant 0 : i32
    %c0_i32_1 = arith.constant 0 : i32
    return %c0_i32, %c0_i32_0 : i32, i32
  }
  func.func @transform_3(%arg0: i32) -> (i32, i32) {
    %c0_i32 = arith.constant 0 : i32
    %c0_i32_0 = arith.constant 0 : i32
    %c0_i32_1 = arith.constant 0 : i32
    return %c0_i32, %c0_i32_0 : i32, i32
  }
  func.func @transform_4(%arg0: i32) -> (i32, i32, i32) {
    %c0_i32 = arith.constant 0 : i32
    %c0_i32_0 = arith.constant 0 : i32
    %c0_i32_1 = arith.constant 0 : i32
    return %arg0, %c0_i32, %c0_i32_0 : i32, i32, i32
  }
}

module attributes {stable_mosaic.version = 11 : i64} {
  func.func @_avgpool_h_kernel(%arg0: i32, %arg1: memref<1x4x4x128xbf16, #tpu.memory_space<vmem>>, %arg2: memref<1x4x128xbf16, #tpu.memory_space<vmem>>) attributes {dimension_semantics = [#tpu.dimension_semantics<parallel>], iteration_bounds = array<i64: 2>, scalar_prefetch = 0 : i64, scratch_operands = 0 : i64, tpu.core_type = #tpu.core_type<tc>, window_params = [{transform_indices = @transform_0, window_bounds = array<i64: 1, 4, 4, 128>}, {transform_indices = @transform_1, window_bounds = array<i64: 1, 4, 128>}]} {
    %c0 = arith.constant 0 : index
    %c0_0 = arith.constant 0 : index
    %c0_1 = arith.constant 0 : index
    %c0_2 = arith.constant 0 : index
    %0 = vector.load %arg1[%c0, %c0_0, %c0_1, %c0_2] : memref<1x4x4x128xbf16, #tpu.memory_space<vmem>>, vector<1x4x4x128xbf16>
    %1 = vector.shape_cast %0 : vector<1x4x4x128xbf16> to vector<4x4x128xbf16>
    %2 = arith.extf %1 : vector<4x4x128xbf16> to vector<4x4x128xf32>
    %cst = arith.constant dense<0.000000e+00> : vector<4x128xf32>
    %3 = vector.multi_reduction <add>, %2, %cst [0] : vector<4x4x128xf32> to vector<4x128xf32>
    %cst_3 = arith.constant 4.000000e+00 : f32
    %4 = vector.broadcast %cst_3 : f32 to vector<4x128xf32>
    %5 = arith.divf %3, %4 : vector<4x128xf32>
    %6 = arith.truncf %5 : vector<4x128xf32> to vector<4x128xbf16>
    %c0_4 = arith.constant 0 : index
    %c0_5 = arith.constant 0 : index
    %c0_6 = arith.constant 0 : index
    %7 = vector.load %arg2[%c0_4, %c0_5, %c0_6] : memref<1x4x128xbf16, #tpu.memory_space<vmem>>, vector<1x4x128xbf16>
    %8 = vector.shape_cast %7 : vector<1x4x128xbf16> to vector<4x128xbf16>
    %9 = vector.shape_cast %6 : vector<4x128xbf16> to vector<1x4x128xbf16>
    tpu.vector_store %arg2[%c0_4, %c0_5, %c0_6], %9 {strides = array<i32>} : memref<1x4x128xbf16, #tpu.memory_space<vmem>>, vector<1x4x128xbf16>,
    return
  }
  func.func @transform_0(%arg0: i32) -> (i32, i32, i32, i32) {
    %c0_i32 = arith.constant 0 : i32
    %c0_i32_0 = arith.constant 0 : i32
    %c0_i32_1 = arith.constant 0 : i32
    %c0_i32_2 = arith.constant 0 : i32
    return %arg0, %c0_i32, %c0_i32_0, %c0_i32_1 : i32, i32, i32, i32
  }
  func.func @transform_1(%arg0: i32) -> (i32, i32, i32) {
    %c0_i32 = arith.constant 0 : i32
    %c0_i32_0 = arith.constant 0 : i32
    %c0_i32_1 = arith.constant 0 : i32
    return %arg0, %c0_i32, %c0_i32_0 : i32, i32, i32
  }
}

module attributes {stable_mosaic.version = 11 : i64} {
  func.func @_bigru_kernel(%arg0: memref<4x2x96xf32, #tpu.memory_space<vmem>>, %arg1: memref<16x48xf32, #tpu.memory_space<vmem>>, %arg2: memref<16x48xf32, #tpu.memory_space<vmem>>, %arg3: memref<1x48xf32, #tpu.memory_space<vmem>>, %arg4: memref<1x48xf32, #tpu.memory_space<vmem>>, %arg5: memref<4x2x16xbf16, #tpu.memory_space<vmem>>, %arg6: memref<4x2x16xbf16, #tpu.memory_space<vmem>>, %arg7: memref<2x2x16xf32, #tpu.memory_space<vmem>>) attributes {dimension_semantics = [], scalar_prefetch = 0 : i64, scratch_operands = 0 : i64, tpu.core_type = #tpu.core_type<tc>} {
    %cst = arith.constant 0.000000e+00 : f32
    %0 = vector.broadcast %cst : f32 to vector<2x16xf32>
    %c0_i32 = arith.constant 0 : i32
    %c4_i32 = arith.constant 4 : i32
    %1 = arith.addi %c0_i32, %c4_i32 : i32
    %c1_i32 = arith.constant 1 : i32
    %2:2 = scf.for %arg8 = %c0_i32 to %1 step %c1_i32 iter_args(%arg9 = %0, %arg10 = %0) -> (vector<2x16xf32>, vector<2x16xf32>)  : i32 {
      %9 = arith.index_cast %arg8 : i32 to index
      %c0_5 = arith.constant 0 : index
      %c0_6 = arith.constant 0 : index
      %10 = vector.load %arg0[%9, %c0_5, %c0_6] : memref<4x2x96xf32, #tpu.memory_space<vmem>>, vector<1x2x96xf32>
      %11 = vector.shape_cast %10 : vector<1x2x96xf32> to vector<2x96xf32>
      %12 = vector.extract_strided_slice %11 {offsets = [0, 0], sizes = [2, 48], strides = [1, 1]} : vector<2x96xf32> to vector<2x48xf32>
      %c3_i32 = arith.constant 3 : i32
      %13 = arith.subi %c3_i32, %arg8 : i32
      %14 = arith.index_cast %13 : i32 to index
      %c0_7 = arith.constant 0 : index
      %c0_8 = arith.constant 0 : index
      %15 = vector.load %arg0[%14, %c0_7, %c0_8] : memref<4x2x96xf32, #tpu.memory_space<vmem>>, vector<1x2x96xf32>
      %16 = vector.shape_cast %15 : vector<1x2x96xf32> to vector<2x96xf32>
      %17 = vector.extract_strided_slice %16 {offsets = [0, 48], sizes = [2, 48], strides = [1, 1]} : vector<2x96xf32> to vector<2x48xf32>
      %c0_9 = arith.constant 0 : index
      %c0_10 = arith.constant 0 : index
      %18 = vector.load %arg1[%c0_9, %c0_10] : memref<16x48xf32, #tpu.memory_space<vmem>>, vector<16x48xf32>
      %cst_11 = arith.constant dense<0.000000e+00> : vector<2x48xf32>
      %19 = tpu.matmul %arg9, %18, %cst_11 {dimension_numbers = #tpu.dot_dimension_numbers<[1], [0], [0], [1], [0, 0, 1, 1], [], []>} : vector<2x16xf32>, vector<16x48xf32>, vector<2x48xf32> -> vector<2x48xf32>
      %c0_12 = arith.constant 0 : index
      %c0_13 = arith.constant 0 : index
      %20 = vector.load %arg3[%c0_12, %c0_13] : memref<1x48xf32, #tpu.memory_space<vmem>>, vector<1x48xf32>
      %21 = vector.broadcast %20 : vector<1x48xf32> to vector<2x48xf32>
      %22 = arith.addf %19, %21 : vector<2x48xf32>
      %c0_14 = arith.constant 0 : index
      %c0_15 = arith.constant 0 : index
      %23 = vector.load %arg2[%c0_14, %c0_15] : memref<16x48xf32, #tpu.memory_space<vmem>>, vector<16x48xf32>
      %cst_16 = arith.constant dense<0.000000e+00> : vector<2x48xf32>
      %24 = tpu.matmul %arg10, %23, %cst_16 {dimension_numbers = #tpu.dot_dimension_numbers<[1], [0], [0], [1], [0, 0, 1, 1], [], []>} : vector<2x16xf32>, vector<16x48xf32>, vector<2x48xf32> -> vector<2x48xf32>
      %c0_17 = arith.constant 0 : index
      %c0_18 = arith.constant 0 : index
      %25 = vector.load %arg4[%c0_17, %c0_18] : memref<1x48xf32, #tpu.memory_space<vmem>>, vector<1x48xf32>
      %26 = vector.broadcast %25 : vector<1x48xf32> to vector<2x48xf32>
      %27 = arith.addf %24, %26 : vector<2x48xf32>
      %28 = vector.extract_strided_slice %12 {offsets = [0, 0], sizes = [2, 16], strides = [1, 1]} : vector<2x48xf32> to vector<2x16xf32>
      %29 = vector.extract_strided_slice %22 {offsets = [0, 0], sizes = [2, 16], strides = [1, 1]} : vector<2x48xf32> to vector<2x16xf32>
      %30 = arith.addf %28, %29 : vector<2x16xf32>
      %31 = arith.negf %30 : vector<2x16xf32>
      %32 = math.exp %31 : vector<2x16xf32>
      %cst_19 = arith.constant 1.000000e+00 : f32
      %33 = vector.broadcast %cst_19 : f32 to vector<2x16xf32>
      %34 = arith.addf %33, %32 : vector<2x16xf32>
      %35 = arith.divf %33, %34 : vector<2x16xf32>
      %36 = vector.extract_strided_slice %12 {offsets = [0, 16], sizes = [2, 16], strides = [1, 1]} : vector<2x48xf32> to vector<2x16xf32>
      %37 = vector.extract_strided_slice %22 {offsets = [0, 16], sizes = [2, 16], strides = [1, 1]} : vector<2x48xf32> to vector<2x16xf32>
      %38 = arith.addf %36, %37 : vector<2x16xf32>
      %39 = arith.negf %38 : vector<2x16xf32>
      %40 = math.exp %39 : vector<2x16xf32>
      %cst_20 = arith.constant 1.000000e+00 : f32
      %41 = vector.broadcast %cst_20 : f32 to vector<2x16xf32>
      %42 = arith.addf %41, %40 : vector<2x16xf32>
      %43 = arith.divf %41, %42 : vector<2x16xf32>
      %44 = vector.extract_strided_slice %12 {offsets = [0, 32], sizes = [2, 16], strides = [1, 1]} : vector<2x48xf32> to vector<2x16xf32>
      %45 = vector.extract_strided_slice %22 {offsets = [0, 32], sizes = [2, 16], strides = [1, 1]} : vector<2x48xf32> to vector<2x16xf32>
      %46 = arith.mulf %35, %45 : vector<2x16xf32>
      %47 = arith.addf %44, %46 : vector<2x16xf32>
      %48 = math.tanh %47 : vector<2x16xf32>
      %cst_21 = arith.constant 1.000000e+00 : f32
      %49 = vector.broadcast %cst_21 : f32 to vector<2x16xf32>
      %50 = arith.subf %49, %43 : vector<2x16xf32>
      %51 = arith.mulf %50, %48 : vector<2x16xf32>
      %52 = arith.mulf %43, %arg9 : vector<2x16xf32>
      %53 = arith.addf %51, %52 : vector<2x16xf32>
      %54 = vector.extract_strided_slice %17 {offsets = [0, 0], sizes = [2, 16], strides = [1, 1]} : vector<2x48xf32> to vector<2x16xf32>
      %55 = vector.extract_strided_slice %27 {offsets = [0, 0], sizes = [2, 16], strides = [1, 1]} : vector<2x48xf32> to vector<2x16xf32>
      %56 = arith.addf %54, %55 : vector<2x16xf32>
      %57 = arith.negf %56 : vector<2x16xf32>
      %58 = math.exp %57 : vector<2x16xf32>
      %cst_22 = arith.constant 1.000000e+00 : f32
      %59 = vector.broadcast %cst_22 : f32 to vector<2x16xf32>
      %60 = arith.addf %59, %58 : vector<2x16xf32>
      %61 = arith.divf %59, %60 : vector<2x16xf32>
      %62 = vector.extract_strided_slice %17 {offsets = [0, 16], sizes = [2, 16], strides = [1, 1]} : vector<2x48xf32> to vector<2x16xf32>
      %63 = vector.extract_strided_slice %27 {offsets = [0, 16], sizes = [2, 16], strides = [1, 1]} : vector<2x48xf32> to vector<2x16xf32>
      %64 = arith.addf %62, %63 : vector<2x16xf32>
      %65 = arith.negf %64 : vector<2x16xf32>
      %66 = math.exp %65 : vector<2x16xf32>
      %cst_23 = arith.constant 1.000000e+00 : f32
      %67 = vector.broadcast %cst_23 : f32 to vector<2x16xf32>
      %68 = arith.addf %67, %66 : vector<2x16xf32>
      %69 = arith.divf %67, %68 : vector<2x16xf32>
      %70 = vector.extract_strided_slice %17 {offsets = [0, 32], sizes = [2, 16], strides = [1, 1]} : vector<2x48xf32> to vector<2x16xf32>
      %71 = vector.extract_strided_slice %27 {offsets = [0, 32], sizes = [2, 16], strides = [1, 1]} : vector<2x48xf32> to vector<2x16xf32>
      %72 = arith.mulf %61, %71 : vector<2x16xf32>
      %73 = arith.addf %70, %72 : vector<2x16xf32>
      %74 = math.tanh %73 : vector<2x16xf32>
      %cst_24 = arith.constant 1.000000e+00 : f32
      %75 = vector.broadcast %cst_24 : f32 to vector<2x16xf32>
      %76 = arith.subf %75, %69 : vector<2x16xf32>
      %77 = arith.mulf %76, %74 : vector<2x16xf32>
      %78 = arith.mulf %69, %arg10 : vector<2x16xf32>
      %79 = arith.addf %77, %78 : vector<2x16xf32>
      %80 = arith.truncf %53 : vector<2x16xf32> to vector<2x16xbf16>
      %81 = arith.index_cast %arg8 : i32 to index
      %c0_25 = arith.constant 0 : index
      %c0_26 = arith.constant 0 : index
      %82 = vector.load %arg5[%81, %c0_25, %c0_26] : memref<4x2x16xbf16, #tpu.memory_space<vmem>>, vector<1x2x16xbf16>
      %83 = vector.shape_cast %82 : vector<1x2x16xbf16> to vector<2x16xbf16>
      %84 = vector.shape_cast %80 : vector<2x16xbf16> to vector<1x2x16xbf16>
      tpu.vector_store %arg5[%81, %c0_25, %c0_26], %84 {strides = array<i32>} : memref<4x2x16xbf16, #tpu.memory_space<vmem>>, vector<1x2x16xbf16>,
      %85 = arith.truncf %79 : vector<2x16xf32> to vector<2x16xbf16>
      %c3_i32_27 = arith.constant 3 : i32
      %86 = arith.subi %c3_i32_27, %arg8 : i32
      %87 = arith.index_cast %86 : i32 to index
      %c0_28 = arith.constant 0 : index
      %c0_29 = arith.constant 0 : index
      %88 = vector.load %arg6[%87, %c0_28, %c0_29] : memref<4x2x16xbf16, #tpu.memory_space<vmem>>, vector<1x2x16xbf16>
      %89 = vector.shape_cast %88 : vector<1x2x16xbf16> to vector<2x16xbf16>
      %90 = vector.shape_cast %85 : vector<2x16xbf16> to vector<1x2x16xbf16>
      tpu.vector_store %arg6[%87, %c0_28, %c0_29], %90 {strides = array<i32>} : memref<4x2x16xbf16, #tpu.memory_space<vmem>>, vector<1x2x16xbf16>,
      scf.yield %53, %79 : vector<2x16xf32>, vector<2x16xf32>
    }
    %c4_i32_0 = arith.constant 4 : i32
    %c0 = arith.constant 0 : index
    %c0_1 = arith.constant 0 : index
    %c0_2 = arith.constant 0 : index
    %3 = vector.load %arg7[%c0, %c0_1, %c0_2] : memref<2x2x16xf32, #tpu.memory_space<vmem>>, vector<1x2x16xf32>
    %4 = vector.shape_cast %3 : vector<1x2x16xf32> to vector<2x16xf32>
    %5 = vector.shape_cast %2#0 : vector<2x16xf32> to vector<1x2x16xf32>
    tpu.vector_store %arg7[%c0, %c0_1, %c0_2], %5 {strides = array<i32>} : memref<2x2x16xf32, #tpu.memory_space<vmem>>, vector<1x2x16xf32>,
    %c1 = arith.constant 1 : index
    %c0_3 = arith.constant 0 : index
    %c0_4 = arith.constant 0 : index
    %6 = vector.load %arg7[%c1, %c0_3, %c0_4] : memref<2x2x16xf32, #tpu.memory_space<vmem>>, vector<1x2x16xf32>
    %7 = vector.shape_cast %6 : vector<1x2x16xf32> to vector<2x16xf32>
    %8 = vector.shape_cast %2#1 : vector<2x16xf32> to vector<1x2x16xf32>
    tpu.vector_store %arg7[%c1, %c0_3, %c0_4], %8 {strides = array<i32>} : memref<2x2x16xf32, #tpu.memory_space<vmem>>, vector<1x2x16xf32>,
    return
  }
}

module attributes {stable_mosaic.version = 11 : i64} {
  func.func @_proj_bias_kernel(%arg0: memref<8x128xbf16, #tpu.memory_space<vmem>>, %arg1: memref<128x96xbf16, #tpu.memory_space<vmem>>, %arg2: memref<1x96xf32, #tpu.memory_space<vmem>>, %arg3: memref<8x96xf32, #tpu.memory_space<vmem>>) attributes {dimension_semantics = [], scalar_prefetch = 0 : i64, scratch_operands = 0 : i64, tpu.core_type = #tpu.core_type<tc>} {
    %c0 = arith.constant 0 : index
    %c0_0 = arith.constant 0 : index
    %0 = vector.load %arg0[%c0, %c0_0] : memref<8x128xbf16, #tpu.memory_space<vmem>>, vector<8x128xbf16>
    %c0_1 = arith.constant 0 : index
    %c0_2 = arith.constant 0 : index
    %1 = vector.load %arg1[%c0_1, %c0_2] : memref<128x96xbf16, #tpu.memory_space<vmem>>, vector<128x96xbf16>
    %cst = arith.constant dense<0.000000e+00> : vector<8x96xf32>
    %2 = tpu.matmul %0, %1, %cst {dimension_numbers = #tpu.dot_dimension_numbers<[1], [0], [0], [1], [0, 0, 1, 1], [], []>} : vector<8x128xbf16>, vector<128x96xbf16>, vector<8x96xf32> -> vector<8x96xf32>
    %c0_3 = arith.constant 0 : index
    %c0_4 = arith.constant 0 : index
    %3 = vector.load %arg2[%c0_3, %c0_4] : memref<1x96xf32, #tpu.memory_space<vmem>>, vector<1x96xf32>
    %4 = vector.broadcast %3 : vector<1x96xf32> to vector<8x96xf32>
    %5 = arith.addf %2, %4 : vector<8x96xf32>
    %c0_5 = arith.constant 0 : index
    %c0_6 = arith.constant 0 : index
    %6 = vector.load %arg3[%c0_5, %c0_6] : memref<8x96xf32, #tpu.memory_space<vmem>>, vector<8x96xf32>
    tpu.vector_store %arg3[%c0_5, %c0_6], %5 {strides = array<i32>} : memref<8x96xf32, #tpu.memory_space<vmem>>, vector<8x96xf32>,
    return
  }
}

module attributes {stable_mosaic.version = 11 : i64} {
  func.func @_dual_proj_bias_kernel(%arg0: memref<8x16xbf16, #tpu.memory_space<vmem>>, %arg1: memref<8x16xbf16, #tpu.memory_space<vmem>>, %arg2: memref<16x96xbf16, #tpu.memory_space<vmem>>, %arg3: memref<16x96xbf16, #tpu.memory_space<vmem>>, %arg4: memref<1x96xf32, #tpu.memory_space<vmem>>, %arg5: memref<8x96xf32, #tpu.memory_space<vmem>>) attributes {dimension_semantics = [], scalar_prefetch = 0 : i64, scratch_operands = 0 : i64, tpu.core_type = #tpu.core_type<tc>} {
    %c0 = arith.constant 0 : index
    %c0_0 = arith.constant 0 : index
    %0 = vector.load %arg0[%c0, %c0_0] : memref<8x16xbf16, #tpu.memory_space<vmem>>, vector<8x16xbf16>
    %c0_1 = arith.constant 0 : index
    %c0_2 = arith.constant 0 : index
    %1 = vector.load %arg2[%c0_1, %c0_2] : memref<16x96xbf16, #tpu.memory_space<vmem>>, vector<16x96xbf16>
    %cst = arith.constant dense<0.000000e+00> : vector<8x96xf32>
    %2 = tpu.matmul %0, %1, %cst {dimension_numbers = #tpu.dot_dimension_numbers<[1], [0], [0], [1], [0, 0, 1, 1], [], []>} : vector<8x16xbf16>, vector<16x96xbf16>, vector<8x96xf32> -> vector<8x96xf32>
    %c0_3 = arith.constant 0 : index
    %c0_4 = arith.constant 0 : index
    %3 = vector.load %arg1[%c0_3, %c0_4] : memref<8x16xbf16, #tpu.memory_space<vmem>>, vector<8x16xbf16>
    %c0_5 = arith.constant 0 : index
    %c0_6 = arith.constant 0 : index
    %4 = vector.load %arg3[%c0_5, %c0_6] : memref<16x96xbf16, #tpu.memory_space<vmem>>, vector<16x96xbf16>
    %cst_7 = arith.constant dense<0.000000e+00> : vector<8x96xf32>
    %5 = tpu.matmul %3, %4, %cst_7 {dimension_numbers = #tpu.dot_dimension_numbers<[1], [0], [0], [1], [0, 0, 1, 1], [], []>} : vector<8x16xbf16>, vector<16x96xbf16>, vector<8x96xf32> -> vector<8x96xf32>
    %6 = arith.addf %2, %5 : vector<8x96xf32>
    %c0_8 = arith.constant 0 : index
    %c0_9 = arith.constant 0 : index
    %7 = vector.load %arg4[%c0_8, %c0_9] : memref<1x96xf32, #tpu.memory_space<vmem>>, vector<1x96xf32>
    %8 = vector.broadcast %7 : vector<1x96xf32> to vector<8x96xf32>
    %9 = arith.addf %6, %8 : vector<8x96xf32>
    %c0_10 = arith.constant 0 : index
    %c0_11 = arith.constant 0 : index
    %10 = vector.load %arg5[%c0_10, %c0_11] : memref<8x96xf32, #tpu.memory_space<vmem>>, vector<8x96xf32>
    tpu.vector_store %arg5[%c0_10, %c0_11], %9 {strides = array<i32>} : memref<8x96xf32, #tpu.memory_space<vmem>>, vector<8x96xf32>,
    return
  }
}

module attributes {stable_mosaic.version = 11 : i64} {
  func.func @_bigru_kernel(%arg0: memref<4x2x96xf32, #tpu.memory_space<vmem>>, %arg1: memref<16x48xf32, #tpu.memory_space<vmem>>, %arg2: memref<16x48xf32, #tpu.memory_space<vmem>>, %arg3: memref<1x48xf32, #tpu.memory_space<vmem>>, %arg4: memref<1x48xf32, #tpu.memory_space<vmem>>, %arg5: memref<4x2x16xf32, #tpu.memory_space<vmem>>, %arg6: memref<4x2x16xf32, #tpu.memory_space<vmem>>, %arg7: memref<2x2x16xf32, #tpu.memory_space<vmem>>) attributes {dimension_semantics = [], scalar_prefetch = 0 : i64, scratch_operands = 0 : i64, tpu.core_type = #tpu.core_type<tc>} {
    %cst = arith.constant 0.000000e+00 : f32
    %0 = vector.broadcast %cst : f32 to vector<2x16xf32>
    %c0_i32 = arith.constant 0 : i32
    %c4_i32 = arith.constant 4 : i32
    %1 = arith.addi %c0_i32, %c4_i32 : i32
    %c1_i32 = arith.constant 1 : i32
    %2:2 = scf.for %arg8 = %c0_i32 to %1 step %c1_i32 iter_args(%arg9 = %0, %arg10 = %0) -> (vector<2x16xf32>, vector<2x16xf32>)  : i32 {
      %9 = arith.index_cast %arg8 : i32 to index
      %c0_5 = arith.constant 0 : index
      %c0_6 = arith.constant 0 : index
      %10 = vector.load %arg0[%9, %c0_5, %c0_6] : memref<4x2x96xf32, #tpu.memory_space<vmem>>, vector<1x2x96xf32>
      %11 = vector.shape_cast %10 : vector<1x2x96xf32> to vector<2x96xf32>
      %12 = vector.extract_strided_slice %11 {offsets = [0, 0], sizes = [2, 48], strides = [1, 1]} : vector<2x96xf32> to vector<2x48xf32>
      %c3_i32 = arith.constant 3 : i32
      %13 = arith.subi %c3_i32, %arg8 : i32
      %14 = arith.index_cast %13 : i32 to index
      %c0_7 = arith.constant 0 : index
      %c0_8 = arith.constant 0 : index
      %15 = vector.load %arg0[%14, %c0_7, %c0_8] : memref<4x2x96xf32, #tpu.memory_space<vmem>>, vector<1x2x96xf32>
      %16 = vector.shape_cast %15 : vector<1x2x96xf32> to vector<2x96xf32>
      %17 = vector.extract_strided_slice %16 {offsets = [0, 48], sizes = [2, 48], strides = [1, 1]} : vector<2x96xf32> to vector<2x48xf32>
      %c0_9 = arith.constant 0 : index
      %c0_10 = arith.constant 0 : index
      %18 = vector.load %arg1[%c0_9, %c0_10] : memref<16x48xf32, #tpu.memory_space<vmem>>, vector<16x48xf32>
      %cst_11 = arith.constant dense<0.000000e+00> : vector<2x48xf32>
      %19 = tpu.matmul %arg9, %18, %cst_11 {dimension_numbers = #tpu.dot_dimension_numbers<[1], [0], [0], [1], [0, 0, 1, 1], [], []>} : vector<2x16xf32>, vector<16x48xf32>, vector<2x48xf32> -> vector<2x48xf32>
      %c0_12 = arith.constant 0 : index
      %c0_13 = arith.constant 0 : index
      %20 = vector.load %arg3[%c0_12, %c0_13] : memref<1x48xf32, #tpu.memory_space<vmem>>, vector<1x48xf32>
      %21 = vector.broadcast %20 : vector<1x48xf32> to vector<2x48xf32>
      %22 = arith.addf %19, %21 : vector<2x48xf32>
      %c0_14 = arith.constant 0 : index
      %c0_15 = arith.constant 0 : index
      %23 = vector.load %arg2[%c0_14, %c0_15] : memref<16x48xf32, #tpu.memory_space<vmem>>, vector<16x48xf32>
      %cst_16 = arith.constant dense<0.000000e+00> : vector<2x48xf32>
      %24 = tpu.matmul %arg10, %23, %cst_16 {dimension_numbers = #tpu.dot_dimension_numbers<[1], [0], [0], [1], [0, 0, 1, 1], [], []>} : vector<2x16xf32>, vector<16x48xf32>, vector<2x48xf32> -> vector<2x48xf32>
      %c0_17 = arith.constant 0 : index
      %c0_18 = arith.constant 0 : index
      %25 = vector.load %arg4[%c0_17, %c0_18] : memref<1x48xf32, #tpu.memory_space<vmem>>, vector<1x48xf32>
      %26 = vector.broadcast %25 : vector<1x48xf32> to vector<2x48xf32>
      %27 = arith.addf %24, %26 : vector<2x48xf32>
      %28 = vector.extract_strided_slice %12 {offsets = [0, 0], sizes = [2, 16], strides = [1, 1]} : vector<2x48xf32> to vector<2x16xf32>
      %29 = vector.extract_strided_slice %22 {offsets = [0, 0], sizes = [2, 16], strides = [1, 1]} : vector<2x48xf32> to vector<2x16xf32>
      %30 = arith.addf %28, %29 : vector<2x16xf32>
      %31 = arith.negf %30 : vector<2x16xf32>
      %32 = math.exp %31 : vector<2x16xf32>
      %cst_19 = arith.constant 1.000000e+00 : f32
      %33 = vector.broadcast %cst_19 : f32 to vector<2x16xf32>
      %34 = arith.addf %33, %32 : vector<2x16xf32>
      %35 = arith.divf %33, %34 : vector<2x16xf32>
      %36 = vector.extract_strided_slice %12 {offsets = [0, 16], sizes = [2, 16], strides = [1, 1]} : vector<2x48xf32> to vector<2x16xf32>
      %37 = vector.extract_strided_slice %22 {offsets = [0, 16], sizes = [2, 16], strides = [1, 1]} : vector<2x48xf32> to vector<2x16xf32>
      %38 = arith.addf %36, %37 : vector<2x16xf32>
      %39 = arith.negf %38 : vector<2x16xf32>
      %40 = math.exp %39 : vector<2x16xf32>
      %cst_20 = arith.constant 1.000000e+00 : f32
      %41 = vector.broadcast %cst_20 : f32 to vector<2x16xf32>
      %42 = arith.addf %41, %40 : vector<2x16xf32>
      %43 = arith.divf %41, %42 : vector<2x16xf32>
      %44 = vector.extract_strided_slice %12 {offsets = [0, 32], sizes = [2, 16], strides = [1, 1]} : vector<2x48xf32> to vector<2x16xf32>
      %45 = vector.extract_strided_slice %22 {offsets = [0, 32], sizes = [2, 16], strides = [1, 1]} : vector<2x48xf32> to vector<2x16xf32>
      %46 = arith.mulf %35, %45 : vector<2x16xf32>
      %47 = arith.addf %44, %46 : vector<2x16xf32>
      %48 = math.tanh %47 : vector<2x16xf32>
      %cst_21 = arith.constant 1.000000e+00 : f32
      %49 = vector.broadcast %cst_21 : f32 to vector<2x16xf32>
      %50 = arith.subf %49, %43 : vector<2x16xf32>
      %51 = arith.mulf %50, %48 : vector<2x16xf32>
      %52 = arith.mulf %43, %arg9 : vector<2x16xf32>
      %53 = arith.addf %51, %52 : vector<2x16xf32>
      %54 = vector.extract_strided_slice %17 {offsets = [0, 0], sizes = [2, 16], strides = [1, 1]} : vector<2x48xf32> to vector<2x16xf32>
      %55 = vector.extract_strided_slice %27 {offsets = [0, 0], sizes = [2, 16], strides = [1, 1]} : vector<2x48xf32> to vector<2x16xf32>
      %56 = arith.addf %54, %55 : vector<2x16xf32>
      %57 = arith.negf %56 : vector<2x16xf32>
      %58 = math.exp %57 : vector<2x16xf32>
      %cst_22 = arith.constant 1.000000e+00 : f32
      %59 = vector.broadcast %cst_22 : f32 to vector<2x16xf32>
      %60 = arith.addf %59, %58 : vector<2x16xf32>
      %61 = arith.divf %59, %60 : vector<2x16xf32>
      %62 = vector.extract_strided_slice %17 {offsets = [0, 16], sizes = [2, 16], strides = [1, 1]} : vector<2x48xf32> to vector<2x16xf32>
      %63 = vector.extract_strided_slice %27 {offsets = [0, 16], sizes = [2, 16], strides = [1, 1]} : vector<2x48xf32> to vector<2x16xf32>
      %64 = arith.addf %62, %63 : vector<2x16xf32>
      %65 = arith.negf %64 : vector<2x16xf32>
      %66 = math.exp %65 : vector<2x16xf32>
      %cst_23 = arith.constant 1.000000e+00 : f32
      %67 = vector.broadcast %cst_23 : f32 to vector<2x16xf32>
      %68 = arith.addf %67, %66 : vector<2x16xf32>
      %69 = arith.divf %67, %68 : vector<2x16xf32>
      %70 = vector.extract_strided_slice %17 {offsets = [0, 32], sizes = [2, 16], strides = [1, 1]} : vector<2x48xf32> to vector<2x16xf32>
      %71 = vector.extract_strided_slice %27 {offsets = [0, 32], sizes = [2, 16], strides = [1, 1]} : vector<2x48xf32> to vector<2x16xf32>
      %72 = arith.mulf %61, %71 : vector<2x16xf32>
      %73 = arith.addf %70, %72 : vector<2x16xf32>
      %74 = math.tanh %73 : vector<2x16xf32>
      %cst_24 = arith.constant 1.000000e+00 : f32
      %75 = vector.broadcast %cst_24 : f32 to vector<2x16xf32>
      %76 = arith.subf %75, %69 : vector<2x16xf32>
      %77 = arith.mulf %76, %74 : vector<2x16xf32>
      %78 = arith.mulf %69, %arg10 : vector<2x16xf32>
      %79 = arith.addf %77, %78 : vector<2x16xf32>
      %80 = arith.index_cast %arg8 : i32 to index
      %c0_25 = arith.constant 0 : index
      %c0_26 = arith.constant 0 : index
      %81 = vector.load %arg5[%80, %c0_25, %c0_26] : memref<4x2x16xf32, #tpu.memory_space<vmem>>, vector<1x2x16xf32>
      %82 = vector.shape_cast %81 : vector<1x2x16xf32> to vector<2x16xf32>
      %83 = vector.shape_cast %53 : vector<2x16xf32> to vector<1x2x16xf32>
      tpu.vector_store %arg5[%80, %c0_25, %c0_26], %83 {strides = array<i32>} : memref<4x2x16xf32, #tpu.memory_space<vmem>>, vector<1x2x16xf32>,
      %c3_i32_27 = arith.constant 3 : i32
      %84 = arith.subi %c3_i32_27, %arg8 : i32
      %85 = arith.index_cast %84 : i32 to index
      %c0_28 = arith.constant 0 : index
      %c0_29 = arith.constant 0 : index
      %86 = vector.load %arg6[%85, %c0_28, %c0_29] : memref<4x2x16xf32, #tpu.memory_space<vmem>>, vector<1x2x16xf32>
      %87 = vector.shape_cast %86 : vector<1x2x16xf32> to vector<2x16xf32>
      %88 = vector.shape_cast %79 : vector<2x16xf32> to vector<1x2x16xf32>
      tpu.vector_store %arg6[%85, %c0_28, %c0_29], %88 {strides = array<i32>} : memref<4x2x16xf32, #tpu.memory_space<vmem>>, vector<1x2x16xf32>,
      scf.yield %53, %79 : vector<2x16xf32>, vector<2x16xf32>
    }
    %c4_i32_0 = arith.constant 4 : i32
    %c0 = arith.constant 0 : index
    %c0_1 = arith.constant 0 : index
    %c0_2 = arith.constant 0 : index
    %3 = vector.load %arg7[%c0, %c0_1, %c0_2] : memref<2x2x16xf32, #tpu.memory_space<vmem>>, vector<1x2x16xf32>
    %4 = vector.shape_cast %3 : vector<1x2x16xf32> to vector<2x16xf32>
    %5 = vector.shape_cast %2#0 : vector<2x16xf32> to vector<1x2x16xf32>
    tpu.vector_store %arg7[%c0, %c0_1, %c0_2], %5 {strides = array<i32>} : memref<2x2x16xf32, #tpu.memory_space<vmem>>, vector<1x2x16xf32>,
    %c1 = arith.constant 1 : index
    %c0_3 = arith.constant 0 : index
    %c0_4 = arith.constant 0 : index
    %6 = vector.load %arg7[%c1, %c0_3, %c0_4] : memref<2x2x16xf32, #tpu.memory_space<vmem>>, vector<1x2x16xf32>
    %7 = vector.shape_cast %6 : vector<1x2x16xf32> to vector<2x16xf32>
    %8 = vector.shape_cast %2#1 : vector<2x16xf32> to vector<1x2x16xf32>
    tpu.vector_store %arg7[%c1, %c0_3, %c0_4], %8 {strides = array<i32>} : memref<2x2x16xf32, #tpu.memory_space<vmem>>, vector<1x2x16xf32>,
    return
  }
}

</mosaic_0001>

<llo_original>
// kernel: _forward_impl.11
$region0: #{_forward_impl.11}
  #allocation0 [shape = 'u32[]', space=smem, size = 0x4, offset = 0x4, fixed_abs, tag = 'smem constant byte address 0x4 - core index']
  #allocation1 [shape = 'u32[144,128]{1,0:T(1,128)}', space=vmem, size = 0x12000, scoped, tag = 'internal scratch']
  %s0 = inlined_call_operand.vmem [shape: bf16[2,8,2,8,64], index: 0, kind: input, shape index: {}]
  %s1 = inlined_call_operand.vmem [shape: bf16[2,8,8,32], index: 1, kind: output, shape index: {}]
  %s2 = sld [smem:[#allocation0]]
  $region37: #{_forward_impl.11} parent=0
    _
  %s4 = ssub.s32 1, %s2
  %s5 = scalar_select 0, %s4, %s2
  loop: start=0, step=1, limit=4
  $region2: #{_forward_impl.11} parent=0 // loop_pre_header
    _
  $region3: #{_forward_impl.11} parent=0 // loop_header
    %s7 = sphi 0, %s11
    %p8 = scmp.ge.s32.totalorder %s7, 4
    %s17 = sphi 0, %s19
    %s20 = sphi 0, %s17
    %s21 = sphi 0, %s20
    %s37 = sphi 0, %s21
    %s43 = sphi 0, %s45
    %s46 = sphi 0, %s43
    %s47 = sphi 0, %s46
    %s63 = sphi 0, %s47
  $region4: #{_forward_impl.11} parent=0 // loop_header_branch
    %10 = sbr.rel (%p8) target = $region8
  $region5: #{_forward_impl.11} parent=0 // loop_body
    %s12 = ssub.s32 %s7, 1
    %s13 = ssub.s32 %s7, 2
    %s14 = sadd.s32 %s7, 1
    %s15 = ssub.s32 %s7, %s14
    %p16 = scmp.eq.s32.totalorder %s15, 0
    %s18 = sadd.s32 %s17, 1
    %s19 = scalar_select %p16, %s17, %s18
    %p22 = pneg %p16
    %p23 = scmp.eq.s32.totalorder %s7, 1
    %p24 = por %p22, %p23
    %p25 = scmp.ne.s32.totalorder %s17, %s20
    %p26 = scmp.eq.s32.totalorder %s7, 0
    %p27 = por %p25, %p26
    %p28 = scmp.ne.s32.totalorder %s17, %s20
    %p29 = scmp.eq.s32.totalorder %s12, 1
    %p30 = por %p28, %p29
    %p31 = scmp.ne.s32.totalorder %s20, %s21
    %p32 = scmp.eq.s32.totalorder %s12, 0
    %p33 = por %p31, %p32
    %p34 = scmp.ne.s32.totalorder %s20, %s21
    %p35 = scmp.eq.s32.totalorder %s13, 1
    %p36 = por %p34, %p35
    %p38 = scmp.ne.s32.totalorder %s21, %s37
    %p39 = scmp.eq.s32.totalorder %s13, 0
    %p40 = por %p38, %p39
    %s41 = ssub.s32 %s7, %s14
    %p42 = scmp.eq.s32.totalorder %s41, 0
    %s44 = sadd.s32 %s43, 1
    %s45 = scalar_select %p42, %s43, %s44
    %p48 = pneg %p42
    %p49 = scmp.eq.s32.totalorder %s7, 1
    %p50 = por %p48, %p49
    %p51 = scmp.ne.s32.totalorder %s43, %s46
    %p52 = scmp.eq.s32.totalorder %s7, 0
    %p53 = por %p51, %p52
    %p54 = scmp.ne.s32.totalorder %s43, %s46
    %p55 = scmp.eq.s32.totalorder %s12, 1
    %p56 = por %p54, %p55
    %p57 = scmp.ne.s32.totalorder %s46, %s47
    %p58 = scmp.eq.s32.totalorder %s12, 0
    %p59 = por %p57, %p58
    %p60 = scmp.ne.s32.totalorder %s46, %s47
    %p61 = scmp.eq.s32.totalorder %s13, 1
    %p62 = por %p60, %p61
    %p64 = scmp.ne.s32.totalorder %s47, %s63
    %p65 = scmp.eq.s32.totalorder %s13, 0
    %p66 = por %p64, %p65
    %p67 = scmp.le.s32.totalorder 1, %s7
    %p68 = scmp.lt.s32.totalorder %s7, 3
    %p69 = pnand %p67, %p68
    %p70 = pneg %p69
    // Predicated region
    $region9: #{_forward_impl.11} parent=5 // pred_check
      _
    $region10: #{_forward_impl.11} parent=5 // pred_check_branch
      %72 = sbr.rel (%p69) target = $region12
    $region11: #{_forward_impl.11} parent=5 // pred_region
      %s73 = ssub.s32 %s7, 1
    $region12: #{_forward_impl.11} parent=5 // pred_fallthru
      _
    %p74 = scmp.lt.s32.totalorder %s7, 2
    // Predicated region
    $region13: #{_forward_impl.11} parent=5 // pred_check
      %p75 = pneg %p74
    $region14: #{_forward_impl.11} parent=5 // pred_check_branch
      %77 = sbr.rel (%p75) target = $region16
    $region15: #{_forward_impl.11} parent=5 // pred_region
      // Predicated region
      $region17: #{_forward_impl.11} parent=15 // pred_check
        %p78 = pneg %p27
      $region18: #{_forward_impl.11} parent=15 // pred_check_branch
        %80 = sbr.rel (%p78) target = $region20
      $region19: #{_forward_impl.11} parent=15 // pred_region
        %p81 = scmp.lt.s32.totalorder %s7, 1
        %s82 = scalar_select %p81, %s7, 1
        %s83 = smul.addr %s82, 16
        %s84 = smul.addr %s83, 4
        %s85 = scalar_lea.vmem %s0, %s84
      $region20: #{_forward_impl.11} parent=15 // pred_fallthru
        _
    $region16: #{_forward_impl.11} parent=5 // pred_fallthru
      _
    %p86 = scmp.le.s32.totalorder 1, %s7
    %p87 = scmp.lt.s32.totalorder %s7, 3
    %p88 = pnand %p86, %p87
    %p89 = pneg %p88
    // Predicated region
    $region21: #{_forward_impl.11} parent=5 // pred_check
      _
    $region22: #{_forward_impl.11} parent=5 // pred_check_branch
      %91 = sbr.rel (%p88) target = $region24
    $region23: #{_forward_impl.11} parent=5 // pred_region
      %s92 = ssub.s32 %s7, 1
      %p93 = scmp.lt.s32.totalorder %s12, 1
      %s94 = scalar_select %p93, %s12, 1
      %s95 = smul.addr %s94, 16
      %s96 = smul.addr %s95, 4
      %s97 = scalar_lea.vmem %s0, %s96
      %p98 = pneg %p33
      %p99 = pneg %p30
      %p100 = pneg %p59
      %p101 = pneg %p56
      %p102 = scmp.lt.s32.totalorder %s12, 1
      %s103 = scalar_select %p102, %s12, 1
      %s104 = smul.addr %s103, 8
      %s105 = smul.addr %s104, 4
      %s106 = scalar_lea.vmem %s1, %s105
      %p107 = scmp.lt.s32.totalorder %s12, 1
      %s108 = scalar_select %p107, %s12, 1
      %s109 = smul.addr %s108, 16
      %s110 = smul.addr %s109, 4
      %s111 = scalar_lea.vmem %s0, %s110
      %p112 = scmp.lt.s32.totalorder %s12, 1
      %s113 = scalar_select %p112, %s12, 1
      %s114 = smul.addr %s113, 8
      %s115 = smul.addr %s114, 4
      %s116 = scalar_lea.vmem %s1, %s115
      %v117 = vld [vmem:[%s111] sm:$0xf]
      %v118 = vld [vmem:[%s111 + $0x4] sm:$0xf]
      %v119 = vld [vmem:[%s111 + $0x8] sm:$0xf]
      %v120 = vld [vmem:[%s111 + $0xc] sm:$0xf]
      %v121 = vld [vmem:[%s111 + $0x10] sm:$0xf]
      %v122 = vld [vmem:[%s111 + $0x14] sm:$0xf]
      %v123 = vld [vmem:[%s111 + $0x18] sm:$0xf]
      %v124 = vld [vmem:[%s111 + $0x1c] sm:$0xf]
      %v125 = vld [vmem:[%s111 + $0x20] sm:$0xf]
      %v126 = vld [vmem:[%s111 + $0x24] sm:$0xf]
      %v127 = vld [vmem:[%s111 + $0x28] sm:$0xf]
      %v128 = vld [vmem:[%s111 + $0x2c] sm:$0xf]
      %v129 = vld [vmem:[%s111 + $0x30] sm:$0xf]
      %v130 = vld [vmem:[%s111 + $0x34] sm:$0xf]
      %v131 = vld [vmem:[%s111 + $0x38] sm:$0xf]
      %v132 = vld [vmem:[%s111 + $0x3c] sm:$0xf]
      %141 = vrot.lane.b32.xlu0 %v117, 96
      %v142 = vpop.permute.xlu0 %141
      %143 = vrot.lane.b32.xlu0 %v119, 96
      %v144 = vpop.permute.xlu0 %143
      %145 = vrot.lane.b32.xlu0 %v121, 96
      %v146 = vpop.permute.xlu0 %145
      %147 = vrot.lane.b32.xlu0 %v123, 96
      %v148 = vpop.permute.xlu0 %147
      %149 = vrot.lane.b32.xlu0 %v125, 96
      %v150 = vpop.permute.xlu0 %149
      %151 = vrot.lane.b32.xlu0 %v127, 96
      %v152 = vpop.permute.xlu0 %151
      %153 = vrot.lane.b32.xlu0 %v129, 96
      %v154 = vpop.permute.xlu0 %153
      %155 = vrot.lane.b32.xlu0 %v131, 96
      %v156 = vpop.permute.xlu0 %155
      %v165 = vmax.bf16 %v117, %v142
      %v166 = vmax.bf16 %v119, %v144
      %v167 = vmax.bf16 %v121, %v146
      %v168 = vmax.bf16 %v123, %v148
      %v169 = vmax.bf16 %v125, %v150
      %v170 = vmax.bf16 %v127, %v152
      %v171 = vmax.bf16 %v129, %v154
      %v172 = vmax.bf16 %v131, %v156
      %181 = vrot.lane.b32.xlu0 %v118, 96
      %v182 = vpop.permute.xlu0 %181
      %183 = vrot.lane.b32.xlu0 %v120, 96
      %v184 = vpop.permute.xlu0 %183
      %185 = vrot.lane.b32.xlu0 %v122, 96
      %v186 = vpop.permute.xlu0 %185
      %187 = vrot.lane.b32.xlu0 %v124, 96
      %v188 = vpop.permute.xlu0 %187
      %189 = vrot.lane.b32.xlu0 %v126, 96
      %v190 = vpop.permute.xlu0 %189
      %191 = vrot.lane.b32.xlu0 %v128, 96
      %v192 = vpop.permute.xlu0 %191
      %193 = vrot.lane.b32.xlu0 %v130, 96
      %v194 = vpop.permute.xlu0 %193
      %195 = vrot.lane.b32.xlu0 %v132, 96
      %v196 = vpop.permute.xlu0 %195
      %v205 = vmax.bf16 %v118, %v182
      %v206 = vmax.bf16 %v120, %v184
      %v207 = vmax.bf16 %v122, %v186
      %v208 = vmax.bf16 %v124, %v188
      %v209 = vmax.bf16 %v126, %v190
      %v210 = vmax.bf16 %v128, %v192
      %v211 = vmax.bf16 %v130, %v194
      %v212 = vmax.bf16 %v132, %v196
      %v213 = vmax.bf16 %v165, %v205
      %v214 = vmax.bf16 %v166, %v206
      %v215 = vmax.bf16 %v167, %v207
      %v216 = vmax.bf16 %v168, %v208
      %v217 = vmax.bf16 %v169, %v209
      %v218 = vmax.bf16 %v170, %v210
      %v219 = vmax.bf16 %v171, %v211
      %v220 = vmax.bf16 %v172, %v212
      %vm221 = vcmask 257024
      %222 = vst.msk [vmem:[%s116] sm:$0xf] %vm221, %v213
      %223 = vst.msk [vmem:[%s116 + $0x4] sm:$0xf] %vm221, %v214
      %224 = vst.msk [vmem:[%s116 + $0x8] sm:$0xf] %vm221, %v215
      %225 = vst.msk [vmem:[%s116 + $0xc] sm:$0xf] %vm221, %v216
      %226 = vst.msk [vmem:[%s116 + $0x10] sm:$0xf] %vm221, %v217
      %227 = vst.msk [vmem:[%s116 + $0x14] sm:$0xf] %vm221, %v218
      %228 = vst.msk [vmem:[%s116 + $0x18] sm:$0xf] %vm221, %v219
      %229 = vst.msk [vmem:[%s116 + $0x1c] sm:$0xf] %vm221, %v220
      %p230 = scmp.lt.s32.totalorder %s12, 1
      %s231 = scalar_select %p230, %s12, 1
      %s232 = smul.addr %s231, 8
      %s233 = smul.addr %s232, 4
      %s234 = scalar_lea.vmem %s1, %s233
      // Predicated region
      $region25: #{_forward_impl.11} parent=23 // pred_check
        %p235 = pneg %p56
      $region26: #{_forward_impl.11} parent=23 // pred_check_branch
        %237 = sbr.rel (%p235) target = $region28
      $region27: #{_forward_impl.11} parent=23 // pred_region
        _
      $region28: #{_forward_impl.11} parent=23 // pred_fallthru
        _
    $region24: #{_forward_impl.11} parent=5 // pred_fallthru
      _
    %p238 = scmp.le.s32.totalorder 2, %s7
    // Predicated region
    $region29: #{_forward_impl.11} parent=5 // pred_check
      %p239 = pneg %p238
    $region30: #{_forward_impl.11} parent=5 // pred_check_branch
      %241 = sbr.rel (%p239) target = $region32
    $region31: #{_forward_impl.11} parent=5 // pred_region
      %s242 = ssub.s32 %s7, 2
      // Predicated region
      $region33: #{_forward_impl.11} parent=31 // pred_check
        %p243 = pneg %p62
      $region34: #{_forward_impl.11} parent=31 // pred_check_branch
        %245 = sbr.rel (%p243) target = $region36
      $region35: #{_forward_impl.11} parent=31 // pred_region
        %p246 = scmp.lt.s32.totalorder %s13, 1
        %s247 = scalar_select %p246, %s13, 1
        %s248 = smul.addr %s247, 8
        %s249 = smul.addr %s248, 4
        %s250 = scalar_lea.vmem %s1, %s249
      $region36: #{_forward_impl.11} parent=31 // pred_fallthru
        _
    $region32: #{_forward_impl.11} parent=5 // pred_fallthru
      _
  $region6: #{_forward_impl.11} parent=0 // loop_footer
    %s11 = sadd.s32 1, %s7
  $region7: #{_forward_impl.11} parent=0 // loop_footer_branch
    %6 = sbr.rel target = $region3
  $region8: #{_forward_impl.11} parent=0 // loop_exit
    _

// kernel: _forward_impl.13
$region0: #{_forward_impl.13}
  #allocation0 [shape = 'u32[]', space=smem, size = 0x4, offset = 0x4, fixed_abs, tag = 'smem constant byte address 0x4 - core index']
  #allocation1 [shape = 'u32[144,128]{1,0:T(1,128)}', space=vmem, size = 0x12000, scoped, tag = 'internal scratch']
  %s0 = inlined_call_operand.vmem [shape: bf16[2,4,2,4,128], index: 0, kind: input, shape index: {}]
  %s1 = inlined_call_operand.vmem [shape: bf16[2,4,4,64], index: 1, kind: output, shape index: {}]
  %s2 = sld [smem:[#allocation0]]
  $region37: #{_forward_impl.13} parent=0
    _
  %s4 = ssub.s32 1, %s2
  %s5 = scalar_select 0, %s4, %s2
  loop: start=0, step=1, limit=4
  $region2: #{_forward_impl.13} parent=0 // loop_pre_header
    _
  $region3: #{_forward_impl.13} parent=0 // loop_header
    %s7 = sphi 0, %s11
    %p8 = scmp.ge.s32.totalorder %s7, 4
    %s17 = sphi 0, %s19
    %s20 = sphi 0, %s17
    %s21 = sphi 0, %s20
    %s37 = sphi 0, %s21
    %s43 = sphi 0, %s45
    %s46 = sphi 0, %s43
    %s47 = sphi 0, %s46
    %s63 = sphi 0, %s47
  $region4: #{_forward_impl.13} parent=0 // loop_header_branch
    %10 = sbr.rel (%p8) target = $region8
  $region5: #{_forward_impl.13} parent=0 // loop_body
    %s12 = ssub.s32 %s7, 1
    %s13 = ssub.s32 %s7, 2
    %s14 = sadd.s32 %s7, 1
    %s15 = ssub.s32 %s7, %s14
    %p16 = scmp.eq.s32.totalorder %s15, 0
    %s18 = sadd.s32 %s17, 1
    %s19 = scalar_select %p16, %s17, %s18
    %p22 = pneg %p16
    %p23 = scmp.eq.s32.totalorder %s7, 1
    %p24 = por %p22, %p23
    %p25 = scmp.ne.s32.totalorder %s17, %s20
    %p26 = scmp.eq.s32.totalorder %s7, 0
    %p27 = por %p25, %p26
    %p28 = scmp.ne.s32.totalorder %s17, %s20
    %p29 = scmp.eq.s32.totalorder %s12, 1
    %p30 = por %p28, %p29
    %p31 = scmp.ne.s32.totalorder %s20, %s21
    %p32 = scmp.eq.s32.totalorder %s12, 0
    %p33 = por %p31, %p32
    %p34 = scmp.ne.s32.totalorder %s20, %s21
    %p35 = scmp.eq.s32.totalorder %s13, 1
    %p36 = por %p34, %p35
    %p38 = scmp.ne.s32.totalorder %s21, %s37
    %p39 = scmp.eq.s32.totalorder %s13, 0
    %p40 = por %p38, %p39
    %s41 = ssub.s32 %s7, %s14
    %p42 = scmp.eq.s32.totalorder %s41, 0
    %s44 = sadd.s32 %s43, 1
    %s45 = scalar_select %p42, %s43, %s44
    %p48 = pneg %p42
    %p49 = scmp.eq.s32.totalorder %s7, 1
    %p50 = por %p48, %p49
    %p51 = scmp.ne.s32.totalorder %s43, %s46
    %p52 = scmp.eq.s32.totalorder %s7, 0
    %p53 = por %p51, %p52
    %p54 = scmp.ne.s32.totalorder %s43, %s46
    %p55 = scmp.eq.s32.totalorder %s12, 1
    %p56 = por %p54, %p55
    %p57 = scmp.ne.s32.totalorder %s46, %s47
    %p58 = scmp.eq.s32.totalorder %s12, 0
    %p59 = por %p57, %p58
    %p60 = scmp.ne.s32.totalorder %s46, %s47
    %p61 = scmp.eq.s32.totalorder %s13, 1
    %p62 = por %p60, %p61
    %p64 = scmp.ne.s32.totalorder %s47, %s63
    %p65 = scmp.eq.s32.totalorder %s13, 0
    %p66 = por %p64, %p65
    %p67 = scmp.le.s32.totalorder 1, %s7
    %p68 = scmp.lt.s32.totalorder %s7, 3
    %p69 = pnand %p67, %p68
    %p70 = pneg %p69
    // Predicated region
    $region9: #{_forward_impl.13} parent=5 // pred_check
      _
    $region10: #{_forward_impl.13} parent=5 // pred_check_branch
      %72 = sbr.rel (%p69) target = $region12
    $region11: #{_forward_impl.13} parent=5 // pred_region
      %s73 = ssub.s32 %s7, 1
    $region12: #{_forward_impl.13} parent=5 // pred_fallthru
      _
    %p74 = scmp.lt.s32.totalorder %s7, 2
    // Predicated region
    $region13: #{_forward_impl.13} parent=5 // pred_check
      %p75 = pneg %p74
    $region14: #{_forward_impl.13} parent=5 // pred_check_branch
      %77 = sbr.rel (%p75) target = $region16
    $region15: #{_forward_impl.13} parent=5 // pred_region
      // Predicated region
      $region17: #{_forward_impl.13} parent=15 // pred_check
        %p78 = pneg %p27
      $region18: #{_forward_impl.13} parent=15 // pred_check_branch
        %80 = sbr.rel (%p78) target = $region20
      $region19: #{_forward_impl.13} parent=15 // pred_region
        %p81 = scmp.lt.s32.totalorder %s7, 1
        %s82 = scalar_select %p81, %s7, 1
        %s83 = smul.addr %s82, 8
        %s84 = smul.addr %s83, 2
        %s85 = scalar_lea.vmem %s0, %s84
      $region20: #{_forward_impl.13} parent=15 // pred_fallthru
        _
    $region16: #{_forward_impl.13} parent=5 // pred_fallthru
      _
    %p86 = scmp.le.s32.totalorder 1, %s7
    %p87 = scmp.lt.s32.totalorder %s7, 3
    %p88 = pnand %p86, %p87
    %p89 = pneg %p88
    // Predicated region
    $region21: #{_forward_impl.13} parent=5 // pred_check
      _
    $region22: #{_forward_impl.13} parent=5 // pred_check_branch
      %91 = sbr.rel (%p88) target = $region24
    $region23: #{_forward_impl.13} parent=5 // pred_region
      %s92 = ssub.s32 %s7, 1
      %p93 = scmp.lt.s32.totalorder %s12, 1
      %s94 = scalar_select %p93, %s12, 1
      %s95 = smul.addr %s94, 8
      %s96 = smul.addr %s95, 2
      %s97 = scalar_lea.vmem %s0, %s96
      %p98 = pneg %p33
      %p99 = pneg %p30
      %p100 = pneg %p59
      %p101 = pneg %p56
      %p102 = scmp.lt.s32.totalorder %s12, 1
      %s103 = scalar_select %p102, %s12, 1
      %s104 = smul.addr %s103, 4
      %s105 = smul.addr %s104, 2
      %s106 = scalar_lea.vmem %s1, %s105
      %p107 = scmp.lt.s32.totalorder %s12, 1
      %s108 = scalar_select %p107, %s12, 1
      %s109 = smul.addr %s108, 8
      %s110 = smul.addr %s109, 2
      %s111 = scalar_lea.vmem %s0, %s110
      %p112 = scmp.lt.s32.totalorder %s12, 1
      %s113 = scalar_select %p112, %s12, 1
      %s114 = smul.addr %s113, 4
      %s115 = smul.addr %s114, 2
      %s116 = scalar_lea.vmem %s1, %s115
      %v117 = vld [vmem:[%s111] sm:$0x3]
      %v118 = vld [vmem:[%s111 + $0x2] sm:$0x3]
      %v119 = vld [vmem:[%s111 + $0x4] sm:$0x3]
      %v120 = vld [vmem:[%s111 + $0x6] sm:$0x3]
      %v121 = vld [vmem:[%s111 + $0x8] sm:$0x3]
      %v122 = vld [vmem:[%s111 + $0xa] sm:$0x3]
      %v123 = vld [vmem:[%s111 + $0xc] sm:$0x3]
      %v124 = vld [vmem:[%s111 + $0xe] sm:$0x3]
      %129 = vrot.lane.b32.xlu0 %v117, 64
      %v130 = vpop.permute.xlu0 %129
      %131 = vrot.lane.b32.xlu0 %v119, 64
      %v132 = vpop.permute.xlu0 %131
      %133 = vrot.lane.b32.xlu0 %v121, 64
      %v134 = vpop.permute.xlu0 %133
      %135 = vrot.lane.b32.xlu0 %v123, 64
      %v136 = vpop.permute.xlu0 %135
      %v141 = vmax.bf16 %v117, %v130
      %v142 = vmax.bf16 %v119, %v132
      %v143 = vmax.bf16 %v121, %v134
      %v144 = vmax.bf16 %v123, %v136
      %149 = vrot.lane.b32.xlu0 %v118, 64
      %v150 = vpop.permute.xlu0 %149
      %151 = vrot.lane.b32.xlu0 %v120, 64
      %v152 = vpop.permute.xlu0 %151
      %153 = vrot.lane.b32.xlu0 %v122, 64
      %v154 = vpop.permute.xlu0 %153
      %155 = vrot.lane.b32.xlu0 %v124, 64
      %v156 = vpop.permute.xlu0 %155
      %v161 = vmax.bf16 %v118, %v150
      %v162 = vmax.bf16 %v120, %v152
      %v163 = vmax.bf16 %v122, %v154
      %v164 = vmax.bf16 %v124, %v156
      %v165 = vmax.bf16 %v141, %v161
      %v166 = vmax.bf16 %v142, %v162
      %v167 = vmax.bf16 %v143, %v163
      %v168 = vmax.bf16 %v144, %v164
      %vm169 = vcmask 517120
      %170 = vst.msk [vmem:[%s116] sm:$0x3] %vm169, %v165
      %171 = vst.msk [vmem:[%s116 + $0x2] sm:$0x3] %vm169, %v166
      %172 = vst.msk [vmem:[%s116 + $0x4] sm:$0x3] %vm169, %v167
      %173 = vst.msk [vmem:[%s116 + $0x6] sm:$0x3] %vm169, %v168
      %p174 = scmp.lt.s32.totalorder %s12, 1
      %s175 = scalar_select %p174, %s12, 1
      %s176 = smul.addr %s175, 4
      %s177 = smul.addr %s176, 2
      %s178 = scalar_lea.vmem %s1, %s177
      // Predicated region
      $region25: #{_forward_impl.13} parent=23 // pred_check
        %p179 = pneg %p56
      $region26: #{_forward_impl.13} parent=23 // pred_check_branch
        %181 = sbr.rel (%p179) target = $region28
      $region27: #{_forward_impl.13} parent=23 // pred_region
        _
      $region28: #{_forward_impl.13} parent=23 // pred_fallthru
        _
    $region24: #{_forward_impl.13} parent=5 // pred_fallthru
      _
    %p182 = scmp.le.s32.totalorder 2, %s7
    // Predicated region
    $region29: #{_forward_impl.13} parent=5 // pred_check
      %p183 = pneg %p182
    $region30: #{_forward_impl.13} parent=5 // pred_check_branch
      %185 = sbr.rel (%p183) target = $region32
    $region31: #{_forward_impl.13} parent=5 // pred_region
      %s186 = ssub.s32 %s7, 2
      // Predicated region
      $region33: #{_forward_impl.13} parent=31 // pred_check
        %p187 = pneg %p62
      $region34: #{_forward_impl.13} parent=31 // pred_check_branch
        %189 = sbr.rel (%p187) target = $region36
      $region35: #{_forward_impl.13} parent=31 // pred_region
        %p190 = scmp.lt.s32.totalorder %s13, 1
        %s191 = scalar_select %p190, %s13, 1
        %s192 = smul.addr %s191, 4
        %s193 = smul.addr %s192, 2
        %s194 = scalar_lea.vmem %s1, %s193
      $region36: #{_forward_impl.13} parent=31 // pred_fallthru
        _
    $region32: #{_forward_impl.13} parent=5 // pred_fallthru
      _
  $region6: #{_forward_impl.13} parent=0 // loop_footer
    %s11 = sadd.s32 1, %s7
  $region7: #{_forward_impl.13} parent=0 // loop_footer_branch
    %6 = sbr.rel target = $region3
  $region8: #{_forward_impl.13} parent=0 // loop_exit
    _

// kernel: _forward_impl.12
$region0: #{_forward_impl.12}
  #allocation0 [shape = 'u32[]', space=smem, size = 0x4, offset = 0x4, fixed_abs, tag = 'smem constant byte address 0x4 - core index']
  #allocation1 [shape = 'u32[144,128]{1,0:T(1,128)}', space=vmem, size = 0x12000, scoped, tag = 'internal scratch']
  %s0 = inlined_call_operand.vmem [shape: bf16[2,82,32], index: 0, kind: input, shape index: {}]
  %s1 = inlined_call_operand.vmem [shape: bf16[9,32,64], index: 1, kind: input, shape index: {}]
  %s2 = inlined_call_operand.vmem [shape: f32[1,64], index: 2, kind: input, shape index: {}]
  %s3 = inlined_call_operand.vmem [shape: f32[1,64], index: 3, kind: input, shape index: {}]
  %s4 = inlined_call_operand.vmem [shape: bf16[2,64,64], index: 4, kind: output, shape index: {}]
  %s5 = sld [smem:[#allocation0]]
  $region49: #{_forward_impl.12} parent=0
    _
  %s7 = ssub.s32 1, %s5
  %s8 = scalar_select 0, %s7, %s5
  loop: start=0, step=1, limit=4
  $region2: #{_forward_impl.12} parent=0 // loop_pre_header
    _
  $region3: #{_forward_impl.12} parent=0 // loop_header
    %s10 = sphi 0, %s14
    %p11 = scmp.ge.s32.totalorder %s10, 4
    %s20 = sphi 0, %s22
    %s23 = sphi 0, %s20
    %s24 = sphi 0, %s23
    %s40 = sphi 0, %s24
    %s44 = sphi 0, %s44
    %s46 = sphi 0, %s44
    %s47 = sphi 0, %s46
    %s61 = sphi 0, %s47
    %s65 = sphi 0, %s65
    %s67 = sphi 0, %s65
    %s68 = sphi 0, %s67
    %s82 = sphi 0, %s68
    %s86 = sphi 0, %s86
    %s88 = sphi 0, %s86
    %s89 = sphi 0, %s88
    %s103 = sphi 0, %s89
    %s109 = sphi 0, %s111
    %s112 = sphi 0, %s109
    %s113 = sphi 0, %s112
    %s129 = sphi 0, %s113
  $region4: #{_forward_impl.12} parent=0 // loop_header_branch
    %13 = sbr.rel (%p11) target = $region8
  $region5: #{_forward_impl.12} parent=0 // loop_body
    %s15 = ssub.s32 %s10, 1
    %s16 = ssub.s32 %s10, 2
    %s17 = sadd.s32 %s10, 1
    %s18 = ssub.s32 %s10, %s17
    %p19 = scmp.eq.s32.totalorder %s18, 0
    %s21 = sadd.s32 %s20, 1
    %s22 = scalar_select %p19, %s20, %s21
    %p25 = pneg %p19
    %p26 = scmp.eq.s32.totalorder %s10, 1
    %p27 = por %p25, %p26
    %p28 = scmp.ne.s32.totalorder %s20, %s23
    %p29 = scmp.eq.s32.totalorder %s10, 0
    %p30 = por %p28, %p29
    %p31 = scmp.ne.s32.totalorder %s20, %s23
    %p32 = scmp.eq.s32.totalorder %s15, 1
    %p33 = por %p31, %p32
    %p34 = scmp.ne.s32.totalorder %s23, %s24
    %p35 = scmp.eq.s32.totalorder %s15, 0
    %p36 = por %p34, %p35
    %p37 = scmp.ne.s32.totalorder %s23, %s24
    %p38 = scmp.eq.s32.totalorder %s16, 1
    %p39 = por %p37, %p38
    %p41 = scmp.ne.s32.totalorder %s24, %s40
    %p42 = scmp.eq.s32.totalorder %s16, 0
    %p43 = por %p41, %p42
    %s45 = sadd.s32 %s44, 1
    %p48 = scmp.eq.s32.totalorder %s10, 1
    %p49 = scmp.ne.s32.totalorder %s44, %s46
    %p50 = scmp.eq.s32.totalorder %s10, 0
    %p51 = por %p49, %p50
    %p52 = scmp.ne.s32.totalorder %s44, %s46
    %p53 = scmp.eq.s32.totalorder %s15, 1
    %p54 = por %p52, %p53
    %p55 = scmp.ne.s32.totalorder %s46, %s47
    %p56 = scmp.eq.s32.totalorder %s15, 0
    %p57 = por %p55, %p56
    %p58 = scmp.ne.s32.totalorder %s46, %s47
    %p59 = scmp.eq.s32.totalorder %s16, 1
    %p60 = por %p58, %p59
    %p62 = scmp.ne.s32.totalorder %s47, %s61
    %p63 = scmp.eq.s32.totalorder %s16, 0
    %p64 = por %p62, %p63
    %s66 = sadd.s32 %s65, 1
    %p69 = scmp.eq.s32.totalorder %s10, 1
    %p70 = scmp.ne.s32.totalorder %s65, %s67
    %p71 = scmp.eq.s32.totalorder %s10, 0
    %p72 = por %p70, %p71
    %p73 = scmp.ne.s32.totalorder %s65, %s67
    %p74 = scmp.eq.s32.totalorder %s15, 1
    %p75 = por %p73, %p74
    %p76 = scmp.ne.s32.totalorder %s67, %s68
    %p77 = scmp.eq.s32.totalorder %s15, 0
    %p78 = por %p76, %p77
    %p79 = scmp.ne.s32.totalorder %s67, %s68
    %p80 = scmp.eq.s32.totalorder %s16, 1
    %p81 = por %p79, %p80
    %p83 = scmp.ne.s32.totalorder %s68, %s82
    %p84 = scmp.eq.s32.totalorder %s16, 0
    %p85 = por %p83, %p84
    %s87 = sadd.s32 %s86, 1
    %p90 = scmp.eq.s32.totalorder %s10, 1
    %p91 = scmp.ne.s32.totalorder %s86, %s88
    %p92 = scmp.eq.s32.totalorder %s10, 0
    %p93 = por %p91, %p92
    %p94 = scmp.ne.s32.totalorder %s86, %s88
    %p95 = scmp.eq.s32.totalorder %s15, 1
    %p96 = por %p94, %p95
    %p97 = scmp.ne.s32.totalorder %s88, %s89
    %p98 = scmp.eq.s32.totalorder %s15, 0
    %p99 = por %p97, %p98
    %p100 = scmp.ne.s32.totalorder %s88, %s89
    %p101 = scmp.eq.s32.totalorder %s16, 1
    %p102 = por %p100, %p101
    %p104 = scmp.ne.s32.totalorder %s89, %s103
    %p105 = scmp.eq.s32.totalorder %s16, 0
    %p106 = por %p104, %p105
    %s107 = ssub.s32 %s10, %s17
    %p108 = scmp.eq.s32.totalorder %s107, 0
    %s110 = sadd.s32 %s109, 1
    %s111 = scalar_select %p108, %s109, %s110
    %p114 = pneg %p108
    %p115 = scmp.eq.s32.totalorder %s10, 1
    %p116 = por %p114, %p115
    %p117 = scmp.ne.s32.totalorder %s109, %s112
    %p118 = scmp.eq.s32.totalorder %s10, 0
    %p119 = por %p117, %p118
    %p120 = scmp.ne.s32.totalorder %s109, %s112
    %p121 = scmp.eq.s32.totalorder %s15, 1
    %p122 = por %p120, %p121
    %p123 = scmp.ne.s32.totalorder %s112, %s113
    %p124 = scmp.eq.s32.totalorder %s15, 0
    %p125 = por %p123, %p124
    %p126 = scmp.ne.s32.totalorder %s112, %s113
    %p127 = scmp.eq.s32.totalorder %s16, 1
    %p128 = por %p126, %p127
    %p130 = scmp.ne.s32.totalorder %s113, %s129
    %p131 = scmp.eq.s32.totalorder %s16, 0
    %p132 = por %p130, %p131
    %p133 = scmp.le.s32.totalorder 1, %s10
    %p134 = scmp.lt.s32.totalorder %s10, 3
    %p135 = pnand %p133, %p134
    %p136 = pneg %p135
    // Predicated region
    $region9: #{_forward_impl.12} parent=5 // pred_check
      _
    $region10: #{_forward_impl.12} parent=5 // pred_check_branch
      %138 = sbr.rel (%p135) target = $region12
    $region11: #{_forward_impl.12} parent=5 // pred_region
      %s139 = ssub.s32 %s10, 1
      // Predicated region
      $region13: #{_forward_impl.12} parent=11 // pred_check
        %p140 = pneg %p57
      $region14: #{_forward_impl.12} parent=11 // pred_check_branch
        %142 = sbr.rel (%p140) target = $region16
      $region15: #{_forward_impl.12} parent=11 // pred_region
        _
      $region16: #{_forward_impl.12} parent=11 // pred_fallthru
        _
      // Predicated region
      $region17: #{_forward_impl.12} parent=11 // pred_check
        %p143 = pneg %p78
      $region18: #{_forward_impl.12} parent=11 // pred_check_branch
        %145 = sbr.rel (%p143) target = $region20
      $region19: #{_forward_impl.12} parent=11 // pred_region
        _
      $region20: #{_forward_impl.12} parent=11 // pred_fallthru
        _
      // Predicated region
      $region21: #{_forward_impl.12} parent=11 // pred_check
        %p146 = pneg %p99
      $region22: #{_forward_impl.12} parent=11 // pred_check_branch
        %148 = sbr.rel (%p146) target = $region24
      $region23: #{_forward_impl.12} parent=11 // pred_region
        _
      $region24: #{_forward_impl.12} parent=11 // pred_fallthru
        _
    $region12: #{_forward_impl.12} parent=5 // pred_fallthru
      _
    %p149 = scmp.lt.s32.totalorder %s10, 2
    // Predicated region
    $region25: #{_forward_impl.12} parent=5 // pred_check
      %p150 = pneg %p149
    $region26: #{_forward_impl.12} parent=5 // pred_check_branch
      %152 = sbr.rel (%p150) target = $region28
    $region27: #{_forward_impl.12} parent=5 // pred_region
      // Predicated region
      $region29: #{_forward_impl.12} parent=27 // pred_check
        %p153 = pneg %p30
      $region30: #{_forward_impl.12} parent=27 // pred_check_branch
        %155 = sbr.rel (%p153) target = $region32
      $region31: #{_forward_impl.12} parent=27 // pred_region
        %p156 = scmp.lt.s32.totalorder %s10, 1
        %s157 = scalar_select %p156, %s10, 1
        %s158 = smul.addr %s157, 11
        %s159 = smul.addr %s158, 4
        %s160 = scalar_lea.vmem %s0, %s159
      $region32: #{_forward_impl.12} parent=27 // pred_fallthru
        _
    $region28: #{_forward_impl.12} parent=5 // pred_fallthru
      _
    %p161 = scmp.le.s32.totalorder 1, %s10
    %p162 = scmp.lt.s32.totalorder %s10, 3
    %p163 = pnand %p161, %p162
    %p164 = pneg %p163
    // Predicated region
    $region33: #{_forward_impl.12} parent=5 // pred_check
      _
    $region34: #{_forward_impl.12} parent=5 // pred_check_branch
      %166 = sbr.rel (%p163) target = $region36
    $region35: #{_forward_impl.12} parent=5 // pred_region
      %s167 = ssub.s32 %s10, 1
      %p168 = scmp.lt.s32.totalorder %s15, 1
      %s169 = scalar_select %p168, %s15, 1
      %s170 = smul.addr %s169, 11
      %s171 = smul.addr %s170, 4
      %s172 = scalar_lea.vmem %s0, %s171
      %p173 = pneg %p36
      %p174 = pneg %p33
      %p175 = pneg %p57
      %p176 = pneg %p54
      %p177 = pneg %p78
      %p178 = pneg %p75
      %p179 = pneg %p99
      %p180 = pneg %p96
      %p181 = pneg %p125
      %p182 = pneg %p122
      %p183 = scmp.lt.s32.totalorder %s15, 1
      %s184 = scalar_select %p183, %s15, 1
      %s185 = smul.addr %s184, 8
      %s186 = smul.addr %s185, 4
      %s187 = scalar_lea.vmem %s4, %s186
      %p188 = scmp.lt.s32.totalorder %s15, 1
      %s189 = scalar_select %p188, %s15, 1
      %s190 = smul.addr %s189, 11
      %s191 = smul.addr %s190, 4
      %s192 = scalar_lea.vmem %s0, %s191
      %p193 = scmp.lt.s32.totalorder %s15, 1
      %s194 = scalar_select %p193, %s15, 1
      %s195 = smul.addr %s194, 8
      %s196 = smul.addr %s195, 4
      %s197 = scalar_lea.vmem %s4, %s196
      %v199 = vlaneseq
      %v200 = vshrl.u32 %v199, 7
      %v201 = vadd.s32 %v200, 8
      %v202 = vadd.s32 %v200, 16
      %v203 = vadd.s32 %v200, 24
      %v204 = vadd.s32 %v200, 32
      %v205 = vadd.s32 %v200, 40
      %v206 = vadd.s32 %v200, 48
      %v207 = vadd.s32 %v200, 56
      %v208 = vand.u32 %v200, 7
      %v209 = vand.u32 %v201, 7
      %v210 = vand.u32 %v202, 7
      %v211 = vand.u32 %v203, 7
      %v212 = vand.u32 %v204, 7
      %v213 = vand.u32 %v205, 7
      %v214 = vand.u32 %v206, 7
      %v215 = vand.u32 %v207, 7
      %vm216 = vcmp.eq.s32.totalorder %v208, 0
      %vm217 = vcmp.eq.s32.totalorder %v209, 0
      %vm218 = vcmp.eq.s32.totalorder %v210, 0
      %vm219 = vcmp.eq.s32.totalorder %v211, 0
      %vm220 = vcmp.eq.s32.totalorder %v212, 0
      %vm221 = vcmp.eq.s32.totalorder %v213, 0
      %vm222 = vcmp.eq.s32.totalorder %v214, 0
      %vm223 = vcmp.eq.s32.totalorder %v215, 0
      %vm224 = vcmp.eq.s32.totalorder %v208, 7
      %vm225 = vcmp.eq.s32.totalorder %v209, 7
      %vm226 = vcmp.eq.s32.totalorder %v210, 7
      %vm227 = vcmp.eq.s32.totalorder %v211, 7
      %vm228 = vcmp.eq.s32.totalorder %v212, 7
      %vm229 = vcmp.eq.s32.totalorder %v213, 7
      %vm230 = vcmp.eq.s32.totalorder %v214, 7
      %vm231 = vcmp.eq.s32.totalorder %v215, 7
      %v232 = vld [vmem:[%s192] sm:$0xf]
      %v233 = vld [vmem:[%s192 + $0x4] sm:$0xf]
      %v234 = vld [vmem:[%s192 + $0x8] sm:$0xf]
      %v235 = vld [vmem:[%s192 + $0xc] sm:$0xf]
      %v236 = vld [vmem:[%s192 + $0x10] sm:$0xf]
      %v237 = vld [vmem:[%s192 + $0x14] sm:$0xf]
      %v238 = vld [vmem:[%s192 + $0x18] sm:$0xf]
      %v239 = vld [vmem:[%s192 + $0x1c] sm:$0xf]
      %v240 = vld [vmem:[%s1] sm:$0xf]
      %v241 = vld [vmem:[%s1 + $0x4] sm:$0xf]
      %v242 = vld [vmem:[%s1 + $0x8] sm:$0xf]
      %v243 = vld [vmem:[%s1 + $0xc] sm:$0xf]
      %v252 = vunpack.c.l.b16 %v232
      %v253 = vunpack.c.l.b16 %v233
      %v254 = vunpack.c.l.b16 %v234
      %v255 = vunpack.c.l.b16 %v235
      %v256 = vunpack.c.l.b16 %v236
      %v257 = vunpack.c.l.b16 %v237
      %v258 = vunpack.c.l.b16 %v238
      %v259 = vunpack.c.l.b16 %v239
      %v260 = vpack.c.b16 %v253, %v252
      %v261 = vpack.c.b16 %v255, %v254
      %v262 = vpack.c.b16 %v257, %v256
      %v263 = vpack.c.b16 %v259, %v258
      %v268 = vunpack.c.l.b16 %v240
      %v269 = vunpack.c.l.b16 %v241
      %v270 = vunpack.c.l.b16 %v242
      %v271 = vunpack.c.l.b16 %v243
      %v272 = vpack.c.b16 %v269, %v268
      %v273 = vpack.c.b16 %v271, %v270
      %vm276 = vcmask 261120
      %v278 = vsel %vm276, %v260, 0
      %v281 = vsel %vm276, %v261, 0
      %v284 = vsel %vm276, %v262, 0
      %v287 = vsel %vm276, %v263, 0
      %289 = vmatprep.subr.bf16.mxu0 0
      %290 = vmatpush1.bf16.msra.mxu0 %v272
      %291 = vmatprep.subr.bf16.mxu0 0
      %292 = vmatpush1.bf16.msra.mxu0 %v273
      %293 = vmatprep.subr.bf16.mxu0 0
      %294 = vmatpush1.bf16.msra.mxu0 0
      %295 = vmatprep.subr.bf16.mxu0 0
      %296 = vmatpush1.bf16.msra.mxu0 0
      %297 = vmatprep.subr.bf16.mxu0 0
      %298 = vmatpush1.bf16.msra.mxu0 0
      %299 = vmatprep.subr.bf16.mxu0 0
      %300 = vmatpush1.bf16.msra.mxu0 0
      %301 = vmatprep.subr.bf16.mxu0 0
      %302 = vmatpush1.bf16.msra.mxu0 0
      %303 = vmatprep.subr.bf16.mxu0 0
      %304 = vmatpush1.bf16.msra.mxu0 0
      %305 = vmatprep.subr.bf16.mxu0 0
      %306 = vmatpush1.bf16.msra.mxu0 0
      %307 = vmatprep.subr.bf16.mxu0 0
      %308 = vmatpush1.bf16.msra.mxu0 0
      %309 = vmatprep.subr.bf16.mxu0 0
      %310 = vmatpush1.bf16.msra.mxu0 0
      %311 = vmatprep.subr.bf16.mxu0 0
      %312 = vmatpush1.bf16.msra.mxu0 0
      %313 = vmatprep.subr.bf16.mxu0 0
      %314 = vmatpush1.bf16.msra.mxu0 0
      %315 = vmatprep.subr.bf16.mxu0 0
      %316 = vmatpush1.bf16.msra.mxu0 0
      %317 = vmatprep.subr.bf16.mxu0 0
      %318 = vmatpush1.bf16.msra.mxu0 0
      %319 = vmatprep.subr.bf16.mxu0 0
      %320 = vmatpush1.bf16.msra.mxu0 0
      %321 = vmatprep.mubr.bf16.mxu0 0
      %322 = vmatmul.mubr.bf16.gmra.mrb[0].mxu0 %v278
      %v323 = vpop.f32.mrb[0].mxu0
      %v324 = vadd.f32 0.0, %v323
      %v325 = vpop.f32.mrb[0].mxu0
      %v326 = vpop.f32.mrb[0].mxu0
      %v327 = vadd.f32 0.0, %v326
      %v328 = vpop.f32.mrb[0].mxu0
      %329 = vmatprep.mubr.bf16.mxu0 0
      %330 = vmatmul.mubr.bf16.gmra.mrb[0].mxu0 %v281
      %v331 = vpop.f32.mrb[0].mxu0
      %v332 = vadd.f32 0.0, %v331
      %v333 = vpop.f32.mrb[0].mxu0
      %v334 = vpop.f32.mrb[0].mxu0
      %v335 = vadd.f32 0.0, %v334
      %v336 = vpop.f32.mrb[0].mxu0
      %337 = vmatprep.mubr.bf16.mxu0 0
      %338 = vmatmul.mubr.bf16.gmra.mrb[0].mxu0 %v284
      %v339 = vpop.f32.mrb[0].mxu0
      %v340 = vadd.f32 0.0, %v339
      %v341 = vpop.f32.mrb[0].mxu0
      %v342 = vpop.f32.mrb[0].mxu0
      %v343 = vadd.f32 0.0, %v342
      %v344 = vpop.f32.mrb[0].mxu0
      %345 = vmatprep.mubr.bf16.mxu0 0
      %346 = vmatmul.mubr.bf16.gmra.mrb[0].mxu0 %v287
      %v347 = vpop.f32.mrb[0].mxu0
      %v348 = vadd.f32 0.0, %v347
      %v349 = vpop.f32.mrb[0].mxu0
      %v350 = vpop.f32.mrb[0].mxu0
      %v351 = vadd.f32 0.0, %v350
      %v352 = vpop.f32.mrb[0].mxu0
      %353 = vdwg.mxu0
      %v354 = vsel %vm216, 0.0, %v324
      %v355 = vsel %vm217, 0.0, %v327
      %v356 = vsel %vm218, 0.0, %v332
      %v357 = vsel %vm219, 0.0, %v335
      %v358 = vsel %vm220, 0.0, %v340
      %v359 = vsel %vm221, 0.0, %v343
      %v360 = vsel %vm222, 0.0, %v348
      %v361 = vsel %vm223, 0.0, %v351
      %v362 = vadd.f32 %v354, 0.0
      %v363 = vadd.f32 %v355, 0.0
      %v364 = vadd.f32 %v356, 0.0
      %v365 = vadd.f32 %v357, 0.0
      %v366 = vadd.f32 %v358, 0.0
      %v367 = vadd.f32 %v359, 0.0
      %v368 = vadd.f32 %v360, 0.0
      %v369 = vadd.f32 %v361, 0.0
      %v370 = vld [vmem:[%s192] sm:$0xf]
      %v371 = vld [vmem:[%s192 + $0x4] sm:$0xf]
      %v372 = vld [vmem:[%s192 + $0x8] sm:$0xf]
      %v373 = vld [vmem:[%s192 + $0xc] sm:$0xf]
      %v374 = vld [vmem:[%s192 + $0x10] sm:$0xf]
      %v375 = vld [vmem:[%s192 + $0x14] sm:$0xf]
      %v376 = vld [vmem:[%s192 + $0x18] sm:$0xf]
      %v377 = vld [vmem:[%s192 + $0x1c] sm:$0xf]
      %v378 = vld [vmem:[%s192 + $0x20] sm:$0x1]
      %s379 = scalar_lea.vmem %s1, 16
      %v380 = vld [vmem:[%s379] sm:$0xf]
      %v381 = vld [vmem:[%s379 + $0x4] sm:$0xf]
      %v382 = vld [vmem:[%s379 + $0x8] sm:$0xf]
      %v383 = vld [vmem:[%s379 + $0xc] sm:$0xf]
      %v393 = vunpack.c.l.b16 %v370
      %v394 = vunpack.c.l.b16 %v371
      %v395 = vunpack.c.l.b16 %v372
      %v396 = vunpack.c.l.b16 %v373
      %v397 = vunpack.c.l.b16 %v374
      %v398 = vunpack.c.l.b16 %v375
      %v399 = vunpack.c.l.b16 %v376
      %v400 = vunpack.c.l.b16 %v377
      %v401 = vunpack.c.l.b16 %v378
      %v402 = vpack.c.b16 %v394, %v393
      %v403 = vpack.c.b16 %v396, %v395
      %v404 = vpack.c.b16 %v398, %v397
      %v405 = vpack.c.b16 %v400, %v399
      %v406 = vpack.c.b16 %v401, %v401
      %vm407 = vsmask.f32 7424
      %v409 = vshrl.u32 %v402, 16
      %v411 = vshll.u32 %v402, 16
      %v413 = vrot.slane %v411, 1
      %v414 = vor.u32 %v409, %v413
      %v416 = vshll.u32 %v403, 16
      %v418 = vrot.slane %v416, 1
      %v419 = vsel %vm407, %v414, %v418
      %v420 = vshrl.u32 %v403, 16
      %v422 = vor.u32 %v420, %v418
      %v424 = vshll.u32 %v404, 16
      %v426 = vrot.slane %v424, 1
      %v427 = vsel %vm407, %v422, %v426
      %v428 = vshrl.u32 %v404, 16
      %v430 = vor.u32 %v428, %v426
      %v432 = vshll.u32 %v405, 16
      %v434 = vrot.slane %v432, 1
      %v435 = vsel %vm407, %v430, %v434
      %v436 = vshrl.u32 %v405, 16
      %v438 = vor.u32 %v436, %v434
      %v440 = vshll.u32 %v406, 16
      %v442 = vrot.slane %v440, 1
      %v443 = vsel %vm407, %v438, %v442
      %v448 = vunpack.c.l.b16 %v380
      %v449 = vunpack.c.l.b16 %v381
      %v450 = vunpack.c.l.b16 %v382
      %v451 = vunpack.c.l.b16 %v383
      %v452 = vpack.c.b16 %v449, %v448
      %v453 = vpack.c.b16 %v451, %v450
      %v457 = vsel %vm276, %v419, 0
      %v460 = vsel %vm276, %v427, 0
      %v463 = vsel %vm276, %v435, 0
      %v466 = vsel %vm276, %v443, 0
      %468 = vmatprep.subr.bf16.mxu0 0
      %469 = vmatpush1.bf16.msra.mxu0 %v452
      %470 = vmatprep.subr.bf16.mxu0 0
      %471 = vmatpush1.bf16.msra.mxu0 %v453
      %472 = vmatprep.subr.bf16.mxu0 0
      %473 = vmatpush1.bf16.msra.mxu0 0
      %474 = vmatprep.subr.bf16.mxu0 0
      %475 = vmatpush1.bf16.msra.mxu0 0
      %476 = vmatprep.subr.bf16.mxu0 0
      %477 = vmatpush1.bf16.msra.mxu0 0
      %478 = vmatprep.subr.bf16.mxu0 0
      %479 = vmatpush1.bf16.msra.mxu0 0
      %480 = vmatprep.subr.bf16.mxu0 0
      %481 = vmatpush1.bf16.msra.mxu0 0
      %482 = vmatprep.subr.bf16.mxu0 0
      %483 = vmatpush1.bf16.msra.mxu0 0
      %484 = vmatprep.subr.bf16.mxu0 0
      %485 = vmatpush1.bf16.msra.mxu0 0
      %486 = vmatprep.subr.bf16.mxu0 0
      %487 = vmatpush1.bf16.msra.mxu0 0
      %488 = vmatprep.subr.bf16.mxu0 0
      %489 = vmatpush1.bf16.msra.mxu0 0
      %490 = vmatprep.subr.bf16.mxu0 0
      %491 = vmatpush1.bf16.msra.mxu0 0
      %492 = vmatprep.subr.bf16.mxu0 0
      %493 = vmatpush1.bf16.msra.mxu0 0
      %494 = vmatprep.subr.bf16.mxu0 0
      %495 = vmatpush1.bf16.msra.mxu0 0
      %496 = vmatprep.subr.bf16.mxu0 0
      %497 = vmatpush1.bf16.msra.mxu0 0
      %498 = vmatprep.subr.bf16.mxu0 0
      %499 = vmatpush1.bf16.msra.mxu0 0
      %500 = vmatprep.mubr.bf16.mxu0 0
      %501 = vmatmul.mubr.bf16.gmra.mrb[0].mxu0 %v457
      %v502 = vpop.f32.mrb[0].mxu0
      %v503 = vadd.f32 0.0, %v502
      %v504 = vpop.f32.mrb[0].mxu0
      %v505 = vpop.f32.mrb[0].mxu0
      %v506 = vadd.f32 0.0, %v505
      %v507 = vpop.f32.mrb[0].mxu0
      %508 = vmatprep.mubr.bf16.mxu0 0
      %509 = vmatmul.mubr.bf16.gmra.mrb[0].mxu0 %v460
      %v510 = vpop.f32.mrb[0].mxu0
      %v511 = vadd.f32 0.0, %v510
      %v512 = vpop.f32.mrb[0].mxu0
      %v513 = vpop.f32.mrb[0].mxu0
      %v514 = vadd.f32 0.0, %v513
      %v515 = vpop.f32.mrb[0].mxu0
      %516 = vmatprep.mubr.bf16.mxu0 0
      %517 = vmatmul.mubr.bf16.gmra.mrb[0].mxu0 %v463
      %v518 = vpop.f32.mrb[0].mxu0
      %v519 = vadd.f32 0.0, %v518
      %v520 = vpop.f32.mrb[0].mxu0
      %v521 = vpop.f32.mrb[0].mxu0
      %v522 = vadd.f32 0.0, %v521
      %v523 = vpop.f32.mrb[0].mxu0
      %524 = vmatprep.mubr.bf16.mxu0 0
      %525 = vmatmul.mubr.bf16.gmra.mrb[0].mxu0 %v466
      %v526 = vpop.f32.mrb[0].mxu0
      %v527 = vadd.f32 0.0, %v526
      %v528 = vpop.f32.mrb[0].mxu0
      %v529 = vpop.f32.mrb[0].mxu0
      %v530 = vadd.f32 0.0, %v529
      %v531 = vpop.f32.mrb[0].mxu0
      %532 = vdwg.mxu0
      %v533 = vadd.f32 %v362, %v503
      %v534 = vadd.f32 %v363, %v506
      %v535 = vadd.f32 %v364, %v511
      %v536 = vadd.f32 %v365, %v514
      %v537 = vadd.f32 %v366, %v519
      %v538 = vadd.f32 %v367, %v522
      %v539 = vadd.f32 %v368, %v527
      %v540 = vadd.f32 %v369, %v530
      %v541 = vld [vmem:[%s192] sm:$0xe]
      %s542 = scalar_lea.vmem %s1, 32
      %v543 = vld [vmem:[%s542] sm:$0xf]
      %v544 = vld [vmem:[%s542 + $0x4] sm:$0xf]
      %v545 = vld [vmem:[%s542 + $0x8] sm:$0xf]
      %v546 = vld [vmem:[%s542 + $0xc] sm:$0xf]
      %v548 = vunpack.c.l.b16 %v541
      %v549 = vpack.c.b16 %v394, %v548
      %vm550 = vcmask 1046528
      %v551 = vrot.slane %v549, 1
      %v552 = vrot.slane %v403, 1
      %v553 = vsel %vm550, %v551, %v552
      %v554 = vrot.slane %v404, 1
      %v555 = vsel %vm550, %v552, %v554
      %v556 = vrot.slane %v405, 1
      %v557 = vsel %vm550, %v554, %v556
      %v558 = vrot.slane %v406, 1
      %v559 = vsel %vm550, %v556, %v558
      %v564 = vunpack.c.l.b16 %v543
      %v565 = vunpack.c.l.b16 %v544
      %v566 = vunpack.c.l.b16 %v545
      %v567 = vunpack.c.l.b16 %v546
      %v568 = vpack.c.b16 %v565, %v564
      %v569 = vpack.c.b16 %v567, %v566
      %v573 = vsel %vm276, %v553, 0
      %v576 = vsel %vm276, %v555, 0
      %v579 = vsel %vm276, %v557, 0
      %v582 = vsel %vm276, %v559, 0
      %584 = vmatprep.subr.bf16.mxu0 0
      %585 = vmatpush1.bf16.msra.mxu0 %v568
      %586 = vmatprep.subr.bf16.mxu0 0
      %587 = vmatpush1.bf16.msra.mxu0 %v569
      %588 = vmatprep.subr.bf16.mxu0 0
      %589 = vmatpush1.bf16.msra.mxu0 0
      %590 = vmatprep.subr.bf16.mxu0 0
      %591 = vmatpush1.bf16.msra.mxu0 0
      %592 = vmatprep.subr.bf16.mxu0 0
      %593 = vmatpush1.bf16.msra.mxu0 0
      %594 = vmatprep.subr.bf16.mxu0 0
      %595 = vmatpush1.bf16.msra.mxu0 0
      %596 = vmatprep.subr.bf16.mxu0 0
      %597 = vmatpush1.bf16.msra.mxu0 0
      %598 = vmatprep.subr.bf16.mxu0 0
      %599 = vmatpush1.bf16.msra.mxu0 0
      %600 = vmatprep.subr.bf16.mxu0 0
      %601 = vmatpush1.bf16.msra.mxu0 0
      %602 = vmatprep.subr.bf16.mxu0 0
      %603 = vmatpush1.bf16.msra.mxu0 0
      %604 = vmatprep.subr.bf16.mxu0 0
      %605 = vmatpush1.bf16.msra.mxu0 0
      %606 = vmatprep.subr.bf16.mxu0 0
      %607 = vmatpush1.bf16.msra.mxu0 0
      %608 = vmatprep.subr.bf16.mxu0 0
      %609 = vmatpush1.bf16.msra.mxu0 0
      %610 = vmatprep.subr.bf16.mxu0 0
      %611 = vmatpush1.bf16.msra.mxu0 0
      %612 = vmatprep.subr.bf16.mxu0 0
      %613 = vmatpush1.bf16.msra.mxu0 0
      %614 = vmatprep.subr.bf16.mxu0 0
      %615 = vmatpush1.bf16.msra.mxu0 0
      %616 = vmatprep.mubr.bf16.mxu0 0
      %617 = vmatmul.mubr.bf16.gmra.mrb[0].mxu0 %v573
      %v618 = vpop.f32.mrb[0].mxu0
      %v619 = vadd.f32 0.0, %v618
      %v620 = vpop.f32.mrb[0].mxu0
      %v621 = vpop.f32.mrb[0].mxu0
      %v622 = vadd.f32 0.0, %v621
      %v623 = vpop.f32.mrb[0].mxu0
      %624 = vmatprep.mubr.bf16.mxu0 0
      %625 = vmatmul.mubr.bf16.gmra.mrb[0].mxu0 %v576
      %v626 = vpop.f32.mrb[0].mxu0
      %v627 = vadd.f32 0.0, %v626
      %v628 = vpop.f32.mrb[0].mxu0
      %v629 = vpop.f32.mrb[0].mxu0
      %v630 = vadd.f32 0.0, %v629
      %v631 = vpop.f32.mrb[0].mxu0
      %632 = vmatprep.mubr.bf16.mxu0 0
      %633 = vmatmul.mubr.bf16.gmra.mrb[0].mxu0 %v579
      %v634 = vpop.f32.mrb[0].mxu0
      %v635 = vadd.f32 0.0, %v634
      %v636 = vpop.f32.mrb[0].mxu0
      %v637 = vpop.f32.mrb[0].mxu0
      %v638 = vadd.f32 0.0, %v637
      %v639 = vpop.f32.mrb[0].mxu0
      %640 = vmatprep.mubr.bf16.mxu0 0
      %641 = vmatmul.mubr.bf16.gmra.mrb[0].mxu0 %v582
      %v642 = vpop.f32.mrb[0].mxu0
      %v643 = vadd.f32 0.0, %v642
      %v644 = vpop.f32.mrb[0].mxu0
      %v645 = vpop.f32.mrb[0].mxu0
      %v646 = vadd.f32 0.0, %v645
      %v647 = vpop.f32.mrb[0].mxu0
      %648 = vdwg.mxu0
      %v649 = vsel %vm224, 0.0, %v619
      %v650 = vsel %vm225, 0.0, %v622
      %v651 = vsel %vm226, 0.0, %v627
      %v652 = vsel %vm227, 0.0, %v630
      %v653 = vsel %vm228, 0.0, %v635
      %v654 = vsel %vm229, 0.0, %v638
      %v655 = vsel %vm230, 0.0, %v643
      %v656 = vsel %vm231, 0.0, %v646
      %v657 = vadd.f32 %v533, %v649
      %v658 = vadd.f32 %v534, %v650
      %v659 = vadd.f32 %v535, %v651
      %v660 = vadd.f32 %v536, %v652
      %v661 = vadd.f32 %v537, %v653
      %v662 = vadd.f32 %v538, %v654
      %v663 = vadd.f32 %v539, %v655
      %v664 = vadd.f32 %v540, %v656
      %v665 = vld [vmem:[%s192 + $0x20] sm:$0xf]
      %s666 = scalar_lea.vmem %s1, 48
      %v667 = vld [vmem:[%s666] sm:$0xf]
      %v668 = vld [vmem:[%s666 + $0x4] sm:$0xf]
      %v669 = vld [vmem:[%s666 + $0x8] sm:$0xf]
      %v670 = vld [vmem:[%s666 + $0xc] sm:$0xf]
      %v672 = vunpack.c.l.b16 %v665
      %v673 = vpack.c.b16 %v395, %v394
      %v674 = vpack.c.b16 %v397, %v396
      %v675 = vpack.c.b16 %v399, %v398
      %v676 = vpack.c.b16 %v672, %v400
      %v681 = vunpack.c.l.b16 %v667
      %v682 = vunpack.c.l.b16 %v668
      %v683 = vunpack.c.l.b16 %v669
      %v684 = vunpack.c.l.b16 %v670
      %v685 = vpack.c.b16 %v682, %v681
      %v686 = vpack.c.b16 %v684, %v683
      %v690 = vsel %vm276, %v673, 0
      %v693 = vsel %vm276, %v674, 0
      %v696 = vsel %vm276, %v675, 0
      %v699 = vsel %vm276, %v676, 0
      %701 = vmatprep.subr.bf16.mxu0 0
      %702 = vmatpush1.bf16.msra.mxu0 %v685
      %703 = vmatprep.subr.bf16.mxu0 0
      %704 = vmatpush1.bf16.msra.mxu0 %v686
      %705 = vmatprep.subr.bf16.mxu0 0
      %706 = vmatpush1.bf16.msra.mxu0 0
      %707 = vmatprep.subr.bf16.mxu0 0
      %708 = vmatpush1.bf16.msra.mxu0 0
      %709 = vmatprep.subr.bf16.mxu0 0
      %710 = vmatpush1.bf16.msra.mxu0 0
      %711 = vmatprep.subr.bf16.mxu0 0
      %712 = vmatpush1.bf16.msra.mxu0 0
      %713 = vmatprep.subr.bf16.mxu0 0
      %714 = vmatpush1.bf16.msra.mxu0 0
      %715 = vmatprep.subr.bf16.mxu0 0
      %716 = vmatpush1.bf16.msra.mxu0 0
      %717 = vmatprep.subr.bf16.mxu0 0
      %718 = vmatpush1.bf16.msra.mxu0 0
      %719 = vmatprep.subr.bf16.mxu0 0
      %720 = vmatpush1.bf16.msra.mxu0 0
      %721 = vmatprep.subr.bf16.mxu0 0
      %722 = vmatpush1.bf16.msra.mxu0 0
      %723 = vmatprep.subr.bf16.mxu0 0
      %724 = vmatpush1.bf16.msra.mxu0 0
      %725 = vmatprep.subr.bf16.mxu0 0
      %726 = vmatpush1.bf16.msra.mxu0 0
      %727 = vmatprep.subr.bf16.mxu0 0
      %728 = vmatpush1.bf16.msra.mxu0 0
      %729 = vmatprep.subr.bf16.mxu0 0
      %730 = vmatpush1.bf16.msra.mxu0 0
      %731 = vmatprep.subr.bf16.mxu0 0
      %732 = vmatpush1.bf16.msra.mxu0 0
      %733 = vmatprep.mubr.bf16.mxu0 0
      %734 = vmatmul.mubr.bf16.gmra.mrb[0].mxu0 %v690
      %v735 = vpop.f32.mrb[0].mxu0
      %v736 = vadd.f32 0.0, %v735
      %v737 = vpop.f32.mrb[0].mxu0
      %v738 = vpop.f32.mrb[0].mxu0
      %v739 = vadd.f32 0.0, %v738
      %v740 = vpop.f32.mrb[0].mxu0
      %741 = vmatprep.mubr.bf16.mxu0 0
      %742 = vmatmul.mubr.bf16.gmra.mrb[0].mxu0 %v693
      %v743 = vpop.f32.mrb[0].mxu0
      %v744 = vadd.f32 0.0, %v743
      %v745 = vpop.f32.mrb[0].mxu0
      %v746 = vpop.f32.mrb[0].mxu0
      %v747 = vadd.f32 0.0, %v746
      %v748 = vpop.f32.mrb[0].mxu0
      %749 = vmatprep.mubr.bf16.mxu0 0
      %750 = vmatmul.mubr.bf16.gmra.mrb[0].mxu0 %v696
      %v751 = vpop.f32.mrb[0].mxu0
      %v752 = vadd.f32 0.0, %v751
      %v753 = vpop.f32.mrb[0].mxu0
      %v754 = vpop.f32.mrb[0].mxu0
      %v755 = vadd.f32 0.0, %v754
      %v756 = vpop.f32.mrb[0].mxu0
      %757 = vmatprep.mubr.bf16.mxu0 0
      %758 = vmatmul.mubr.bf16.gmra.mrb[0].mxu0 %v699
      %v759 = vpop.f32.mrb[0].mxu0
      %v760 = vadd.f32 0.0, %v759
      %v761 = vpop.f32.mrb[0].mxu0
      %v762 = vpop.f32.mrb[0].mxu0
      %v763 = vadd.f32 0.0, %v762
      %v764 = vpop.f32.mrb[0].mxu0
      %765 = vdwg.mxu0
      %v766 = vsel %vm216, 0.0, %v736
      %v767 = vsel %vm217, 0.0, %v739
      %v768 = vsel %vm218, 0.0, %v744
      %v769 = vsel %vm219, 0.0, %v747
      %v770 = vsel %vm220, 0.0, %v752
      %v771 = vsel %vm221, 0.0, %v755
      %v772 = vsel %vm222, 0.0, %v760
      %v773 = vsel %vm223, 0.0, %v763
      %v774 = vadd.f32 %v657, %v766
      %v775 = vadd.f32 %v658, %v767
      %v776 = vadd.f32 %v659, %v768
      %v777 = vadd.f32 %v660, %v769
      %v778 = vadd.f32 %v661, %v770
      %v779 = vadd.f32 %v662, %v771
      %v780 = vadd.f32 %v663, %v772
      %v781 = vadd.f32 %v664, %v773
      %v782 = vld [vmem:[%s192 + $0x4] sm:$0xf]
      %v783 = vld [vmem:[%s192 + $0x8] sm:$0xf]
      %v784 = vld [vmem:[%s192 + $0xc] sm:$0xf]
      %v785 = vld [vmem:[%s192 + $0x10] sm:$0xf]
      %v786 = vld [vmem:[%s192 + $0x14] sm:$0xf]
      %v787 = vld [vmem:[%s192 + $0x18] sm:$0xf]
      %v788 = vld [vmem:[%s192 + $0x1c] sm:$0xf]
      %v789 = vld [vmem:[%s192 + $0x20] sm:$0xf]
      %v790 = vld [vmem:[%s192 + $0x24] sm:$0x1]
      %s791 = scalar_lea.vmem %s1, 64
      %v792 = vld [vmem:[%s791] sm:$0xf]
      %v793 = vld [vmem:[%s791 + $0x4] sm:$0xf]
      %v794 = vld [vmem:[%s791 + $0x8] sm:$0xf]
      %v795 = vld [vmem:[%s791 + $0xc] sm:$0xf]
      %v805 = vunpack.c.l.b16 %v782
      %v806 = vunpack.c.l.b16 %v783
      %v807 = vunpack.c.l.b16 %v784
      %v808 = vunpack.c.l.b16 %v785
      %v809 = vunpack.c.l.b16 %v786
      %v810 = vunpack.c.l.b16 %v787
      %v811 = vunpack.c.l.b16 %v788
      %v812 = vunpack.c.l.b16 %v789
      %v813 = vunpack.c.l.b16 %v790
      %v814 = vpack.c.b16 %v806, %v805
      %v815 = vpack.c.b16 %v808, %v807
      %v816 = vpack.c.b16 %v810, %v809
      %v817 = vpack.c.b16 %v812, %v811
      %v818 = vpack.c.b16 %v813, %v813
      %v820 = vshrl.u32 %v814, 16
      %v822 = vshll.u32 %v814, 16
      %v824 = vrot.slane %v822, 1
      %v825 = vor.u32 %v820, %v824
      %v827 = vshll.u32 %v815, 16
      %v829 = vrot.slane %v827, 1
      %v830 = vsel %vm407, %v825, %v829
      %v831 = vshrl.u32 %v815, 16
      %v833 = vor.u32 %v831, %v829
      %v835 = vshll.u32 %v816, 16
      %v837 = vrot.slane %v835, 1
      %v838 = vsel %vm407, %v833, %v837
      %v839 = vshrl.u32 %v816, 16
      %v841 = vor.u32 %v839, %v837
      %v843 = vshll.u32 %v817, 16
      %v845 = vrot.slane %v843, 1
      %v846 = vsel %vm407, %v841, %v845
      %v847 = vshrl.u32 %v817, 16
      %v849 = vor.u32 %v847, %v845
      %v851 = vshll.u32 %v818, 16
      %v853 = vrot.slane %v851, 1
      %v854 = vsel %vm407, %v849, %v853
      %v859 = vunpack.c.l.b16 %v792
      %v860 = vunpack.c.l.b16 %v793
      %v861 = vunpack.c.l.b16 %v794
      %v862 = vunpack.c.l.b16 %v795
      %v863 = vpack.c.b16 %v860, %v859
      %v864 = vpack.c.b16 %v862, %v861
      %v868 = vsel %vm276, %v830, 0
      %v871 = vsel %vm276, %v838, 0
      %v874 = vsel %vm276, %v846, 0
      %v877 = vsel %vm276, %v854, 0
      %879 = vmatprep.subr.bf16.mxu0 0
      %880 = vmatpush1.bf16.msra.mxu0 %v863
      %881 = vmatprep.subr.bf16.mxu0 0
      %882 = vmatpush1.bf16.msra.mxu0 %v864
      %883 = vmatprep.subr.bf16.mxu0 0
      %884 = vmatpush1.bf16.msra.mxu0 0
      %885 = vmatprep.subr.bf16.mxu0 0
      %886 = vmatpush1.bf16.msra.mxu0 0
      %887 = vmatprep.subr.bf16.mxu0 0
      %888 = vmatpush1.bf16.msra.mxu0 0
      %889 = vmatprep.subr.bf16.mxu0 0
      %890 = vmatpush1.bf16.msra.mxu0 0
      %891 = vmatprep.subr.bf16.mxu0 0
      %892 = vmatpush1.bf16.msra.mxu0 0
      %893 = vmatprep.subr.bf16.mxu0 0
      %894 = vmatpush1.bf16.msra.mxu0 0
      %895 = vmatprep.subr.bf16.mxu0 0
      %896 = vmatpush1.bf16.msra.mxu0 0
      %897 = vmatprep.subr.bf16.mxu0 0
      %898 = vmatpush1.bf16.msra.mxu0 0
      %899 = vmatprep.subr.bf16.mxu0 0
      %900 = vmatpush1.bf16.msra.mxu0 0
      %901 = vmatprep.subr.bf16.mxu0 0
      %902 = vmatpush1.bf16.msra.mxu0 0
      %903 = vmatprep.subr.bf16.mxu0 0
      %904 = vmatpush1.bf16.msra.mxu0 0
      %905 = vmatprep.subr.bf16.mxu0 0
      %906 = vmatpush1.bf16.msra.mxu0 0
      %907 = vmatprep.subr.bf16.mxu0 0
      %908 = vmatpush1.bf16.msra.mxu0 0
      %909 = vmatprep.subr.bf16.mxu0 0
      %910 = vmatpush1.bf16.msra.mxu0 0
      %911 = vmatprep.mubr.bf16.mxu0 0
      %912 = vmatmul.mubr.bf16.gmra.mrb[0].mxu0 %v868
      %v913 = vpop.f32.mrb[0].mxu0
      %v914 = vadd.f32 0.0, %v913
      %v915 = vpop.f32.mrb[0].mxu0
      %v916 = vpop.f32.mrb[0].mxu0
      %v917 = vadd.f32 0.0, %v916
      %v918 = vpop.f32.mrb[0].mxu0
      %919 = vmatprep.mubr.bf16.mxu0 0
      %920 = vmatmul.mubr.bf16.gmra.mrb[0].mxu0 %v871
      %v921 = vpop.f32.mrb[0].mxu0
      %v922 = vadd.f32 0.0, %v921
      %v923 = vpop.f32.mrb[0].mxu0
      %v924 = vpop.f32.mrb[0].mxu0
      %v925 = vadd.f32 0.0, %v924
      %v926 = vpop.f32.mrb[0].mxu0
      %927 = vmatprep.mubr.bf16.mxu0 0
      %928 = vmatmul.mubr.bf16.gmra.mrb[0].mxu0 %v874
      %v929 = vpop.f32.mrb[0].mxu0
      %v930 = vadd.f32 0.0, %v929
      %v931 = vpop.f32.mrb[0].mxu0
      %v932 = vpop.f32.mrb[0].mxu0
      %v933 = vadd.f32 0.0, %v932
      %v934 = vpop.f32.mrb[0].mxu0
      %935 = vmatprep.mubr.bf16.mxu0 0
      %936 = vmatmul.mubr.bf16.gmra.mrb[0].mxu0 %v877
      %v937 = vpop.f32.mrb[0].mxu0
      %v938 = vadd.f32 0.0, %v937
      %v939 = vpop.f32.mrb[0].mxu0
      %v940 = vpop.f32.mrb[0].mxu0
      %v941 = vadd.f32 0.0, %v940
      %v942 = vpop.f32.mrb[0].mxu0
      %943 = vdwg.mxu0
      %v944 = vadd.f32 %v774, %v914
      %v945 = vadd.f32 %v775, %v917
      %v946 = vadd.f32 %v776, %v922
      %v947 = vadd.f32 %v777, %v925
      %v948 = vadd.f32 %v778, %v930
      %v949 = vadd.f32 %v779, %v933
      %v950 = vadd.f32 %v780, %v938
      %v951 = vadd.f32 %v781, %v941
      %v952 = vld [vmem:[%s192 + $0x4] sm:$0xe]
      %s953 = scalar_lea.vmem %s1, 80
      %v954 = vld [vmem:[%s953] sm:$0xf]
      %v955 = vld [vmem:[%s953 + $0x4] sm:$0xf]
      %v956 = vld [vmem:[%s953 + $0x8] sm:$0xf]
      %v957 = vld [vmem:[%s953 + $0xc] sm:$0xf]
      %v959 = vunpack.c.l.b16 %v952
      %v960 = vpack.c.b16 %v806, %v959
      %v961 = vrot.slane %v960, 1
      %v962 = vrot.slane %v815, 1
      %v963 = vsel %vm550, %v961, %v962
      %v964 = vrot.slane %v816, 1
      %v965 = vsel %vm550, %v962, %v964
      %v966 = vrot.slane %v817, 1
      %v967 = vsel %vm550, %v964, %v966
      %v968 = vrot.slane %v818, 1
      %v969 = vsel %vm550, %v966, %v968
      %v974 = vunpack.c.l.b16 %v954
      %v975 = vunpack.c.l.b16 %v955
      %v976 = vunpack.c.l.b16 %v956
      %v977 = vunpack.c.l.b16 %v957
      %v978 = vpack.c.b16 %v975, %v974
      %v979 = vpack.c.b16 %v977, %v976
      %v983 = vsel %vm276, %v963, 0
      %v986 = vsel %vm276, %v965, 0
      %v989 = vsel %vm276, %v967, 0
      %v992 = vsel %vm276, %v969, 0
      %994 = vmatprep.subr.bf16.mxu0 0
      %995 = vmatpush1.bf16.msra.mxu0 %v978
      %996 = vmatprep.subr.bf16.mxu0 0
      %997 = vmatpush1.bf16.msra.mxu0 %v979
      %998 = vmatprep.subr.bf16.mxu0 0
      %999 = vmatpush1.bf16.msra.mxu0 0
      %1000 = vmatprep.subr.bf16.mxu0 0
      %1001 = vmatpush1.bf16.msra.mxu0 0
      %1002 = vmatprep.subr.bf16.mxu0 0
      %1003 = vmatpush1.bf16.msra.mxu0 0
      %1004 = vmatprep.subr.bf16.mxu0 0
      %1005 = vmatpush1.bf16.msra.mxu0 0
      %1006 = vmatprep.subr.bf16.mxu0 0
      %1007 = vmatpush1.bf16.msra.mxu0 0
      %1008 = vmatprep.subr.bf16.mxu0 0
      %1009 = vmatpush1.bf16.msra.mxu0 0
      %1010 = vmatprep.subr.bf16.mxu0 0
      %1011 = vmatpush1.bf16.msra.mxu0 0
      %1012 = vmatprep.subr.bf16.mxu0 0
      %1013 = vmatpush1.bf16.msra.mxu0 0
      %1014 = vmatprep.subr.bf16.mxu0 0
      %1015 = vmatpush1.bf16.msra.mxu0 0
      %1016 = vmatprep.subr.bf16.mxu0 0
      %1017 = vmatpush1.bf16.msra.mxu0 0
      %1018 = vmatprep.subr.bf16.mxu0 0
      %1019 = vmatpush1.bf16.msra.mxu0 0
      %1020 = vmatprep.subr.bf16.mxu0 0
      %1021 = vmatpush1.bf16.msra.mxu0 0
      %1022 = vmatprep.subr.bf16.mxu0 0
      %1023 = vmatpush1.bf16.msra.mxu0 0
      %1024 = vmatprep.subr.bf16.mxu0 0
      %1025 = vmatpush1.bf16.msra.mxu0 0
      %1026 = vmatprep.mubr.bf16.mxu0 0
      %1027 = vmatmul.mubr.bf16.gmra.mrb[0].mxu0 %v983
      %v1028 = vpop.f32.mrb[0].mxu0
      %v1029 = vadd.f32 0.0, %v1028
      %v1030 = vpop.f32.mrb[0].mxu0
      %v1031 = vpop.f32.mrb[0].mxu0
      %v1032 = vadd.f32 0.0, %v1031
      %v1033 = vpop.f32.mrb[0].mxu0
      %1034 = vmatprep.mubr.bf16.mxu0 0
      %1035 = vmatmul.mubr.bf16.gmra.mrb[0].mxu0 %v986
      %v1036 = vpop.f32.mrb[0].mxu0
      %v1037 = vadd.f32 0.0, %v1036
      %v1038 = vpop.f32.mrb[0].mxu0
      %v1039 = vpop.f32.mrb[0].mxu0
      %v1040 = vadd.f32 0.0, %v1039
      %v1041 = vpop.f32.mrb[0].mxu0
      %1042 = vmatprep.mubr.bf16.mxu0 0
      %1043 = vmatmul.mubr.bf16.gmra.mrb[0].mxu0 %v989
      %v1044 = vpop.f32.mrb[0].mxu0
      %v1045 = vadd.f32 0.0, %v1044
      %v1046 = vpop.f32.mrb[0].mxu0
      %v1047 = vpop.f32.mrb[0].mxu0
      %v1048 = vadd.f32 0.0, %v1047
      %v1049 = vpop.f32.mrb[0].mxu0
      %1050 = vmatprep.mubr.bf16.mxu0 0
      %1051 = vmatmul.mubr.bf16.gmra.mrb[0].mxu0 %v992
      %v1052 = vpop.f32.mrb[0].mxu0
      %v1053 = vadd.f32 0.0, %v1052
      %v1054 = vpop.f32.mrb[0].mxu0
      %v1055 = vpop.f32.mrb[0].mxu0
      %v1056 = vadd.f32 0.0, %v1055
      %v1057 = vpop.f32.mrb[0].mxu0
      %1058 = vdwg.mxu0
      %v1059 = vsel %vm224, 0.0, %v1029
      %v1060 = vsel %vm225, 0.0, %v1032
      %v1061 = vsel %vm226, 0.0, %v1037
      %v1062 = vsel %vm227, 0.0, %v1040
      %v1063 = vsel %vm228, 0.0, %v1045
      %v1064 = vsel %vm229, 0.0, %v1048
      %v1065 = vsel %vm230, 0.0, %v1053
      %v1066 = vsel %vm231, 0.0, %v1056
      %v1067 = vadd.f32 %v944, %v1059
      %v1068 = vadd.f32 %v945, %v1060
      %v1069 = vadd.f32 %v946, %v1061
      %v1070 = vadd.f32 %v947, %v1062
      %v1071 = vadd.f32 %v948, %v1063
      %v1072 = vadd.f32 %v949, %v1064
      %v1073 = vadd.f32 %v950, %v1065
      %v1074 = vadd.f32 %v951, %v1066
      %v1075 = vld [vmem:[%s192 + $0x24] sm:$0xf]
      %s1076 = scalar_lea.vmem %s1, 96
      %v1077 = vld [vmem:[%s1076] sm:$0xf]
      %v1078 = vld [vmem:[%s1076 + $0x4] sm:$0xf]
      %v1079 = vld [vmem:[%s1076 + $0x8] sm:$0xf]
      %v1080 = vld [vmem:[%s1076 + $0xc] sm:$0xf]
      %v1082 = vunpack.c.l.b16 %v1075
      %v1083 = vpack.c.b16 %v807, %v806
      %v1084 = vpack.c.b16 %v809, %v808
      %v1085 = vpack.c.b16 %v811, %v810
      %v1086 = vpack.c.b16 %v1082, %v812
      %v1091 = vunpack.c.l.b16 %v1077
      %v1092 = vunpack.c.l.b16 %v1078
      %v1093 = vunpack.c.l.b16 %v1079
      %v1094 = vunpack.c.l.b16 %v1080
      %v1095 = vpack.c.b16 %v1092, %v1091
      %v1096 = vpack.c.b16 %v1094, %v1093
      %v1100 = vsel %vm276, %v1083, 0
      %v1103 = vsel %vm276, %v1084, 0
      %v1106 = vsel %vm276, %v1085, 0
      %v1109 = vsel %vm276, %v1086, 0
      %1111 = vmatprep.subr.bf16.mxu0 0
      %1112 = vmatpush1.bf16.msra.mxu0 %v1095
      %1113 = vmatprep.subr.bf16.mxu0 0
      %1114 = vmatpush1.bf16.msra.mxu0 %v1096
      %1115 = vmatprep.subr.bf16.mxu0 0
      %1116 = vmatpush1.bf16.msra.mxu0 0
      %1117 = vmatprep.subr.bf16.mxu0 0
      %1118 = vmatpush1.bf16.msra.mxu0 0
      %1119 = vmatprep.subr.bf16.mxu0 0
      %1120 = vmatpush1.bf16.msra.mxu0 0
      %1121 = vmatprep.subr.bf16.mxu0 0
      %1122 = vmatpush1.bf16.msra.mxu0 0
      %1123 = vmatprep.subr.bf16.mxu0 0
      %1124 = vmatpush1.bf16.msra.mxu0 0
      %1125 = vmatprep.subr.bf16.mxu0 0
      %1126 = vmatpush1.bf16.msra.mxu0 0
      %1127 = vmatprep.subr.bf16.mxu0 0
      %1128 = vmatpush1.bf16.msra.mxu0 0
      %1129 = vmatprep.subr.bf16.mxu0 0
      %1130 = vmatpush1.bf16.msra.mxu0 0
      %1131 = vmatprep.subr.bf16.mxu0 0
      %1132 = vmatpush1.bf16.msra.mxu0 0
      %1133 = vmatprep.subr.bf16.mxu0 0
      %1134 = vmatpush1.bf16.msra.mxu0 0
      %1135 = vmatprep.subr.bf16.mxu0 0
      %1136 = vmatpush1.bf16.msra.mxu0 0
      %1137 = vmatprep.subr.bf16.mxu0 0
      %1138 = vmatpush1.bf16.msra.mxu0 0
      %1139 = vmatprep.subr.bf16.mxu0 0
      %1140 = vmatpush1.bf16.msra.mxu0 0
      %1141 = vmatprep.subr.bf16.mxu0 0
      %1142 = vmatpush1.bf16.msra.mxu0 0
      %1143 = vmatprep.mubr.bf16.mxu0 0
      %1144 = vmatmul.mubr.bf16.gmra.mrb[0].mxu0 %v1100
      %v1145 = vpop.f32.mrb[0].mxu0
      %v1146 = vadd.f32 0.0, %v1145
      %v1147 = vpop.f32.mrb[0].mxu0
      %v1148 = vpop.f32.mrb[0].mxu0
      %v1149 = vadd.f32 0.0, %v1148
      %v1150 = vpop.f32.mrb[0].mxu0
      %1151 = vmatprep.mubr.bf16.mxu0 0
      %1152 = vmatmul.mubr.bf16.gmra.mrb[0].mxu0 %v1103
      %v1153 = vpop.f32.mrb[0].mxu0
      %v1154 = vadd.f32 0.0, %v1153
      %v1155 = vpop.f32.mrb[0].mxu0
      %v1156 = vpop.f32.mrb[0].mxu0
      %v1157 = vadd.f32 0.0, %v1156
      %v1158 = vpop.f32.mrb[0].mxu0
      %1159 = vmatprep.mubr.bf16.mxu0 0
      %1160 = vmatmul.mubr.bf16.gmra.mrb[0].mxu0 %v1106
      %v1161 = vpop.f32.mrb[0].mxu0
      %v1162 = vadd.f32 0.0, %v1161
      %v1163 = vpop.f32.mrb[0].mxu0
      %v1164 = vpop.f32.mrb[0].mxu0
      %v1165 = vadd.f32 0.0, %v1164
      %v1166 = vpop.f32.mrb[0].mxu0
      %1167 = vmatprep.mubr.bf16.mxu0 0
      %1168 = vmatmul.mubr.bf16.gmra.mrb[0].mxu0 %v1109
      %v1169 = vpop.f32.mrb[0].mxu0
      %v1170 = vadd.f32 0.0, %v1169
      %v1171 = vpop.f32.mrb[0].mxu0
      %v1172 = vpop.f32.mrb[0].mxu0
      %v1173 = vadd.f32 0.0, %v1172
      %v1174 = vpop.f32.mrb[0].mxu0
      %1175 = vdwg.mxu0
      %v1176 = vsel %vm216, 0.0, %v1146
      %v1177 = vsel %vm217, 0.0, %v1149
      %v1178 = vsel %vm218, 0.0, %v1154
      %v1179 = vsel %vm219, 0.0, %v1157
      %v1180 = vsel %vm220, 0.0, %v1162
      %v1181 = vsel %vm221, 0.0, %v1165
      %v1182 = vsel %vm222, 0.0, %v1170
      %v1183 = vsel %vm223, 0.0, %v1173
      %v1184 = vadd.f32 %v1067, %v1176
      %v1185 = vadd.f32 %v1068, %v1177
      %v1186 = vadd.f32 %v1069, %v1178
      %v1187 = vadd.f32 %v1070, %v1179
      %v1188 = vadd.f32 %v1071, %v1180
      %v1189 = vadd.f32 %v1072, %v1181
      %v1190 = vadd.f32 %v1073, %v1182
      %v1191 = vadd.f32 %v1074, %v1183
      %v1192 = vld [vmem:[%s192 + $0x8] sm:$0xf]
      %v1193 = vld [vmem:[%s192 + $0xc] sm:$0xf]
      %v1194 = vld [vmem:[%s192 + $0x10] sm:$0xf]
      %v1195 = vld [vmem:[%s192 + $0x14] sm:$0xf]
      %v1196 = vld [vmem:[%s192 + $0x18] sm:$0xf]
      %v1197 = vld [vmem:[%s192 + $0x1c] sm:$0xf]
      %v1198 = vld [vmem:[%s192 + $0x20] sm:$0xf]
      %v1199 = vld [vmem:[%s192 + $0x24] sm:$0xf]
      %v1200 = vld [vmem:[%s192 + $0x28] sm:$0x1]
      %s1201 = scalar_lea.vmem %s1, 112
      %v1202 = vld [vmem:[%s1201] sm:$0xf]
      %v1203 = vld [vmem:[%s1201 + $0x4] sm:$0xf]
      %v1204 = vld [vmem:[%s1201 + $0x8] sm:$0xf]
      %v1205 = vld [vmem:[%s1201 + $0xc] sm:$0xf]
      %v1215 = vunpack.c.l.b16 %v1192
      %v1216 = vunpack.c.l.b16 %v1193
      %v1217 = vunpack.c.l.b16 %v1194
      %v1218 = vunpack.c.l.b16 %v1195
      %v1219 = vunpack.c.l.b16 %v1196
      %v1220 = vunpack.c.l.b16 %v1197
      %v1221 = vunpack.c.l.b16 %v1198
      %v1222 = vunpack.c.l.b16 %v1199
      %v1223 = vunpack.c.l.b16 %v1200
      %v1224 = vpack.c.b16 %v1216, %v1215
      %v1225 = vpack.c.b16 %v1218, %v1217
      %v1226 = vpack.c.b16 %v1220, %v1219
      %v1227 = vpack.c.b16 %v1222, %v1221
      %v1228 = vpack.c.b16 %v1223, %v1223
      %v1230 = vshrl.u32 %v1224, 16
      %v1232 = vshll.u32 %v1224, 16
      %v1234 = vrot.slane %v1232, 1
      %v1235 = vor.u32 %v1230, %v1234
      %v1237 = vshll.u32 %v1225, 16
      %v1239 = vrot.slane %v1237, 1
      %v1240 = vsel %vm407, %v1235, %v1239
      %v1241 = vshrl.u32 %v1225, 16
      %v1243 = vor.u32 %v1241, %v1239
      %v1245 = vshll.u32 %v1226, 16
      %v1247 = vrot.slane %v1245, 1
      %v1248 = vsel %vm407, %v1243, %v1247
      %v1249 = vshrl.u32 %v1226, 16
      %v1251 = vor.u32 %v1249, %v1247
      %v1253 = vshll.u32 %v1227, 16
      %v1255 = vrot.slane %v1253, 1
      %v1256 = vsel %vm407, %v1251, %v1255
      %v1257 = vshrl.u32 %v1227, 16
      %v1259 = vor.u32 %v1257, %v1255
      %v1261 = vshll.u32 %v1228, 16
      %v1263 = vrot.slane %v1261, 1
      %v1264 = vsel %vm407, %v1259, %v1263
      %v1269 = vunpack.c.l.b16 %v1202
      %v1270 = vunpack.c.l.b16 %v1203
      %v1271 = vunpack.c.l.b16 %v1204
      %v1272 = vunpack.c.l.b16 %v1205
      %v1273 = vpack.c.b16 %v1270, %v1269
      %v1274 = vpack.c.b16 %v1272, %v1271
      %v1278 = vsel %vm276, %v1240, 0
      %v1281 = vsel %vm276, %v1248, 0
      %v1284 = vsel %vm276, %v1256, 0
      %v1287 = vsel %vm276, %v1264, 0
      %1289 = vmatprep.subr.bf16.mxu0 0
      %1290 = vmatpush1.bf16.msra.mxu0 %v1273
      %1291 = vmatprep.subr.bf16.mxu0 0
      %1292 = vmatpush1.bf16.msra.mxu0 %v1274
      %1293 = vmatprep.subr.bf16.mxu0 0
      %1294 = vmatpush1.bf16.msra.mxu0 0
      %1295 = vmatprep.subr.bf16.mxu0 0
      %1296 = vmatpush1.bf16.msra.mxu0 0
      %1297 = vmatprep.subr.bf16.mxu0 0
      %1298 = vmatpush1.bf16.msra.mxu0 0
      %1299 = vmatprep.subr.bf16.mxu0 0
      %1300 = vmatpush1.bf16.msra.mxu0 0
      %1301 = vmatprep.subr.bf16.mxu0 0
      %1302 = vmatpush1.bf16.msra.mxu0 0
      %1303 = vmatprep.subr.bf16.mxu0 0
      %1304 = vmatpush1.bf16.msra.mxu0 0
      %1305 = vmatprep.subr.bf16.mxu0 0
      %1306 = vmatpush1.bf16.msra.mxu0 0
      %1307 = vmatprep.subr.bf16.mxu0 0
      %1308 = vmatpush1.bf16.msra.mxu0 0
      %1309 = vmatprep.subr.bf16.mxu0 0
      %1310 = vmatpush1.bf16.msra.mxu0 0
      %1311 = vmatprep.subr.bf16.mxu0 0
      %1312 = vmatpush1.bf16.msra.mxu0 0
      %1313 = vmatprep.subr.bf16.mxu0 0
      %1314 = vmatpush1.bf16.msra.mxu0 0
      %1315 = vmatprep.subr.bf16.mxu0 0
      %1316 = vmatpush1.bf16.msra.mxu0 0
      %1317 = vmatprep.subr.bf16.mxu0 0
      %1318 = vmatpush1.bf16.msra.mxu0 0
      %1319 = vmatprep.subr.bf16.mxu0 0
      %1320 = vmatpush1.bf16.msra.mxu0 0
      %1321 = vmatprep.mubr.bf16.mxu0 0
      %1322 = vmatmul.mubr.bf16.gmra.mrb[0].mxu0 %v1278
      %v1323 = vpop.f32.mrb[0].mxu0
      %v1324 = vadd.f32 0.0, %v1323
      %v1325 = vpop.f32.mrb[0].mxu0
      %v1326 = vpop.f32.mrb[0].mxu0
      %v1327 = vadd.f32 0.0, %v1326
      %v1328 = vpop.f32.mrb[0].mxu0
      %1329 = vmatprep.mubr.bf16.mxu0 0
      %1330 = vmatmul.mubr.bf16.gmra.mrb[0].mxu0 %v1281
      %v1331 = vpop.f32.mrb[0].mxu0
      %v1332 = vadd.f32 0.0, %v1331
      %v1333 = vpop.f32.mrb[0].mxu0
      %v1334 = vpop.f32.mrb[0].mxu0
      %v1335 = vadd.f32 0.0, %v1334
      %v1336 = vpop.f32.mrb[0].mxu0
      %1337 = vmatprep.mubr.bf16.mxu0 0
      %1338 = vmatmul.mubr.bf16.gmra.mrb[0].mxu0 %v1284
      %v1339 = vpop.f32.mrb[0].mxu0
      %v1340 = vadd.f32 0.0, %v1339
      %v1341 = vpop.f32.mrb[0].mxu0
      %v1342 = vpop.f32.mrb[0].mxu0
      %v1343 = vadd.f32 0.0, %v1342
      %v1344 = vpop.f32.mrb[0].mxu0
      %1345 = vmatprep.mubr.bf16.mxu0 0
      %1346 = vmatmul.mubr.bf16.gmra.mrb[0].mxu0 %v1287
      %v1347 = vpop.f32.mrb[0].mxu0
      %v1348 = vadd.f32 0.0, %v1347
      %v1349 = vpop.f32.mrb[0].mxu0
      %v1350 = vpop.f32.mrb[0].mxu0
      %v1351 = vadd.f32 0.0, %v1350
      %v1352 = vpop.f32.mrb[0].mxu0
      %1353 = vdwg.mxu0
      %v1354 = vadd.f32 %v1184, %v1324
      %v1355 = vadd.f32 %v1185, %v1327
      %v1356 = vadd.f32 %v1186, %v1332
      %v1357 = vadd.f32 %v1187, %v1335
      %v1358 = vadd.f32 %v1188, %v1340
      %v1359 = vadd.f32 %v1189, %v1343
      %v1360 = vadd.f32 %v1190, %v1348
      %v1361 = vadd.f32 %v1191, %v1351
      %v1362 = vld [vmem:[%s192 + $0x8] sm:$0xe]
      %s1363 = scalar_lea.vmem %s1, 128
      %v1364 = vld [vmem:[%s1363] sm:$0xf]
      %v1365 = vld [vmem:[%s1363 + $0x4] sm:$0xf]
      %v1366 = vld [vmem:[%s1363 + $0x8] sm:$0xf]
      %v1367 = vld [vmem:[%s1363 + $0xc] sm:$0xf]
      %v1369 = vunpack.c.l.b16 %v1362
      %v1370 = vpack.c.b16 %v1216, %v1369
      %v1371 = vrot.slane %v1370, 1
      %v1372 = vrot.slane %v1225, 1
      %v1373 = vsel %vm550, %v1371, %v1372
      %v1374 = vrot.slane %v1226, 1
      %v1375 = vsel %vm550, %v1372, %v1374
      %v1376 = vrot.slane %v1227, 1
      %v1377 = vsel %vm550, %v1374, %v1376
      %v1378 = vrot.slane %v1228, 1
      %v1379 = vsel %vm550, %v1376, %v1378
      %v1384 = vunpack.c.l.b16 %v1364
      %v1385 = vunpack.c.l.b16 %v1365
      %v1386 = vunpack.c.l.b16 %v1366
      %v1387 = vunpack.c.l.b16 %v1367
      %v1388 = vpack.c.b16 %v1385, %v1384
      %v1389 = vpack.c.b16 %v1387, %v1386
      %v1393 = vsel %vm276, %v1373, 0
      %v1396 = vsel %vm276, %v1375, 0
      %v1399 = vsel %vm276, %v1377, 0
      %v1402 = vsel %vm276, %v1379, 0
      %1404 = vmatprep.subr.bf16.mxu0 0
      %1405 = vmatpush1.bf16.msra.mxu0 %v1388
      %1406 = vmatprep.subr.bf16.mxu0 0
      %1407 = vmatpush1.bf16.msra.mxu0 %v1389
      %1408 = vmatprep.subr.bf16.mxu0 0
      %1409 = vmatpush1.bf16.msra.mxu0 0
      %1410 = vmatprep.subr.bf16.mxu0 0
      %1411 = vmatpush1.bf16.msra.mxu0 0
      %1412 = vmatprep.subr.bf16.mxu0 0
      %1413 = vmatpush1.bf16.msra.mxu0 0
      %1414 = vmatprep.subr.bf16.mxu0 0
      %1415 = vmatpush1.bf16.msra.mxu0 0
      %1416 = vmatprep.subr.bf16.mxu0 0
      %1417 = vmatpush1.bf16.msra.mxu0 0
      %1418 = vmatprep.subr.bf16.mxu0 0
      %1419 = vmatpush1.bf16.msra.mxu0 0
      %1420 = vmatprep.subr.bf16.mxu0 0
      %1421 = vmatpush1.bf16.msra.mxu0 0
      %1422 = vmatprep.subr.bf16.mxu0 0
      %1423 = vmatpush1.bf16.msra.mxu0 0
      %1424 = vmatprep.subr.bf16.mxu0 0
      %1425 = vmatpush1.bf16.msra.mxu0 0
      %1426 = vmatprep.subr.bf16.mxu0 0
      %1427 = vmatpush1.bf16.msra.mxu0 0
      %1428 = vmatprep.subr.bf16.mxu0 0
      %1429 = vmatpush1.bf16.msra.mxu0 0
      %1430 = vmatprep.subr.bf16.mxu0 0
      %1431 = vmatpush1.bf16.msra.mxu0 0
      %1432 = vmatprep.subr.bf16.mxu0 0
      %1433 = vmatpush1.bf16.msra.mxu0 0
      %1434 = vmatprep.subr.bf16.mxu0 0
      %1435 = vmatpush1.bf16.msra.mxu0 0
      %1436 = vmatprep.mubr.bf16.mxu0 0
      %1437 = vmatmul.mubr.bf16.gmra.mrb[0].mxu0 %v1393
      %v1438 = vpop.f32.mrb[0].mxu0
      %v1439 = vadd.f32 0.0, %v1438
      %v1440 = vpop.f32.mrb[0].mxu0
      %v1441 = vpop.f32.mrb[0].mxu0
      %v1442 = vadd.f32 0.0, %v1441
      %v1443 = vpop.f32.mrb[0].mxu0
      %1444 = vmatprep.mubr.bf16.mxu0 0
      %1445 = vmatmul.mubr.bf16.gmra.mrb[0].mxu0 %v1396
      %v1446 = vpop.f32.mrb[0].mxu0
      %v1447 = vadd.f32 0.0, %v1446
      %v1448 = vpop.f32.mrb[0].mxu0
      %v1449 = vpop.f32.mrb[0].mxu0
      %v1450 = vadd.f32 0.0, %v1449
      %v1451 = vpop.f32.mrb[0].mxu0
      %1452 = vmatprep.mubr.bf16.mxu0 0
      %1453 = vmatmul.mubr.bf16.gmra.mrb[0].mxu0 %v1399
      %v1454 = vpop.f32.mrb[0].mxu0
      %v1455 = vadd.f32 0.0, %v1454
      %v1456 = vpop.f32.mrb[0].mxu0
      %v1457 = vpop.f32.mrb[0].mxu0
      %v1458 = vadd.f32 0.0, %v1457
      %v1459 = vpop.f32.mrb[0].mxu0
      %1460 = vmatprep.mubr.bf16.mxu0 0
      %1461 = vmatmul.mubr.bf16.gmra.mrb[0].mxu0 %v1402
      %v1462 = vpop.f32.mrb[0].mxu0
      %v1463 = vadd.f32 0.0, %v1462
      %v1464 = vpop.f32.mrb[0].mxu0
      %v1465 = vpop.f32.mrb[0].mxu0
      %v1466 = vadd.f32 0.0, %v1465
      %v1467 = vpop.f32.mrb[0].mxu0
      %1468 = vdwg.mxu0
      %v1469 = vsel %vm224, 0.0, %v1439
      %v1470 = vsel %vm225, 0.0, %v1442
      %v1471 = vsel %vm226, 0.0, %v1447
      %v1472 = vsel %vm227, 0.0, %v1450
      %v1473 = vsel %vm228, 0.0, %v1455
      %v1474 = vsel %vm229, 0.0, %v1458
      %v1475 = vsel %vm230, 0.0, %v1463
      %v1476 = vsel %vm231, 0.0, %v1466
      %v1477 = vadd.f32 %v1354, %v1469
      %v1478 = vadd.f32 %v1355, %v1470
      %v1479 = vadd.f32 %v1356, %v1471
      %v1480 = vadd.f32 %v1357, %v1472
      %v1481 = vadd.f32 %v1358, %v1473
      %v1482 = vadd.f32 %v1359, %v1474
      %v1483 = vadd.f32 %v1360, %v1475
      %v1484 = vadd.f32 %v1361, %v1476
      %v1485 = vld [vmem:[%s2] sm:$0x1]
      %v1487 = vlaneseq
      %v1488 = vshrl.u32 %v1487, 7
      %v1489 = vsub.s32 0, %v1488
      %v1490 = vrot.slane %v1485, %v1489
      %v1492 = vmul.f32 %v1477, %v1490
      %v1493 = vmul.f32 %v1478, %v1490
      %v1494 = vmul.f32 %v1479, %v1490
      %v1495 = vmul.f32 %v1480, %v1490
      %v1496 = vmul.f32 %v1481, %v1490
      %v1497 = vmul.f32 %v1482, %v1490
      %v1498 = vmul.f32 %v1483, %v1490
      %v1499 = vmul.f32 %v1484, %v1490
      %v1500 = vld [vmem:[%s3] sm:$0x1]
      %v1502 = vlaneseq
      %v1503 = vshrl.u32 %v1502, 7
      %v1504 = vsub.s32 0, %v1503
      %v1505 = vrot.slane %v1500, %v1504
      %v1507 = vadd.f32 %v1492, %v1505
      %v1508 = vadd.f32 %v1493, %v1505
      %v1509 = vadd.f32 %v1494, %v1505
      %v1510 = vadd.f32 %v1495, %v1505
      %v1511 = vadd.f32 %v1496, %v1505
      %v1512 = vadd.f32 %v1497, %v1505
      %v1513 = vadd.f32 %v1498, %v1505
      %v1514 = vadd.f32 %v1499, %v1505
      %v1515 = vmax.f32 %v1507, 0.0
      %v1516 = vmax.f32 %v1508, 0.0
      %v1517 = vmax.f32 %v1509, 0.0
      %v1518 = vmax.f32 %v1510, 0.0
      %v1519 = vmax.f32 %v1511, 0.0
      %v1520 = vmax.f32 %v1512, 0.0
      %v1521 = vmax.f32 %v1513, 0.0
      %v1522 = vmax.f32 %v1514, 0.0
      %v1523 = vpack.c.bf16 %v1516, %v1515
      %v1524 = vpack.c.bf16 %v1518, %v1517
      %v1525 = vpack.c.bf16 %v1520, %v1519
      %v1526 = vpack.c.bf16 %v1522, %v1521
      %v1531 = vunpack.c.l.b16 %v1523
      %v1532 = vunpack.c.h.b16 %v1523
      %v1533 = vunpack.c.l.b16 %v1524
      %v1534 = vunpack.c.h.b16 %v1524
      %v1535 = vunpack.c.l.b16 %v1525
      %v1536 = vunpack.c.h.b16 %v1525
      %v1537 = vunpack.c.l.b16 %v1526
      %v1538 = vunpack.c.h.b16 %v1526
      %v1539 = vpack.c.b16 %v1531, %v1531
      %v1540 = vpack.c.b16 %v1532, %v1532
      %v1541 = vpack.c.b16 %v1533, %v1533
      %v1542 = vpack.c.b16 %v1534, %v1534
      %v1543 = vpack.c.b16 %v1535, %v1535
      %v1544 = vpack.c.b16 %v1536, %v1536
      %v1545 = vpack.c.b16 %v1537, %v1537
      %v1546 = vpack.c.b16 %v1538, %v1538
      %vm1555 = vcmask 519168
      %1556 = vst.msk [vmem:[%s197] sm:$0xf] %vm1555, %v1539
      %1557 = vst.msk [vmem:[%s197 + $0x4] sm:$0xf] %vm1555, %v1540
      %1558 = vst.msk [vmem:[%s197 + $0x8] sm:$0xf] %vm1555, %v1541
      %1559 = vst.msk [vmem:[%s197 + $0xc] sm:$0xf] %vm1555, %v1542
      %1560 = vst.msk [vmem:[%s197 + $0x10] sm:$0xf] %vm1555, %v1543
      %1561 = vst.msk [vmem:[%s197 + $0x14] sm:$0xf] %vm1555, %v1544
      %1562 = vst.msk [vmem:[%s197 + $0x18] sm:$0xf] %vm1555, %v1545
      %1563 = vst.msk [vmem:[%s197 + $0x1c] sm:$0xf] %vm1555, %v1546
      %p1564 = scmp.lt.s32.totalorder %s15, 1
      %s1565 = scalar_select %p1564, %s15, 1
      %s1566 = smul.addr %s1565, 8
      %s1567 = smul.addr %s1566, 4
      %s1568 = scalar_lea.vmem %s4, %s1567
      // Predicated region
      $region37: #{_forward_impl.12} parent=35 // pred_check
        %p1569 = pneg %p122
      $region38: #{_forward_impl.12} parent=35 // pred_check_branch
        %1571 = sbr.rel (%p1569) target = $region40
      $region39: #{_forward_impl.12} parent=35 // pred_region
        _
      $region40: #{_forward_impl.12} parent=35 // pred_fallthru
        _
    $region36: #{_forward_impl.12} parent=5 // pred_fallthru
      _
    %p1572 = scmp.le.s32.totalorder 2, %s10
    // Predicated region
    $region41: #{_forward_impl.12} parent=5 // pred_check
      %p1573 = pneg %p1572
    $region42: #{_forward_impl.12} parent=5 // pred_check_branch
      %1575 = sbr.rel (%p1573) target = $region44
    $region43: #{_forward_impl.12} parent=5 // pred_region
      %s1576 = ssub.s32 %s10, 2
      // Predicated region
      $region45: #{_forward_impl.12} parent=43 // pred_check
        %p1577 = pneg %p128
      $region46: #{_forward_impl.12} parent=43 // pred_check_branch
        %1579 = sbr.rel (%p1577) target = $region48
      $region47: #{_forward_impl.12} parent=43 // pred_region
        %p1580 = scmp.lt.s32.totalorder %s16, 1
        %s1581 = scalar_select %p1580, %s16, 1
        %s1582 = smul.addr %s1581, 8
        %s1583 = smul.addr %s1582, 4
        %s1584 = scalar_lea.vmem %s4, %s1583
      $region48: #{_forward_impl.12} parent=43 // pred_fallthru
        _
    $region44: #{_forward_impl.12} parent=5 // pred_fallthru
      _
  $region6: #{_forward_impl.12} parent=0 // loop_footer
    %s14 = sadd.s32 1, %s10
  $region7: #{_forward_impl.12} parent=0 // loop_footer_branch
    %9 = sbr.rel target = $region3
  $region8: #{_forward_impl.12} parent=0 // loop_exit
    _

// kernel: _forward_impl.15
$region0: #{_forward_impl.15}
  #allocation0 [shape = 'u32[]', space=smem, size = 0x4, offset = 0x4, fixed_abs, tag = 'smem constant byte address 0x4 - core index']
  #allocation1 [shape = 'u32[144,128]{1,0:T(1,128)}', space=vmem, size = 0x12000, scoped, tag = 'internal scratch']
  %s0 = inlined_call_operand.vmem [shape: bf16[2,4,4,128], index: 0, kind: input, shape index: {}]
  %s1 = inlined_call_operand.vmem [shape: bf16[2,4,128], index: 1, kind: output, shape index: {}]
  %s2 = sld [smem:[#allocation0]]
  $region37: #{_forward_impl.15} parent=0
    _
  %s4 = ssub.s32 1, %s2
  %s5 = scalar_select 0, %s4, %s2
  loop: start=0, step=1, limit=4
  $region2: #{_forward_impl.15} parent=0 // loop_pre_header
    _
  $region3: #{_forward_impl.15} parent=0 // loop_header
    %s7 = sphi 0, %s11
    %p8 = scmp.ge.s32.totalorder %s7, 4
    %s17 = sphi 0, %s19
    %s20 = sphi 0, %s17
    %s21 = sphi 0, %s20
    %s37 = sphi 0, %s21
    %s43 = sphi 0, %s45
    %s46 = sphi 0, %s43
    %s47 = sphi 0, %s46
    %s63 = sphi 0, %s47
  $region4: #{_forward_impl.15} parent=0 // loop_header_branch
    %10 = sbr.rel (%p8) target = $region8
  $region5: #{_forward_impl.15} parent=0 // loop_body
    %s12 = ssub.s32 %s7, 1
    %s13 = ssub.s32 %s7, 2
    %s14 = sadd.s32 %s7, 1
    %s15 = ssub.s32 %s7, %s14
    %p16 = scmp.eq.s32.totalorder %s15, 0
    %s18 = sadd.s32 %s17, 1
    %s19 = scalar_select %p16, %s17, %s18
    %p22 = pneg %p16
    %p23 = scmp.eq.s32.totalorder %s7, 1
    %p24 = por %p22, %p23
    %p25 = scmp.ne.s32.totalorder %s17, %s20
    %p26 = scmp.eq.s32.totalorder %s7, 0
    %p27 = por %p25, %p26
    %p28 = scmp.ne.s32.totalorder %s17, %s20
    %p29 = scmp.eq.s32.totalorder %s12, 1
    %p30 = por %p28, %p29
    %p31 = scmp.ne.s32.totalorder %s20, %s21
    %p32 = scmp.eq.s32.totalorder %s12, 0
    %p33 = por %p31, %p32
    %p34 = scmp.ne.s32.totalorder %s20, %s21
    %p35 = scmp.eq.s32.totalorder %s13, 1
    %p36 = por %p34, %p35
    %p38 = scmp.ne.s32.totalorder %s21, %s37
    %p39 = scmp.eq.s32.totalorder %s13, 0
    %p40 = por %p38, %p39
    %s41 = ssub.s32 %s7, %s14
    %p42 = scmp.eq.s32.totalorder %s41, 0
    %s44 = sadd.s32 %s43, 1
    %s45 = scalar_select %p42, %s43, %s44
    %p48 = pneg %p42
    %p49 = scmp.eq.s32.totalorder %s7, 1
    %p50 = por %p48, %p49
    %p51 = scmp.ne.s32.totalorder %s43, %s46
    %p52 = scmp.eq.s32.totalorder %s7, 0
    %p53 = por %p51, %p52
    %p54 = scmp.ne.s32.totalorder %s43, %s46
    %p55 = scmp.eq.s32.totalorder %s12, 1
    %p56 = por %p54, %p55
    %p57 = scmp.ne.s32.totalorder %s46, %s47
    %p58 = scmp.eq.s32.totalorder %s12, 0
    %p59 = por %p57, %p58
    %p60 = scmp.ne.s32.totalorder %s46, %s47
    %p61 = scmp.eq.s32.totalorder %s13, 1
    %p62 = por %p60, %p61
    %p64 = scmp.ne.s32.totalorder %s47, %s63
    %p65 = scmp.eq.s32.totalorder %s13, 0
    %p66 = por %p64, %p65
    %p67 = scmp.le.s32.totalorder 1, %s7
    %p68 = scmp.lt.s32.totalorder %s7, 3
    %p69 = pnand %p67, %p68
    %p70 = pneg %p69
    // Predicated region
    $region9: #{_forward_impl.15} parent=5 // pred_check
      _
    $region10: #{_forward_impl.15} parent=5 // pred_check_branch
      %72 = sbr.rel (%p69) target = $region12
    $region11: #{_forward_impl.15} parent=5 // pred_region
      %s73 = ssub.s32 %s7, 1
    $region12: #{_forward_impl.15} parent=5 // pred_fallthru
      _
    %p74 = scmp.lt.s32.totalorder %s7, 2
    // Predicated region
    $region13: #{_forward_impl.15} parent=5 // pred_check
      %p75 = pneg %p74
    $region14: #{_forward_impl.15} parent=5 // pred_check_branch
      %77 = sbr.rel (%p75) target = $region16
    $region15: #{_forward_impl.15} parent=5 // pred_region
      // Predicated region
      $region17: #{_forward_impl.15} parent=15 // pred_check
        %p78 = pneg %p27
      $region18: #{_forward_impl.15} parent=15 // pred_check_branch
        %80 = sbr.rel (%p78) target = $region20
      $region19: #{_forward_impl.15} parent=15 // pred_region
        %p81 = scmp.lt.s32.totalorder %s7, 1
        %s82 = scalar_select %p81, %s7, 1
        %s83 = smul.addr %s82, 4
        %s84 = smul.addr %s83, 2
        %s85 = scalar_lea.vmem %s0, %s84
      $region20: #{_forward_impl.15} parent=15 // pred_fallthru
        _
    $region16: #{_forward_impl.15} parent=5 // pred_fallthru
      _
    %p86 = scmp.le.s32.totalorder 1, %s7
    %p87 = scmp.lt.s32.totalorder %s7, 3
    %p88 = pnand %p86, %p87
    %p89 = pneg %p88
    // Predicated region
    $region21: #{_forward_impl.15} parent=5 // pred_check
      _
    $region22: #{_forward_impl.15} parent=5 // pred_check_branch
      %91 = sbr.rel (%p88) target = $region24
    $region23: #{_forward_impl.15} parent=5 // pred_region
      %s92 = ssub.s32 %s7, 1
      %p93 = scmp.lt.s32.totalorder %s12, 1
      %s94 = scalar_select %p93, %s12, 1
      %s95 = smul.addr %s94, 4
      %s96 = smul.addr %s95, 2
      %s97 = scalar_lea.vmem %s0, %s96
      %p98 = pneg %p33
      %p99 = pneg %p30
      %p100 = pneg %p59
      %p101 = pneg %p56
      %p102 = scmp.lt.s32.totalorder %s12, 1
      %s103 = scalar_select %p102, %s12, 1
      %s104 = smul.addr %s103, 2
      %s105 = scalar_lea.vmem %s1, %s104
      %p106 = scmp.lt.s32.totalorder %s12, 1
      %s107 = scalar_select %p106, %s12, 1
      %s108 = smul.addr %s107, 4
      %s109 = smul.addr %s108, 2
      %s110 = scalar_lea.vmem %s0, %s109
      %p111 = scmp.lt.s32.totalorder %s12, 1
      %s112 = scalar_select %p111, %s12, 1
      %s113 = smul.addr %s112, 2
      %s114 = scalar_lea.vmem %s1, %s113
      %v115 = vld [vmem:[%s110] sm:$0x3]
      %v116 = vld [vmem:[%s110 + $0x2] sm:$0x3]
      %v117 = vld [vmem:[%s110 + $0x4] sm:$0x3]
      %v118 = vld [vmem:[%s110 + $0x6] sm:$0x3]
      %v119 = vunpack.c.l.bf16 %v115
      %v120 = vunpack.c.l.bf16 %v116
      %v121 = vunpack.c.l.bf16 %v117
      %v122 = vunpack.c.l.bf16 %v118
      %vm123 = vcmask 1043456
      %v124 = vsel %vm123, %v119, 0.0
      %v125 = vsel %vm123, %v120, 0.0
      %v126 = vadd.f32 %v124, %v125
      %v127 = vsel %vm123, %v121, 0.0
      %v128 = vadd.f32 %v126, %v127
      %v129 = vsel %vm123, %v122, 0.0
      %v130 = vadd.f32 %v128, %v129
      %v131 = vrcp.pop 4.0
      %v132 = vmul.f32 %v130, %v131
      %v133 = vpack.c.bf16 %v132, %v132
      %134 = vst [vmem:[%s114] sm:$0x3] %v133
      %p135 = scmp.lt.s32.totalorder %s12, 1
      %s136 = scalar_select %p135, %s12, 1
      %s137 = smul.addr %s136, 2
      %s138 = scalar_lea.vmem %s1, %s137
      // Predicated region
      $region25: #{_forward_impl.15} parent=23 // pred_check
        %p139 = pneg %p56
      $region26: #{_forward_impl.15} parent=23 // pred_check_branch
        %141 = sbr.rel (%p139) target = $region28
      $region27: #{_forward_impl.15} parent=23 // pred_region
        _
      $region28: #{_forward_impl.15} parent=23 // pred_fallthru
        _
    $region24: #{_forward_impl.15} parent=5 // pred_fallthru
      _
    %p142 = scmp.le.s32.totalorder 2, %s7
    // Predicated region
    $region29: #{_forward_impl.15} parent=5 // pred_check
      %p143 = pneg %p142
    $region30: #{_forward_impl.15} parent=5 // pred_check_branch
      %145 = sbr.rel (%p143) target = $region32
    $region31: #{_forward_impl.15} parent=5 // pred_region
      %s146 = ssub.s32 %s7, 2
      // Predicated region
      $region33: #{_forward_impl.15} parent=31 // pred_check
        %p147 = pneg %p62
      $region34: #{_forward_impl.15} parent=31 // pred_check_branch
        %149 = sbr.rel (%p147) target = $region36
      $region35: #{_forward_impl.15} parent=31 // pred_region
        %p150 = scmp.lt.s32.totalorder %s13, 1
        %s151 = scalar_select %p150, %s13, 1
        %s152 = smul.addr %s151, 2
        %s153 = scalar_lea.vmem %s1, %s152
      $region36: #{_forward_impl.15} parent=31 // pred_fallthru
        _
    $region32: #{_forward_impl.15} parent=5 // pred_fallthru
      _
  $region6: #{_forward_impl.15} parent=0 // loop_footer
    %s11 = sadd.s32 1, %s7
  $region7: #{_forward_impl.15} parent=0 // loop_footer_branch
    %6 = sbr.rel target = $region3
  $region8: #{_forward_impl.15} parent=0 // loop_exit
    _

// kernel: _forward_impl.14
$region0: #{_forward_impl.14}
  #allocation0 [shape = 'u32[]', space=smem, size = 0x4, offset = 0x4, fixed_abs, tag = 'smem constant byte address 0x4 - core index']
  #allocation1 [shape = 'u32[144,128]{1,0:T(1,128)}', space=vmem, size = 0x12000, scoped, tag = 'internal scratch']
  %s0 = inlined_call_operand.vmem [shape: bf16[2,26,64], index: 0, kind: input, shape index: {}]
  %s1 = inlined_call_operand.vmem [shape: bf16[9,64,128], index: 1, kind: input, shape index: {}]
  %s2 = inlined_call_operand.vmem [shape: f32[1,128], index: 2, kind: input, shape index: {}]
  %s3 = inlined_call_operand.vmem [shape: f32[1,128], index: 3, kind: input, shape index: {}]
  %s4 = inlined_call_operand.vmem [shape: bf16[2,16,128], index: 4, kind: output, shape index: {}]
  %s5 = sld [smem:[#allocation0]]
  $region49: #{_forward_impl.14} parent=0
    _
  %s7 = ssub.s32 1, %s5
  %s8 = scalar_select 0, %s7, %s5
  loop: start=0, step=1, limit=4
  $region2: #{_forward_impl.14} parent=0 // loop_pre_header
    _
  $region3: #{_forward_impl.14} parent=0 // loop_header
    %s10 = sphi 0, %s14
    %p11 = scmp.ge.s32.totalorder %s10, 4
    %s20 = sphi 0, %s22
    %s23 = sphi 0, %s20
    %s24 = sphi 0, %s23
    %s40 = sphi 0, %s24
    %s44 = sphi 0, %s44
    %s46 = sphi 0, %s44
    %s47 = sphi 0, %s46
    %s61 = sphi 0, %s47
    %s65 = sphi 0, %s65
    %s67 = sphi 0, %s65
    %s68 = sphi 0, %s67
    %s82 = sphi 0, %s68
    %s86 = sphi 0, %s86
    %s88 = sphi 0, %s86
    %s89 = sphi 0, %s88
    %s103 = sphi 0, %s89
    %s109 = sphi 0, %s111
    %s112 = sphi 0, %s109
    %s113 = sphi 0, %s112
    %s129 = sphi 0, %s113
  $region4: #{_forward_impl.14} parent=0 // loop_header_branch
    %13 = sbr.rel (%p11) target = $region8
  $region5: #{_forward_impl.14} parent=0 // loop_body
    %s15 = ssub.s32 %s10, 1
    %s16 = ssub.s32 %s10, 2
    %s17 = sadd.s32 %s10, 1
    %s18 = ssub.s32 %s10, %s17
    %p19 = scmp.eq.s32.totalorder %s18, 0
    %s21 = sadd.s32 %s20, 1
    %s22 = scalar_select %p19, %s20, %s21
    %p25 = pneg %p19
    %p26 = scmp.eq.s32.totalorder %s10, 1
    %p27 = por %p25, %p26
    %p28 = scmp.ne.s32.totalorder %s20, %s23
    %p29 = scmp.eq.s32.totalorder %s10, 0
    %p30 = por %p28, %p29
    %p31 = scmp.ne.s32.totalorder %s20, %s23
    %p32 = scmp.eq.s32.totalorder %s15, 1
    %p33 = por %p31, %p32
    %p34 = scmp.ne.s32.totalorder %s23, %s24
    %p35 = scmp.eq.s32.totalorder %s15, 0
    %p36 = por %p34, %p35
    %p37 = scmp.ne.s32.totalorder %s23, %s24
    %p38 = scmp.eq.s32.totalorder %s16, 1
    %p39 = por %p37, %p38
    %p41 = scmp.ne.s32.totalorder %s24, %s40
    %p42 = scmp.eq.s32.totalorder %s16, 0
    %p43 = por %p41, %p42
    %s45 = sadd.s32 %s44, 1
    %p48 = scmp.eq.s32.totalorder %s10, 1
    %p49 = scmp.ne.s32.totalorder %s44, %s46
    %p50 = scmp.eq.s32.totalorder %s10, 0
    %p51 = por %p49, %p50
    %p52 = scmp.ne.s32.totalorder %s44, %s46
    %p53 = scmp.eq.s32.totalorder %s15, 1
    %p54 = por %p52, %p53
    %p55 = scmp.ne.s32.totalorder %s46, %s47
    %p56 = scmp.eq.s32.totalorder %s15, 0
    %p57 = por %p55, %p56
    %p58 = scmp.ne.s32.totalorder %s46, %s47
    %p59 = scmp.eq.s32.totalorder %s16, 1
    %p60 = por %p58, %p59
    %p62 = scmp.ne.s32.totalorder %s47, %s61
    %p63 = scmp.eq.s32.totalorder %s16, 0
    %p64 = por %p62, %p63
    %s66 = sadd.s32 %s65, 1
    %p69 = scmp.eq.s32.totalorder %s10, 1
    %p70 = scmp.ne.s32.totalorder %s65, %s67
    %p71 = scmp.eq.s32.totalorder %s10, 0
    %p72 = por %p70, %p71
    %p73 = scmp.ne.s32.totalorder %s65, %s67
    %p74 = scmp.eq.s32.totalorder %s15, 1
    %p75 = por %p73, %p74
    %p76 = scmp.ne.s32.totalorder %s67, %s68
    %p77 = scmp.eq.s32.totalorder %s15, 0
    %p78 = por %p76, %p77
    %p79 = scmp.ne.s32.totalorder %s67, %s68
    %p80 = scmp.eq.s32.totalorder %s16, 1
    %p81 = por %p79, %p80
    %p83 = scmp.ne.s32.totalorder %s68, %s82
    %p84 = scmp.eq.s32.totalorder %s16, 0
    %p85 = por %p83, %p84
    %s87 = sadd.s32 %s86, 1
    %p90 = scmp.eq.s32.totalorder %s10, 1
    %p91 = scmp.ne.s32.totalorder %s86, %s88
    %p92 = scmp.eq.s32.totalorder %s10, 0
    %p93 = por %p91, %p92
    %p94 = scmp.ne.s32.totalorder %s86, %s88
    %p95 = scmp.eq.s32.totalorder %s15, 1
    %p96 = por %p94, %p95
    %p97 = scmp.ne.s32.totalorder %s88, %s89
    %p98 = scmp.eq.s32.totalorder %s15, 0
    %p99 = por %p97, %p98
    %p100 = scmp.ne.s32.totalorder %s88, %s89
    %p101 = scmp.eq.s32.totalorder %s16, 1
    %p102 = por %p100, %p101
    %p104 = scmp.ne.s32.totalorder %s89, %s103
    %p105 = scmp.eq.s32.totalorder %s16, 0
    %p106 = por %p104, %p105
    %s107 = ssub.s32 %s10, %s17
    %p108 = scmp.eq.s32.totalorder %s107, 0
    %s110 = sadd.s32 %s109, 1
    %s111 = scalar_select %p108, %s109, %s110
    %p114 = pneg %p108
    %p115 = scmp.eq.s32.totalorder %s10, 1
    %p116 = por %p114, %p115
    %p117 = scmp.ne.s32.totalorder %s109, %s112
    %p118 = scmp.eq.s32.totalorder %s10, 0
    %p119 = por %p117, %p118
    %p120 = scmp.ne.s32.totalorder %s109, %s112
    %p121 = scmp.eq.s32.totalorder %s15, 1
    %p122 = por %p120, %p121
    %p123 = scmp.ne.s32.totalorder %s112, %s113
    %p124 = scmp.eq.s32.totalorder %s15, 0
    %p125 = por %p123, %p124
    %p126 = scmp.ne.s32.totalorder %s112, %s113
    %p127 = scmp.eq.s32.totalorder %s16, 1
    %p128 = por %p126, %p127
    %p130 = scmp.ne.s32.totalorder %s113, %s129
    %p131 = scmp.eq.s32.totalorder %s16, 0
    %p132 = por %p130, %p131
    %p133 = scmp.le.s32.totalorder 1, %s10
    %p134 = scmp.lt.s32.totalorder %s10, 3
    %p135 = pnand %p133, %p134
    %p136 = pneg %p135
    // Predicated region
    $region9: #{_forward_impl.14} parent=5 // pred_check
      _
    $region10: #{_forward_impl.14} parent=5 // pred_check_branch
      %138 = sbr.rel (%p135) target = $region12
    $region11: #{_forward_impl.14} parent=5 // pred_region
      %s139 = ssub.s32 %s10, 1
      // Predicated region
      $region13: #{_forward_impl.14} parent=11 // pred_check
        %p140 = pneg %p57
      $region14: #{_forward_impl.14} parent=11 // pred_check_branch
        %142 = sbr.rel (%p140) target = $region16
      $region15: #{_forward_impl.14} parent=11 // pred_region
        _
      $region16: #{_forward_impl.14} parent=11 // pred_fallthru
        _
      // Predicated region
      $region17: #{_forward_impl.14} parent=11 // pred_check
        %p143 = pneg %p78
      $region18: #{_forward_impl.14} parent=11 // pred_check_branch
        %145 = sbr.rel (%p143) target = $region20
      $region19: #{_forward_impl.14} parent=11 // pred_region
        _
      $region20: #{_forward_impl.14} parent=11 // pred_fallthru
        _
      // Predicated region
      $region21: #{_forward_impl.14} parent=11 // pred_check
        %p146 = pneg %p99
      $region22: #{_forward_impl.14} parent=11 // pred_check_branch
        %148 = sbr.rel (%p146) target = $region24
      $region23: #{_forward_impl.14} parent=11 // pred_region
        _
      $region24: #{_forward_impl.14} parent=11 // pred_fallthru
        _
    $region12: #{_forward_impl.14} parent=5 // pred_fallthru
      _
    %p149 = scmp.lt.s32.totalorder %s10, 2
    // Predicated region
    $region25: #{_forward_impl.14} parent=5 // pred_check
      %p150 = pneg %p149
    $region26: #{_forward_impl.14} parent=5 // pred_check_branch
      %152 = sbr.rel (%p150) target = $region28
    $region27: #{_forward_impl.14} parent=5 // pred_region
      // Predicated region
      $region29: #{_forward_impl.14} parent=27 // pred_check
        %p153 = pneg %p30
      $region30: #{_forward_impl.14} parent=27 // pred_check_branch
        %155 = sbr.rel (%p153) target = $region32
      $region31: #{_forward_impl.14} parent=27 // pred_region
        %p156 = scmp.lt.s32.totalorder %s10, 1
        %s157 = scalar_select %p156, %s10, 1
        %s158 = smul.addr %s157, 4
        %s159 = smul.addr %s158, 4
        %s160 = scalar_lea.vmem %s0, %s159
      $region32: #{_forward_impl.14} parent=27 // pred_fallthru
        _
    $region28: #{_forward_impl.14} parent=5 // pred_fallthru
      _
    %p161 = scmp.le.s32.totalorder 1, %s10
    %p162 = scmp.lt.s32.totalorder %s10, 3
    %p163 = pnand %p161, %p162
    %p164 = pneg %p163
    // Predicated region
    $region33: #{_forward_impl.14} parent=5 // pred_check
      _
    $region34: #{_forward_impl.14} parent=5 // pred_check_branch
      %166 = sbr.rel (%p163) target = $region36
    $region35: #{_forward_impl.14} parent=5 // pred_region
      %s167 = ssub.s32 %s10, 1
      %p168 = scmp.lt.s32.totalorder %s15, 1
      %s169 = scalar_select %p168, %s15, 1
      %s170 = smul.addr %s169, 4
      %s171 = smul.addr %s170, 4
      %s172 = scalar_lea.vmem %s0, %s171
      %p173 = pneg %p36
      %p174 = pneg %p33
      %p175 = pneg %p57
      %p176 = pneg %p54
      %p177 = pneg %p78
      %p178 = pneg %p75
      %p179 = pneg %p99
      %p180 = pneg %p96
      %p181 = pneg %p125
      %p182 = pneg %p122
      %p183 = scmp.lt.s32.totalorder %s15, 1
      %s184 = scalar_select %p183, %s15, 1
      %s185 = smul.addr %s184, 2
      %s186 = smul.addr %s185, 4
      %s187 = scalar_lea.vmem %s4, %s186
      %p188 = scmp.lt.s32.totalorder %s15, 1
      %s189 = scalar_select %p188, %s15, 1
      %s190 = smul.addr %s189, 4
      %s191 = smul.addr %s190, 4
      %s192 = scalar_lea.vmem %s0, %s191
      %p193 = scmp.lt.s32.totalorder %s15, 1
      %s194 = scalar_select %p193, %s15, 1
      %s195 = smul.addr %s194, 2
      %s196 = smul.addr %s195, 4
      %s197 = scalar_lea.vmem %s4, %s196
      %v199 = vlaneseq
      %v200 = vshrl.u32 %v199, 7
      %v201 = vadd.s32 %v200, 8
      %v202 = vand.u32 %v200, 3
      %v203 = vand.u32 %v201, 3
      %vm204 = vcmp.eq.s32.totalorder %v202, 0
      %vm205 = vcmp.eq.s32.totalorder %v203, 0
      %vm206 = vcmp.eq.s32.totalorder %v202, 3
      %vm207 = vcmp.eq.s32.totalorder %v203, 3
      %v208 = vld [vmem:[%s192] sm:$0xf]
      %v209 = vld [vmem:[%s192 + $0x4] sm:$0xf]
      %v210 = vld [vmem:[%s1] sm:$0xf]
      %v211 = vld [vmem:[%s1 + $0x4] sm:$0xf]
      %v212 = vld [vmem:[%s1 + $0x8] sm:$0xf]
      %v213 = vld [vmem:[%s1 + $0xc] sm:$0xf]
      %v214 = vld [vmem:[%s1 + $0x10] sm:$0xf]
      %v215 = vld [vmem:[%s1 + $0x14] sm:$0xf]
      %v216 = vld [vmem:[%s1 + $0x18] sm:$0xf]
      %v217 = vld [vmem:[%s1 + $0x1c] sm:$0xf]
      %v220 = vunpack.c.l.b16 %v208
      %v221 = vunpack.c.l.b16 %v209
      %v222 = vpack.c.b16 %v221, %v220
      %v231 = vunpack.c.l.b16 %v210
      %v232 = vunpack.c.l.b16 %v211
      %v233 = vunpack.c.l.b16 %v212
      %v234 = vunpack.c.l.b16 %v213
      %v235 = vunpack.c.l.b16 %v214
      %v236 = vunpack.c.l.b16 %v215
      %v237 = vunpack.c.l.b16 %v216
      %v238 = vunpack.c.l.b16 %v217
      %v239 = vpack.c.b16 %v232, %v231
      %v240 = vpack.c.b16 %v234, %v233
      %v241 = vpack.c.b16 %v236, %v235
      %v242 = vpack.c.b16 %v238, %v237
      %vm247 = vcmask 523264
      %v249 = vsel %vm247, %v222, 0
      %251 = vmatprep.subr.bf16.mxu0 0
      %252 = vmatpush1.bf16.msra.mxu0 %v239
      %253 = vmatprep.subr.bf16.mxu0 0
      %254 = vmatpush1.bf16.msra.mxu0 %v240
      %255 = vmatprep.subr.bf16.mxu0 0
      %256 = vmatpush1.bf16.msra.mxu0 %v241
      %257 = vmatprep.subr.bf16.mxu0 0
      %258 = vmatpush1.bf16.msra.mxu0 %v242
      %259 = vmatprep.subr.bf16.mxu0 0
      %260 = vmatpush1.bf16.msra.mxu0 0
      %261 = vmatprep.subr.bf16.mxu0 0
      %262 = vmatpush1.bf16.msra.mxu0 0
      %263 = vmatprep.subr.bf16.mxu0 0
      %264 = vmatpush1.bf16.msra.mxu0 0
      %265 = vmatprep.subr.bf16.mxu0 0
      %266 = vmatpush1.bf16.msra.mxu0 0
      %267 = vmatprep.subr.bf16.mxu0 0
      %268 = vmatpush1.bf16.msra.mxu0 0
      %269 = vmatprep.subr.bf16.mxu0 0
      %270 = vmatpush1.bf16.msra.mxu0 0
      %271 = vmatprep.subr.bf16.mxu0 0
      %272 = vmatpush1.bf16.msra.mxu0 0
      %273 = vmatprep.subr.bf16.mxu0 0
      %274 = vmatpush1.bf16.msra.mxu0 0
      %275 = vmatprep.subr.bf16.mxu0 0
      %276 = vmatpush1.bf16.msra.mxu0 0
      %277 = vmatprep.subr.bf16.mxu0 0
      %278 = vmatpush1.bf16.msra.mxu0 0
      %279 = vmatprep.subr.bf16.mxu0 0
      %280 = vmatpush1.bf16.msra.mxu0 0
      %281 = vmatprep.subr.bf16.mxu0 0
      %282 = vmatpush1.bf16.msra.mxu0 0
      %283 = vmatprep.mubr.bf16.mxu0 0
      %284 = vmatmul.mubr.bf16.gmra.mrb[0].mxu0 %v249
      %v285 = vpop.f32.mrb[0].mxu0
      %v286 = vadd.f32 0.0, %v285
      %v287 = vpop.f32.mrb[0].mxu0
      %v288 = vpop.f32.mrb[0].mxu0
      %v289 = vadd.f32 0.0, %v288
      %v290 = vpop.f32.mrb[0].mxu0
      %291 = vdwg.mxu0
      %v292 = vsel %vm204, 0.0, %v286
      %v293 = vsel %vm205, 0.0, %v289
      %v294 = vadd.f32 %v292, 0.0
      %v295 = vadd.f32 %v293, 0.0
      %v296 = vld [vmem:[%s192] sm:$0xf]
      %v297 = vld [vmem:[%s192 + $0x4] sm:$0xf]
      %v298 = vld [vmem:[%s192 + $0x8] sm:$0x1]
      %s299 = scalar_lea.vmem %s1, 32
      %v300 = vld [vmem:[%s299] sm:$0xf]
      %v301 = vld [vmem:[%s299 + $0x4] sm:$0xf]
      %v302 = vld [vmem:[%s299 + $0x8] sm:$0xf]
      %v303 = vld [vmem:[%s299 + $0xc] sm:$0xf]
      %v304 = vld [vmem:[%s299 + $0x10] sm:$0xf]
      %v305 = vld [vmem:[%s299 + $0x14] sm:$0xf]
      %v306 = vld [vmem:[%s299 + $0x18] sm:$0xf]
      %v307 = vld [vmem:[%s299 + $0x1c] sm:$0xf]
      %v311 = vunpack.c.l.b16 %v296
      %v312 = vunpack.c.l.b16 %v297
      %v313 = vunpack.c.l.b16 %v298
      %v314 = vpack.c.b16 %v312, %v311
      %v315 = vpack.c.b16 %v313, %v313
      %vm316 = vsmask.f32 7424
      %v318 = vshrl.u32 %v314, 16
      %v320 = vshll.u32 %v314, 16
      %v322 = vrot.slane %v320, 1
      %v323 = vor.u32 %v318, %v322
      %v325 = vshll.u32 %v315, 16
      %v327 = vrot.slane %v325, 1
      %v328 = vsel %vm316, %v323, %v327
      %v337 = vunpack.c.l.b16 %v300
      %v338 = vunpack.c.l.b16 %v301
      %v339 = vunpack.c.l.b16 %v302
      %v340 = vunpack.c.l.b16 %v303
      %v341 = vunpack.c.l.b16 %v304
      %v342 = vunpack.c.l.b16 %v305
      %v343 = vunpack.c.l.b16 %v306
      %v344 = vunpack.c.l.b16 %v307
      %v345 = vpack.c.b16 %v338, %v337
      %v346 = vpack.c.b16 %v340, %v339
      %v347 = vpack.c.b16 %v342, %v341
      %v348 = vpack.c.b16 %v344, %v343
      %v354 = vsel %vm247, %v328, 0
      %356 = vmatprep.subr.bf16.mxu0 0
      %357 = vmatpush1.bf16.msra.mxu0 %v345
      %358 = vmatprep.subr.bf16.mxu0 0
      %359 = vmatpush1.bf16.msra.mxu0 %v346
      %360 = vmatprep.subr.bf16.mxu0 0
      %361 = vmatpush1.bf16.msra.mxu0 %v347
      %362 = vmatprep.subr.bf16.mxu0 0
      %363 = vmatpush1.bf16.msra.mxu0 %v348
      %364 = vmatprep.subr.bf16.mxu0 0
      %365 = vmatpush1.bf16.msra.mxu0 0
      %366 = vmatprep.subr.bf16.mxu0 0
      %367 = vmatpush1.bf16.msra.mxu0 0
      %368 = vmatprep.subr.bf16.mxu0 0
      %369 = vmatpush1.bf16.msra.mxu0 0
      %370 = vmatprep.subr.bf16.mxu0 0
      %371 = vmatpush1.bf16.msra.mxu0 0
      %372 = vmatprep.subr.bf16.mxu0 0
      %373 = vmatpush1.bf16.msra.mxu0 0
      %374 = vmatprep.subr.bf16.mxu0 0
      %375 = vmatpush1.bf16.msra.mxu0 0
      %376 = vmatprep.subr.bf16.mxu0 0
      %377 = vmatpush1.bf16.msra.mxu0 0
      %378 = vmatprep.subr.bf16.mxu0 0
      %379 = vmatpush1.bf16.msra.mxu0 0
      %380 = vmatprep.subr.bf16.mxu0 0
      %381 = vmatpush1.bf16.msra.mxu0 0
      %382 = vmatprep.subr.bf16.mxu0 0
      %383 = vmatpush1.bf16.msra.mxu0 0
      %384 = vmatprep.subr.bf16.mxu0 0
      %385 = vmatpush1.bf16.msra.mxu0 0
      %386 = vmatprep.subr.bf16.mxu0 0
      %387 = vmatpush1.bf16.msra.mxu0 0
      %388 = vmatprep.mubr.bf16.mxu0 0
      %389 = vmatmul.mubr.bf16.gmra.mrb[0].mxu0 %v354
      %v390 = vpop.f32.mrb[0].mxu0
      %v391 = vadd.f32 0.0, %v390
      %v392 = vpop.f32.mrb[0].mxu0
      %v393 = vpop.f32.mrb[0].mxu0
      %v394 = vadd.f32 0.0, %v393
      %v395 = vpop.f32.mrb[0].mxu0
      %396 = vdwg.mxu0
      %v397 = vadd.f32 %v294, %v391
      %v398 = vadd.f32 %v295, %v394
      %v399 = vld [vmem:[%s192] sm:$0xe]
      %s400 = scalar_lea.vmem %s1, 64
      %v401 = vld [vmem:[%s400] sm:$0xf]
      %v402 = vld [vmem:[%s400 + $0x4] sm:$0xf]
      %v403 = vld [vmem:[%s400 + $0x8] sm:$0xf]
      %v404 = vld [vmem:[%s400 + $0xc] sm:$0xf]
      %v405 = vld [vmem:[%s400 + $0x10] sm:$0xf]
      %v406 = vld [vmem:[%s400 + $0x14] sm:$0xf]
      %v407 = vld [vmem:[%s400 + $0x18] sm:$0xf]
      %v408 = vld [vmem:[%s400 + $0x1c] sm:$0xf]
      %v410 = vunpack.c.l.b16 %v399
      %v411 = vpack.c.b16 %v312, %v410
      %vm412 = vcmask 1046528
      %v413 = vrot.slane %v411, 1
      %v414 = vrot.slane %v315, 1
      %v415 = vsel %vm412, %v413, %v414
      %v424 = vunpack.c.l.b16 %v401
      %v425 = vunpack.c.l.b16 %v402
      %v426 = vunpack.c.l.b16 %v403
      %v427 = vunpack.c.l.b16 %v404
      %v428 = vunpack.c.l.b16 %v405
      %v429 = vunpack.c.l.b16 %v406
      %v430 = vunpack.c.l.b16 %v407
      %v431 = vunpack.c.l.b16 %v408
      %v432 = vpack.c.b16 %v425, %v424
      %v433 = vpack.c.b16 %v427, %v426
      %v434 = vpack.c.b16 %v429, %v428
      %v435 = vpack.c.b16 %v431, %v430
      %v441 = vsel %vm247, %v415, 0
      %443 = vmatprep.subr.bf16.mxu0 0
      %444 = vmatpush1.bf16.msra.mxu0 %v432
      %445 = vmatprep.subr.bf16.mxu0 0
      %446 = vmatpush1.bf16.msra.mxu0 %v433
      %447 = vmatprep.subr.bf16.mxu0 0
      %448 = vmatpush1.bf16.msra.mxu0 %v434
      %449 = vmatprep.subr.bf16.mxu0 0
      %450 = vmatpush1.bf16.msra.mxu0 %v435
      %451 = vmatprep.subr.bf16.mxu0 0
      %452 = vmatpush1.bf16.msra.mxu0 0
      %453 = vmatprep.subr.bf16.mxu0 0
      %454 = vmatpush1.bf16.msra.mxu0 0
      %455 = vmatprep.subr.bf16.mxu0 0
      %456 = vmatpush1.bf16.msra.mxu0 0
      %457 = vmatprep.subr.bf16.mxu0 0
      %458 = vmatpush1.bf16.msra.mxu0 0
      %459 = vmatprep.subr.bf16.mxu0 0
      %460 = vmatpush1.bf16.msra.mxu0 0
      %461 = vmatprep.subr.bf16.mxu0 0
      %462 = vmatpush1.bf16.msra.mxu0 0
      %463 = vmatprep.subr.bf16.mxu0 0
      %464 = vmatpush1.bf16.msra.mxu0 0
      %465 = vmatprep.subr.bf16.mxu0 0
      %466 = vmatpush1.bf16.msra.mxu0 0
      %467 = vmatprep.subr.bf16.mxu0 0
      %468 = vmatpush1.bf16.msra.mxu0 0
      %469 = vmatprep.subr.bf16.mxu0 0
      %470 = vmatpush1.bf16.msra.mxu0 0
      %471 = vmatprep.subr.bf16.mxu0 0
      %472 = vmatpush1.bf16.msra.mxu0 0
      %473 = vmatprep.subr.bf16.mxu0 0
      %474 = vmatpush1.bf16.msra.mxu0 0
      %475 = vmatprep.mubr.bf16.mxu0 0
      %476 = vmatmul.mubr.bf16.gmra.mrb[0].mxu0 %v441
      %v477 = vpop.f32.mrb[0].mxu0
      %v478 = vadd.f32 0.0, %v477
      %v479 = vpop.f32.mrb[0].mxu0
      %v480 = vpop.f32.mrb[0].mxu0
      %v481 = vadd.f32 0.0, %v480
      %v482 = vpop.f32.mrb[0].mxu0
      %483 = vdwg.mxu0
      %v484 = vsel %vm206, 0.0, %v478
      %v485 = vsel %vm207, 0.0, %v481
      %v486 = vadd.f32 %v397, %v484
      %v487 = vadd.f32 %v398, %v485
      %v488 = vld [vmem:[%s192] sm:$0xc]
      %v489 = vld [vmem:[%s192 + $0x8] sm:$0x3]
      %s490 = scalar_lea.vmem %s1, 96
      %v491 = vld [vmem:[%s490] sm:$0xf]
      %v492 = vld [vmem:[%s490 + $0x4] sm:$0xf]
      %v493 = vld [vmem:[%s490 + $0x8] sm:$0xf]
      %v494 = vld [vmem:[%s490 + $0xc] sm:$0xf]
      %v495 = vld [vmem:[%s490 + $0x10] sm:$0xf]
      %v496 = vld [vmem:[%s490 + $0x14] sm:$0xf]
      %v497 = vld [vmem:[%s490 + $0x18] sm:$0xf]
      %v498 = vld [vmem:[%s490 + $0x1c] sm:$0xf]
      %v501 = vunpack.c.l.b16 %v488
      %v502 = vunpack.c.l.b16 %v489
      %v503 = vpack.c.b16 %v312, %v501
      %v504 = vpack.c.b16 %v502, %v502
      %vm505 = vcmask 1045504
      %v506 = vrot.slane %v503, 2
      %v507 = vrot.slane %v504, 2
      %v508 = vsel %vm505, %v506, %v507
      %v517 = vunpack.c.l.b16 %v491
      %v518 = vunpack.c.l.b16 %v492
      %v519 = vunpack.c.l.b16 %v493
      %v520 = vunpack.c.l.b16 %v494
      %v521 = vunpack.c.l.b16 %v495
      %v522 = vunpack.c.l.b16 %v496
      %v523 = vunpack.c.l.b16 %v497
      %v524 = vunpack.c.l.b16 %v498
      %v525 = vpack.c.b16 %v518, %v517
      %v526 = vpack.c.b16 %v520, %v519
      %v527 = vpack.c.b16 %v522, %v521
      %v528 = vpack.c.b16 %v524, %v523
      %v534 = vsel %vm247, %v508, 0
      %536 = vmatprep.subr.bf16.mxu0 0
      %537 = vmatpush1.bf16.msra.mxu0 %v525
      %538 = vmatprep.subr.bf16.mxu0 0
      %539 = vmatpush1.bf16.msra.mxu0 %v526
      %540 = vmatprep.subr.bf16.mxu0 0
      %541 = vmatpush1.bf16.msra.mxu0 %v527
      %542 = vmatprep.subr.bf16.mxu0 0
      %543 = vmatpush1.bf16.msra.mxu0 %v528
      %544 = vmatprep.subr.bf16.mxu0 0
      %545 = vmatpush1.bf16.msra.mxu0 0
      %546 = vmatprep.subr.bf16.mxu0 0
      %547 = vmatpush1.bf16.msra.mxu0 0
      %548 = vmatprep.subr.bf16.mxu0 0
      %549 = vmatpush1.bf16.msra.mxu0 0
      %550 = vmatprep.subr.bf16.mxu0 0
      %551 = vmatpush1.bf16.msra.mxu0 0
      %552 = vmatprep.subr.bf16.mxu0 0
      %553 = vmatpush1.bf16.msra.mxu0 0
      %554 = vmatprep.subr.bf16.mxu0 0
      %555 = vmatpush1.bf16.msra.mxu0 0
      %556 = vmatprep.subr.bf16.mxu0 0
      %557 = vmatpush1.bf16.msra.mxu0 0
      %558 = vmatprep.subr.bf16.mxu0 0
      %559 = vmatpush1.bf16.msra.mxu0 0
      %560 = vmatprep.subr.bf16.mxu0 0
      %561 = vmatpush1.bf16.msra.mxu0 0
      %562 = vmatprep.subr.bf16.mxu0 0
      %563 = vmatpush1.bf16.msra.mxu0 0
      %564 = vmatprep.subr.bf16.mxu0 0
      %565 = vmatpush1.bf16.msra.mxu0 0
      %566 = vmatprep.subr.bf16.mxu0 0
      %567 = vmatpush1.bf16.msra.mxu0 0
      %568 = vmatprep.mubr.bf16.mxu0 0
      %569 = vmatmul.mubr.bf16.gmra.mrb[0].mxu0 %v534
      %v570 = vpop.f32.mrb[0].mxu0
      %v571 = vadd.f32 0.0, %v570
      %v572 = vpop.f32.mrb[0].mxu0
      %v573 = vpop.f32.mrb[0].mxu0
      %v574 = vadd.f32 0.0, %v573
      %v575 = vpop.f32.mrb[0].mxu0
      %576 = vdwg.mxu0
      %v577 = vsel %vm204, 0.0, %v571
      %v578 = vsel %vm205, 0.0, %v574
      %v579 = vadd.f32 %v486, %v577
      %v580 = vadd.f32 %v487, %v578
      %v581 = vld [vmem:[%s192 + $0x8] sm:$0x7]
      %s582 = scalar_lea.vmem %s1, 128
      %v583 = vld [vmem:[%s582] sm:$0xf]
      %v584 = vld [vmem:[%s582 + $0x4] sm:$0xf]
      %v585 = vld [vmem:[%s582 + $0x8] sm:$0xf]
      %v586 = vld [vmem:[%s582 + $0xc] sm:$0xf]
      %v587 = vld [vmem:[%s582 + $0x10] sm:$0xf]
      %v588 = vld [vmem:[%s582 + $0x14] sm:$0xf]
      %v589 = vld [vmem:[%s582 + $0x18] sm:$0xf]
      %v590 = vld [vmem:[%s582 + $0x1c] sm:$0xf]
      %v592 = vunpack.c.l.b16 %v581
      %v593 = vpack.c.b16 %v592, %v592
      %vm594 = vsmask.f32 5376
      %v596 = vshrl.u32 %v503, 16
      %v598 = vrot.slane %v596, 2
      %v599 = vshll.u32 %v503, 16
      %v601 = vrot.slane %v599, 3
      %v602 = vor.u32 %v598, %v601
      %v604 = vshrl.u32 %v593, 16
      %v606 = vrot.slane %v604, 2
      %v607 = vshll.u32 %v593, 16
      %v609 = vrot.slane %v607, 3
      %v610 = vor.u32 %v606, %v609
      %v611 = vsel %vm594, %v602, %v610
      %v620 = vunpack.c.l.b16 %v583
      %v621 = vunpack.c.l.b16 %v584
      %v622 = vunpack.c.l.b16 %v585
      %v623 = vunpack.c.l.b16 %v586
      %v624 = vunpack.c.l.b16 %v587
      %v625 = vunpack.c.l.b16 %v588
      %v626 = vunpack.c.l.b16 %v589
      %v627 = vunpack.c.l.b16 %v590
      %v628 = vpack.c.b16 %v621, %v620
      %v629 = vpack.c.b16 %v623, %v622
      %v630 = vpack.c.b16 %v625, %v624
      %v631 = vpack.c.b16 %v627, %v626
      %v637 = vsel %vm247, %v611, 0
      %639 = vmatprep.subr.bf16.mxu0 0
      %640 = vmatpush1.bf16.msra.mxu0 %v628
      %641 = vmatprep.subr.bf16.mxu0 0
      %642 = vmatpush1.bf16.msra.mxu0 %v629
      %643 = vmatprep.subr.bf16.mxu0 0
      %644 = vmatpush1.bf16.msra.mxu0 %v630
      %645 = vmatprep.subr.bf16.mxu0 0
      %646 = vmatpush1.bf16.msra.mxu0 %v631
      %647 = vmatprep.subr.bf16.mxu0 0
      %648 = vmatpush1.bf16.msra.mxu0 0
      %649 = vmatprep.subr.bf16.mxu0 0
      %650 = vmatpush1.bf16.msra.mxu0 0
      %651 = vmatprep.subr.bf16.mxu0 0
      %652 = vmatpush1.bf16.msra.mxu0 0
      %653 = vmatprep.subr.bf16.mxu0 0
      %654 = vmatpush1.bf16.msra.mxu0 0
      %655 = vmatprep.subr.bf16.mxu0 0
      %656 = vmatpush1.bf16.msra.mxu0 0
      %657 = vmatprep.subr.bf16.mxu0 0
      %658 = vmatpush1.bf16.msra.mxu0 0
      %659 = vmatprep.subr.bf16.mxu0 0
      %660 = vmatpush1.bf16.msra.mxu0 0
      %661 = vmatprep.subr.bf16.mxu0 0
      %662 = vmatpush1.bf16.msra.mxu0 0
      %663 = vmatprep.subr.bf16.mxu0 0
      %664 = vmatpush1.bf16.msra.mxu0 0
      %665 = vmatprep.subr.bf16.mxu0 0
      %666 = vmatpush1.bf16.msra.mxu0 0
      %667 = vmatprep.subr.bf16.mxu0 0
      %668 = vmatpush1.bf16.msra.mxu0 0
      %669 = vmatprep.subr.bf16.mxu0 0
      %670 = vmatpush1.bf16.msra.mxu0 0
      %671 = vmatprep.mubr.bf16.mxu0 0
      %672 = vmatmul.mubr.bf16.gmra.mrb[0].mxu0 %v637
      %v673 = vpop.f32.mrb[0].mxu0
      %v674 = vadd.f32 0.0, %v673
      %v675 = vpop.f32.mrb[0].mxu0
      %v676 = vpop.f32.mrb[0].mxu0
      %v677 = vadd.f32 0.0, %v676
      %v678 = vpop.f32.mrb[0].mxu0
      %679 = vdwg.mxu0
      %v680 = vadd.f32 %v579, %v674
      %v681 = vadd.f32 %v580, %v677
      %v682 = vld [vmem:[%s192] sm:$0x8]
      %s683 = scalar_lea.vmem %s1, 160
      %v684 = vld [vmem:[%s683] sm:$0xf]
      %v685 = vld [vmem:[%s683 + $0x4] sm:$0xf]
      %v686 = vld [vmem:[%s683 + $0x8] sm:$0xf]
      %v687 = vld [vmem:[%s683 + $0xc] sm:$0xf]
      %v688 = vld [vmem:[%s683 + $0x10] sm:$0xf]
      %v689 = vld [vmem:[%s683 + $0x14] sm:$0xf]
      %v690 = vld [vmem:[%s683 + $0x18] sm:$0xf]
      %v691 = vld [vmem:[%s683 + $0x1c] sm:$0xf]
      %v693 = vunpack.c.l.b16 %v682
      %v694 = vpack.c.b16 %v312, %v693
      %vm695 = vcmask 1044480
      %v696 = vrot.slane %v694, 3
      %v697 = vrot.slane %v593, 3
      %v698 = vsel %vm695, %v696, %v697
      %v707 = vunpack.c.l.b16 %v684
      %v708 = vunpack.c.l.b16 %v685
      %v709 = vunpack.c.l.b16 %v686
      %v710 = vunpack.c.l.b16 %v687
      %v711 = vunpack.c.l.b16 %v688
      %v712 = vunpack.c.l.b16 %v689
      %v713 = vunpack.c.l.b16 %v690
      %v714 = vunpack.c.l.b16 %v691
      %v715 = vpack.c.b16 %v708, %v707
      %v716 = vpack.c.b16 %v710, %v709
      %v717 = vpack.c.b16 %v712, %v711
      %v718 = vpack.c.b16 %v714, %v713
      %v724 = vsel %vm247, %v698, 0
      %726 = vmatprep.subr.bf16.mxu0 0
      %727 = vmatpush1.bf16.msra.mxu0 %v715
      %728 = vmatprep.subr.bf16.mxu0 0
      %729 = vmatpush1.bf16.msra.mxu0 %v716
      %730 = vmatprep.subr.bf16.mxu0 0
      %731 = vmatpush1.bf16.msra.mxu0 %v717
      %732 = vmatprep.subr.bf16.mxu0 0
      %733 = vmatpush1.bf16.msra.mxu0 %v718
      %734 = vmatprep.subr.bf16.mxu0 0
      %735 = vmatpush1.bf16.msra.mxu0 0
      %736 = vmatprep.subr.bf16.mxu0 0
      %737 = vmatpush1.bf16.msra.mxu0 0
      %738 = vmatprep.subr.bf16.mxu0 0
      %739 = vmatpush1.bf16.msra.mxu0 0
      %740 = vmatprep.subr.bf16.mxu0 0
      %741 = vmatpush1.bf16.msra.mxu0 0
      %742 = vmatprep.subr.bf16.mxu0 0
      %743 = vmatpush1.bf16.msra.mxu0 0
      %744 = vmatprep.subr.bf16.mxu0 0
      %745 = vmatpush1.bf16.msra.mxu0 0
      %746 = vmatprep.subr.bf16.mxu0 0
      %747 = vmatpush1.bf16.msra.mxu0 0
      %748 = vmatprep.subr.bf16.mxu0 0
      %749 = vmatpush1.bf16.msra.mxu0 0
      %750 = vmatprep.subr.bf16.mxu0 0
      %751 = vmatpush1.bf16.msra.mxu0 0
      %752 = vmatprep.subr.bf16.mxu0 0
      %753 = vmatpush1.bf16.msra.mxu0 0
      %754 = vmatprep.subr.bf16.mxu0 0
      %755 = vmatpush1.bf16.msra.mxu0 0
      %756 = vmatprep.subr.bf16.mxu0 0
      %757 = vmatpush1.bf16.msra.mxu0 0
      %758 = vmatprep.mubr.bf16.mxu0 0
      %759 = vmatmul.mubr.bf16.gmra.mrb[0].mxu0 %v724
      %v760 = vpop.f32.mrb[0].mxu0
      %v761 = vadd.f32 0.0, %v760
      %v762 = vpop.f32.mrb[0].mxu0
      %v763 = vpop.f32.mrb[0].mxu0
      %v764 = vadd.f32 0.0, %v763
      %v765 = vpop.f32.mrb[0].mxu0
      %766 = vdwg.mxu0
      %v767 = vsel %vm206, 0.0, %v761
      %v768 = vsel %vm207, 0.0, %v764
      %v769 = vadd.f32 %v680, %v767
      %v770 = vadd.f32 %v681, %v768
      %v771 = vld [vmem:[%s192 + $0x8] sm:$0xf]
      %s772 = scalar_lea.vmem %s1, 192
      %v773 = vld [vmem:[%s772] sm:$0xf]
      %v774 = vld [vmem:[%s772 + $0x4] sm:$0xf]
      %v775 = vld [vmem:[%s772 + $0x8] sm:$0xf]
      %v776 = vld [vmem:[%s772 + $0xc] sm:$0xf]
      %v777 = vld [vmem:[%s772 + $0x10] sm:$0xf]
      %v778 = vld [vmem:[%s772 + $0x14] sm:$0xf]
      %v779 = vld [vmem:[%s772 + $0x18] sm:$0xf]
      %v780 = vld [vmem:[%s772 + $0x1c] sm:$0xf]
      %v782 = vunpack.c.l.b16 %v771
      %v783 = vpack.c.b16 %v782, %v312
      %v792 = vunpack.c.l.b16 %v773
      %v793 = vunpack.c.l.b16 %v774
      %v794 = vunpack.c.l.b16 %v775
      %v795 = vunpack.c.l.b16 %v776
      %v796 = vunpack.c.l.b16 %v777
      %v797 = vunpack.c.l.b16 %v778
      %v798 = vunpack.c.l.b16 %v779
      %v799 = vunpack.c.l.b16 %v780
      %v800 = vpack.c.b16 %v793, %v792
      %v801 = vpack.c.b16 %v795, %v794
      %v802 = vpack.c.b16 %v797, %v796
      %v803 = vpack.c.b16 %v799, %v798
      %v809 = vsel %vm247, %v783, 0
      %811 = vmatprep.subr.bf16.mxu0 0
      %812 = vmatpush1.bf16.msra.mxu0 %v800
      %813 = vmatprep.subr.bf16.mxu0 0
      %814 = vmatpush1.bf16.msra.mxu0 %v801
      %815 = vmatprep.subr.bf16.mxu0 0
      %816 = vmatpush1.bf16.msra.mxu0 %v802
      %817 = vmatprep.subr.bf16.mxu0 0
      %818 = vmatpush1.bf16.msra.mxu0 %v803
      %819 = vmatprep.subr.bf16.mxu0 0
      %820 = vmatpush1.bf16.msra.mxu0 0
      %821 = vmatprep.subr.bf16.mxu0 0
      %822 = vmatpush1.bf16.msra.mxu0 0
      %823 = vmatprep.subr.bf16.mxu0 0
      %824 = vmatpush1.bf16.msra.mxu0 0
      %825 = vmatprep.subr.bf16.mxu0 0
      %826 = vmatpush1.bf16.msra.mxu0 0
      %827 = vmatprep.subr.bf16.mxu0 0
      %828 = vmatpush1.bf16.msra.mxu0 0
      %829 = vmatprep.subr.bf16.mxu0 0
      %830 = vmatpush1.bf16.msra.mxu0 0
      %831 = vmatprep.subr.bf16.mxu0 0
      %832 = vmatpush1.bf16.msra.mxu0 0
      %833 = vmatprep.subr.bf16.mxu0 0
      %834 = vmatpush1.bf16.msra.mxu0 0
      %835 = vmatprep.subr.bf16.mxu0 0
      %836 = vmatpush1.bf16.msra.mxu0 0
      %837 = vmatprep.subr.bf16.mxu0 0
      %838 = vmatpush1.bf16.msra.mxu0 0
      %839 = vmatprep.subr.bf16.mxu0 0
      %840 = vmatpush1.bf16.msra.mxu0 0
      %841 = vmatprep.subr.bf16.mxu0 0
      %842 = vmatpush1.bf16.msra.mxu0 0
      %843 = vmatprep.mubr.bf16.mxu0 0
      %844 = vmatmul.mubr.bf16.gmra.mrb[0].mxu0 %v809
      %v845 = vpop.f32.mrb[0].mxu0
      %v846 = vadd.f32 0.0, %v845
      %v847 = vpop.f32.mrb[0].mxu0
      %v848 = vpop.f32.mrb[0].mxu0
      %v849 = vadd.f32 0.0, %v848
      %v850 = vpop.f32.mrb[0].mxu0
      %851 = vdwg.mxu0
      %v852 = vsel %vm204, 0.0, %v846
      %v853 = vsel %vm205, 0.0, %v849
      %v854 = vadd.f32 %v769, %v852
      %v855 = vadd.f32 %v770, %v853
      %v856 = vld [vmem:[%s192 + $0x4] sm:$0xf]
      %v857 = vld [vmem:[%s192 + $0x8] sm:$0xf]
      %v858 = vld [vmem:[%s192 + $0xc] sm:$0x1]
      %s859 = scalar_lea.vmem %s1, 224
      %v860 = vld [vmem:[%s859] sm:$0xf]
      %v861 = vld [vmem:[%s859 + $0x4] sm:$0xf]
      %v862 = vld [vmem:[%s859 + $0x8] sm:$0xf]
      %v863 = vld [vmem:[%s859 + $0xc] sm:$0xf]
      %v864 = vld [vmem:[%s859 + $0x10] sm:$0xf]
      %v865 = vld [vmem:[%s859 + $0x14] sm:$0xf]
      %v866 = vld [vmem:[%s859 + $0x18] sm:$0xf]
      %v867 = vld [vmem:[%s859 + $0x1c] sm:$0xf]
      %v871 = vunpack.c.l.b16 %v856
      %v872 = vunpack.c.l.b16 %v857
      %v873 = vunpack.c.l.b16 %v858
      %v874 = vpack.c.b16 %v872, %v871
      %v875 = vpack.c.b16 %v873, %v873
      %v877 = vshrl.u32 %v874, 16
      %v879 = vshll.u32 %v874, 16
      %v881 = vrot.slane %v879, 1
      %v882 = vor.u32 %v877, %v881
      %v884 = vshll.u32 %v875, 16
      %v886 = vrot.slane %v884, 1
      %v887 = vsel %vm316, %v882, %v886
      %v896 = vunpack.c.l.b16 %v860
      %v897 = vunpack.c.l.b16 %v861
      %v898 = vunpack.c.l.b16 %v862
      %v899 = vunpack.c.l.b16 %v863
      %v900 = vunpack.c.l.b16 %v864
      %v901 = vunpack.c.l.b16 %v865
      %v902 = vunpack.c.l.b16 %v866
      %v903 = vunpack.c.l.b16 %v867
      %v904 = vpack.c.b16 %v897, %v896
      %v905 = vpack.c.b16 %v899, %v898
      %v906 = vpack.c.b16 %v901, %v900
      %v907 = vpack.c.b16 %v903, %v902
      %v913 = vsel %vm247, %v887, 0
      %915 = vmatprep.subr.bf16.mxu0 0
      %916 = vmatpush1.bf16.msra.mxu0 %v904
      %917 = vmatprep.subr.bf16.mxu0 0
      %918 = vmatpush1.bf16.msra.mxu0 %v905
      %919 = vmatprep.subr.bf16.mxu0 0
      %920 = vmatpush1.bf16.msra.mxu0 %v906
      %921 = vmatprep.subr.bf16.mxu0 0
      %922 = vmatpush1.bf16.msra.mxu0 %v907
      %923 = vmatprep.subr.bf16.mxu0 0
      %924 = vmatpush1.bf16.msra.mxu0 0
      %925 = vmatprep.subr.bf16.mxu0 0
      %926 = vmatpush1.bf16.msra.mxu0 0
      %927 = vmatprep.subr.bf16.mxu0 0
      %928 = vmatpush1.bf16.msra.mxu0 0
      %929 = vmatprep.subr.bf16.mxu0 0
      %930 = vmatpush1.bf16.msra.mxu0 0
      %931 = vmatprep.subr.bf16.mxu0 0
      %932 = vmatpush1.bf16.msra.mxu0 0
      %933 = vmatprep.subr.bf16.mxu0 0
      %934 = vmatpush1.bf16.msra.mxu0 0
      %935 = vmatprep.subr.bf16.mxu0 0
      %936 = vmatpush1.bf16.msra.mxu0 0
      %937 = vmatprep.subr.bf16.mxu0 0
      %938 = vmatpush1.bf16.msra.mxu0 0
      %939 = vmatprep.subr.bf16.mxu0 0
      %940 = vmatpush1.bf16.msra.mxu0 0
      %941 = vmatprep.subr.bf16.mxu0 0
      %942 = vmatpush1.bf16.msra.mxu0 0
      %943 = vmatprep.subr.bf16.mxu0 0
      %944 = vmatpush1.bf16.msra.mxu0 0
      %945 = vmatprep.subr.bf16.mxu0 0
      %946 = vmatpush1.bf16.msra.mxu0 0
      %947 = vmatprep.mubr.bf16.mxu0 0
      %948 = vmatmul.mubr.bf16.gmra.mrb[0].mxu0 %v913
      %v949 = vpop.f32.mrb[0].mxu0
      %v950 = vadd.f32 0.0, %v949
      %v951 = vpop.f32.mrb[0].mxu0
      %v952 = vpop.f32.mrb[0].mxu0
      %v953 = vadd.f32 0.0, %v952
      %v954 = vpop.f32.mrb[0].mxu0
      %955 = vdwg.mxu0
      %v956 = vadd.f32 %v854, %v950
      %v957 = vadd.f32 %v855, %v953
      %v958 = vld [vmem:[%s192 + $0x4] sm:$0xe]
      %s959 = scalar_lea.vmem %s1, 256
      %v960 = vld [vmem:[%s959] sm:$0xf]
      %v961 = vld [vmem:[%s959 + $0x4] sm:$0xf]
      %v962 = vld [vmem:[%s959 + $0x8] sm:$0xf]
      %v963 = vld [vmem:[%s959 + $0xc] sm:$0xf]
      %v964 = vld [vmem:[%s959 + $0x10] sm:$0xf]
      %v965 = vld [vmem:[%s959 + $0x14] sm:$0xf]
      %v966 = vld [vmem:[%s959 + $0x18] sm:$0xf]
      %v967 = vld [vmem:[%s959 + $0x1c] sm:$0xf]
      %v969 = vunpack.c.l.b16 %v958
      %v970 = vpack.c.b16 %v872, %v969
      %v971 = vrot.slane %v970, 1
      %v972 = vrot.slane %v875, 1
      %v973 = vsel %vm412, %v971, %v972
      %v982 = vunpack.c.l.b16 %v960
      %v983 = vunpack.c.l.b16 %v961
      %v984 = vunpack.c.l.b16 %v962
      %v985 = vunpack.c.l.b16 %v963
      %v986 = vunpack.c.l.b16 %v964
      %v987 = vunpack.c.l.b16 %v965
      %v988 = vunpack.c.l.b16 %v966
      %v989 = vunpack.c.l.b16 %v967
      %v990 = vpack.c.b16 %v983, %v982
      %v991 = vpack.c.b16 %v985, %v984
      %v992 = vpack.c.b16 %v987, %v986
      %v993 = vpack.c.b16 %v989, %v988
      %v999 = vsel %vm247, %v973, 0
      %1001 = vmatprep.subr.bf16.mxu0 0
      %1002 = vmatpush1.bf16.msra.mxu0 %v990
      %1003 = vmatprep.subr.bf16.mxu0 0
      %1004 = vmatpush1.bf16.msra.mxu0 %v991
      %1005 = vmatprep.subr.bf16.mxu0 0
      %1006 = vmatpush1.bf16.msra.mxu0 %v992
      %1007 = vmatprep.subr.bf16.mxu0 0
      %1008 = vmatpush1.bf16.msra.mxu0 %v993
      %1009 = vmatprep.subr.bf16.mxu0 0
      %1010 = vmatpush1.bf16.msra.mxu0 0
      %1011 = vmatprep.subr.bf16.mxu0 0
      %1012 = vmatpush1.bf16.msra.mxu0 0
      %1013 = vmatprep.subr.bf16.mxu0 0
      %1014 = vmatpush1.bf16.msra.mxu0 0
      %1015 = vmatprep.subr.bf16.mxu0 0
      %1016 = vmatpush1.bf16.msra.mxu0 0
      %1017 = vmatprep.subr.bf16.mxu0 0
      %1018 = vmatpush1.bf16.msra.mxu0 0
      %1019 = vmatprep.subr.bf16.mxu0 0
      %1020 = vmatpush1.bf16.msra.mxu0 0
      %1021 = vmatprep.subr.bf16.mxu0 0
      %1022 = vmatpush1.bf16.msra.mxu0 0
      %1023 = vmatprep.subr.bf16.mxu0 0
      %1024 = vmatpush1.bf16.msra.mxu0 0
      %1025 = vmatprep.subr.bf16.mxu0 0
      %1026 = vmatpush1.bf16.msra.mxu0 0
      %1027 = vmatprep.subr.bf16.mxu0 0
      %1028 = vmatpush1.bf16.msra.mxu0 0
      %1029 = vmatprep.subr.bf16.mxu0 0
      %1030 = vmatpush1.bf16.msra.mxu0 0
      %1031 = vmatprep.subr.bf16.mxu0 0
      %1032 = vmatpush1.bf16.msra.mxu0 0
      %1033 = vmatprep.mubr.bf16.mxu0 0
      %1034 = vmatmul.mubr.bf16.gmra.mrb[0].mxu0 %v999
      %v1035 = vpop.f32.mrb[0].mxu0
      %v1036 = vadd.f32 0.0, %v1035
      %v1037 = vpop.f32.mrb[0].mxu0
      %v1038 = vpop.f32.mrb[0].mxu0
      %v1039 = vadd.f32 0.0, %v1038
      %v1040 = vpop.f32.mrb[0].mxu0
      %1041 = vdwg.mxu0
      %v1042 = vsel %vm206, 0.0, %v1036
      %v1043 = vsel %vm207, 0.0, %v1039
      %v1044 = vadd.f32 %v956, %v1042
      %v1045 = vadd.f32 %v957, %v1043
      %v1046 = vld [vmem:[%s2] sm:$0x1]
      %v1048 = vlaneseq
      %v1049 = vshrl.u32 %v1048, 7
      %v1050 = vsub.s32 0, %v1049
      %v1051 = vrot.slane %v1046, %v1050
      %v1053 = vmul.f32 %v1044, %v1051
      %v1054 = vmul.f32 %v1045, %v1051
      %v1055 = vld [vmem:[%s3] sm:$0x1]
      %v1057 = vlaneseq
      %v1058 = vshrl.u32 %v1057, 7
      %v1059 = vsub.s32 0, %v1058
      %v1060 = vrot.slane %v1055, %v1059
      %v1062 = vadd.f32 %v1053, %v1060
      %v1063 = vadd.f32 %v1054, %v1060
      %v1064 = vmax.f32 %v1062, 0.0
      %v1065 = vmax.f32 %v1063, 0.0
      %v1066 = vpack.c.bf16 %v1065, %v1064
      %v1068 = vunpack.c.l.b16 %v1066
      %v1069 = vunpack.c.h.b16 %v1066
      %v1070 = vpack.c.b16 %v1068, %v1068
      %v1071 = vpack.c.b16 %v1069, %v1069
      %1074 = vst [vmem:[%s197] sm:$0xf] %v1070
      %1075 = vst [vmem:[%s197 + $0x4] sm:$0xf] %v1071
      %p1076 = scmp.lt.s32.totalorder %s15, 1
      %s1077 = scalar_select %p1076, %s15, 1
      %s1078 = smul.addr %s1077, 2
      %s1079 = smul.addr %s1078, 4
      %s1080 = scalar_lea.vmem %s4, %s1079
      // Predicated region
      $region37: #{_forward_impl.14} parent=35 // pred_check
        %p1081 = pneg %p122
      $region38: #{_forward_impl.14} parent=35 // pred_check_branch
        %1083 = sbr.rel (%p1081) target = $region40
      $region39: #{_forward_impl.14} parent=35 // pred_region
        _
      $region40: #{_forward_impl.14} parent=35 // pred_fallthru
        _
    $region36: #{_forward_impl.14} parent=5 // pred_fallthru
      _
    %p1084 = scmp.le.s32.totalorder 2, %s10
    // Predicated region
    $region41: #{_forward_impl.14} parent=5 // pred_check
      %p1085 = pneg %p1084
    $region42: #{_forward_impl.14} parent=5 // pred_check_branch
      %1087 = sbr.rel (%p1085) target = $region44
    $region43: #{_forward_impl.14} parent=5 // pred_region
      %s1088 = ssub.s32 %s10, 2
      // Predicated region
      $region45: #{_forward_impl.14} parent=43 // pred_check
        %p1089 = pneg %p128
      $region46: #{_forward_impl.14} parent=43 // pred_check_branch
        %1091 = sbr.rel (%p1089) target = $region48
      $region47: #{_forward_impl.14} parent=43 // pred_region
        %p1092 = scmp.lt.s32.totalorder %s16, 1
        %s1093 = scalar_select %p1092, %s16, 1
        %s1094 = smul.addr %s1093, 2
        %s1095 = smul.addr %s1094, 4
        %s1096 = scalar_lea.vmem %s4, %s1095
      $region48: #{_forward_impl.14} parent=43 // pred_fallthru
        _
    $region44: #{_forward_impl.14} parent=5 // pred_fallthru
      _
  $region6: #{_forward_impl.14} parent=0 // loop_footer
    %s14 = sadd.s32 1, %s10
  $region7: #{_forward_impl.14} parent=0 // loop_footer_branch
    %9 = sbr.rel target = $region3
  $region8: #{_forward_impl.14} parent=0 // loop_exit
    _

// kernel: _forward_impl.10
$region0: #{_forward_impl.10}
  #allocation0 [shape = 'u32[]', space=smem, size = 0x4, offset = 0x4, fixed_abs, tag = 'smem constant byte address 0x4 - core index']
  #allocation1 [shape = 'u32[144,128]{1,0:T(1,128)}', space=vmem, size = 0x12000, scoped, tag = 'internal scratch']
  %s0 = inlined_call_operand.vmem [shape: bf16[2,290,1], index: 0, kind: input, shape index: {}]
  %s1 = inlined_call_operand.vmem [shape: bf16[9,1,32], index: 1, kind: input, shape index: {}]
  %s2 = inlined_call_operand.vmem [shape: f32[1,32], index: 2, kind: input, shape index: {}]
  %s3 = inlined_call_operand.vmem [shape: f32[1,32], index: 3, kind: input, shape index: {}]
  %s4 = inlined_call_operand.vmem [shape: bf16[2,256,32], index: 4, kind: output, shape index: {}]
  %s5 = sld [smem:[#allocation0]]
  $region49: #{_forward_impl.10} parent=0
    _
  %s7 = ssub.s32 1, %s5
  %s8 = scalar_select 0, %s7, %s5
  loop: start=0, step=1, limit=4
  $region2: #{_forward_impl.10} parent=0 // loop_pre_header
    _
  $region3: #{_forward_impl.10} parent=0 // loop_header
    %s10 = sphi 0, %s14
    %p11 = scmp.ge.s32.totalorder %s10, 4
    %s20 = sphi 0, %s22
    %s23 = sphi 0, %s20
    %s24 = sphi 0, %s23
    %s40 = sphi 0, %s24
    %s44 = sphi 0, %s44
    %s46 = sphi 0, %s44
    %s47 = sphi 0, %s46
    %s61 = sphi 0, %s47
    %s65 = sphi 0, %s65
    %s67 = sphi 0, %s65
    %s68 = sphi 0, %s67
    %s82 = sphi 0, %s68
    %s86 = sphi 0, %s86
    %s88 = sphi 0, %s86
    %s89 = sphi 0, %s88
    %s103 = sphi 0, %s89
    %s109 = sphi 0, %s111
    %s112 = sphi 0, %s109
    %s113 = sphi 0, %s112
    %s129 = sphi 0, %s113
  $region4: #{_forward_impl.10} parent=0 // loop_header_branch
    %13 = sbr.rel (%p11) target = $region8
  $region5: #{_forward_impl.10} parent=0 // loop_body
    %s15 = ssub.s32 %s10, 1
    %s16 = ssub.s32 %s10, 2
    %s17 = sadd.s32 %s10, 1
    %s18 = ssub.s32 %s10, %s17
    %p19 = scmp.eq.s32.totalorder %s18, 0
    %s21 = sadd.s32 %s20, 1
    %s22 = scalar_select %p19, %s20, %s21
    %p25 = pneg %p19
    %p26 = scmp.eq.s32.totalorder %s10, 1
    %p27 = por %p25, %p26
    %p28 = scmp.ne.s32.totalorder %s20, %s23
    %p29 = scmp.eq.s32.totalorder %s10, 0
    %p30 = por %p28, %p29
    %p31 = scmp.ne.s32.totalorder %s20, %s23
    %p32 = scmp.eq.s32.totalorder %s15, 1
    %p33 = por %p31, %p32
    %p34 = scmp.ne.s32.totalorder %s23, %s24
    %p35 = scmp.eq.s32.totalorder %s15, 0
    %p36 = por %p34, %p35
    %p37 = scmp.ne.s32.totalorder %s23, %s24
    %p38 = scmp.eq.s32.totalorder %s16, 1
    %p39 = por %p37, %p38
    %p41 = scmp.ne.s32.totalorder %s24, %s40
    %p42 = scmp.eq.s32.totalorder %s16, 0
    %p43 = por %p41, %p42
    %s45 = sadd.s32 %s44, 1
    %p48 = scmp.eq.s32.totalorder %s10, 1
    %p49 = scmp.ne.s32.totalorder %s44, %s46
    %p50 = scmp.eq.s32.totalorder %s10, 0
    %p51 = por %p49, %p50
    %p52 = scmp.ne.s32.totalorder %s44, %s46
    %p53 = scmp.eq.s32.totalorder %s15, 1
    %p54 = por %p52, %p53
    %p55 = scmp.ne.s32.totalorder %s46, %s47
    %p56 = scmp.eq.s32.totalorder %s15, 0
    %p57 = por %p55, %p56
    %p58 = scmp.ne.s32.totalorder %s46, %s47
    %p59 = scmp.eq.s32.totalorder %s16, 1
    %p60 = por %p58, %p59
    %p62 = scmp.ne.s32.totalorder %s47, %s61
    %p63 = scmp.eq.s32.totalorder %s16, 0
    %p64 = por %p62, %p63
    %s66 = sadd.s32 %s65, 1
    %p69 = scmp.eq.s32.totalorder %s10, 1
    %p70 = scmp.ne.s32.totalorder %s65, %s67
    %p71 = scmp.eq.s32.totalorder %s10, 0
    %p72 = por %p70, %p71
    %p73 = scmp.ne.s32.totalorder %s65, %s67
    %p74 = scmp.eq.s32.totalorder %s15, 1
    %p75 = por %p73, %p74
    %p76 = scmp.ne.s32.totalorder %s67, %s68
    %p77 = scmp.eq.s32.totalorder %s15, 0
    %p78 = por %p76, %p77
    %p79 = scmp.ne.s32.totalorder %s67, %s68
    %p80 = scmp.eq.s32.totalorder %s16, 1
    %p81 = por %p79, %p80
    %p83 = scmp.ne.s32.totalorder %s68, %s82
    %p84 = scmp.eq.s32.totalorder %s16, 0
    %p85 = por %p83, %p84
    %s87 = sadd.s32 %s86, 1
    %p90 = scmp.eq.s32.totalorder %s10, 1
    %p91 = scmp.ne.s32.totalorder %s86, %s88
    %p92 = scmp.eq.s32.totalorder %s10, 0
    %p93 = por %p91, %p92
    %p94 = scmp.ne.s32.totalorder %s86, %s88
    %p95 = scmp.eq.s32.totalorder %s15, 1
    %p96 = por %p94, %p95
    %p97 = scmp.ne.s32.totalorder %s88, %s89
    %p98 = scmp.eq.s32.totalorder %s15, 0
    %p99 = por %p97, %p98
    %p100 = scmp.ne.s32.totalorder %s88, %s89
    %p101 = scmp.eq.s32.totalorder %s16, 1
    %p102 = por %p100, %p101
    %p104 = scmp.ne.s32.totalorder %s89, %s103
    %p105 = scmp.eq.s32.totalorder %s16, 0
    %p106 = por %p104, %p105
    %s107 = ssub.s32 %s10, %s17
    %p108 = scmp.eq.s32.totalorder %s107, 0
    %s110 = sadd.s32 %s109, 1
    %s111 = scalar_select %p108, %s109, %s110
    %p114 = pneg %p108
    %p115 = scmp.eq.s32.totalorder %s10, 1
    %p116 = por %p114, %p115
    %p117 = scmp.ne.s32.totalorder %s109, %s112
    %p118 = scmp.eq.s32.totalorder %s10, 0
    %p119 = por %p117, %p118
    %p120 = scmp.ne.s32.totalorder %s109, %s112
    %p121 = scmp.eq.s32.totalorder %s15, 1
    %p122 = por %p120, %p121
    %p123 = scmp.ne.s32.totalorder %s112, %s113
    %p124 = scmp.eq.s32.totalorder %s15, 0
    %p125 = por %p123, %p124
    %p126 = scmp.ne.s32.totalorder %s112, %s113
    %p127 = scmp.eq.s32.totalorder %s16, 1
    %p128 = por %p126, %p127
    %p130 = scmp.ne.s32.totalorder %s113, %s129
    %p131 = scmp.eq.s32.totalorder %s16, 0
    %p132 = por %p130, %p131
    %p133 = scmp.le.s32.totalorder 1, %s10
    %p134 = scmp.lt.s32.totalorder %s10, 3
    %p135 = pnand %p133, %p134
    %p136 = pneg %p135
    // Predicated region
    $region9: #{_forward_impl.10} parent=5 // pred_check
      _
    $region10: #{_forward_impl.10} parent=5 // pred_check_branch
      %138 = sbr.rel (%p135) target = $region12
    $region11: #{_forward_impl.10} parent=5 // pred_region
      %s139 = ssub.s32 %s10, 1
      // Predicated region
      $region13: #{_forward_impl.10} parent=11 // pred_check
        %p140 = pneg %p57
      $region14: #{_forward_impl.10} parent=11 // pred_check_branch
        %142 = sbr.rel (%p140) target = $region16
      $region15: #{_forward_impl.10} parent=11 // pred_region
        _
      $region16: #{_forward_impl.10} parent=11 // pred_fallthru
        _
      // Predicated region
      $region17: #{_forward_impl.10} parent=11 // pred_check
        %p143 = pneg %p78
      $region18: #{_forward_impl.10} parent=11 // pred_check_branch
        %145 = sbr.rel (%p143) target = $region20
      $region19: #{_forward_impl.10} parent=11 // pred_region
        _
      $region20: #{_forward_impl.10} parent=11 // pred_fallthru
        _
      // Predicated region
      $region21: #{_forward_impl.10} parent=11 // pred_check
        %p146 = pneg %p99
      $region22: #{_forward_impl.10} parent=11 // pred_check_branch
        %148 = sbr.rel (%p146) target = $region24
      $region23: #{_forward_impl.10} parent=11 // pred_region
        _
      $region24: #{_forward_impl.10} parent=11 // pred_fallthru
        _
    $region12: #{_forward_impl.10} parent=5 // pred_fallthru
      _
    %p149 = scmp.lt.s32.totalorder %s10, 2
    // Predicated region
    $region25: #{_forward_impl.10} parent=5 // pred_check
      %p150 = pneg %p149
    $region26: #{_forward_impl.10} parent=5 // pred_check_branch
      %152 = sbr.rel (%p150) target = $region28
    $region27: #{_forward_impl.10} parent=5 // pred_region
      // Predicated region
      $region29: #{_forward_impl.10} parent=27 // pred_check
        %p153 = pneg %p30
      $region30: #{_forward_impl.10} parent=27 // pred_check_branch
        %155 = sbr.rel (%p153) target = $region32
      $region31: #{_forward_impl.10} parent=27 // pred_region
        %p156 = scmp.lt.s32.totalorder %s10, 1
        %s157 = scalar_select %p156, %s10, 1
        %s158 = smul.addr %s157, 37
        %s159 = smul.addr %s158, 4
        %s160 = scalar_lea.vmem %s0, %s159
      $region32: #{_forward_impl.10} parent=27 // pred_fallthru
        _
    $region28: #{_forward_impl.10} parent=5 // pred_fallthru
      _
    %p161 = scmp.le.s32.totalorder 1, %s10
    %p162 = scmp.lt.s32.totalorder %s10, 3
    %p163 = pnand %p161, %p162
    %p164 = pneg %p163
    // Predicated region
    $region33: #{_forward_impl.10} parent=5 // pred_check
      _
    $region34: #{_forward_impl.10} parent=5 // pred_check_branch
      %166 = sbr.rel (%p163) target = $region36
    $region35: #{_forward_impl.10} parent=5 // pred_region
      %s167 = ssub.s32 %s10, 1
      %p168 = scmp.lt.s32.totalorder %s15, 1
      %s169 = scalar_select %p168, %s15, 1
      %s170 = smul.addr %s169, 37
      %s171 = smul.addr %s170, 4
      %s172 = scalar_lea.vmem %s0, %s171
      %p173 = pneg %p36
      %p174 = pneg %p33
      %p175 = pneg %p57
      %p176 = pneg %p54
      %p177 = pneg %p78
      %p178 = pneg %p75
      %p179 = pneg %p99
      %p180 = pneg %p96
      %p181 = pneg %p125
      %p182 = pneg %p122
      %p183 = scmp.lt.s32.totalorder %s15, 1
      %s184 = scalar_select %p183, %s15, 1
      %s185 = smul.addr %s184, 32
      %s186 = smul.addr %s185, 4
      %s187 = scalar_lea.vmem %s4, %s186
      %p188 = scmp.lt.s32.totalorder %s15, 1
      %s189 = scalar_select %p188, %s15, 1
      %s190 = smul.addr %s189, 37
      %s191 = smul.addr %s190, 4
      %s192 = scalar_lea.vmem %s0, %s191
      %p193 = scmp.lt.s32.totalorder %s15, 1
      %s194 = scalar_select %p193, %s15, 1
      %s195 = smul.addr %s194, 32
      %s196 = smul.addr %s195, 4
      %s197 = scalar_lea.vmem %s4, %s196
      %v198 = vlaneseq
      %v199 = vshrl.u32 %v198, 7
      %v200 = vadd.s32 %v199, 8
      %v201 = vadd.s32 %v199, 16
      %v202 = vadd.s32 %v199, 24
      %v203 = vadd.s32 %v199, 32
      %v204 = vadd.s32 %v199, 40
      %v205 = vadd.s32 %v199, 48
      %v206 = vadd.s32 %v199, 56
      %v207 = vadd.s32 %v199, 64
      %v208 = vadd.s32 %v199, 72
      %v209 = vadd.s32 %v199, 80
      %v210 = vadd.s32 %v199, 88
      %v211 = vadd.s32 %v199, 96
      %v212 = vadd.s32 %v199, 104
      %v213 = vadd.s32 %v199, 112
      %v214 = vadd.s32 %v199, 120
      %v215 = vadd.s32 %v199, 128
      %v216 = vadd.s32 %v199, 136
      %v217 = vadd.s32 %v199, 144
      %v218 = vadd.s32 %v199, 152
      %v219 = vadd.s32 %v199, 160
      %v220 = vadd.s32 %v199, 168
      %v221 = vadd.s32 %v199, 176
      %v222 = vadd.s32 %v199, 184
      %v223 = vadd.s32 %v199, 192
      %v224 = vadd.s32 %v199, 200
      %v225 = vadd.s32 %v199, 208
      %v226 = vadd.s32 %v199, 216
      %v227 = vadd.s32 %v199, 224
      %v228 = vadd.s32 %v199, 232
      %v229 = vadd.s32 %v199, 240
      %v230 = vadd.s32 %v199, 248
      %v231 = vand.u32 %v199, 15
      %v232 = vand.u32 %v200, 15
      %v233 = vand.u32 %v201, 15
      %v234 = vand.u32 %v202, 15
      %v235 = vand.u32 %v203, 15
      %v236 = vand.u32 %v204, 15
      %v237 = vand.u32 %v205, 15
      %v238 = vand.u32 %v206, 15
      %v239 = vand.u32 %v207, 15
      %v240 = vand.u32 %v208, 15
      %v241 = vand.u32 %v209, 15
      %v242 = vand.u32 %v210, 15
      %v243 = vand.u32 %v211, 15
      %v244 = vand.u32 %v212, 15
      %v245 = vand.u32 %v213, 15
      %v246 = vand.u32 %v214, 15
      %v247 = vand.u32 %v215, 15
      %v248 = vand.u32 %v216, 15
      %v249 = vand.u32 %v217, 15
      %v250 = vand.u32 %v218, 15
      %v251 = vand.u32 %v219, 15
      %v252 = vand.u32 %v220, 15
      %v253 = vand.u32 %v221, 15
      %v254 = vand.u32 %v222, 15
      %v255 = vand.u32 %v223, 15
      %v256 = vand.u32 %v224, 15
      %v257 = vand.u32 %v225, 15
      %v258 = vand.u32 %v226, 15
      %v259 = vand.u32 %v227, 15
      %v260 = vand.u32 %v228, 15
      %v261 = vand.u32 %v229, 15
      %v262 = vand.u32 %v230, 15
      %vm263 = vcmp.eq.s32.totalorder %v231, 0
      %vm264 = vcmp.eq.s32.totalorder %v232, 0
      %vm265 = vcmp.eq.s32.totalorder %v233, 0
      %vm266 = vcmp.eq.s32.totalorder %v234, 0
      %vm267 = vcmp.eq.s32.totalorder %v235, 0
      %vm268 = vcmp.eq.s32.totalorder %v236, 0
      %vm269 = vcmp.eq.s32.totalorder %v237, 0
      %vm270 = vcmp.eq.s32.totalorder %v238, 0
      %vm271 = vcmp.eq.s32.totalorder %v239, 0
      %vm272 = vcmp.eq.s32.totalorder %v240, 0
      %vm273 = vcmp.eq.s32.totalorder %v241, 0
      %vm274 = vcmp.eq.s32.totalorder %v242, 0
      %vm275 = vcmp.eq.s32.totalorder %v243, 0
      %vm276 = vcmp.eq.s32.totalorder %v244, 0
      %vm277 = vcmp.eq.s32.totalorder %v245, 0
      %vm278 = vcmp.eq.s32.totalorder %v246, 0
      %vm279 = vcmp.eq.s32.totalorder %v247, 0
      %vm280 = vcmp.eq.s32.totalorder %v248, 0
      %vm281 = vcmp.eq.s32.totalorder %v249, 0
      %vm282 = vcmp.eq.s32.totalorder %v250, 0
      %vm283 = vcmp.eq.s32.totalorder %v251, 0
      %vm284 = vcmp.eq.s32.totalorder %v252, 0
      %vm285 = vcmp.eq.s32.totalorder %v253, 0
      %vm286 = vcmp.eq.s32.totalorder %v254, 0
      %vm287 = vcmp.eq.s32.totalorder %v255, 0
      %vm288 = vcmp.eq.s32.totalorder %v256, 0
      %vm289 = vcmp.eq.s32.totalorder %v257, 0
      %vm290 = vcmp.eq.s32.totalorder %v258, 0
      %vm291 = vcmp.eq.s32.totalorder %v259, 0
      %vm292 = vcmp.eq.s32.totalorder %v260, 0
      %vm293 = vcmp.eq.s32.totalorder %v261, 0
      %vm294 = vcmp.eq.s32.totalorder %v262, 0
      %vm295 = vcmp.eq.s32.totalorder %v231, 15
      %vm296 = vcmp.eq.s32.totalorder %v232, 15
      %vm297 = vcmp.eq.s32.totalorder %v233, 15
      %vm298 = vcmp.eq.s32.totalorder %v234, 15
      %vm299 = vcmp.eq.s32.totalorder %v235, 15
      %vm300 = vcmp.eq.s32.totalorder %v236, 15
      %vm301 = vcmp.eq.s32.totalorder %v237, 15
      %vm302 = vcmp.eq.s32.totalorder %v238, 15
      %vm303 = vcmp.eq.s32.totalorder %v239, 15
      %vm304 = vcmp.eq.s32.totalorder %v240, 15
      %vm305 = vcmp.eq.s32.totalorder %v241, 15
      %vm306 = vcmp.eq.s32.totalorder %v242, 15
      %vm307 = vcmp.eq.s32.totalorder %v243, 15
      %vm308 = vcmp.eq.s32.totalorder %v244, 15
      %vm309 = vcmp.eq.s32.totalorder %v245, 15
      %vm310 = vcmp.eq.s32.totalorder %v246, 15
      %vm311 = vcmp.eq.s32.totalorder %v247, 15
      %vm312 = vcmp.eq.s32.totalorder %v248, 15
      %vm313 = vcmp.eq.s32.totalorder %v249, 15
      %vm314 = vcmp.eq.s32.totalorder %v250, 15
      %vm315 = vcmp.eq.s32.totalorder %v251, 15
      %vm316 = vcmp.eq.s32.totalorder %v252, 15
      %vm317 = vcmp.eq.s32.totalorder %v253, 15
      %vm318 = vcmp.eq.s32.totalorder %v254, 15
      %vm319 = vcmp.eq.s32.totalorder %v255, 15
      %vm320 = vcmp.eq.s32.totalorder %v256, 15
      %vm321 = vcmp.eq.s32.totalorder %v257, 15
      %vm322 = vcmp.eq.s32.totalorder %v258, 15
      %vm323 = vcmp.eq.s32.totalorder %v259, 15
      %vm324 = vcmp.eq.s32.totalorder %v260, 15
      %vm325 = vcmp.eq.s32.totalorder %v261, 15
      %vm326 = vcmp.eq.s32.totalorder %v262, 15
      %v327 = vld [vmem:[%s192] sm:$0xf]
      %v328 = vld [vmem:[%s192 + $0x4] sm:$0xf]
      %v329 = vld [vmem:[%s192 + $0x8] sm:$0xf]
      %v330 = vld [vmem:[%s192 + $0xc] sm:$0xf]
      %v331 = vld [vmem:[%s192 + $0x10] sm:$0xf]
      %v332 = vld [vmem:[%s192 + $0x14] sm:$0xf]
      %v333 = vld [vmem:[%s192 + $0x18] sm:$0xf]
      %v334 = vld [vmem:[%s192 + $0x1c] sm:$0xf]
      %v335 = vld [vmem:[%s192 + $0x20] sm:$0xf]
      %v336 = vld [vmem:[%s192 + $0x24] sm:$0xf]
      %v337 = vld [vmem:[%s192 + $0x28] sm:$0xf]
      %v338 = vld [vmem:[%s192 + $0x2c] sm:$0xf]
      %v339 = vld [vmem:[%s192 + $0x30] sm:$0xf]
      %v340 = vld [vmem:[%s192 + $0x34] sm:$0xf]
      %v341 = vld [vmem:[%s192 + $0x38] sm:$0xf]
      %v342 = vld [vmem:[%s192 + $0x3c] sm:$0xf]
      %v343 = vld [vmem:[%s192 + $0x40] sm:$0xf]
      %v344 = vld [vmem:[%s192 + $0x44] sm:$0xf]
      %v345 = vld [vmem:[%s192 + $0x48] sm:$0xf]
      %v346 = vld [vmem:[%s192 + $0x4c] sm:$0xf]
      %v347 = vld [vmem:[%s192 + $0x50] sm:$0xf]
      %v348 = vld [vmem:[%s192 + $0x54] sm:$0xf]
      %v349 = vld [vmem:[%s192 + $0x58] sm:$0xf]
      %v350 = vld [vmem:[%s192 + $0x5c] sm:$0xf]
      %v351 = vld [vmem:[%s192 + $0x60] sm:$0xf]
      %v352 = vld [vmem:[%s192 + $0x64] sm:$0xf]
      %v353 = vld [vmem:[%s192 + $0x68] sm:$0xf]
      %v354 = vld [vmem:[%s192 + $0x6c] sm:$0xf]
      %v355 = vld [vmem:[%s192 + $0x70] sm:$0xf]
      %v356 = vld [vmem:[%s192 + $0x74] sm:$0xf]
      %v357 = vld [vmem:[%s192 + $0x78] sm:$0xf]
      %v358 = vld [vmem:[%s192 + $0x7c] sm:$0xf]
      %v359 = vld [vmem:[%s1] sm:$0x1]
      %v360 = vunpack.c.l.bf16 %v327
      %v361 = vunpack.c.l.bf16 %v328
      %v362 = vunpack.c.l.bf16 %v329
      %v363 = vunpack.c.l.bf16 %v330
      %v364 = vunpack.c.l.bf16 %v331
      %v365 = vunpack.c.l.bf16 %v332
      %v366 = vunpack.c.l.bf16 %v333
      %v367 = vunpack.c.l.bf16 %v334
      %v368 = vunpack.c.l.bf16 %v335
      %v369 = vunpack.c.l.bf16 %v336
      %v370 = vunpack.c.l.bf16 %v337
      %v371 = vunpack.c.l.bf16 %v338
      %v372 = vunpack.c.l.bf16 %v339
      %v373 = vunpack.c.l.bf16 %v340
      %v374 = vunpack.c.l.bf16 %v341
      %v375 = vunpack.c.l.bf16 %v342
      %v376 = vunpack.c.l.bf16 %v343
      %v377 = vunpack.c.l.bf16 %v344
      %v378 = vunpack.c.l.bf16 %v345
      %v379 = vunpack.c.l.bf16 %v346
      %v380 = vunpack.c.l.bf16 %v347
      %v381 = vunpack.c.l.bf16 %v348
      %v382 = vunpack.c.l.bf16 %v349
      %v383 = vunpack.c.l.bf16 %v350
      %v384 = vunpack.c.l.bf16 %v351
      %v385 = vunpack.c.l.bf16 %v352
      %v386 = vunpack.c.l.bf16 %v353
      %v387 = vunpack.c.l.bf16 %v354
      %v388 = vunpack.c.l.bf16 %v355
      %v389 = vunpack.c.l.bf16 %v356
      %v390 = vunpack.c.l.bf16 %v357
      %v391 = vunpack.c.l.bf16 %v358
      %v392 = vunpack.c.l.bf16 %v359
      %394 = vset.pattern.permute.xlu0 0
      %395 = vperm.xlu0 %394, %v360
      %v396 = vpop.permute.xlu0 %395
      %399 = vset.pattern.permute.xlu0 0
      %400 = vperm.xlu0 %399, %v361
      %v401 = vpop.permute.xlu0 %400
      %404 = vset.pattern.permute.xlu0 0
      %405 = vperm.xlu0 %404, %v362
      %v406 = vpop.permute.xlu0 %405
      %409 = vset.pattern.permute.xlu0 0
      %410 = vperm.xlu0 %409, %v363
      %v411 = vpop.permute.xlu0 %410
      %414 = vset.pattern.permute.xlu0 0
      %415 = vperm.xlu0 %414, %v364
      %v416 = vpop.permute.xlu0 %415
      %419 = vset.pattern.permute.xlu0 0
      %420 = vperm.xlu0 %419, %v365
      %v421 = vpop.permute.xlu0 %420
      %424 = vset.pattern.permute.xlu0 0
      %425 = vperm.xlu0 %424, %v366
      %v426 = vpop.permute.xlu0 %425
      %429 = vset.pattern.permute.xlu0 0
      %430 = vperm.xlu0 %429, %v367
      %v431 = vpop.permute.xlu0 %430
      %434 = vset.pattern.permute.xlu0 0
      %435 = vperm.xlu0 %434, %v368
      %v436 = vpop.permute.xlu0 %435
      %439 = vset.pattern.permute.xlu0 0
      %440 = vperm.xlu0 %439, %v369
      %v441 = vpop.permute.xlu0 %440
      %444 = vset.pattern.permute.xlu0 0
      %445 = vperm.xlu0 %444, %v370
      %v446 = vpop.permute.xlu0 %445
      %449 = vset.pattern.permute.xlu0 0
      %450 = vperm.xlu0 %449, %v371
      %v451 = vpop.permute.xlu0 %450
      %454 = vset.pattern.permute.xlu0 0
      %455 = vperm.xlu0 %454, %v372
      %v456 = vpop.permute.xlu0 %455
      %459 = vset.pattern.permute.xlu0 0
      %460 = vperm.xlu0 %459, %v373
      %v461 = vpop.permute.xlu0 %460
      %464 = vset.pattern.permute.xlu0 0
      %465 = vperm.xlu0 %464, %v374
      %v466 = vpop.permute.xlu0 %465
      %469 = vset.pattern.permute.xlu0 0
      %470 = vperm.xlu0 %469, %v375
      %v471 = vpop.permute.xlu0 %470
      %474 = vset.pattern.permute.xlu0 0
      %475 = vperm.xlu0 %474, %v376
      %v476 = vpop.permute.xlu0 %475
      %479 = vset.pattern.permute.xlu0 0
      %480 = vperm.xlu0 %479, %v377
      %v481 = vpop.permute.xlu0 %480
      %484 = vset.pattern.permute.xlu0 0
      %485 = vperm.xlu0 %484, %v378
      %v486 = vpop.permute.xlu0 %485
      %489 = vset.pattern.permute.xlu0 0
      %490 = vperm.xlu0 %489, %v379
      %v491 = vpop.permute.xlu0 %490
      %494 = vset.pattern.permute.xlu0 0
      %495 = vperm.xlu0 %494, %v380
      %v496 = vpop.permute.xlu0 %495
      %499 = vset.pattern.permute.xlu0 0
      %500 = vperm.xlu0 %499, %v381
      %v501 = vpop.permute.xlu0 %500
      %504 = vset.pattern.permute.xlu0 0
      %505 = vperm.xlu0 %504, %v382
      %v506 = vpop.permute.xlu0 %505
      %509 = vset.pattern.permute.xlu0 0
      %510 = vperm.xlu0 %509, %v383
      %v511 = vpop.permute.xlu0 %510
      %514 = vset.pattern.permute.xlu0 0
      %515 = vperm.xlu0 %514, %v384
      %v516 = vpop.permute.xlu0 %515
      %519 = vset.pattern.permute.xlu0 0
      %520 = vperm.xlu0 %519, %v385
      %v521 = vpop.permute.xlu0 %520
      %524 = vset.pattern.permute.xlu0 0
      %525 = vperm.xlu0 %524, %v386
      %v526 = vpop.permute.xlu0 %525
      %529 = vset.pattern.permute.xlu0 0
      %530 = vperm.xlu0 %529, %v387
      %v531 = vpop.permute.xlu0 %530
      %534 = vset.pattern.permute.xlu0 0
      %535 = vperm.xlu0 %534, %v388
      %v536 = vpop.permute.xlu0 %535
      %539 = vset.pattern.permute.xlu0 0
      %540 = vperm.xlu0 %539, %v389
      %v541 = vpop.permute.xlu0 %540
      %544 = vset.pattern.permute.xlu0 0
      %545 = vperm.xlu0 %544, %v390
      %v546 = vpop.permute.xlu0 %545
      %549 = vset.pattern.permute.xlu0 0
      %550 = vperm.xlu0 %549, %v391
      %v551 = vpop.permute.xlu0 %550
      %v553 = vlaneseq
      %v554 = vshrl.u32 %v553, 7
      %v555 = vsub.s32 0, %v554
      %v556 = vrot.slane %v392, %v555
      %v557 = vmul.f32 %v396, %v556
      %v558 = vmul.f32 %v401, %v556
      %v559 = vmul.f32 %v406, %v556
      %v560 = vmul.f32 %v411, %v556
      %v561 = vmul.f32 %v416, %v556
      %v562 = vmul.f32 %v421, %v556
      %v563 = vmul.f32 %v426, %v556
      %v564 = vmul.f32 %v431, %v556
      %v565 = vmul.f32 %v436, %v556
      %v566 = vmul.f32 %v441, %v556
      %v567 = vmul.f32 %v446, %v556
      %v568 = vmul.f32 %v451, %v556
      %v569 = vmul.f32 %v456, %v556
      %v570 = vmul.f32 %v461, %v556
      %v571 = vmul.f32 %v466, %v556
      %v572 = vmul.f32 %v471, %v556
      %v573 = vmul.f32 %v476, %v556
      %v574 = vmul.f32 %v481, %v556
      %v575 = vmul.f32 %v486, %v556
      %v576 = vmul.f32 %v491, %v556
      %v577 = vmul.f32 %v496, %v556
      %v578 = vmul.f32 %v501, %v556
      %v579 = vmul.f32 %v506, %v556
      %v580 = vmul.f32 %v511, %v556
      %v581 = vmul.f32 %v516, %v556
      %v582 = vmul.f32 %v521, %v556
      %v583 = vmul.f32 %v526, %v556
      %v584 = vmul.f32 %v531, %v556
      %v585 = vmul.f32 %v536, %v556
      %v586 = vmul.f32 %v541, %v556
      %v587 = vmul.f32 %v546, %v556
      %v588 = vmul.f32 %v551, %v556
      %v589 = vsel %vm263, 0.0, %v557
      %v590 = vsel %vm264, 0.0, %v558
      %v591 = vsel %vm265, 0.0, %v559
      %v592 = vsel %vm266, 0.0, %v560
      %v593 = vsel %vm267, 0.0, %v561
      %v594 = vsel %vm268, 0.0, %v562
      %v595 = vsel %vm269, 0.0, %v563
      %v596 = vsel %vm270, 0.0, %v564
      %v597 = vsel %vm271, 0.0, %v565
      %v598 = vsel %vm272, 0.0, %v566
      %v599 = vsel %vm273, 0.0, %v567
      %v600 = vsel %vm274, 0.0, %v568
      %v601 = vsel %vm275, 0.0, %v569
      %v602 = vsel %vm276, 0.0, %v570
      %v603 = vsel %vm277, 0.0, %v571
      %v604 = vsel %vm278, 0.0, %v572
      %v605 = vsel %vm279, 0.0, %v573
      %v606 = vsel %vm280, 0.0, %v574
      %v607 = vsel %vm281, 0.0, %v575
      %v608 = vsel %vm282, 0.0, %v576
      %v609 = vsel %vm283, 0.0, %v577
      %v610 = vsel %vm284, 0.0, %v578
      %v611 = vsel %vm285, 0.0, %v579
      %v612 = vsel %vm286, 0.0, %v580
      %v613 = vsel %vm287, 0.0, %v581
      %v614 = vsel %vm288, 0.0, %v582
      %v615 = vsel %vm289, 0.0, %v583
      %v616 = vsel %vm290, 0.0, %v584
      %v617 = vsel %vm291, 0.0, %v585
      %v618 = vsel %vm292, 0.0, %v586
      %v619 = vsel %vm293, 0.0, %v587
      %v620 = vsel %vm294, 0.0, %v588
      %v621 = vadd.f32 %v589, 0.0
      %v622 = vadd.f32 %v590, 0.0
      %v623 = vadd.f32 %v591, 0.0
      %v624 = vadd.f32 %v592, 0.0
      %v625 = vadd.f32 %v593, 0.0
      %v626 = vadd.f32 %v594, 0.0
      %v627 = vadd.f32 %v595, 0.0
      %v628 = vadd.f32 %v596, 0.0
      %v629 = vadd.f32 %v597, 0.0
      %v630 = vadd.f32 %v598, 0.0
      %v631 = vadd.f32 %v599, 0.0
      %v632 = vadd.f32 %v600, 0.0
      %v633 = vadd.f32 %v601, 0.0
      %v634 = vadd.f32 %v602, 0.0
      %v635 = vadd.f32 %v603, 0.0
      %v636 = vadd.f32 %v604, 0.0
      %v637 = vadd.f32 %v605, 0.0
      %v638 = vadd.f32 %v606, 0.0
      %v639 = vadd.f32 %v607, 0.0
      %v640 = vadd.f32 %v608, 0.0
      %v641 = vadd.f32 %v609, 0.0
      %v642 = vadd.f32 %v610, 0.0
      %v643 = vadd.f32 %v611, 0.0
      %v644 = vadd.f32 %v612, 0.0
      %v645 = vadd.f32 %v613, 0.0
      %v646 = vadd.f32 %v614, 0.0
      %v647 = vadd.f32 %v615, 0.0
      %v648 = vadd.f32 %v616, 0.0
      %v649 = vadd.f32 %v617, 0.0
      %v650 = vadd.f32 %v618, 0.0
      %v651 = vadd.f32 %v619, 0.0
      %v652 = vadd.f32 %v620, 0.0
      %v653 = vld [vmem:[%s192] sm:$0xf]
      %v654 = vld [vmem:[%s192 + $0x4] sm:$0xf]
      %v655 = vld [vmem:[%s192 + $0x8] sm:$0xf]
      %v656 = vld [vmem:[%s192 + $0xc] sm:$0xf]
      %v657 = vld [vmem:[%s192 + $0x10] sm:$0xf]
      %v658 = vld [vmem:[%s192 + $0x14] sm:$0xf]
      %v659 = vld [vmem:[%s192 + $0x18] sm:$0xf]
      %v660 = vld [vmem:[%s192 + $0x1c] sm:$0xf]
      %v661 = vld [vmem:[%s192 + $0x20] sm:$0xf]
      %v662 = vld [vmem:[%s192 + $0x24] sm:$0xf]
      %v663 = vld [vmem:[%s192 + $0x28] sm:$0xf]
      %v664 = vld [vmem:[%s192 + $0x2c] sm:$0xf]
      %v665 = vld [vmem:[%s192 + $0x30] sm:$0xf]
      %v666 = vld [vmem:[%s192 + $0x34] sm:$0xf]
      %v667 = vld [vmem:[%s192 + $0x38] sm:$0xf]
      %v668 = vld [vmem:[%s192 + $0x3c] sm:$0xf]
      %v669 = vld [vmem:[%s192 + $0x40] sm:$0xf]
      %v670 = vld [vmem:[%s192 + $0x44] sm:$0xf]
      %v671 = vld [vmem:[%s192 + $0x48] sm:$0xf]
      %v672 = vld [vmem:[%s192 + $0x4c] sm:$0xf]
      %v673 = vld [vmem:[%s192 + $0x50] sm:$0xf]
      %v674 = vld [vmem:[%s192 + $0x54] sm:$0xf]
      %v675 = vld [vmem:[%s192 + $0x58] sm:$0xf]
      %v676 = vld [vmem:[%s192 + $0x5c] sm:$0xf]
      %v677 = vld [vmem:[%s192 + $0x60] sm:$0xf]
      %v678 = vld [vmem:[%s192 + $0x64] sm:$0xf]
      %v679 = vld [vmem:[%s192 + $0x68] sm:$0xf]
      %v680 = vld [vmem:[%s192 + $0x6c] sm:$0xf]
      %v681 = vld [vmem:[%s192 + $0x70] sm:$0xf]
      %v682 = vld [vmem:[%s192 + $0x74] sm:$0xf]
      %v683 = vld [vmem:[%s192 + $0x78] sm:$0xf]
      %v684 = vld [vmem:[%s192 + $0x7c] sm:$0xf]
      %v685 = vld [vmem:[%s192 + $0x80] sm:$0x1]
      %s686 = scalar_lea.vmem %s1, 1
      %v687 = vld [vmem:[%s686] sm:$0x1]
      %v688 = vunpack.c.l.bf16 %v653
      %v689 = vunpack.c.l.bf16 %v654
      %v690 = vunpack.c.l.bf16 %v655
      %v691 = vunpack.c.l.bf16 %v656
      %v692 = vunpack.c.l.bf16 %v657
      %v693 = vunpack.c.l.bf16 %v658
      %v694 = vunpack.c.l.bf16 %v659
      %v695 = vunpack.c.l.bf16 %v660
      %v696 = vunpack.c.l.bf16 %v661
      %v697 = vunpack.c.l.bf16 %v662
      %v698 = vunpack.c.l.bf16 %v663
      %v699 = vunpack.c.l.bf16 %v664
      %v700 = vunpack.c.l.bf16 %v665
      %v701 = vunpack.c.l.bf16 %v666
      %v702 = vunpack.c.l.bf16 %v667
      %v703 = vunpack.c.l.bf16 %v668
      %v704 = vunpack.c.l.bf16 %v669
      %v705 = vunpack.c.l.bf16 %v670
      %v706 = vunpack.c.l.bf16 %v671
      %v707 = vunpack.c.l.bf16 %v672
      %v708 = vunpack.c.l.bf16 %v673
      %v709 = vunpack.c.l.bf16 %v674
      %v710 = vunpack.c.l.bf16 %v675
      %v711 = vunpack.c.l.bf16 %v676
      %v712 = vunpack.c.l.bf16 %v677
      %v713 = vunpack.c.l.bf16 %v678
      %v714 = vunpack.c.l.bf16 %v679
      %v715 = vunpack.c.l.bf16 %v680
      %v716 = vunpack.c.l.bf16 %v681
      %v717 = vunpack.c.l.bf16 %v682
      %v718 = vunpack.c.l.bf16 %v683
      %v719 = vunpack.c.l.bf16 %v684
      %v720 = vunpack.c.l.bf16 %v685
      %v721 = vunpack.c.l.bf16 %v687
      %723 = vset.pattern.permute.xlu0 0
      %724 = vperm.xlu0 %723, %v688
      %v725 = vpop.permute.xlu0 %724
      %728 = vset.pattern.permute.xlu0 0
      %729 = vperm.xlu0 %728, %v689
      %v730 = vpop.permute.xlu0 %729
      %733 = vset.pattern.permute.xlu0 0
      %734 = vperm.xlu0 %733, %v690
      %v735 = vpop.permute.xlu0 %734
      %738 = vset.pattern.permute.xlu0 0
      %739 = vperm.xlu0 %738, %v691
      %v740 = vpop.permute.xlu0 %739
      %743 = vset.pattern.permute.xlu0 0
      %744 = vperm.xlu0 %743, %v692
      %v745 = vpop.permute.xlu0 %744
      %748 = vset.pattern.permute.xlu0 0
      %749 = vperm.xlu0 %748, %v693
      %v750 = vpop.permute.xlu0 %749
      %753 = vset.pattern.permute.xlu0 0
      %754 = vperm.xlu0 %753, %v694
      %v755 = vpop.permute.xlu0 %754
      %758 = vset.pattern.permute.xlu0 0
      %759 = vperm.xlu0 %758, %v695
      %v760 = vpop.permute.xlu0 %759
      %763 = vset.pattern.permute.xlu0 0
      %764 = vperm.xlu0 %763, %v696
      %v765 = vpop.permute.xlu0 %764
      %768 = vset.pattern.permute.xlu0 0
      %769 = vperm.xlu0 %768, %v697
      %v770 = vpop.permute.xlu0 %769
      %773 = vset.pattern.permute.xlu0 0
      %774 = vperm.xlu0 %773, %v698
      %v775 = vpop.permute.xlu0 %774
      %778 = vset.pattern.permute.xlu0 0
      %779 = vperm.xlu0 %778, %v699
      %v780 = vpop.permute.xlu0 %779
      %783 = vset.pattern.permute.xlu0 0
      %784 = vperm.xlu0 %783, %v700
      %v785 = vpop.permute.xlu0 %784
      %788 = vset.pattern.permute.xlu0 0
      %789 = vperm.xlu0 %788, %v701
      %v790 = vpop.permute.xlu0 %789
      %793 = vset.pattern.permute.xlu0 0
      %794 = vperm.xlu0 %793, %v702
      %v795 = vpop.permute.xlu0 %794
      %798 = vset.pattern.permute.xlu0 0
      %799 = vperm.xlu0 %798, %v703
      %v800 = vpop.permute.xlu0 %799
      %803 = vset.pattern.permute.xlu0 0
      %804 = vperm.xlu0 %803, %v704
      %v805 = vpop.permute.xlu0 %804
      %808 = vset.pattern.permute.xlu0 0
      %809 = vperm.xlu0 %808, %v705
      %v810 = vpop.permute.xlu0 %809
      %813 = vset.pattern.permute.xlu0 0
      %814 = vperm.xlu0 %813, %v706
      %v815 = vpop.permute.xlu0 %814
      %818 = vset.pattern.permute.xlu0 0
      %819 = vperm.xlu0 %818, %v707
      %v820 = vpop.permute.xlu0 %819
      %823 = vset.pattern.permute.xlu0 0
      %824 = vperm.xlu0 %823, %v708
      %v825 = vpop.permute.xlu0 %824
      %828 = vset.pattern.permute.xlu0 0
      %829 = vperm.xlu0 %828, %v709
      %v830 = vpop.permute.xlu0 %829
      %833 = vset.pattern.permute.xlu0 0
      %834 = vperm.xlu0 %833, %v710
      %v835 = vpop.permute.xlu0 %834
      %838 = vset.pattern.permute.xlu0 0
      %839 = vperm.xlu0 %838, %v711
      %v840 = vpop.permute.xlu0 %839
      %843 = vset.pattern.permute.xlu0 0
      %844 = vperm.xlu0 %843, %v712
      %v845 = vpop.permute.xlu0 %844
      %848 = vset.pattern.permute.xlu0 0
      %849 = vperm.xlu0 %848, %v713
      %v850 = vpop.permute.xlu0 %849
      %853 = vset.pattern.permute.xlu0 0
      %854 = vperm.xlu0 %853, %v714
      %v855 = vpop.permute.xlu0 %854
      %858 = vset.pattern.permute.xlu0 0
      %859 = vperm.xlu0 %858, %v715
      %v860 = vpop.permute.xlu0 %859
      %863 = vset.pattern.permute.xlu0 0
      %864 = vperm.xlu0 %863, %v716
      %v865 = vpop.permute.xlu0 %864
      %868 = vset.pattern.permute.xlu0 0
      %869 = vperm.xlu0 %868, %v717
      %v870 = vpop.permute.xlu0 %869
      %873 = vset.pattern.permute.xlu0 0
      %874 = vperm.xlu0 %873, %v718
      %v875 = vpop.permute.xlu0 %874
      %878 = vset.pattern.permute.xlu0 0
      %879 = vperm.xlu0 %878, %v719
      %v880 = vpop.permute.xlu0 %879
      %883 = vset.pattern.permute.xlu0 0
      %884 = vperm.xlu0 %883, %v720
      %v885 = vpop.permute.xlu0 %884
      %v887 = vlaneseq
      %v888 = vshrl.u32 %v887, 7
      %v889 = vsub.s32 0, %v888
      %v890 = vrot.slane %v721, %v889
      %v891 = vmul.f32 %v725, %v890
      %v892 = vmul.f32 %v730, %v890
      %v893 = vmul.f32 %v735, %v890
      %v894 = vmul.f32 %v740, %v890
      %v895 = vmul.f32 %v745, %v890
      %v896 = vmul.f32 %v750, %v890
      %v897 = vmul.f32 %v755, %v890
      %v898 = vmul.f32 %v760, %v890
      %v899 = vmul.f32 %v765, %v890
      %v900 = vmul.f32 %v770, %v890
      %v901 = vmul.f32 %v775, %v890
      %v902 = vmul.f32 %v780, %v890
      %v903 = vmul.f32 %v785, %v890
      %v904 = vmul.f32 %v790, %v890
      %v905 = vmul.f32 %v795, %v890
      %v906 = vmul.f32 %v800, %v890
      %v907 = vmul.f32 %v805, %v890
      %v908 = vmul.f32 %v810, %v890
      %v909 = vmul.f32 %v815, %v890
      %v910 = vmul.f32 %v820, %v890
      %v911 = vmul.f32 %v825, %v890
      %v912 = vmul.f32 %v830, %v890
      %v913 = vmul.f32 %v835, %v890
      %v914 = vmul.f32 %v840, %v890
      %v915 = vmul.f32 %v845, %v890
      %v916 = vmul.f32 %v850, %v890
      %v917 = vmul.f32 %v855, %v890
      %v918 = vmul.f32 %v860, %v890
      %v919 = vmul.f32 %v865, %v890
      %v920 = vmul.f32 %v870, %v890
      %v921 = vmul.f32 %v875, %v890
      %v922 = vmul.f32 %v880, %v890
      %v923 = vmul.f32 %v885, %v890
      %vm957 = vcmask 1046528
      %v958 = vrot.slane %v891, 1
      %v959 = vrot.slane %v892, 1
      %v960 = vsel %vm957, %v958, %v959
      %v961 = vrot.slane %v893, 1
      %v962 = vsel %vm957, %v959, %v961
      %v963 = vrot.slane %v894, 1
      %v964 = vsel %vm957, %v961, %v963
      %v965 = vrot.slane %v895, 1
      %v966 = vsel %vm957, %v963, %v965
      %v967 = vrot.slane %v896, 1
      %v968 = vsel %vm957, %v965, %v967
      %v969 = vrot.slane %v897, 1
      %v970 = vsel %vm957, %v967, %v969
      %v971 = vrot.slane %v898, 1
      %v972 = vsel %vm957, %v969, %v971
      %v973 = vrot.slane %v899, 1
      %v974 = vsel %vm957, %v971, %v973
      %v975 = vrot.slane %v900, 1
      %v976 = vsel %vm957, %v973, %v975
      %v977 = vrot.slane %v901, 1
      %v978 = vsel %vm957, %v975, %v977
      %v979 = vrot.slane %v902, 1
      %v980 = vsel %vm957, %v977, %v979
      %v981 = vrot.slane %v903, 1
      %v982 = vsel %vm957, %v979, %v981
      %v983 = vrot.slane %v904, 1
      %v984 = vsel %vm957, %v981, %v983
      %v985 = vrot.slane %v905, 1
      %v986 = vsel %vm957, %v983, %v985
      %v987 = vrot.slane %v906, 1
      %v988 = vsel %vm957, %v985, %v987
      %v989 = vrot.slane %v907, 1
      %v990 = vsel %vm957, %v987, %v989
      %v991 = vrot.slane %v908, 1
      %v992 = vsel %vm957, %v989, %v991
      %v993 = vrot.slane %v909, 1
      %v994 = vsel %vm957, %v991, %v993
      %v995 = vrot.slane %v910, 1
      %v996 = vsel %vm957, %v993, %v995
      %v997 = vrot.slane %v911, 1
      %v998 = vsel %vm957, %v995, %v997
      %v999 = vrot.slane %v912, 1
      %v1000 = vsel %vm957, %v997, %v999
      %v1001 = vrot.slane %v913, 1
      %v1002 = vsel %vm957, %v999, %v1001
      %v1003 = vrot.slane %v914, 1
      %v1004 = vsel %vm957, %v1001, %v1003
      %v1005 = vrot.slane %v915, 1
      %v1006 = vsel %vm957, %v1003, %v1005
      %v1007 = vrot.slane %v916, 1
      %v1008 = vsel %vm957, %v1005, %v1007
      %v1009 = vrot.slane %v917, 1
      %v1010 = vsel %vm957, %v1007, %v1009
      %v1011 = vrot.slane %v918, 1
      %v1012 = vsel %vm957, %v1009, %v1011
      %v1013 = vrot.slane %v919, 1
      %v1014 = vsel %vm957, %v1011, %v1013
      %v1015 = vrot.slane %v920, 1
      %v1016 = vsel %vm957, %v1013, %v1015
      %v1017 = vrot.slane %v921, 1
      %v1018 = vsel %vm957, %v1015, %v1017
      %v1019 = vrot.slane %v922, 1
      %v1020 = vsel %vm957, %v1017, %v1019
      %v1021 = vrot.slane %v923, 1
      %v1022 = vsel %vm957, %v1019, %v1021
      %v1055 = vadd.f32 %v621, %v960
      %v1056 = vadd.f32 %v622, %v962
      %v1057 = vadd.f32 %v623, %v964
      %v1058 = vadd.f32 %v624, %v966
      %v1059 = vadd.f32 %v625, %v968
      %v1060 = vadd.f32 %v626, %v970
      %v1061 = vadd.f32 %v627, %v972
      %v1062 = vadd.f32 %v628, %v974
      %v1063 = vadd.f32 %v629, %v976
      %v1064 = vadd.f32 %v630, %v978
      %v1065 = vadd.f32 %v631, %v980
      %v1066 = vadd.f32 %v632, %v982
      %v1067 = vadd.f32 %v633, %v984
      %v1068 = vadd.f32 %v634, %v986
      %v1069 = vadd.f32 %v635, %v988
      %v1070 = vadd.f32 %v636, %v990
      %v1071 = vadd.f32 %v637, %v992
      %v1072 = vadd.f32 %v638, %v994
      %v1073 = vadd.f32 %v639, %v996
      %v1074 = vadd.f32 %v640, %v998
      %v1075 = vadd.f32 %v641, %v1000
      %v1076 = vadd.f32 %v642, %v1002
      %v1077 = vadd.f32 %v643, %v1004
      %v1078 = vadd.f32 %v644, %v1006
      %v1079 = vadd.f32 %v645, %v1008
      %v1080 = vadd.f32 %v646, %v1010
      %v1081 = vadd.f32 %v647, %v1012
      %v1082 = vadd.f32 %v648, %v1014
      %v1083 = vadd.f32 %v649, %v1016
      %v1084 = vadd.f32 %v650, %v1018
      %v1085 = vadd.f32 %v651, %v1020
      %v1086 = vadd.f32 %v652, %v1022
      %v1087 = vld [vmem:[%s192] sm:$0xe]
      %s1088 = scalar_lea.vmem %s1, 2
      %v1089 = vld [vmem:[%s1088] sm:$0x1]
      %v1090 = vunpack.c.l.bf16 %v1087
      %v1091 = vunpack.c.l.bf16 %v1089
      %1093 = vset.pattern.permute.xlu0 0
      %1094 = vperm.xlu0 %1093, %v1090
      %v1095 = vpop.permute.xlu0 %1094
      %v1097 = vlaneseq
      %v1098 = vshrl.u32 %v1097, 7
      %v1099 = vsub.s32 0, %v1098
      %v1100 = vrot.slane %v1091, %v1099
      %v1101 = vmul.f32 %v1095, %v1100
      %v1102 = vmul.f32 %v730, %v1100
      %v1103 = vmul.f32 %v735, %v1100
      %v1104 = vmul.f32 %v740, %v1100
      %v1105 = vmul.f32 %v745, %v1100
      %v1106 = vmul.f32 %v750, %v1100
      %v1107 = vmul.f32 %v755, %v1100
      %v1108 = vmul.f32 %v760, %v1100
      %v1109 = vmul.f32 %v765, %v1100
      %v1110 = vmul.f32 %v770, %v1100
      %v1111 = vmul.f32 %v775, %v1100
      %v1112 = vmul.f32 %v780, %v1100
      %v1113 = vmul.f32 %v785, %v1100
      %v1114 = vmul.f32 %v790, %v1100
      %v1115 = vmul.f32 %v795, %v1100
      %v1116 = vmul.f32 %v800, %v1100
      %v1117 = vmul.f32 %v805, %v1100
      %v1118 = vmul.f32 %v810, %v1100
      %v1119 = vmul.f32 %v815, %v1100
      %v1120 = vmul.f32 %v820, %v1100
      %v1121 = vmul.f32 %v825, %v1100
      %v1122 = vmul.f32 %v830, %v1100
      %v1123 = vmul.f32 %v835, %v1100
      %v1124 = vmul.f32 %v840, %v1100
      %v1125 = vmul.f32 %v845, %v1100
      %v1126 = vmul.f32 %v850, %v1100
      %v1127 = vmul.f32 %v855, %v1100
      %v1128 = vmul.f32 %v860, %v1100
      %v1129 = vmul.f32 %v865, %v1100
      %v1130 = vmul.f32 %v870, %v1100
      %v1131 = vmul.f32 %v875, %v1100
      %v1132 = vmul.f32 %v880, %v1100
      %v1133 = vmul.f32 %v885, %v1100
      %vm1167 = vcmask 1045504
      %v1168 = vrot.slane %v1101, 2
      %v1169 = vrot.slane %v1102, 2
      %v1170 = vsel %vm1167, %v1168, %v1169
      %v1171 = vrot.slane %v1103, 2
      %v1172 = vsel %vm1167, %v1169, %v1171
      %v1173 = vrot.slane %v1104, 2
      %v1174 = vsel %vm1167, %v1171, %v1173
      %v1175 = vrot.slane %v1105, 2
      %v1176 = vsel %vm1167, %v1173, %v1175
      %v1177 = vrot.slane %v1106, 2
      %v1178 = vsel %vm1167, %v1175, %v1177
      %v1179 = vrot.slane %v1107, 2
      %v1180 = vsel %vm1167, %v1177, %v1179
      %v1181 = vrot.slane %v1108, 2
      %v1182 = vsel %vm1167, %v1179, %v1181
      %v1183 = vrot.slane %v1109, 2
      %v1184 = vsel %vm1167, %v1181, %v1183
      %v1185 = vrot.slane %v1110, 2
      %v1186 = vsel %vm1167, %v1183, %v1185
      %v1187 = vrot.slane %v1111, 2
      %v1188 = vsel %vm1167, %v1185, %v1187
      %v1189 = vrot.slane %v1112, 2
      %v1190 = vsel %vm1167, %v1187, %v1189
      %v1191 = vrot.slane %v1113, 2
      %v1192 = vsel %vm1167, %v1189, %v1191
      %v1193 = vrot.slane %v1114, 2
      %v1194 = vsel %vm1167, %v1191, %v1193
      %v1195 = vrot.slane %v1115, 2
      %v1196 = vsel %vm1167, %v1193, %v1195
      %v1197 = vrot.slane %v1116, 2
      %v1198 = vsel %vm1167, %v1195, %v1197
      %v1199 = vrot.slane %v1117, 2
      %v1200 = vsel %vm1167, %v1197, %v1199
      %v1201 = vrot.slane %v1118, 2
      %v1202 = vsel %vm1167, %v1199, %v1201
      %v1203 = vrot.slane %v1119, 2
      %v1204 = vsel %vm1167, %v1201, %v1203
      %v1205 = vrot.slane %v1120, 2
      %v1206 = vsel %vm1167, %v1203, %v1205
      %v1207 = vrot.slane %v1121, 2
      %v1208 = vsel %vm1167, %v1205, %v1207
      %v1209 = vrot.slane %v1122, 2
      %v1210 = vsel %vm1167, %v1207, %v1209
      %v1211 = vrot.slane %v1123, 2
      %v1212 = vsel %vm1167, %v1209, %v1211
      %v1213 = vrot.slane %v1124, 2
      %v1214 = vsel %vm1167, %v1211, %v1213
      %v1215 = vrot.slane %v1125, 2
      %v1216 = vsel %vm1167, %v1213, %v1215
      %v1217 = vrot.slane %v1126, 2
      %v1218 = vsel %vm1167, %v1215, %v1217
      %v1219 = vrot.slane %v1127, 2
      %v1220 = vsel %vm1167, %v1217, %v1219
      %v1221 = vrot.slane %v1128, 2
      %v1222 = vsel %vm1167, %v1219, %v1221
      %v1223 = vrot.slane %v1129, 2
      %v1224 = vsel %vm1167, %v1221, %v1223
      %v1225 = vrot.slane %v1130, 2
      %v1226 = vsel %vm1167, %v1223, %v1225
      %v1227 = vrot.slane %v1131, 2
      %v1228 = vsel %vm1167, %v1225, %v1227
      %v1229 = vrot.slane %v1132, 2
      %v1230 = vsel %vm1167, %v1227, %v1229
      %v1231 = vrot.slane %v1133, 2
      %v1232 = vsel %vm1167, %v1229, %v1231
      %v1265 = vsel %vm295, 0.0, %v1170
      %v1266 = vsel %vm296, 0.0, %v1172
      %v1267 = vsel %vm297, 0.0, %v1174
      %v1268 = vsel %vm298, 0.0, %v1176
      %v1269 = vsel %vm299, 0.0, %v1178
      %v1270 = vsel %vm300, 0.0, %v1180
      %v1271 = vsel %vm301, 0.0, %v1182
      %v1272 = vsel %vm302, 0.0, %v1184
      %v1273 = vsel %vm303, 0.0, %v1186
      %v1274 = vsel %vm304, 0.0, %v1188
      %v1275 = vsel %vm305, 0.0, %v1190
      %v1276 = vsel %vm306, 0.0, %v1192
      %v1277 = vsel %vm307, 0.0, %v1194
      %v1278 = vsel %vm308, 0.0, %v1196
      %v1279 = vsel %vm309, 0.0, %v1198
      %v1280 = vsel %vm310, 0.0, %v1200
      %v1281 = vsel %vm311, 0.0, %v1202
      %v1282 = vsel %vm312, 0.0, %v1204
      %v1283 = vsel %vm313, 0.0, %v1206
      %v1284 = vsel %vm314, 0.0, %v1208
      %v1285 = vsel %vm315, 0.0, %v1210
      %v1286 = vsel %vm316, 0.0, %v1212
      %v1287 = vsel %vm317, 0.0, %v1214
      %v1288 = vsel %vm318, 0.0, %v1216
      %v1289 = vsel %vm319, 0.0, %v1218
      %v1290 = vsel %vm320, 0.0, %v1220
      %v1291 = vsel %vm321, 0.0, %v1222
      %v1292 = vsel %vm322, 0.0, %v1224
      %v1293 = vsel %vm323, 0.0, %v1226
      %v1294 = vsel %vm324, 0.0, %v1228
      %v1295 = vsel %vm325, 0.0, %v1230
      %v1296 = vsel %vm326, 0.0, %v1232
      %v1297 = vadd.f32 %v1055, %v1265
      %v1298 = vadd.f32 %v1056, %v1266
      %v1299 = vadd.f32 %v1057, %v1267
      %v1300 = vadd.f32 %v1058, %v1268
      %v1301 = vadd.f32 %v1059, %v1269
      %v1302 = vadd.f32 %v1060, %v1270
      %v1303 = vadd.f32 %v1061, %v1271
      %v1304 = vadd.f32 %v1062, %v1272
      %v1305 = vadd.f32 %v1063, %v1273
      %v1306 = vadd.f32 %v1064, %v1274
      %v1307 = vadd.f32 %v1065, %v1275
      %v1308 = vadd.f32 %v1066, %v1276
      %v1309 = vadd.f32 %v1067, %v1277
      %v1310 = vadd.f32 %v1068, %v1278
      %v1311 = vadd.f32 %v1069, %v1279
      %v1312 = vadd.f32 %v1070, %v1280
      %v1313 = vadd.f32 %v1071, %v1281
      %v1314 = vadd.f32 %v1072, %v1282
      %v1315 = vadd.f32 %v1073, %v1283
      %v1316 = vadd.f32 %v1074, %v1284
      %v1317 = vadd.f32 %v1075, %v1285
      %v1318 = vadd.f32 %v1076, %v1286
      %v1319 = vadd.f32 %v1077, %v1287
      %v1320 = vadd.f32 %v1078, %v1288
      %v1321 = vadd.f32 %v1079, %v1289
      %v1322 = vadd.f32 %v1080, %v1290
      %v1323 = vadd.f32 %v1081, %v1291
      %v1324 = vadd.f32 %v1082, %v1292
      %v1325 = vadd.f32 %v1083, %v1293
      %v1326 = vadd.f32 %v1084, %v1294
      %v1327 = vadd.f32 %v1085, %v1295
      %v1328 = vadd.f32 %v1086, %v1296
      %v1329 = vld [vmem:[%s192 + $0x8] sm:$0xf]
      %v1330 = vld [vmem:[%s192 + $0xc] sm:$0xf]
      %v1331 = vld [vmem:[%s192 + $0x10] sm:$0xf]
      %v1332 = vld [vmem:[%s192 + $0x14] sm:$0xf]
      %v1333 = vld [vmem:[%s192 + $0x18] sm:$0xf]
      %v1334 = vld [vmem:[%s192 + $0x1c] sm:$0xf]
      %v1335 = vld [vmem:[%s192 + $0x20] sm:$0xf]
      %v1336 = vld [vmem:[%s192 + $0x24] sm:$0xf]
      %v1337 = vld [vmem:[%s192 + $0x28] sm:$0xf]
      %v1338 = vld [vmem:[%s192 + $0x2c] sm:$0xf]
      %v1339 = vld [vmem:[%s192 + $0x30] sm:$0xf]
      %v1340 = vld [vmem:[%s192 + $0x34] sm:$0xf]
      %v1341 = vld [vmem:[%s192 + $0x38] sm:$0xf]
      %v1342 = vld [vmem:[%s192 + $0x3c] sm:$0xf]
      %v1343 = vld [vmem:[%s192 + $0x40] sm:$0xf]
      %v1344 = vld [vmem:[%s192 + $0x44] sm:$0xf]
      %v1345 = vld [vmem:[%s192 + $0x48] sm:$0xf]
      %v1346 = vld [vmem:[%s192 + $0x4c] sm:$0xf]
      %v1347 = vld [vmem:[%s192 + $0x50] sm:$0xf]
      %v1348 = vld [vmem:[%s192 + $0x54] sm:$0xf]
      %v1349 = vld [vmem:[%s192 + $0x58] sm:$0xf]
      %v1350 = vld [vmem:[%s192 + $0x5c] sm:$0xf]
      %v1351 = vld [vmem:[%s192 + $0x60] sm:$0xf]
      %v1352 = vld [vmem:[%s192 + $0x64] sm:$0xf]
      %v1353 = vld [vmem:[%s192 + $0x68] sm:$0xf]
      %v1354 = vld [vmem:[%s192 + $0x6c] sm:$0xf]
      %v1355 = vld [vmem:[%s192 + $0x70] sm:$0xf]
      %v1356 = vld [vmem:[%s192 + $0x74] sm:$0xf]
      %v1357 = vld [vmem:[%s192 + $0x78] sm:$0xf]
      %v1358 = vld [vmem:[%s192 + $0x7c] sm:$0xf]
      %v1359 = vld [vmem:[%s192 + $0x80] sm:$0xf]
      %v1360 = vld [vmem:[%s192 + $0x84] sm:$0xf]
      %s1361 = scalar_lea.vmem %s1, 3
      %v1362 = vld [vmem:[%s1361] sm:$0x1]
      %v1363 = vunpack.c.l.bf16 %v1329
      %v1364 = vunpack.c.l.bf16 %v1330
      %v1365 = vunpack.c.l.bf16 %v1331
      %v1366 = vunpack.c.l.bf16 %v1332
      %v1367 = vunpack.c.l.bf16 %v1333
      %v1368 = vunpack.c.l.bf16 %v1334
      %v1369 = vunpack.c.l.bf16 %v1335
      %v1370 = vunpack.c.l.bf16 %v1336
      %v1371 = vunpack.c.l.bf16 %v1337
      %v1372 = vunpack.c.l.bf16 %v1338
      %v1373 = vunpack.c.l.bf16 %v1339
      %v1374 = vunpack.c.l.bf16 %v1340
      %v1375 = vunpack.c.l.bf16 %v1341
      %v1376 = vunpack.c.l.bf16 %v1342
      %v1377 = vunpack.c.l.bf16 %v1343
      %v1378 = vunpack.c.l.bf16 %v1344
      %v1379 = vunpack.c.l.bf16 %v1345
      %v1380 = vunpack.c.l.bf16 %v1346
      %v1381 = vunpack.c.l.bf16 %v1347
      %v1382 = vunpack.c.l.bf16 %v1348
      %v1383 = vunpack.c.l.bf16 %v1349
      %v1384 = vunpack.c.l.bf16 %v1350
      %v1385 = vunpack.c.l.bf16 %v1351
      %v1386 = vunpack.c.l.bf16 %v1352
      %v1387 = vunpack.c.l.bf16 %v1353
      %v1388 = vunpack.c.l.bf16 %v1354
      %v1389 = vunpack.c.l.bf16 %v1355
      %v1390 = vunpack.c.l.bf16 %v1356
      %v1391 = vunpack.c.l.bf16 %v1357
      %v1392 = vunpack.c.l.bf16 %v1358
      %v1393 = vunpack.c.l.bf16 %v1359
      %v1394 = vunpack.c.l.bf16 %v1360
      %v1395 = vunpack.c.l.bf16 %v1362
      %1397 = vset.pattern.permute.xlu0 0
      %1398 = vperm.xlu0 %1397, %v1363
      %v1399 = vpop.permute.xlu0 %1398
      %1402 = vset.pattern.permute.xlu0 0
      %1403 = vperm.xlu0 %1402, %v1364
      %v1404 = vpop.permute.xlu0 %1403
      %1407 = vset.pattern.permute.xlu0 0
      %1408 = vperm.xlu0 %1407, %v1365
      %v1409 = vpop.permute.xlu0 %1408
      %1412 = vset.pattern.permute.xlu0 0
      %1413 = vperm.xlu0 %1412, %v1366
      %v1414 = vpop.permute.xlu0 %1413
      %1417 = vset.pattern.permute.xlu0 0
      %1418 = vperm.xlu0 %1417, %v1367
      %v1419 = vpop.permute.xlu0 %1418
      %1422 = vset.pattern.permute.xlu0 0
      %1423 = vperm.xlu0 %1422, %v1368
      %v1424 = vpop.permute.xlu0 %1423
      %1427 = vset.pattern.permute.xlu0 0
      %1428 = vperm.xlu0 %1427, %v1369
      %v1429 = vpop.permute.xlu0 %1428
      %1432 = vset.pattern.permute.xlu0 0
      %1433 = vperm.xlu0 %1432, %v1370
      %v1434 = vpop.permute.xlu0 %1433
      %1437 = vset.pattern.permute.xlu0 0
      %1438 = vperm.xlu0 %1437, %v1371
      %v1439 = vpop.permute.xlu0 %1438
      %1442 = vset.pattern.permute.xlu0 0
      %1443 = vperm.xlu0 %1442, %v1372
      %v1444 = vpop.permute.xlu0 %1443
      %1447 = vset.pattern.permute.xlu0 0
      %1448 = vperm.xlu0 %1447, %v1373
      %v1449 = vpop.permute.xlu0 %1448
      %1452 = vset.pattern.permute.xlu0 0
      %1453 = vperm.xlu0 %1452, %v1374
      %v1454 = vpop.permute.xlu0 %1453
      %1457 = vset.pattern.permute.xlu0 0
      %1458 = vperm.xlu0 %1457, %v1375
      %v1459 = vpop.permute.xlu0 %1458
      %1462 = vset.pattern.permute.xlu0 0
      %1463 = vperm.xlu0 %1462, %v1376
      %v1464 = vpop.permute.xlu0 %1463
      %1467 = vset.pattern.permute.xlu0 0
      %1468 = vperm.xlu0 %1467, %v1377
      %v1469 = vpop.permute.xlu0 %1468
      %1472 = vset.pattern.permute.xlu0 0
      %1473 = vperm.xlu0 %1472, %v1378
      %v1474 = vpop.permute.xlu0 %1473
      %1477 = vset.pattern.permute.xlu0 0
      %1478 = vperm.xlu0 %1477, %v1379
      %v1479 = vpop.permute.xlu0 %1478
      %1482 = vset.pattern.permute.xlu0 0
      %1483 = vperm.xlu0 %1482, %v1380
      %v1484 = vpop.permute.xlu0 %1483
      %1487 = vset.pattern.permute.xlu0 0
      %1488 = vperm.xlu0 %1487, %v1381
      %v1489 = vpop.permute.xlu0 %1488
      %1492 = vset.pattern.permute.xlu0 0
      %1493 = vperm.xlu0 %1492, %v1382
      %v1494 = vpop.permute.xlu0 %1493
      %1497 = vset.pattern.permute.xlu0 0
      %1498 = vperm.xlu0 %1497, %v1383
      %v1499 = vpop.permute.xlu0 %1498
      %1502 = vset.pattern.permute.xlu0 0
      %1503 = vperm.xlu0 %1502, %v1384
      %v1504 = vpop.permute.xlu0 %1503
      %1507 = vset.pattern.permute.xlu0 0
      %1508 = vperm.xlu0 %1507, %v1385
      %v1509 = vpop.permute.xlu0 %1508
      %1512 = vset.pattern.permute.xlu0 0
      %1513 = vperm.xlu0 %1512, %v1386
      %v1514 = vpop.permute.xlu0 %1513
      %1517 = vset.pattern.permute.xlu0 0
      %1518 = vperm.xlu0 %1517, %v1387
      %v1519 = vpop.permute.xlu0 %1518
      %1522 = vset.pattern.permute.xlu0 0
      %1523 = vperm.xlu0 %1522, %v1388
      %v1524 = vpop.permute.xlu0 %1523
      %1527 = vset.pattern.permute.xlu0 0
      %1528 = vperm.xlu0 %1527, %v1389
      %v1529 = vpop.permute.xlu0 %1528
      %1532 = vset.pattern.permute.xlu0 0
      %1533 = vperm.xlu0 %1532, %v1390
      %v1534 = vpop.permute.xlu0 %1533
      %1537 = vset.pattern.permute.xlu0 0
      %1538 = vperm.xlu0 %1537, %v1391
      %v1539 = vpop.permute.xlu0 %1538
      %1542 = vset.pattern.permute.xlu0 0
      %1543 = vperm.xlu0 %1542, %v1392
      %v1544 = vpop.permute.xlu0 %1543
      %1547 = vset.pattern.permute.xlu0 0
      %1548 = vperm.xlu0 %1547, %v1393
      %v1549 = vpop.permute.xlu0 %1548
      %1552 = vset.pattern.permute.xlu0 0
      %1553 = vperm.xlu0 %1552, %v1394
      %v1554 = vpop.permute.xlu0 %1553
      %v1556 = vlaneseq
      %v1557 = vshrl.u32 %v1556, 7
      %v1558 = vsub.s32 0, %v1557
      %v1559 = vrot.slane %v1395, %v1558
      %v1560 = vmul.f32 %v1399, %v1559
      %v1561 = vmul.f32 %v1404, %v1559
      %v1562 = vmul.f32 %v1409, %v1559
      %v1563 = vmul.f32 %v1414, %v1559
      %v1564 = vmul.f32 %v1419, %v1559
      %v1565 = vmul.f32 %v1424, %v1559
      %v1566 = vmul.f32 %v1429, %v1559
      %v1567 = vmul.f32 %v1434, %v1559
      %v1568 = vmul.f32 %v1439, %v1559
      %v1569 = vmul.f32 %v1444, %v1559
      %v1570 = vmul.f32 %v1449, %v1559
      %v1571 = vmul.f32 %v1454, %v1559
      %v1572 = vmul.f32 %v1459, %v1559
      %v1573 = vmul.f32 %v1464, %v1559
      %v1574 = vmul.f32 %v1469, %v1559
      %v1575 = vmul.f32 %v1474, %v1559
      %v1576 = vmul.f32 %v1479, %v1559
      %v1577 = vmul.f32 %v1484, %v1559
      %v1578 = vmul.f32 %v1489, %v1559
      %v1579 = vmul.f32 %v1494, %v1559
      %v1580 = vmul.f32 %v1499, %v1559
      %v1581 = vmul.f32 %v1504, %v1559
      %v1582 = vmul.f32 %v1509, %v1559
      %v1583 = vmul.f32 %v1514, %v1559
      %v1584 = vmul.f32 %v1519, %v1559
      %v1585 = vmul.f32 %v1524, %v1559
      %v1586 = vmul.f32 %v1529, %v1559
      %v1587 = vmul.f32 %v1534, %v1559
      %v1588 = vmul.f32 %v1539, %v1559
      %v1589 = vmul.f32 %v1544, %v1559
      %v1590 = vmul.f32 %v1549, %v1559
      %v1591 = vmul.f32 %v1554, %v1559
      %v1592 = vsel %vm263, 0.0, %v1560
      %v1593 = vsel %vm264, 0.0, %v1561
      %v1594 = vsel %vm265, 0.0, %v1562
      %v1595 = vsel %vm266, 0.0, %v1563
      %v1596 = vsel %vm267, 0.0, %v1564
      %v1597 = vsel %vm268, 0.0, %v1565
      %v1598 = vsel %vm269, 0.0, %v1566
      %v1599 = vsel %vm270, 0.0, %v1567
      %v1600 = vsel %vm271, 0.0, %v1568
      %v1601 = vsel %vm272, 0.0, %v1569
      %v1602 = vsel %vm273, 0.0, %v1570
      %v1603 = vsel %vm274, 0.0, %v1571
      %v1604 = vsel %vm275, 0.0, %v1572
      %v1605 = vsel %vm276, 0.0, %v1573
      %v1606 = vsel %vm277, 0.0, %v1574
      %v1607 = vsel %vm278, 0.0, %v1575
      %v1608 = vsel %vm279, 0.0, %v1576
      %v1609 = vsel %vm280, 0.0, %v1577
      %v1610 = vsel %vm281, 0.0, %v1578
      %v1611 = vsel %vm282, 0.0, %v1579
      %v1612 = vsel %vm283, 0.0, %v1580
      %v1613 = vsel %vm284, 0.0, %v1581
      %v1614 = vsel %vm285, 0.0, %v1582
      %v1615 = vsel %vm286, 0.0, %v1583
      %v1616 = vsel %vm287, 0.0, %v1584
      %v1617 = vsel %vm288, 0.0, %v1585
      %v1618 = vsel %vm289, 0.0, %v1586
      %v1619 = vsel %vm290, 0.0, %v1587
      %v1620 = vsel %vm291, 0.0, %v1588
      %v1621 = vsel %vm292, 0.0, %v1589
      %v1622 = vsel %vm293, 0.0, %v1590
      %v1623 = vsel %vm294, 0.0, %v1591
      %v1624 = vadd.f32 %v1297, %v1592
      %v1625 = vadd.f32 %v1298, %v1593
      %v1626 = vadd.f32 %v1299, %v1594
      %v1627 = vadd.f32 %v1300, %v1595
      %v1628 = vadd.f32 %v1301, %v1596
      %v1629 = vadd.f32 %v1302, %v1597
      %v1630 = vadd.f32 %v1303, %v1598
      %v1631 = vadd.f32 %v1304, %v1599
      %v1632 = vadd.f32 %v1305, %v1600
      %v1633 = vadd.f32 %v1306, %v1601
      %v1634 = vadd.f32 %v1307, %v1602
      %v1635 = vadd.f32 %v1308, %v1603
      %v1636 = vadd.f32 %v1309, %v1604
      %v1637 = vadd.f32 %v1310, %v1605
      %v1638 = vadd.f32 %v1311, %v1606
      %v1639 = vadd.f32 %v1312, %v1607
      %v1640 = vadd.f32 %v1313, %v1608
      %v1641 = vadd.f32 %v1314, %v1609
      %v1642 = vadd.f32 %v1315, %v1610
      %v1643 = vadd.f32 %v1316, %v1611
      %v1644 = vadd.f32 %v1317, %v1612
      %v1645 = vadd.f32 %v1318, %v1613
      %v1646 = vadd.f32 %v1319, %v1614
      %v1647 = vadd.f32 %v1320, %v1615
      %v1648 = vadd.f32 %v1321, %v1616
      %v1649 = vadd.f32 %v1322, %v1617
      %v1650 = vadd.f32 %v1323, %v1618
      %v1651 = vadd.f32 %v1324, %v1619
      %v1652 = vadd.f32 %v1325, %v1620
      %v1653 = vadd.f32 %v1326, %v1621
      %v1654 = vadd.f32 %v1327, %v1622
      %v1655 = vadd.f32 %v1328, %v1623
      %v1656 = vld [vmem:[%s192 + $0x8] sm:$0xf]
      %v1657 = vld [vmem:[%s192 + $0xc] sm:$0xf]
      %v1658 = vld [vmem:[%s192 + $0x10] sm:$0xf]
      %v1659 = vld [vmem:[%s192 + $0x14] sm:$0xf]
      %v1660 = vld [vmem:[%s192 + $0x18] sm:$0xf]
      %v1661 = vld [vmem:[%s192 + $0x1c] sm:$0xf]
      %v1662 = vld [vmem:[%s192 + $0x20] sm:$0xf]
      %v1663 = vld [vmem:[%s192 + $0x24] sm:$0xf]
      %v1664 = vld [vmem:[%s192 + $0x28] sm:$0xf]
      %v1665 = vld [vmem:[%s192 + $0x2c] sm:$0xf]
      %v1666 = vld [vmem:[%s192 + $0x30] sm:$0xf]
      %v1667 = vld [vmem:[%s192 + $0x34] sm:$0xf]
      %v1668 = vld [vmem:[%s192 + $0x38] sm:$0xf]
      %v1669 = vld [vmem:[%s192 + $0x3c] sm:$0xf]
      %v1670 = vld [vmem:[%s192 + $0x40] sm:$0xf]
      %v1671 = vld [vmem:[%s192 + $0x44] sm:$0xf]
      %v1672 = vld [vmem:[%s192 + $0x48] sm:$0xf]
      %v1673 = vld [vmem:[%s192 + $0x4c] sm:$0xf]
      %v1674 = vld [vmem:[%s192 + $0x50] sm:$0xf]
      %v1675 = vld [vmem:[%s192 + $0x54] sm:$0xf]
      %v1676 = vld [vmem:[%s192 + $0x58] sm:$0xf]
      %v1677 = vld [vmem:[%s192 + $0x5c] sm:$0xf]
      %v1678 = vld [vmem:[%s192 + $0x60] sm:$0xf]
      %v1679 = vld [vmem:[%s192 + $0x64] sm:$0xf]
      %v1680 = vld [vmem:[%s192 + $0x68] sm:$0xf]
      %v1681 = vld [vmem:[%s192 + $0x6c] sm:$0xf]
      %v1682 = vld [vmem:[%s192 + $0x70] sm:$0xf]
      %v1683 = vld [vmem:[%s192 + $0x74] sm:$0xf]
      %v1684 = vld [vmem:[%s192 + $0x78] sm:$0xf]
      %v1685 = vld [vmem:[%s192 + $0x7c] sm:$0xf]
      %v1686 = vld [vmem:[%s192 + $0x80] sm:$0xf]
      %v1687 = vld [vmem:[%s192 + $0x84] sm:$0xf]
      %v1688 = vld [vmem:[%s192 + $0x88] sm:$0x1]
      %s1689 = scalar_lea.vmem %s1, 4
      %v1690 = vld [vmem:[%s1689] sm:$0x1]
      %v1691 = vunpack.c.l.bf16 %v1656
      %v1692 = vunpack.c.l.bf16 %v1657
      %v1693 = vunpack.c.l.bf16 %v1658
      %v1694 = vunpack.c.l.bf16 %v1659
      %v1695 = vunpack.c.l.bf16 %v1660
      %v1696 = vunpack.c.l.bf16 %v1661
      %v1697 = vunpack.c.l.bf16 %v1662
      %v1698 = vunpack.c.l.bf16 %v1663
      %v1699 = vunpack.c.l.bf16 %v1664
      %v1700 = vunpack.c.l.bf16 %v1665
      %v1701 = vunpack.c.l.bf16 %v1666
      %v1702 = vunpack.c.l.bf16 %v1667
      %v1703 = vunpack.c.l.bf16 %v1668
      %v1704 = vunpack.c.l.bf16 %v1669
      %v1705 = vunpack.c.l.bf16 %v1670
      %v1706 = vunpack.c.l.bf16 %v1671
      %v1707 = vunpack.c.l.bf16 %v1672
      %v1708 = vunpack.c.l.bf16 %v1673
      %v1709 = vunpack.c.l.bf16 %v1674
      %v1710 = vunpack.c.l.bf16 %v1675
      %v1711 = vunpack.c.l.bf16 %v1676
      %v1712 = vunpack.c.l.bf16 %v1677
      %v1713 = vunpack.c.l.bf16 %v1678
      %v1714 = vunpack.c.l.bf16 %v1679
      %v1715 = vunpack.c.l.bf16 %v1680
      %v1716 = vunpack.c.l.bf16 %v1681
      %v1717 = vunpack.c.l.bf16 %v1682
      %v1718 = vunpack.c.l.bf16 %v1683
      %v1719 = vunpack.c.l.bf16 %v1684
      %v1720 = vunpack.c.l.bf16 %v1685
      %v1721 = vunpack.c.l.bf16 %v1686
      %v1722 = vunpack.c.l.bf16 %v1687
      %v1723 = vunpack.c.l.bf16 %v1688
      %v1724 = vunpack.c.l.bf16 %v1690
      %1726 = vset.pattern.permute.xlu0 0
      %1727 = vperm.xlu0 %1726, %v1691
      %v1728 = vpop.permute.xlu0 %1727
      %1731 = vset.pattern.permute.xlu0 0
      %1732 = vperm.xlu0 %1731, %v1692
      %v1733 = vpop.permute.xlu0 %1732
      %1736 = vset.pattern.permute.xlu0 0
      %1737 = vperm.xlu0 %1736, %v1693
      %v1738 = vpop.permute.xlu0 %1737
      %1741 = vset.pattern.permute.xlu0 0
      %1742 = vperm.xlu0 %1741, %v1694
      %v1743 = vpop.permute.xlu0 %1742
      %1746 = vset.pattern.permute.xlu0 0
      %1747 = vperm.xlu0 %1746, %v1695
      %v1748 = vpop.permute.xlu0 %1747
      %1751 = vset.pattern.permute.xlu0 0
      %1752 = vperm.xlu0 %1751, %v1696
      %v1753 = vpop.permute.xlu0 %1752
      %1756 = vset.pattern.permute.xlu0 0
      %1757 = vperm.xlu0 %1756, %v1697
      %v1758 = vpop.permute.xlu0 %1757
      %1761 = vset.pattern.permute.xlu0 0
      %1762 = vperm.xlu0 %1761, %v1698
      %v1763 = vpop.permute.xlu0 %1762
      %1766 = vset.pattern.permute.xlu0 0
      %1767 = vperm.xlu0 %1766, %v1699
      %v1768 = vpop.permute.xlu0 %1767
      %1771 = vset.pattern.permute.xlu0 0
      %1772 = vperm.xlu0 %1771, %v1700
      %v1773 = vpop.permute.xlu0 %1772
      %1776 = vset.pattern.permute.xlu0 0
      %1777 = vperm.xlu0 %1776, %v1701
      %v1778 = vpop.permute.xlu0 %1777
      %1781 = vset.pattern.permute.xlu0 0
      %1782 = vperm.xlu0 %1781, %v1702
      %v1783 = vpop.permute.xlu0 %1782
      %1786 = vset.pattern.permute.xlu0 0
      %1787 = vperm.xlu0 %1786, %v1703
      %v1788 = vpop.permute.xlu0 %1787
      %1791 = vset.pattern.permute.xlu0 0
      %1792 = vperm.xlu0 %1791, %v1704
      %v1793 = vpop.permute.xlu0 %1792
      %1796 = vset.pattern.permute.xlu0 0
      %1797 = vperm.xlu0 %1796, %v1705
      %v1798 = vpop.permute.xlu0 %1797
      %1801 = vset.pattern.permute.xlu0 0
      %1802 = vperm.xlu0 %1801, %v1706
      %v1803 = vpop.permute.xlu0 %1802
      %1806 = vset.pattern.permute.xlu0 0
      %1807 = vperm.xlu0 %1806, %v1707
      %v1808 = vpop.permute.xlu0 %1807
      %1811 = vset.pattern.permute.xlu0 0
      %1812 = vperm.xlu0 %1811, %v1708
      %v1813 = vpop.permute.xlu0 %1812
      %1816 = vset.pattern.permute.xlu0 0
      %1817 = vperm.xlu0 %1816, %v1709
      %v1818 = vpop.permute.xlu0 %1817
      %1821 = vset.pattern.permute.xlu0 0
      %1822 = vperm.xlu0 %1821, %v1710
      %v1823 = vpop.permute.xlu0 %1822
      %1826 = vset.pattern.permute.xlu0 0
      %1827 = vperm.xlu0 %1826, %v1711
      %v1828 = vpop.permute.xlu0 %1827
      %1831 = vset.pattern.permute.xlu0 0
      %1832 = vperm.xlu0 %1831, %v1712
      %v1833 = vpop.permute.xlu0 %1832
      %1836 = vset.pattern.permute.xlu0 0
      %1837 = vperm.xlu0 %1836, %v1713
      %v1838 = vpop.permute.xlu0 %1837
      %1841 = vset.pattern.permute.xlu0 0
      %1842 = vperm.xlu0 %1841, %v1714
      %v1843 = vpop.permute.xlu0 %1842
      %1846 = vset.pattern.permute.xlu0 0
      %1847 = vperm.xlu0 %1846, %v1715
      %v1848 = vpop.permute.xlu0 %1847
      %1851 = vset.pattern.permute.xlu0 0
      %1852 = vperm.xlu0 %1851, %v1716
      %v1853 = vpop.permute.xlu0 %1852
      %1856 = vset.pattern.permute.xlu0 0
      %1857 = vperm.xlu0 %1856, %v1717
      %v1858 = vpop.permute.xlu0 %1857
      %1861 = vset.pattern.permute.xlu0 0
      %1862 = vperm.xlu0 %1861, %v1718
      %v1863 = vpop.permute.xlu0 %1862
      %1866 = vset.pattern.permute.xlu0 0
      %1867 = vperm.xlu0 %1866, %v1719
      %v1868 = vpop.permute.xlu0 %1867
      %1871 = vset.pattern.permute.xlu0 0
      %1872 = vperm.xlu0 %1871, %v1720
      %v1873 = vpop.permute.xlu0 %1872
      %1876 = vset.pattern.permute.xlu0 0
      %1877 = vperm.xlu0 %1876, %v1721
      %v1878 = vpop.permute.xlu0 %1877
      %1881 = vset.pattern.permute.xlu0 0
      %1882 = vperm.xlu0 %1881, %v1722
      %v1883 = vpop.permute.xlu0 %1882
      %1886 = vset.pattern.permute.xlu0 0
      %1887 = vperm.xlu0 %1886, %v1723
      %v1888 = vpop.permute.xlu0 %1887
      %v1890 = vlaneseq
      %v1891 = vshrl.u32 %v1890, 7
      %v1892 = vsub.s32 0, %v1891
      %v1893 = vrot.slane %v1724, %v1892
      %v1894 = vmul.f32 %v1728, %v1893
      %v1895 = vmul.f32 %v1733, %v1893
      %v1896 = vmul.f32 %v1738, %v1893
      %v1897 = vmul.f32 %v1743, %v1893
      %v1898 = vmul.f32 %v1748, %v1893
      %v1899 = vmul.f32 %v1753, %v1893
      %v1900 = vmul.f32 %v1758, %v1893
      %v1901 = vmul.f32 %v1763, %v1893
      %v1902 = vmul.f32 %v1768, %v1893
      %v1903 = vmul.f32 %v1773, %v1893
      %v1904 = vmul.f32 %v1778, %v1893
      %v1905 = vmul.f32 %v1783, %v1893
      %v1906 = vmul.f32 %v1788, %v1893
      %v1907 = vmul.f32 %v1793, %v1893
      %v1908 = vmul.f32 %v1798, %v1893
      %v1909 = vmul.f32 %v1803, %v1893
      %v1910 = vmul.f32 %v1808, %v1893
      %v1911 = vmul.f32 %v1813, %v1893
      %v1912 = vmul.f32 %v1818, %v1893
      %v1913 = vmul.f32 %v1823, %v1893
      %v1914 = vmul.f32 %v1828, %v1893
      %v1915 = vmul.f32 %v1833, %v1893
      %v1916 = vmul.f32 %v1838, %v1893
      %v1917 = vmul.f32 %v1843, %v1893
      %v1918 = vmul.f32 %v1848, %v1893
      %v1919 = vmul.f32 %v1853, %v1893
      %v1920 = vmul.f32 %v1858, %v1893
      %v1921 = vmul.f32 %v1863, %v1893
      %v1922 = vmul.f32 %v1868, %v1893
      %v1923 = vmul.f32 %v1873, %v1893
      %v1924 = vmul.f32 %v1878, %v1893
      %v1925 = vmul.f32 %v1883, %v1893
      %v1926 = vmul.f32 %v1888, %v1893
      %v1960 = vrot.slane %v1894, 1
      %v1961 = vrot.slane %v1895, 1
      %v1962 = vsel %vm957, %v1960, %v1961
      %v1963 = vrot.slane %v1896, 1
      %v1964 = vsel %vm957, %v1961, %v1963
      %v1965 = vrot.slane %v1897, 1
      %v1966 = vsel %vm957, %v1963, %v1965
      %v1967 = vrot.slane %v1898, 1
      %v1968 = vsel %vm957, %v1965, %v1967
      %v1969 = vrot.slane %v1899, 1
      %v1970 = vsel %vm957, %v1967, %v1969
      %v1971 = vrot.slane %v1900, 1
      %v1972 = vsel %vm957, %v1969, %v1971
      %v1973 = vrot.slane %v1901, 1
      %v1974 = vsel %vm957, %v1971, %v1973
      %v1975 = vrot.slane %v1902, 1
      %v1976 = vsel %vm957, %v1973, %v1975
      %v1977 = vrot.slane %v1903, 1
      %v1978 = vsel %vm957, %v1975, %v1977
      %v1979 = vrot.slane %v1904, 1
      %v1980 = vsel %vm957, %v1977, %v1979
      %v1981 = vrot.slane %v1905, 1
      %v1982 = vsel %vm957, %v1979, %v1981
      %v1983 = vrot.slane %v1906, 1
      %v1984 = vsel %vm957, %v1981, %v1983
      %v1985 = vrot.slane %v1907, 1
      %v1986 = vsel %vm957, %v1983, %v1985
      %v1987 = vrot.slane %v1908, 1
      %v1988 = vsel %vm957, %v1985, %v1987
      %v1989 = vrot.slane %v1909, 1
      %v1990 = vsel %vm957, %v1987, %v1989
      %v1991 = vrot.slane %v1910, 1
      %v1992 = vsel %vm957, %v1989, %v1991
      %v1993 = vrot.slane %v1911, 1
      %v1994 = vsel %vm957, %v1991, %v1993
      %v1995 = vrot.slane %v1912, 1
      %v1996 = vsel %vm957, %v1993, %v1995
      %v1997 = vrot.slane %v1913, 1
      %v1998 = vsel %vm957, %v1995, %v1997
      %v1999 = vrot.slane %v1914, 1
      %v2000 = vsel %vm957, %v1997, %v1999
      %v2001 = vrot.slane %v1915, 1
      %v2002 = vsel %vm957, %v1999, %v2001
      %v2003 = vrot.slane %v1916, 1
      %v2004 = vsel %vm957, %v2001, %v2003
      %v2005 = vrot.slane %v1917, 1
      %v2006 = vsel %vm957, %v2003, %v2005
      %v2007 = vrot.slane %v1918, 1
      %v2008 = vsel %vm957, %v2005, %v2007
      %v2009 = vrot.slane %v1919, 1
      %v2010 = vsel %vm957, %v2007, %v2009
      %v2011 = vrot.slane %v1920, 1
      %v2012 = vsel %vm957, %v2009, %v2011
      %v2013 = vrot.slane %v1921, 1
      %v2014 = vsel %vm957, %v2011, %v2013
      %v2015 = vrot.slane %v1922, 1
      %v2016 = vsel %vm957, %v2013, %v2015
      %v2017 = vrot.slane %v1923, 1
      %v2018 = vsel %vm957, %v2015, %v2017
      %v2019 = vrot.slane %v1924, 1
      %v2020 = vsel %vm957, %v2017, %v2019
      %v2021 = vrot.slane %v1925, 1
      %v2022 = vsel %vm957, %v2019, %v2021
      %v2023 = vrot.slane %v1926, 1
      %v2024 = vsel %vm957, %v2021, %v2023
      %v2057 = vadd.f32 %v1624, %v1962
      %v2058 = vadd.f32 %v1625, %v1964
      %v2059 = vadd.f32 %v1626, %v1966
      %v2060 = vadd.f32 %v1627, %v1968
      %v2061 = vadd.f32 %v1628, %v1970
      %v2062 = vadd.f32 %v1629, %v1972
      %v2063 = vadd.f32 %v1630, %v1974
      %v2064 = vadd.f32 %v1631, %v1976
      %v2065 = vadd.f32 %v1632, %v1978
      %v2066 = vadd.f32 %v1633, %v1980
      %v2067 = vadd.f32 %v1634, %v1982
      %v2068 = vadd.f32 %v1635, %v1984
      %v2069 = vadd.f32 %v1636, %v1986
      %v2070 = vadd.f32 %v1637, %v1988
      %v2071 = vadd.f32 %v1638, %v1990
      %v2072 = vadd.f32 %v1639, %v1992
      %v2073 = vadd.f32 %v1640, %v1994
      %v2074 = vadd.f32 %v1641, %v1996
      %v2075 = vadd.f32 %v1642, %v1998
      %v2076 = vadd.f32 %v1643, %v2000
      %v2077 = vadd.f32 %v1644, %v2002
      %v2078 = vadd.f32 %v1645, %v2004
      %v2079 = vadd.f32 %v1646, %v2006
      %v2080 = vadd.f32 %v1647, %v2008
      %v2081 = vadd.f32 %v1648, %v2010
      %v2082 = vadd.f32 %v1649, %v2012
      %v2083 = vadd.f32 %v1650, %v2014
      %v2084 = vadd.f32 %v1651, %v2016
      %v2085 = vadd.f32 %v1652, %v2018
      %v2086 = vadd.f32 %v1653, %v2020
      %v2087 = vadd.f32 %v1654, %v2022
      %v2088 = vadd.f32 %v1655, %v2024
      %v2089 = vld [vmem:[%s192 + $0x8] sm:$0xe]
      %s2090 = scalar_lea.vmem %s1, 5
      %v2091 = vld [vmem:[%s2090] sm:$0x1]
      %v2092 = vunpack.c.l.bf16 %v2089
      %v2093 = vunpack.c.l.bf16 %v2091
      %2095 = vset.pattern.permute.xlu0 0
      %2096 = vperm.xlu0 %2095, %v2092
      %v2097 = vpop.permute.xlu0 %2096
      %v2099 = vlaneseq
      %v2100 = vshrl.u32 %v2099, 7
      %v2101 = vsub.s32 0, %v2100
      %v2102 = vrot.slane %v2093, %v2101
      %v2103 = vmul.f32 %v2097, %v2102
      %v2104 = vmul.f32 %v1733, %v2102
      %v2105 = vmul.f32 %v1738, %v2102
      %v2106 = vmul.f32 %v1743, %v2102
      %v2107 = vmul.f32 %v1748, %v2102
      %v2108 = vmul.f32 %v1753, %v2102
      %v2109 = vmul.f32 %v1758, %v2102
      %v2110 = vmul.f32 %v1763, %v2102
      %v2111 = vmul.f32 %v1768, %v2102
      %v2112 = vmul.f32 %v1773, %v2102
      %v2113 = vmul.f32 %v1778, %v2102
      %v2114 = vmul.f32 %v1783, %v2102
      %v2115 = vmul.f32 %v1788, %v2102
      %v2116 = vmul.f32 %v1793, %v2102
      %v2117 = vmul.f32 %v1798, %v2102
      %v2118 = vmul.f32 %v1803, %v2102
      %v2119 = vmul.f32 %v1808, %v2102
      %v2120 = vmul.f32 %v1813, %v2102
      %v2121 = vmul.f32 %v1818, %v2102
      %v2122 = vmul.f32 %v1823, %v2102
      %v2123 = vmul.f32 %v1828, %v2102
      %v2124 = vmul.f32 %v1833, %v2102
      %v2125 = vmul.f32 %v1838, %v2102
      %v2126 = vmul.f32 %v1843, %v2102
      %v2127 = vmul.f32 %v1848, %v2102
      %v2128 = vmul.f32 %v1853, %v2102
      %v2129 = vmul.f32 %v1858, %v2102
      %v2130 = vmul.f32 %v1863, %v2102
      %v2131 = vmul.f32 %v1868, %v2102
      %v2132 = vmul.f32 %v1873, %v2102
      %v2133 = vmul.f32 %v1878, %v2102
      %v2134 = vmul.f32 %v1883, %v2102
      %v2135 = vmul.f32 %v1888, %v2102
      %v2169 = vrot.slane %v2103, 2
      %v2170 = vrot.slane %v2104, 2
      %v2171 = vsel %vm1167, %v2169, %v2170
      %v2172 = vrot.slane %v2105, 2
      %v2173 = vsel %vm1167, %v2170, %v2172
      %v2174 = vrot.slane %v2106, 2
      %v2175 = vsel %vm1167, %v2172, %v2174
      %v2176 = vrot.slane %v2107, 2
      %v2177 = vsel %vm1167, %v2174, %v2176
      %v2178 = vrot.slane %v2108, 2
      %v2179 = vsel %vm1167, %v2176, %v2178
      %v2180 = vrot.slane %v2109, 2
      %v2181 = vsel %vm1167, %v2178, %v2180
      %v2182 = vrot.slane %v2110, 2
      %v2183 = vsel %vm1167, %v2180, %v2182
      %v2184 = vrot.slane %v2111, 2
      %v2185 = vsel %vm1167, %v2182, %v2184
      %v2186 = vrot.slane %v2112, 2
      %v2187 = vsel %vm1167, %v2184, %v2186
      %v2188 = vrot.slane %v2113, 2
      %v2189 = vsel %vm1167, %v2186, %v2188
      %v2190 = vrot.slane %v2114, 2
      %v2191 = vsel %vm1167, %v2188, %v2190
      %v2192 = vrot.slane %v2115, 2
      %v2193 = vsel %vm1167, %v2190, %v2192
      %v2194 = vrot.slane %v2116, 2
      %v2195 = vsel %vm1167, %v2192, %v2194
      %v2196 = vrot.slane %v2117, 2
      %v2197 = vsel %vm1167, %v2194, %v2196
      %v2198 = vrot.slane %v2118, 2
      %v2199 = vsel %vm1167, %v2196, %v2198
      %v2200 = vrot.slane %v2119, 2
      %v2201 = vsel %vm1167, %v2198, %v2200
      %v2202 = vrot.slane %v2120, 2
      %v2203 = vsel %vm1167, %v2200, %v2202
      %v2204 = vrot.slane %v2121, 2
      %v2205 = vsel %vm1167, %v2202, %v2204
      %v2206 = vrot.slane %v2122, 2
      %v2207 = vsel %vm1167, %v2204, %v2206
      %v2208 = vrot.slane %v2123, 2
      %v2209 = vsel %vm1167, %v2206, %v2208
      %v2210 = vrot.slane %v2124, 2
      %v2211 = vsel %vm1167, %v2208, %v2210
      %v2212 = vrot.slane %v2125, 2
      %v2213 = vsel %vm1167, %v2210, %v2212
      %v2214 = vrot.slane %v2126, 2
      %v2215 = vsel %vm1167, %v2212, %v2214
      %v2216 = vrot.slane %v2127, 2
      %v2217 = vsel %vm1167, %v2214, %v2216
      %v2218 = vrot.slane %v2128, 2
      %v2219 = vsel %vm1167, %v2216, %v2218
      %v2220 = vrot.slane %v2129, 2
      %v2221 = vsel %vm1167, %v2218, %v2220
      %v2222 = vrot.slane %v2130, 2
      %v2223 = vsel %vm1167, %v2220, %v2222
      %v2224 = vrot.slane %v2131, 2
      %v2225 = vsel %vm1167, %v2222, %v2224
      %v2226 = vrot.slane %v2132, 2
      %v2227 = vsel %vm1167, %v2224, %v2226
      %v2228 = vrot.slane %v2133, 2
      %v2229 = vsel %vm1167, %v2226, %v2228
      %v2230 = vrot.slane %v2134, 2
      %v2231 = vsel %vm1167, %v2228, %v2230
      %v2232 = vrot.slane %v2135, 2
      %v2233 = vsel %vm1167, %v2230, %v2232
      %v2266 = vsel %vm295, 0.0, %v2171
      %v2267 = vsel %vm296, 0.0, %v2173
      %v2268 = vsel %vm297, 0.0, %v2175
      %v2269 = vsel %vm298, 0.0, %v2177
      %v2270 = vsel %vm299, 0.0, %v2179
      %v2271 = vsel %vm300, 0.0, %v2181
      %v2272 = vsel %vm301, 0.0, %v2183
      %v2273 = vsel %vm302, 0.0, %v2185
      %v2274 = vsel %vm303, 0.0, %v2187
      %v2275 = vsel %vm304, 0.0, %v2189
      %v2276 = vsel %vm305, 0.0, %v2191
      %v2277 = vsel %vm306, 0.0, %v2193
      %v2278 = vsel %vm307, 0.0, %v2195
      %v2279 = vsel %vm308, 0.0, %v2197
      %v2280 = vsel %vm309, 0.0, %v2199
      %v2281 = vsel %vm310, 0.0, %v2201
      %v2282 = vsel %vm311, 0.0, %v2203
      %v2283 = vsel %vm312, 0.0, %v2205
      %v2284 = vsel %vm313, 0.0, %v2207
      %v2285 = vsel %vm314, 0.0, %v2209
      %v2286 = vsel %vm315, 0.0, %v2211
      %v2287 = vsel %vm316, 0.0, %v2213
      %v2288 = vsel %vm317, 0.0, %v2215
      %v2289 = vsel %vm318, 0.0, %v2217
      %v2290 = vsel %vm319, 0.0, %v2219
      %v2291 = vsel %vm320, 0.0, %v2221
      %v2292 = vsel %vm321, 0.0, %v2223
      %v2293 = vsel %vm322, 0.0, %v2225
      %v2294 = vsel %vm323, 0.0, %v2227
      %v2295 = vsel %vm324, 0.0, %v2229
      %v2296 = vsel %vm325, 0.0, %v2231
      %v2297 = vsel %vm326, 0.0, %v2233
      %v2298 = vadd.f32 %v2057, %v2266
      %v2299 = vadd.f32 %v2058, %v2267
      %v2300 = vadd.f32 %v2059, %v2268
      %v2301 = vadd.f32 %v2060, %v2269
      %v2302 = vadd.f32 %v2061, %v2270
      %v2303 = vadd.f32 %v2062, %v2271
      %v2304 = vadd.f32 %v2063, %v2272
      %v2305 = vadd.f32 %v2064, %v2273
      %v2306 = vadd.f32 %v2065, %v2274
      %v2307 = vadd.f32 %v2066, %v2275
      %v2308 = vadd.f32 %v2067, %v2276
      %v2309 = vadd.f32 %v2068, %v2277
      %v2310 = vadd.f32 %v2069, %v2278
      %v2311 = vadd.f32 %v2070, %v2279
      %v2312 = vadd.f32 %v2071, %v2280
      %v2313 = vadd.f32 %v2072, %v2281
      %v2314 = vadd.f32 %v2073, %v2282
      %v2315 = vadd.f32 %v2074, %v2283
      %v2316 = vadd.f32 %v2075, %v2284
      %v2317 = vadd.f32 %v2076, %v2285
      %v2318 = vadd.f32 %v2077, %v2286
      %v2319 = vadd.f32 %v2078, %v2287
      %v2320 = vadd.f32 %v2079, %v2288
      %v2321 = vadd.f32 %v2080, %v2289
      %v2322 = vadd.f32 %v2081, %v2290
      %v2323 = vadd.f32 %v2082, %v2291
      %v2324 = vadd.f32 %v2083, %v2292
      %v2325 = vadd.f32 %v2084, %v2293
      %v2326 = vadd.f32 %v2085, %v2294
      %v2327 = vadd.f32 %v2086, %v2295
      %v2328 = vadd.f32 %v2087, %v2296
      %v2329 = vadd.f32 %v2088, %v2297
      %v2330 = vld [vmem:[%s192 + $0x10] sm:$0xf]
      %v2331 = vld [vmem:[%s192 + $0x14] sm:$0xf]
      %v2332 = vld [vmem:[%s192 + $0x18] sm:$0xf]
      %v2333 = vld [vmem:[%s192 + $0x1c] sm:$0xf]
      %v2334 = vld [vmem:[%s192 + $0x20] sm:$0xf]
      %v2335 = vld [vmem:[%s192 + $0x24] sm:$0xf]
      %v2336 = vld [vmem:[%s192 + $0x28] sm:$0xf]
      %v2337 = vld [vmem:[%s192 + $0x2c] sm:$0xf]
      %v2338 = vld [vmem:[%s192 + $0x30] sm:$0xf]
      %v2339 = vld [vmem:[%s192 + $0x34] sm:$0xf]
      %v2340 = vld [vmem:[%s192 + $0x38] sm:$0xf]
      %v2341 = vld [vmem:[%s192 + $0x3c] sm:$0xf]
      %v2342 = vld [vmem:[%s192 + $0x40] sm:$0xf]
      %v2343 = vld [vmem:[%s192 + $0x44] sm:$0xf]
      %v2344 = vld [vmem:[%s192 + $0x48] sm:$0xf]
      %v2345 = vld [vmem:[%s192 + $0x4c] sm:$0xf]
      %v2346 = vld [vmem:[%s192 + $0x50] sm:$0xf]
      %v2347 = vld [vmem:[%s192 + $0x54] sm:$0xf]
      %v2348 = vld [vmem:[%s192 + $0x58] sm:$0xf]
      %v2349 = vld [vmem:[%s192 + $0x5c] sm:$0xf]
      %v2350 = vld [vmem:[%s192 + $0x60] sm:$0xf]
      %v2351 = vld [vmem:[%s192 + $0x64] sm:$0xf]
      %v2352 = vld [vmem:[%s192 + $0x68] sm:$0xf]
      %v2353 = vld [vmem:[%s192 + $0x6c] sm:$0xf]
      %v2354 = vld [vmem:[%s192 + $0x70] sm:$0xf]
      %v2355 = vld [vmem:[%s192 + $0x74] sm:$0xf]
      %v2356 = vld [vmem:[%s192 + $0x78] sm:$0xf]
      %v2357 = vld [vmem:[%s192 + $0x7c] sm:$0xf]
      %v2358 = vld [vmem:[%s192 + $0x80] sm:$0xf]
      %v2359 = vld [vmem:[%s192 + $0x84] sm:$0xf]
      %v2360 = vld [vmem:[%s192 + $0x88] sm:$0xf]
      %v2361 = vld [vmem:[%s192 + $0x8c] sm:$0xf]
      %s2362 = scalar_lea.vmem %s1, 6
      %v2363 = vld [vmem:[%s2362] sm:$0x1]
      %v2364 = vunpack.c.l.bf16 %v2330
      %v2365 = vunpack.c.l.bf16 %v2331
      %v2366 = vunpack.c.l.bf16 %v2332
      %v2367 = vunpack.c.l.bf16 %v2333
      %v2368 = vunpack.c.l.bf16 %v2334
      %v2369 = vunpack.c.l.bf16 %v2335
      %v2370 = vunpack.c.l.bf16 %v2336
      %v2371 = vunpack.c.l.bf16 %v2337
      %v2372 = vunpack.c.l.bf16 %v2338
      %v2373 = vunpack.c.l.bf16 %v2339
      %v2374 = vunpack.c.l.bf16 %v2340
      %v2375 = vunpack.c.l.bf16 %v2341
      %v2376 = vunpack.c.l.bf16 %v2342
      %v2377 = vunpack.c.l.bf16 %v2343
      %v2378 = vunpack.c.l.bf16 %v2344
      %v2379 = vunpack.c.l.bf16 %v2345
      %v2380 = vunpack.c.l.bf16 %v2346
      %v2381 = vunpack.c.l.bf16 %v2347
      %v2382 = vunpack.c.l.bf16 %v2348
      %v2383 = vunpack.c.l.bf16 %v2349
      %v2384 = vunpack.c.l.bf16 %v2350
      %v2385 = vunpack.c.l.bf16 %v2351
      %v2386 = vunpack.c.l.bf16 %v2352
      %v2387 = vunpack.c.l.bf16 %v2353
      %v2388 = vunpack.c.l.bf16 %v2354
      %v2389 = vunpack.c.l.bf16 %v2355
      %v2390 = vunpack.c.l.bf16 %v2356
      %v2391 = vunpack.c.l.bf16 %v2357
      %v2392 = vunpack.c.l.bf16 %v2358
      %v2393 = vunpack.c.l.bf16 %v2359
      %v2394 = vunpack.c.l.bf16 %v2360
      %v2395 = vunpack.c.l.bf16 %v2361
      %v2396 = vunpack.c.l.bf16 %v2363
      %2398 = vset.pattern.permute.xlu0 0
      %2399 = vperm.xlu0 %2398, %v2364
      %v2400 = vpop.permute.xlu0 %2399
      %2403 = vset.pattern.permute.xlu0 0
      %2404 = vperm.xlu0 %2403, %v2365
      %v2405 = vpop.permute.xlu0 %2404
      %2408 = vset.pattern.permute.xlu0 0
      %2409 = vperm.xlu0 %2408, %v2366
      %v2410 = vpop.permute.xlu0 %2409
      %2413 = vset.pattern.permute.xlu0 0
      %2414 = vperm.xlu0 %2413, %v2367
      %v2415 = vpop.permute.xlu0 %2414
      %2418 = vset.pattern.permute.xlu0 0
      %2419 = vperm.xlu0 %2418, %v2368
      %v2420 = vpop.permute.xlu0 %2419
      %2423 = vset.pattern.permute.xlu0 0
      %2424 = vperm.xlu0 %2423, %v2369
      %v2425 = vpop.permute.xlu0 %2424
      %2428 = vset.pattern.permute.xlu0 0
      %2429 = vperm.xlu0 %2428, %v2370
      %v2430 = vpop.permute.xlu0 %2429
      %2433 = vset.pattern.permute.xlu0 0
      %2434 = vperm.xlu0 %2433, %v2371
      %v2435 = vpop.permute.xlu0 %2434
      %2438 = vset.pattern.permute.xlu0 0
      %2439 = vperm.xlu0 %2438, %v2372
      %v2440 = vpop.permute.xlu0 %2439
      %2443 = vset.pattern.permute.xlu0 0
      %2444 = vperm.xlu0 %2443, %v2373
      %v2445 = vpop.permute.xlu0 %2444
      %2448 = vset.pattern.permute.xlu0 0
      %2449 = vperm.xlu0 %2448, %v2374
      %v2450 = vpop.permute.xlu0 %2449
      %2453 = vset.pattern.permute.xlu0 0
      %2454 = vperm.xlu0 %2453, %v2375
      %v2455 = vpop.permute.xlu0 %2454
      %2458 = vset.pattern.permute.xlu0 0
      %2459 = vperm.xlu0 %2458, %v2376
      %v2460 = vpop.permute.xlu0 %2459
      %2463 = vset.pattern.permute.xlu0 0
      %2464 = vperm.xlu0 %2463, %v2377
      %v2465 = vpop.permute.xlu0 %2464
      %2468 = vset.pattern.permute.xlu0 0
      %2469 = vperm.xlu0 %2468, %v2378
      %v2470 = vpop.permute.xlu0 %2469
      %2473 = vset.pattern.permute.xlu0 0
      %2474 = vperm.xlu0 %2473, %v2379
      %v2475 = vpop.permute.xlu0 %2474
      %2478 = vset.pattern.permute.xlu0 0
      %2479 = vperm.xlu0 %2478, %v2380
      %v2480 = vpop.permute.xlu0 %2479
      %2483 = vset.pattern.permute.xlu0 0
      %2484 = vperm.xlu0 %2483, %v2381
      %v2485 = vpop.permute.xlu0 %2484
      %2488 = vset.pattern.permute.xlu0 0
      %2489 = vperm.xlu0 %2488, %v2382
      %v2490 = vpop.permute.xlu0 %2489
      %2493 = vset.pattern.permute.xlu0 0
      %2494 = vperm.xlu0 %2493, %v2383
      %v2495 = vpop.permute.xlu0 %2494
      %2498 = vset.pattern.permute.xlu0 0
      %2499 = vperm.xlu0 %2498, %v2384
      %v2500 = vpop.permute.xlu0 %2499
      %2503 = vset.pattern.permute.xlu0 0
      %2504 = vperm.xlu0 %2503, %v2385
      %v2505 = vpop.permute.xlu0 %2504
      %2508 = vset.pattern.permute.xlu0 0
      %2509 = vperm.xlu0 %2508, %v2386
      %v2510 = vpop.permute.xlu0 %2509
      %2513 = vset.pattern.permute.xlu0 0
      %2514 = vperm.xlu0 %2513, %v2387
      %v2515 = vpop.permute.xlu0 %2514
      %2518 = vset.pattern.permute.xlu0 0
      %2519 = vperm.xlu0 %2518, %v2388
      %v2520 = vpop.permute.xlu0 %2519
      %2523 = vset.pattern.permute.xlu0 0
      %2524 = vperm.xlu0 %2523, %v2389
      %v2525 = vpop.permute.xlu0 %2524
      %2528 = vset.pattern.permute.xlu0 0
      %2529 = vperm.xlu0 %2528, %v2390
      %v2530 = vpop.permute.xlu0 %2529
      %2533 = vset.pattern.permute.xlu0 0
      %2534 = vperm.xlu0 %2533, %v2391
      %v2535 = vpop.permute.xlu0 %2534
      %2538 = vset.pattern.permute.xlu0 0
      %2539 = vperm.xlu0 %2538, %v2392
      %v2540 = vpop.permute.xlu0 %2539
      %2543 = vset.pattern.permute.xlu0 0
      %2544 = vperm.xlu0 %2543, %v2393
      %v2545 = vpop.permute.xlu0 %2544
      %2548 = vset.pattern.permute.xlu0 0
      %2549 = vperm.xlu0 %2548, %v2394
      %v2550 = vpop.permute.xlu0 %2549
      %2553 = vset.pattern.permute.xlu0 0
      %2554 = vperm.xlu0 %2553, %v2395
      %v2555 = vpop.permute.xlu0 %2554
      %v2557 = vlaneseq
      %v2558 = vshrl.u32 %v2557, 7
      %v2559 = vsub.s32 0, %v2558
      %v2560 = vrot.slane %v2396, %v2559
      %v2561 = vmul.f32 %v2400, %v2560
      %v2562 = vmul.f32 %v2405, %v2560
      %v2563 = vmul.f32 %v2410, %v2560
      %v2564 = vmul.f32 %v2415, %v2560
      %v2565 = vmul.f32 %v2420, %v2560
      %v2566 = vmul.f32 %v2425, %v2560
      %v2567 = vmul.f32 %v2430, %v2560
      %v2568 = vmul.f32 %v2435, %v2560
      %v2569 = vmul.f32 %v2440, %v2560
      %v2570 = vmul.f32 %v2445, %v2560
      %v2571 = vmul.f32 %v2450, %v2560
      %v2572 = vmul.f32 %v2455, %v2560
      %v2573 = vmul.f32 %v2460, %v2560
      %v2574 = vmul.f32 %v2465, %v2560
      %v2575 = vmul.f32 %v2470, %v2560
      %v2576 = vmul.f32 %v2475, %v2560
      %v2577 = vmul.f32 %v2480, %v2560
      %v2578 = vmul.f32 %v2485, %v2560
      %v2579 = vmul.f32 %v2490, %v2560
      %v2580 = vmul.f32 %v2495, %v2560
      %v2581 = vmul.f32 %v2500, %v2560
      %v2582 = vmul.f32 %v2505, %v2560
      %v2583 = vmul.f32 %v2510, %v2560
      %v2584 = vmul.f32 %v2515, %v2560
      %v2585 = vmul.f32 %v2520, %v2560
      %v2586 = vmul.f32 %v2525, %v2560
      %v2587 = vmul.f32 %v2530, %v2560
      %v2588 = vmul.f32 %v2535, %v2560
      %v2589 = vmul.f32 %v2540, %v2560
      %v2590 = vmul.f32 %v2545, %v2560
      %v2591 = vmul.f32 %v2550, %v2560
      %v2592 = vmul.f32 %v2555, %v2560
      %v2593 = vsel %vm263, 0.0, %v2561
      %v2594 = vsel %vm264, 0.0, %v2562
      %v2595 = vsel %vm265, 0.0, %v2563
      %v2596 = vsel %vm266, 0.0, %v2564
      %v2597 = vsel %vm267, 0.0, %v2565
      %v2598 = vsel %vm268, 0.0, %v2566
      %v2599 = vsel %vm269, 0.0, %v2567
      %v2600 = vsel %vm270, 0.0, %v2568
      %v2601 = vsel %vm271, 0.0, %v2569
      %v2602 = vsel %vm272, 0.0, %v2570
      %v2603 = vsel %vm273, 0.0, %v2571
      %v2604 = vsel %vm274, 0.0, %v2572
      %v2605 = vsel %vm275, 0.0, %v2573
      %v2606 = vsel %vm276, 0.0, %v2574
      %v2607 = vsel %vm277, 0.0, %v2575
      %v2608 = vsel %vm278, 0.0, %v2576
      %v2609 = vsel %vm279, 0.0, %v2577
      %v2610 = vsel %vm280, 0.0, %v2578
      %v2611 = vsel %vm281, 0.0, %v2579
      %v2612 = vsel %vm282, 0.0, %v2580
      %v2613 = vsel %vm283, 0.0, %v2581
      %v2614 = vsel %vm284, 0.0, %v2582
      %v2615 = vsel %vm285, 0.0, %v2583
      %v2616 = vsel %vm286, 0.0, %v2584
      %v2617 = vsel %vm287, 0.0, %v2585
      %v2618 = vsel %vm288, 0.0, %v2586
      %v2619 = vsel %vm289, 0.0, %v2587
      %v2620 = vsel %vm290, 0.0, %v2588
      %v2621 = vsel %vm291, 0.0, %v2589
      %v2622 = vsel %vm292, 0.0, %v2590
      %v2623 = vsel %vm293, 0.0, %v2591
      %v2624 = vsel %vm294, 0.0, %v2592
      %v2625 = vadd.f32 %v2298, %v2593
      %v2626 = vadd.f32 %v2299, %v2594
      %v2627 = vadd.f32 %v2300, %v2595
      %v2628 = vadd.f32 %v2301, %v2596
      %v2629 = vadd.f32 %v2302, %v2597
      %v2630 = vadd.f32 %v2303, %v2598
      %v2631 = vadd.f32 %v2304, %v2599
      %v2632 = vadd.f32 %v2305, %v2600
      %v2633 = vadd.f32 %v2306, %v2601
      %v2634 = vadd.f32 %v2307, %v2602
      %v2635 = vadd.f32 %v2308, %v2603
      %v2636 = vadd.f32 %v2309, %v2604
      %v2637 = vadd.f32 %v2310, %v2605
      %v2638 = vadd.f32 %v2311, %v2606
      %v2639 = vadd.f32 %v2312, %v2607
      %v2640 = vadd.f32 %v2313, %v2608
      %v2641 = vadd.f32 %v2314, %v2609
      %v2642 = vadd.f32 %v2315, %v2610
      %v2643 = vadd.f32 %v2316, %v2611
      %v2644 = vadd.f32 %v2317, %v2612
      %v2645 = vadd.f32 %v2318, %v2613
      %v2646 = vadd.f32 %v2319, %v2614
      %v2647 = vadd.f32 %v2320, %v2615
      %v2648 = vadd.f32 %v2321, %v2616
      %v2649 = vadd.f32 %v2322, %v2617
      %v2650 = vadd.f32 %v2323, %v2618
      %v2651 = vadd.f32 %v2324, %v2619
      %v2652 = vadd.f32 %v2325, %v2620
      %v2653 = vadd.f32 %v2326, %v2621
      %v2654 = vadd.f32 %v2327, %v2622
      %v2655 = vadd.f32 %v2328, %v2623
      %v2656 = vadd.f32 %v2329, %v2624
      %v2657 = vld [vmem:[%s192 + $0x10] sm:$0xf]
      %v2658 = vld [vmem:[%s192 + $0x14] sm:$0xf]
      %v2659 = vld [vmem:[%s192 + $0x18] sm:$0xf]
      %v2660 = vld [vmem:[%s192 + $0x1c] sm:$0xf]
      %v2661 = vld [vmem:[%s192 + $0x20] sm:$0xf]
      %v2662 = vld [vmem:[%s192 + $0x24] sm:$0xf]
      %v2663 = vld [vmem:[%s192 + $0x28] sm:$0xf]
      %v2664 = vld [vmem:[%s192 + $0x2c] sm:$0xf]
      %v2665 = vld [vmem:[%s192 + $0x30] sm:$0xf]
      %v2666 = vld [vmem:[%s192 + $0x34] sm:$0xf]
      %v2667 = vld [vmem:[%s192 + $0x38] sm:$0xf]
      %v2668 = vld [vmem:[%s192 + $0x3c] sm:$0xf]
      %v2669 = vld [vmem:[%s192 + $0x40] sm:$0xf]
      %v2670 = vld [vmem:[%s192 + $0x44] sm:$0xf]
      %v2671 = vld [vmem:[%s192 + $0x48] sm:$0xf]
      %v2672 = vld [vmem:[%s192 + $0x4c] sm:$0xf]
      %v2673 = vld [vmem:[%s192 + $0x50] sm:$0xf]
      %v2674 = vld [vmem:[%s192 + $0x54] sm:$0xf]
      %v2675 = vld [vmem:[%s192 + $0x58] sm:$0xf]
      %v2676 = vld [vmem:[%s192 + $0x5c] sm:$0xf]
      %v2677 = vld [vmem:[%s192 + $0x60] sm:$0xf]
      %v2678 = vld [vmem:[%s192 + $0x64] sm:$0xf]
      %v2679 = vld [vmem:[%s192 + $0x68] sm:$0xf]
      %v2680 = vld [vmem:[%s192 + $0x6c] sm:$0xf]
      %v2681 = vld [vmem:[%s192 + $0x70] sm:$0xf]
      %v2682 = vld [vmem:[%s192 + $0x74] sm:$0xf]
      %v2683 = vld [vmem:[%s192 + $0x78] sm:$0xf]
      %v2684 = vld [vmem:[%s192 + $0x7c] sm:$0xf]
      %v2685 = vld [vmem:[%s192 + $0x80] sm:$0xf]
      %v2686 = vld [vmem:[%s192 + $0x84] sm:$0xf]
      %v2687 = vld [vmem:[%s192 + $0x88] sm:$0xf]
      %v2688 = vld [vmem:[%s192 + $0x8c] sm:$0xf]
      %v2689 = vld [vmem:[%s192 + $0x90] sm:$0x1]
      %s2690 = scalar_lea.vmem %s1, 7
      %v2691 = vld [vmem:[%s2690] sm:$0x1]
      %v2692 = vunpack.c.l.bf16 %v2657
      %v2693 = vunpack.c.l.bf16 %v2658
      %v2694 = vunpack.c.l.bf16 %v2659
      %v2695 = vunpack.c.l.bf16 %v2660
      %v2696 = vunpack.c.l.bf16 %v2661
      %v2697 = vunpack.c.l.bf16 %v2662
      %v2698 = vunpack.c.l.bf16 %v2663
      %v2699 = vunpack.c.l.bf16 %v2664
      %v2700 = vunpack.c.l.bf16 %v2665
      %v2701 = vunpack.c.l.bf16 %v2666
      %v2702 = vunpack.c.l.bf16 %v2667
      %v2703 = vunpack.c.l.bf16 %v2668
      %v2704 = vunpack.c.l.bf16 %v2669
      %v2705 = vunpack.c.l.bf16 %v2670
      %v2706 = vunpack.c.l.bf16 %v2671
      %v2707 = vunpack.c.l.bf16 %v2672
      %v2708 = vunpack.c.l.bf16 %v2673
      %v2709 = vunpack.c.l.bf16 %v2674
      %v2710 = vunpack.c.l.bf16 %v2675
      %v2711 = vunpack.c.l.bf16 %v2676
      %v2712 = vunpack.c.l.bf16 %v2677
      %v2713 = vunpack.c.l.bf16 %v2678
      %v2714 = vunpack.c.l.bf16 %v2679
      %v2715 = vunpack.c.l.bf16 %v2680
      %v2716 = vunpack.c.l.bf16 %v2681
      %v2717 = vunpack.c.l.bf16 %v2682
      %v2718 = vunpack.c.l.bf16 %v2683
      %v2719 = vunpack.c.l.bf16 %v2684
      %v2720 = vunpack.c.l.bf16 %v2685
      %v2721 = vunpack.c.l.bf16 %v2686
      %v2722 = vunpack.c.l.bf16 %v2687
      %v2723 = vunpack.c.l.bf16 %v2688
      %v2724 = vunpack.c.l.bf16 %v2689
      %v2725 = vunpack.c.l.bf16 %v2691
      %2727 = vset.pattern.permute.xlu0 0
      %2728 = vperm.xlu0 %2727, %v2692
      %v2729 = vpop.permute.xlu0 %2728
      %2732 = vset.pattern.permute.xlu0 0
      %2733 = vperm.xlu0 %2732, %v2693
      %v2734 = vpop.permute.xlu0 %2733
      %2737 = vset.pattern.permute.xlu0 0
      %2738 = vperm.xlu0 %2737, %v2694
      %v2739 = vpop.permute.xlu0 %2738
      %2742 = vset.pattern.permute.xlu0 0
      %2743 = vperm.xlu0 %2742, %v2695
      %v2744 = vpop.permute.xlu0 %2743
      %2747 = vset.pattern.permute.xlu0 0
      %2748 = vperm.xlu0 %2747, %v2696
      %v2749 = vpop.permute.xlu0 %2748
      %2752 = vset.pattern.permute.xlu0 0
      %2753 = vperm.xlu0 %2752, %v2697
      %v2754 = vpop.permute.xlu0 %2753
      %2757 = vset.pattern.permute.xlu0 0
      %2758 = vperm.xlu0 %2757, %v2698
      %v2759 = vpop.permute.xlu0 %2758
      %2762 = vset.pattern.permute.xlu0 0
      %2763 = vperm.xlu0 %2762, %v2699
      %v2764 = vpop.permute.xlu0 %2763
      %2767 = vset.pattern.permute.xlu0 0
      %2768 = vperm.xlu0 %2767, %v2700
      %v2769 = vpop.permute.xlu0 %2768
      %2772 = vset.pattern.permute.xlu0 0
      %2773 = vperm.xlu0 %2772, %v2701
      %v2774 = vpop.permute.xlu0 %2773
      %2777 = vset.pattern.permute.xlu0 0
      %2778 = vperm.xlu0 %2777, %v2702
      %v2779 = vpop.permute.xlu0 %2778
      %2782 = vset.pattern.permute.xlu0 0
      %2783 = vperm.xlu0 %2782, %v2703
      %v2784 = vpop.permute.xlu0 %2783
      %2787 = vset.pattern.permute.xlu0 0
      %2788 = vperm.xlu0 %2787, %v2704
      %v2789 = vpop.permute.xlu0 %2788
      %2792 = vset.pattern.permute.xlu0 0
      %2793 = vperm.xlu0 %2792, %v2705
      %v2794 = vpop.permute.xlu0 %2793
      %2797 = vset.pattern.permute.xlu0 0
      %2798 = vperm.xlu0 %2797, %v2706
      %v2799 = vpop.permute.xlu0 %2798
      %2802 = vset.pattern.permute.xlu0 0
      %2803 = vperm.xlu0 %2802, %v2707
      %v2804 = vpop.permute.xlu0 %2803
      %2807 = vset.pattern.permute.xlu0 0
      %2808 = vperm.xlu0 %2807, %v2708
      %v2809 = vpop.permute.xlu0 %2808
      %2812 = vset.pattern.permute.xlu0 0
      %2813 = vperm.xlu0 %2812, %v2709
      %v2814 = vpop.permute.xlu0 %2813
      %2817 = vset.pattern.permute.xlu0 0
      %2818 = vperm.xlu0 %2817, %v2710
      %v2819 = vpop.permute.xlu0 %2818
      %2822 = vset.pattern.permute.xlu0 0
      %2823 = vperm.xlu0 %2822, %v2711
      %v2824 = vpop.permute.xlu0 %2823
      %2827 = vset.pattern.permute.xlu0 0
      %2828 = vperm.xlu0 %2827, %v2712
      %v2829 = vpop.permute.xlu0 %2828
      %2832 = vset.pattern.permute.xlu0 0
      %2833 = vperm.xlu0 %2832, %v2713
      %v2834 = vpop.permute.xlu0 %2833
      %2837 = vset.pattern.permute.xlu0 0
      %2838 = vperm.xlu0 %2837, %v2714
      %v2839 = vpop.permute.xlu0 %2838
      %2842 = vset.pattern.permute.xlu0 0
      %2843 = vperm.xlu0 %2842, %v2715
      %v2844 = vpop.permute.xlu0 %2843
      %2847 = vset.pattern.permute.xlu0 0
      %2848 = vperm.xlu0 %2847, %v2716
      %v2849 = vpop.permute.xlu0 %2848
      %2852 = vset.pattern.permute.xlu0 0
      %2853 = vperm.xlu0 %2852, %v2717
      %v2854 = vpop.permute.xlu0 %2853
      %2857 = vset.pattern.permute.xlu0 0
      %2858 = vperm.xlu0 %2857, %v2718
      %v2859 = vpop.permute.xlu0 %2858
      %2862 = vset.pattern.permute.xlu0 0
      %2863 = vperm.xlu0 %2862, %v2719
      %v2864 = vpop.permute.xlu0 %2863
      %2867 = vset.pattern.permute.xlu0 0
      %2868 = vperm.xlu0 %2867, %v2720
      %v2869 = vpop.permute.xlu0 %2868
      %2872 = vset.pattern.permute.xlu0 0
      %2873 = vperm.xlu0 %2872, %v2721
      %v2874 = vpop.permute.xlu0 %2873
      %2877 = vset.pattern.permute.xlu0 0
      %2878 = vperm.xlu0 %2877, %v2722
      %v2879 = vpop.permute.xlu0 %2878
      %2882 = vset.pattern.permute.xlu0 0
      %2883 = vperm.xlu0 %2882, %v2723
      %v2884 = vpop.permute.xlu0 %2883
      %2887 = vset.pattern.permute.xlu0 0
      %2888 = vperm.xlu0 %2887, %v2724
      %v2889 = vpop.permute.xlu0 %2888
      %v2891 = vlaneseq
      %v2892 = vshrl.u32 %v2891, 7
      %v2893 = vsub.s32 0, %v2892
      %v2894 = vrot.slane %v2725, %v2893
      %v2895 = vmul.f32 %v2729, %v2894
      %v2896 = vmul.f32 %v2734, %v2894
      %v2897 = vmul.f32 %v2739, %v2894
      %v2898 = vmul.f32 %v2744, %v2894
      %v2899 = vmul.f32 %v2749, %v2894
      %v2900 = vmul.f32 %v2754, %v2894
      %v2901 = vmul.f32 %v2759, %v2894
      %v2902 = vmul.f32 %v2764, %v2894
      %v2903 = vmul.f32 %v2769, %v2894
      %v2904 = vmul.f32 %v2774, %v2894
      %v2905 = vmul.f32 %v2779, %v2894
      %v2906 = vmul.f32 %v2784, %v2894
      %v2907 = vmul.f32 %v2789, %v2894
      %v2908 = vmul.f32 %v2794, %v2894
      %v2909 = vmul.f32 %v2799, %v2894
      %v2910 = vmul.f32 %v2804, %v2894
      %v2911 = vmul.f32 %v2809, %v2894
      %v2912 = vmul.f32 %v2814, %v2894
      %v2913 = vmul.f32 %v2819, %v2894
      %v2914 = vmul.f32 %v2824, %v2894
      %v2915 = vmul.f32 %v2829, %v2894
      %v2916 = vmul.f32 %v2834, %v2894
      %v2917 = vmul.f32 %v2839, %v2894
      %v2918 = vmul.f32 %v2844, %v2894
      %v2919 = vmul.f32 %v2849, %v2894
      %v2920 = vmul.f32 %v2854, %v2894
      %v2921 = vmul.f32 %v2859, %v2894
      %v2922 = vmul.f32 %v2864, %v2894
      %v2923 = vmul.f32 %v2869, %v2894
      %v2924 = vmul.f32 %v2874, %v2894
      %v2925 = vmul.f32 %v2879, %v2894
      %v2926 = vmul.f32 %v2884, %v2894
      %v2927 = vmul.f32 %v2889, %v2894
      %v2961 = vrot.slane %v2895, 1
      %v2962 = vrot.slane %v2896, 1
      %v2963 = vsel %vm957, %v2961, %v2962
      %v2964 = vrot.slane %v2897, 1
      %v2965 = vsel %vm957, %v2962, %v2964
      %v2966 = vrot.slane %v2898, 1
      %v2967 = vsel %vm957, %v2964, %v2966
      %v2968 = vrot.slane %v2899, 1
      %v2969 = vsel %vm957, %v2966, %v2968
      %v2970 = vrot.slane %v2900, 1
      %v2971 = vsel %vm957, %v2968, %v2970
      %v2972 = vrot.slane %v2901, 1
      %v2973 = vsel %vm957, %v2970, %v2972
      %v2974 = vrot.slane %v2902, 1
      %v2975 = vsel %vm957, %v2972, %v2974
      %v2976 = vrot.slane %v2903, 1
      %v2977 = vsel %vm957, %v2974, %v2976
      %v2978 = vrot.slane %v2904, 1
      %v2979 = vsel %vm957, %v2976, %v2978
      %v2980 = vrot.slane %v2905, 1
      %v2981 = vsel %vm957, %v2978, %v2980
      %v2982 = vrot.slane %v2906, 1
      %v2983 = vsel %vm957, %v2980, %v2982
      %v2984 = vrot.slane %v2907, 1
      %v2985 = vsel %vm957, %v2982, %v2984
      %v2986 = vrot.slane %v2908, 1
      %v2987 = vsel %vm957, %v2984, %v2986
      %v2988 = vrot.slane %v2909, 1
      %v2989 = vsel %vm957, %v2986, %v2988
      %v2990 = vrot.slane %v2910, 1
      %v2991 = vsel %vm957, %v2988, %v2990
      %v2992 = vrot.slane %v2911, 1
      %v2993 = vsel %vm957, %v2990, %v2992
      %v2994 = vrot.slane %v2912, 1
      %v2995 = vsel %vm957, %v2992, %v2994
      %v2996 = vrot.slane %v2913, 1
      %v2997 = vsel %vm957, %v2994, %v2996
      %v2998 = vrot.slane %v2914, 1
      %v2999 = vsel %vm957, %v2996, %v2998
      %v3000 = vrot.slane %v2915, 1
      %v3001 = vsel %vm957, %v2998, %v3000
      %v3002 = vrot.slane %v2916, 1
      %v3003 = vsel %vm957, %v3000, %v3002
      %v3004 = vrot.slane %v2917, 1
      %v3005 = vsel %vm957, %v3002, %v3004
      %v3006 = vrot.slane %v2918, 1
      %v3007 = vsel %vm957, %v3004, %v3006
      %v3008 = vrot.slane %v2919, 1
      %v3009 = vsel %vm957, %v3006, %v3008
      %v3010 = vrot.slane %v2920, 1
      %v3011 = vsel %vm957, %v3008, %v3010
      %v3012 = vrot.slane %v2921, 1
      %v3013 = vsel %vm957, %v3010, %v3012
      %v3014 = vrot.slane %v2922, 1
      %v3015 = vsel %vm957, %v3012, %v3014
      %v3016 = vrot.slane %v2923, 1
      %v3017 = vsel %vm957, %v3014, %v3016
      %v3018 = vrot.slane %v2924, 1
      %v3019 = vsel %vm957, %v3016, %v3018
      %v3020 = vrot.slane %v2925, 1
      %v3021 = vsel %vm957, %v3018, %v3020
      %v3022 = vrot.slane %v2926, 1
      %v3023 = vsel %vm957, %v3020, %v3022
      %v3024 = vrot.slane %v2927, 1
      %v3025 = vsel %vm957, %v3022, %v3024
      %v3058 = vadd.f32 %v2625, %v2963
      %v3059 = vadd.f32 %v2626, %v2965
      %v3060 = vadd.f32 %v2627, %v2967
      %v3061 = vadd.f32 %v2628, %v2969
      %v3062 = vadd.f32 %v2629, %v2971
      %v3063 = vadd.f32 %v2630, %v2973
      %v3064 = vadd.f32 %v2631, %v2975
      %v3065 = vadd.f32 %v2632, %v2977
      %v3066 = vadd.f32 %v2633, %v2979
      %v3067 = vadd.f32 %v2634, %v2981
      %v3068 = vadd.f32 %v2635, %v2983
      %v3069 = vadd.f32 %v2636, %v2985
      %v3070 = vadd.f32 %v2637, %v2987
      %v3071 = vadd.f32 %v2638, %v2989
      %v3072 = vadd.f32 %v2639, %v2991
      %v3073 = vadd.f32 %v2640, %v2993
      %v3074 = vadd.f32 %v2641, %v2995
      %v3075 = vadd.f32 %v2642, %v2997
      %v3076 = vadd.f32 %v2643, %v2999
      %v3077 = vadd.f32 %v2644, %v3001
      %v3078 = vadd.f32 %v2645, %v3003
      %v3079 = vadd.f32 %v2646, %v3005
      %v3080 = vadd.f32 %v2647, %v3007
      %v3081 = vadd.f32 %v2648, %v3009
      %v3082 = vadd.f32 %v2649, %v3011
      %v3083 = vadd.f32 %v2650, %v3013
      %v3084 = vadd.f32 %v2651, %v3015
      %v3085 = vadd.f32 %v2652, %v3017
      %v3086 = vadd.f32 %v2653, %v3019
      %v3087 = vadd.f32 %v2654, %v3021
      %v3088 = vadd.f32 %v2655, %v3023
      %v3089 = vadd.f32 %v2656, %v3025
      %v3090 = vld [vmem:[%s192 + $0x10] sm:$0xe]
      %s3091 = scalar_lea.vmem %s1, 8
      %v3092 = vld [vmem:[%s3091] sm:$0x1]
      %v3093 = vunpack.c.l.bf16 %v3090
      %v3094 = vunpack.c.l.bf16 %v3092
      %3096 = vset.pattern.permute.xlu0 0
      %3097 = vperm.xlu0 %3096, %v3093
      %v3098 = vpop.permute.xlu0 %3097
      %v3100 = vlaneseq
      %v3101 = vshrl.u32 %v3100, 7
      %v3102 = vsub.s32 0, %v3101
      %v3103 = vrot.slane %v3094, %v3102
      %v3104 = vmul.f32 %v3098, %v3103
      %v3105 = vmul.f32 %v2734, %v3103
      %v3106 = vmul.f32 %v2739, %v3103
      %v3107 = vmul.f32 %v2744, %v3103
      %v3108 = vmul.f32 %v2749, %v3103
      %v3109 = vmul.f32 %v2754, %v3103
      %v3110 = vmul.f32 %v2759, %v3103
      %v3111 = vmul.f32 %v2764, %v3103
      %v3112 = vmul.f32 %v2769, %v3103
      %v3113 = vmul.f32 %v2774, %v3103
      %v3114 = vmul.f32 %v2779, %v3103
      %v3115 = vmul.f32 %v2784, %v3103
      %v3116 = vmul.f32 %v2789, %v3103
      %v3117 = vmul.f32 %v2794, %v3103
      %v3118 = vmul.f32 %v2799, %v3103
      %v3119 = vmul.f32 %v2804, %v3103
      %v3120 = vmul.f32 %v2809, %v3103
      %v3121 = vmul.f32 %v2814, %v3103
      %v3122 = vmul.f32 %v2819, %v3103
      %v3123 = vmul.f32 %v2824, %v3103
      %v3124 = vmul.f32 %v2829, %v3103
      %v3125 = vmul.f32 %v2834, %v3103
      %v3126 = vmul.f32 %v2839, %v3103
      %v3127 = vmul.f32 %v2844, %v3103
      %v3128 = vmul.f32 %v2849, %v3103
      %v3129 = vmul.f32 %v2854, %v3103
      %v3130 = vmul.f32 %v2859, %v3103
      %v3131 = vmul.f32 %v2864, %v3103
      %v3132 = vmul.f32 %v2869, %v3103
      %v3133 = vmul.f32 %v2874, %v3103
      %v3134 = vmul.f32 %v2879, %v3103
      %v3135 = vmul.f32 %v2884, %v3103
      %v3136 = vmul.f32 %v2889, %v3103
      %v3170 = vrot.slane %v3104, 2
      %v3171 = vrot.slane %v3105, 2
      %v3172 = vsel %vm1167, %v3170, %v3171
      %v3173 = vrot.slane %v3106, 2
      %v3174 = vsel %vm1167, %v3171, %v3173
      %v3175 = vrot.slane %v3107, 2
      %v3176 = vsel %vm1167, %v3173, %v3175
      %v3177 = vrot.slane %v3108, 2
      %v3178 = vsel %vm1167, %v3175, %v3177
      %v3179 = vrot.slane %v3109, 2
      %v3180 = vsel %vm1167, %v3177, %v3179
      %v3181 = vrot.slane %v3110, 2
      %v3182 = vsel %vm1167, %v3179, %v3181
      %v3183 = vrot.slane %v3111, 2
      %v3184 = vsel %vm1167, %v3181, %v3183
      %v3185 = vrot.slane %v3112, 2
      %v3186 = vsel %vm1167, %v3183, %v3185
      %v3187 = vrot.slane %v3113, 2
      %v3188 = vsel %vm1167, %v3185, %v3187
      %v3189 = vrot.slane %v3114, 2
      %v3190 = vsel %vm1167, %v3187, %v3189
      %v3191 = vrot.slane %v3115, 2
      %v3192 = vsel %vm1167, %v3189, %v3191
      %v3193 = vrot.slane %v3116, 2
      %v3194 = vsel %vm1167, %v3191, %v3193
      %v3195 = vrot.slane %v3117, 2
      %v3196 = vsel %vm1167, %v3193, %v3195
      %v3197 = vrot.slane %v3118, 2
      %v3198 = vsel %vm1167, %v3195, %v3197
      %v3199 = vrot.slane %v3119, 2
      %v3200 = vsel %vm1167, %v3197, %v3199
      %v3201 = vrot.slane %v3120, 2
      %v3202 = vsel %vm1167, %v3199, %v3201
      %v3203 = vrot.slane %v3121, 2
      %v3204 = vsel %vm1167, %v3201, %v3203
      %v3205 = vrot.slane %v3122, 2
      %v3206 = vsel %vm1167, %v3203, %v3205
      %v3207 = vrot.slane %v3123, 2
      %v3208 = vsel %vm1167, %v3205, %v3207
      %v3209 = vrot.slane %v3124, 2
      %v3210 = vsel %vm1167, %v3207, %v3209
      %v3211 = vrot.slane %v3125, 2
      %v3212 = vsel %vm1167, %v3209, %v3211
      %v3213 = vrot.slane %v3126, 2
      %v3214 = vsel %vm1167, %v3211, %v3213
      %v3215 = vrot.slane %v3127, 2
      %v3216 = vsel %vm1167, %v3213, %v3215
      %v3217 = vrot.slane %v3128, 2
      %v3218 = vsel %vm1167, %v3215, %v3217
      %v3219 = vrot.slane %v3129, 2
      %v3220 = vsel %vm1167, %v3217, %v3219
      %v3221 = vrot.slane %v3130, 2
      %v3222 = vsel %vm1167, %v3219, %v3221
      %v3223 = vrot.slane %v3131, 2
      %v3224 = vsel %vm1167, %v3221, %v3223
      %v3225 = vrot.slane %v3132, 2
      %v3226 = vsel %vm1167, %v3223, %v3225
      %v3227 = vrot.slane %v3133, 2
      %v3228 = vsel %vm1167, %v3225, %v3227
      %v3229 = vrot.slane %v3134, 2
      %v3230 = vsel %vm1167, %v3227, %v3229
      %v3231 = vrot.slane %v3135, 2
      %v3232 = vsel %vm1167, %v3229, %v3231
      %v3233 = vrot.slane %v3136, 2
      %v3234 = vsel %vm1167, %v3231, %v3233
      %v3267 = vsel %vm295, 0.0, %v3172
      %v3268 = vsel %vm296, 0.0, %v3174
      %v3269 = vsel %vm297, 0.0, %v3176
      %v3270 = vsel %vm298, 0.0, %v3178
      %v3271 = vsel %vm299, 0.0, %v3180
      %v3272 = vsel %vm300, 0.0, %v3182
      %v3273 = vsel %vm301, 0.0, %v3184
      %v3274 = vsel %vm302, 0.0, %v3186
      %v3275 = vsel %vm303, 0.0, %v3188
      %v3276 = vsel %vm304, 0.0, %v3190
      %v3277 = vsel %vm305, 0.0, %v3192
      %v3278 = vsel %vm306, 0.0, %v3194
      %v3279 = vsel %vm307, 0.0, %v3196
      %v3280 = vsel %vm308, 0.0, %v3198
      %v3281 = vsel %vm309, 0.0, %v3200
      %v3282 = vsel %vm310, 0.0, %v3202
      %v3283 = vsel %vm311, 0.0, %v3204
      %v3284 = vsel %vm312, 0.0, %v3206
      %v3285 = vsel %vm313, 0.0, %v3208
      %v3286 = vsel %vm314, 0.0, %v3210
      %v3287 = vsel %vm315, 0.0, %v3212
      %v3288 = vsel %vm316, 0.0, %v3214
      %v3289 = vsel %vm317, 0.0, %v3216
      %v3290 = vsel %vm318, 0.0, %v3218
      %v3291 = vsel %vm319, 0.0, %v3220
      %v3292 = vsel %vm320, 0.0, %v3222
      %v3293 = vsel %vm321, 0.0, %v3224
      %v3294 = vsel %vm322, 0.0, %v3226
      %v3295 = vsel %vm323, 0.0, %v3228
      %v3296 = vsel %vm324, 0.0, %v3230
      %v3297 = vsel %vm325, 0.0, %v3232
      %v3298 = vsel %vm326, 0.0, %v3234
      %v3299 = vadd.f32 %v3058, %v3267
      %v3300 = vadd.f32 %v3059, %v3268
      %v3301 = vadd.f32 %v3060, %v3269
      %v3302 = vadd.f32 %v3061, %v3270
      %v3303 = vadd.f32 %v3062, %v3271
      %v3304 = vadd.f32 %v3063, %v3272
      %v3305 = vadd.f32 %v3064, %v3273
      %v3306 = vadd.f32 %v3065, %v3274
      %v3307 = vadd.f32 %v3066, %v3275
      %v3308 = vadd.f32 %v3067, %v3276
      %v3309 = vadd.f32 %v3068, %v3277
      %v3310 = vadd.f32 %v3069, %v3278
      %v3311 = vadd.f32 %v3070, %v3279
      %v3312 = vadd.f32 %v3071, %v3280
      %v3313 = vadd.f32 %v3072, %v3281
      %v3314 = vadd.f32 %v3073, %v3282
      %v3315 = vadd.f32 %v3074, %v3283
      %v3316 = vadd.f32 %v3075, %v3284
      %v3317 = vadd.f32 %v3076, %v3285
      %v3318 = vadd.f32 %v3077, %v3286
      %v3319 = vadd.f32 %v3078, %v3287
      %v3320 = vadd.f32 %v3079, %v3288
      %v3321 = vadd.f32 %v3080, %v3289
      %v3322 = vadd.f32 %v3081, %v3290
      %v3323 = vadd.f32 %v3082, %v3291
      %v3324 = vadd.f32 %v3083, %v3292
      %v3325 = vadd.f32 %v3084, %v3293
      %v3326 = vadd.f32 %v3085, %v3294
      %v3327 = vadd.f32 %v3086, %v3295
      %v3328 = vadd.f32 %v3087, %v3296
      %v3329 = vadd.f32 %v3088, %v3297
      %v3330 = vadd.f32 %v3089, %v3298
      %v3331 = vld [vmem:[%s2] sm:$0x1]
      %v3333 = vlaneseq
      %v3334 = vshrl.u32 %v3333, 7
      %v3335 = vsub.s32 0, %v3334
      %v3336 = vrot.slane %v3331, %v3335
      %v3338 = vmul.f32 %v3299, %v3336
      %v3339 = vmul.f32 %v3300, %v3336
      %v3340 = vmul.f32 %v3301, %v3336
      %v3341 = vmul.f32 %v3302, %v3336
      %v3342 = vmul.f32 %v3303, %v3336
      %v3343 = vmul.f32 %v3304, %v3336
      %v3344 = vmul.f32 %v3305, %v3336
      %v3345 = vmul.f32 %v3306, %v3336
      %v3346 = vmul.f32 %v3307, %v3336
      %v3347 = vmul.f32 %v3308, %v3336
      %v3348 = vmul.f32 %v3309, %v3336
      %v3349 = vmul.f32 %v3310, %v3336
      %v3350 = vmul.f32 %v3311, %v3336
      %v3351 = vmul.f32 %v3312, %v3336
      %v3352 = vmul.f32 %v3313, %v3336
      %v3353 = vmul.f32 %v3314, %v3336
      %v3354 = vmul.f32 %v3315, %v3336
      %v3355 = vmul.f32 %v3316, %v3336
      %v3356 = vmul.f32 %v3317, %v3336
      %v3357 = vmul.f32 %v3318, %v3336
      %v3358 = vmul.f32 %v3319, %v3336
      %v3359 = vmul.f32 %v3320, %v3336
      %v3360 = vmul.f32 %v3321, %v3336
      %v3361 = vmul.f32 %v3322, %v3336
      %v3362 = vmul.f32 %v3323, %v3336
      %v3363 = vmul.f32 %v3324, %v3336
      %v3364 = vmul.f32 %v3325, %v3336
      %v3365 = vmul.f32 %v3326, %v3336
      %v3366 = vmul.f32 %v3327, %v3336
      %v3367 = vmul.f32 %v3328, %v3336
      %v3368 = vmul.f32 %v3329, %v3336
      %v3369 = vmul.f32 %v3330, %v3336
      %v3370 = vld [vmem:[%s3] sm:$0x1]
      %v3372 = vlaneseq
      %v3373 = vshrl.u32 %v3372, 7
      %v3374 = vsub.s32 0, %v3373
      %v3375 = vrot.slane %v3370, %v3374
      %v3377 = vadd.f32 %v3338, %v3375
      %v3378 = vadd.f32 %v3339, %v3375
      %v3379 = vadd.f32 %v3340, %v3375
      %v3380 = vadd.f32 %v3341, %v3375
      %v3381 = vadd.f32 %v3342, %v3375
      %v3382 = vadd.f32 %v3343, %v3375
      %v3383 = vadd.f32 %v3344, %v3375
      %v3384 = vadd.f32 %v3345, %v3375
      %v3385 = vadd.f32 %v3346, %v3375
      %v3386 = vadd.f32 %v3347, %v3375
      %v3387 = vadd.f32 %v3348, %v3375
      %v3388 = vadd.f32 %v3349, %v3375
      %v3389 = vadd.f32 %v3350, %v3375
      %v3390 = vadd.f32 %v3351, %v3375
      %v3391 = vadd.f32 %v3352, %v3375
      %v3392 = vadd.f32 %v3353, %v3375
      %v3393 = vadd.f32 %v3354, %v3375
      %v3394 = vadd.f32 %v3355, %v3375
      %v3395 = vadd.f32 %v3356, %v3375
      %v3396 = vadd.f32 %v3357, %v3375
      %v3397 = vadd.f32 %v3358, %v3375
      %v3398 = vadd.f32 %v3359, %v3375
      %v3399 = vadd.f32 %v3360, %v3375
      %v3400 = vadd.f32 %v3361, %v3375
      %v3401 = vadd.f32 %v3362, %v3375
      %v3402 = vadd.f32 %v3363, %v3375
      %v3403 = vadd.f32 %v3364, %v3375
      %v3404 = vadd.f32 %v3365, %v3375
      %v3405 = vadd.f32 %v3366, %v3375
      %v3406 = vadd.f32 %v3367, %v3375
      %v3407 = vadd.f32 %v3368, %v3375
      %v3408 = vadd.f32 %v3369, %v3375
      %v3409 = vmax.f32 %v3377, 0.0
      %v3410 = vmax.f32 %v3378, 0.0
      %v3411 = vmax.f32 %v3379, 0.0
      %v3412 = vmax.f32 %v3380, 0.0
      %v3413 = vmax.f32 %v3381, 0.0
      %v3414 = vmax.f32 %v3382, 0.0
      %v3415 = vmax.f32 %v3383, 0.0
      %v3416 = vmax.f32 %v3384, 0.0
      %v3417 = vmax.f32 %v3385, 0.0
      %v3418 = vmax.f32 %v3386, 0.0
      %v3419 = vmax.f32 %v3387, 0.0
      %v3420 = vmax.f32 %v3388, 0.0
      %v3421 = vmax.f32 %v3389, 0.0
      %v3422 = vmax.f32 %v3390, 0.0
      %v3423 = vmax.f32 %v3391, 0.0
      %v3424 = vmax.f32 %v3392, 0.0
      %v3425 = vmax.f32 %v3393, 0.0
      %v3426 = vmax.f32 %v3394, 0.0
      %v3427 = vmax.f32 %v3395, 0.0
      %v3428 = vmax.f32 %v3396, 0.0
      %v3429 = vmax.f32 %v3397, 0.0
      %v3430 = vmax.f32 %v3398, 0.0
      %v3431 = vmax.f32 %v3399, 0.0
      %v3432 = vmax.f32 %v3400, 0.0
      %v3433 = vmax.f32 %v3401, 0.0
      %v3434 = vmax.f32 %v3402, 0.0
      %v3435 = vmax.f32 %v3403, 0.0
      %v3436 = vmax.f32 %v3404, 0.0
      %v3437 = vmax.f32 %v3405, 0.0
      %v3438 = vmax.f32 %v3406, 0.0
      %v3439 = vmax.f32 %v3407, 0.0
      %v3440 = vmax.f32 %v3408, 0.0
      %v3441 = vpack.c.bf16 %v3410, %v3409
      %v3442 = vpack.c.bf16 %v3412, %v3411
      %v3443 = vpack.c.bf16 %v3414, %v3413
      %v3444 = vpack.c.bf16 %v3416, %v3415
      %v3445 = vpack.c.bf16 %v3418, %v3417
      %v3446 = vpack.c.bf16 %v3420, %v3419
      %v3447 = vpack.c.bf16 %v3422, %v3421
      %v3448 = vpack.c.bf16 %v3424, %v3423
      %v3449 = vpack.c.bf16 %v3426, %v3425
      %v3450 = vpack.c.bf16 %v3428, %v3427
      %v3451 = vpack.c.bf16 %v3430, %v3429
      %v3452 = vpack.c.bf16 %v3432, %v3431
      %v3453 = vpack.c.bf16 %v3434, %v3433
      %v3454 = vpack.c.bf16 %v3436, %v3435
      %v3455 = vpack.c.bf16 %v3438, %v3437
      %v3456 = vpack.c.bf16 %v3440, %v3439
      %v3473 = vunpack.c.l.b16 %v3441
      %v3474 = vunpack.c.h.b16 %v3441
      %v3475 = vunpack.c.l.b16 %v3442
      %v3476 = vunpack.c.h.b16 %v3442
      %v3477 = vunpack.c.l.b16 %v3443
      %v3478 = vunpack.c.h.b16 %v3443
      %v3479 = vunpack.c.l.b16 %v3444
      %v3480 = vunpack.c.h.b16 %v3444
      %v3481 = vunpack.c.l.b16 %v3445
      %v3482 = vunpack.c.h.b16 %v3445
      %v3483 = vunpack.c.l.b16 %v3446
      %v3484 = vunpack.c.h.b16 %v3446
      %v3485 = vunpack.c.l.b16 %v3447
      %v3486 = vunpack.c.h.b16 %v3447
      %v3487 = vunpack.c.l.b16 %v3448
      %v3488 = vunpack.c.h.b16 %v3448
      %v3489 = vunpack.c.l.b16 %v3449
      %v3490 = vunpack.c.h.b16 %v3449
      %v3491 = vunpack.c.l.b16 %v3450
      %v3492 = vunpack.c.h.b16 %v3450
      %v3493 = vunpack.c.l.b16 %v3451
      %v3494 = vunpack.c.h.b16 %v3451
      %v3495 = vunpack.c.l.b16 %v3452
      %v3496 = vunpack.c.h.b16 %v3452
      %v3497 = vunpack.c.l.b16 %v3453
      %v3498 = vunpack.c.h.b16 %v3453
      %v3499 = vunpack.c.l.b16 %v3454
      %v3500 = vunpack.c.h.b16 %v3454
      %v3501 = vunpack.c.l.b16 %v3455
      %v3502 = vunpack.c.h.b16 %v3455
      %v3503 = vunpack.c.l.b16 %v3456
      %v3504 = vunpack.c.h.b16 %v3456
      %v3505 = vpack.c.b16 %v3473, %v3473
      %v3506 = vpack.c.b16 %v3474, %v3474
      %v3507 = vpack.c.b16 %v3475, %v3475
      %v3508 = vpack.c.b16 %v3476, %v3476
      %v3509 = vpack.c.b16 %v3477, %v3477
      %v3510 = vpack.c.b16 %v3478, %v3478
      %v3511 = vpack.c.b16 %v3479, %v3479
      %v3512 = vpack.c.b16 %v3480, %v3480
      %v3513 = vpack.c.b16 %v3481, %v3481
      %v3514 = vpack.c.b16 %v3482, %v3482
      %v3515 = vpack.c.b16 %v3483, %v3483
      %v3516 = vpack.c.b16 %v3484, %v3484
      %v3517 = vpack.c.b16 %v3485, %v3485
      %v3518 = vpack.c.b16 %v3486, %v3486
      %v3519 = vpack.c.b16 %v3487, %v3487
      %v3520 = vpack.c.b16 %v3488, %v3488
      %v3521 = vpack.c.b16 %v3489, %v3489
      %v3522 = vpack.c.b16 %v3490, %v3490
      %v3523 = vpack.c.b16 %v3491, %v3491
      %v3524 = vpack.c.b16 %v3492, %v3492
      %v3525 = vpack.c.b16 %v3493, %v3493
      %v3526 = vpack.c.b16 %v3494, %v3494
      %v3527 = vpack.c.b16 %v3495, %v3495
      %v3528 = vpack.c.b16 %v3496, %v3496
      %v3529 = vpack.c.b16 %v3497, %v3497
      %v3530 = vpack.c.b16 %v3498, %v3498
      %v3531 = vpack.c.b16 %v3499, %v3499
      %v3532 = vpack.c.b16 %v3500, %v3500
      %v3533 = vpack.c.b16 %v3501, %v3501
      %v3534 = vpack.c.b16 %v3502, %v3502
      %v3535 = vpack.c.b16 %v3503, %v3503
      %v3536 = vpack.c.b16 %v3504, %v3504
      %vm3569 = vcmask 257024
      %3570 = vst.msk [vmem:[%s197] sm:$0xf] %vm3569, %v3505
      %3571 = vst.msk [vmem:[%s197 + $0x4] sm:$0xf] %vm3569, %v3506
      %3572 = vst.msk [vmem:[%s197 + $0x8] sm:$0xf] %vm3569, %v3507
      %3573 = vst.msk [vmem:[%s197 + $0xc] sm:$0xf] %vm3569, %v3508
      %3574 = vst.msk [vmem:[%s197 + $0x10] sm:$0xf] %vm3569, %v3509
      %3575 = vst.msk [vmem:[%s197 + $0x14] sm:$0xf] %vm3569, %v3510
      %3576 = vst.msk [vmem:[%s197 + $0x18] sm:$0xf] %vm3569, %v3511
      %3577 = vst.msk [vmem:[%s197 + $0x1c] sm:$0xf] %vm3569, %v3512
      %3578 = vst.msk [vmem:[%s197 + $0x20] sm:$0xf] %vm3569, %v3513
      %3579 = vst.msk [vmem:[%s197 + $0x24] sm:$0xf] %vm3569, %v3514
      %3580 = vst.msk [vmem:[%s197 + $0x28] sm:$0xf] %vm3569, %v3515
      %3581 = vst.msk [vmem:[%s197 + $0x2c] sm:$0xf] %vm3569, %v3516
      %3582 = vst.msk [vmem:[%s197 + $0x30] sm:$0xf] %vm3569, %v3517
      %3583 = vst.msk [vmem:[%s197 + $0x34] sm:$0xf] %vm3569, %v3518
      %3584 = vst.msk [vmem:[%s197 + $0x38] sm:$0xf] %vm3569, %v3519
      %3585 = vst.msk [vmem:[%s197 + $0x3c] sm:$0xf] %vm3569, %v3520
      %3586 = vst.msk [vmem:[%s197 + $0x40] sm:$0xf] %vm3569, %v3521
      %3587 = vst.msk [vmem:[%s197 + $0x44] sm:$0xf] %vm3569, %v3522
      %3588 = vst.msk [vmem:[%s197 + $0x48] sm:$0xf] %vm3569, %v3523
      %3589 = vst.msk [vmem:[%s197 + $0x4c] sm:$0xf] %vm3569, %v3524
      %3590 = vst.msk [vmem:[%s197 + $0x50] sm:$0xf] %vm3569, %v3525
      %3591 = vst.msk [vmem:[%s197 + $0x54] sm:$0xf] %vm3569, %v3526
      %3592 = vst.msk [vmem:[%s197 + $0x58] sm:$0xf] %vm3569, %v3527
      %3593 = vst.msk [vmem:[%s197 + $0x5c] sm:$0xf] %vm3569, %v3528
      %3594 = vst.msk [vmem:[%s197 + $0x60] sm:$0xf] %vm3569, %v3529
      %3595 = vst.msk [vmem:[%s197 + $0x64] sm:$0xf] %vm3569, %v3530
      %3596 = vst.msk [vmem:[%s197 + $0x68] sm:$0xf] %vm3569, %v3531
      %3597 = vst.msk [vmem:[%s197 + $0x6c] sm:$0xf] %vm3569, %v3532
      %3598 = vst.msk [vmem:[%s197 + $0x70] sm:$0xf] %vm3569, %v3533
      %3599 = vst.msk [vmem:[%s197 + $0x74] sm:$0xf] %vm3569, %v3534
      %3600 = vst.msk [vmem:[%s197 + $0x78] sm:$0xf] %vm3569, %v3535
      %3601 = vst.msk [vmem:[%s197 + $0x7c] sm:$0xf] %vm3569, %v3536
      %p3602 = scmp.lt.s32.totalorder %s15, 1
      %s3603 = scalar_select %p3602, %s15, 1
      %s3604 = smul.addr %s3603, 32
      %s3605 = smul.addr %s3604, 4
      %s3606 = scalar_lea.vmem %s4, %s3605
      // Predicated region
      $region37: #{_forward_impl.10} parent=35 // pred_check
        %p3607 = pneg %p122
      $region38: #{_forward_impl.10} parent=35 // pred_check_branch
        %3609 = sbr.rel (%p3607) target = $region40
      $region39: #{_forward_impl.10} parent=35 // pred_region
        _
      $region40: #{_forward_impl.10} parent=35 // pred_fallthru
        _
    $region36: #{_forward_impl.10} parent=5 // pred_fallthru
      _
    %p3610 = scmp.le.s32.totalorder 2, %s10
    // Predicated region
    $region41: #{_forward_impl.10} parent=5 // pred_check
      %p3611 = pneg %p3610
    $region42: #{_forward_impl.10} parent=5 // pred_check_branch
      %3613 = sbr.rel (%p3611) target = $region44
    $region43: #{_forward_impl.10} parent=5 // pred_region
      %s3614 = ssub.s32 %s10, 2
      // Predicated region
      $region45: #{_forward_impl.10} parent=43 // pred_check
        %p3615 = pneg %p128
      $region46: #{_forward_impl.10} parent=43 // pred_check_branch
        %3617 = sbr.rel (%p3615) target = $region48
      $region47: #{_forward_impl.10} parent=43 // pred_region
        %p3618 = scmp.lt.s32.totalorder %s16, 1
        %s3619 = scalar_select %p3618, %s16, 1
        %s3620 = smul.addr %s3619, 32
        %s3621 = smul.addr %s3620, 4
        %s3622 = scalar_lea.vmem %s4, %s3621
      $region48: #{_forward_impl.10} parent=43 // pred_fallthru
        _
    $region44: #{_forward_impl.10} parent=5 // pred_fallthru
      _
  $region6: #{_forward_impl.10} parent=0 // loop_footer
    %s14 = sadd.s32 1, %s10
  $region7: #{_forward_impl.10} parent=0 // loop_footer_branch
    %9 = sbr.rel target = $region3
  $region8: #{_forward_impl.10} parent=0 // loop_exit
    _

// kernel: _forward_impl.16
$region0: #{_forward_impl.16}
  #allocation0 [shape = 'u32[]', space=smem, size = 0x4, offset = 0x4, fixed_abs, tag = 'smem constant byte address 0x4 - core index']
  #allocation1 [shape = 'u32[144,128]{1,0:T(1,128)}', space=vmem, size = 0x12000, scoped, tag = 'internal scratch']
  %s0 = inlined_call_operand.vmem [shape: bf16[8,128], index: 0, kind: input, shape index: {}]
  %s1 = inlined_call_operand.vmem [shape: bf16[128,96], index: 1, kind: input, shape index: {}]
  %s2 = inlined_call_operand.vmem [shape: f32[1,96], index: 2, kind: input, shape index: {}]
  %s3 = inlined_call_operand.vmem [shape: f32[8,96], index: 3, kind: output, shape index: {}]
  %s4 = sld [smem:[#allocation0]]
  $region22: #{_forward_impl.16} parent=0
    _
  %s6 = ssub.s32 1, %s4
  %s7 = scalar_select 0, %s6, %s4
  // Predicated region
  $region2: #{_forward_impl.16} parent=0 // pred_check
    _
  $region3: #{_forward_impl.16} parent=0 // pred_check_branch
    %9 = sbr.rel (0) target = $region5
  $region4: #{_forward_impl.16} parent=0 // pred_region
    _
  $region5: #{_forward_impl.16} parent=0 // pred_fallthru
    _
  // Predicated region
  $region6: #{_forward_impl.16} parent=0 // pred_check
    _
  $region7: #{_forward_impl.16} parent=0 // pred_check_branch
    %11 = sbr.rel (0) target = $region9
  $region8: #{_forward_impl.16} parent=0 // pred_region
    _
  $region9: #{_forward_impl.16} parent=0 // pred_fallthru
    _
  // Predicated region
  $region10: #{_forward_impl.16} parent=0 // pred_check
    _
  $region11: #{_forward_impl.16} parent=0 // pred_check_branch
    %13 = sbr.rel (0) target = $region13
  $region12: #{_forward_impl.16} parent=0 // pred_region
    _
  $region13: #{_forward_impl.16} parent=0 // pred_fallthru
    _
  %v15 = vld [vmem:[%s0] sm:$0xf]
  %v16 = vld [vmem:[%s1] sm:$0xf]
  %v17 = vld [vmem:[%s1 + $0x4] sm:$0xf]
  %v18 = vld [vmem:[%s1 + $0x8] sm:$0xf]
  %v19 = vld [vmem:[%s1 + $0xc] sm:$0xf]
  %v20 = vld [vmem:[%s1 + $0x10] sm:$0xf]
  %v21 = vld [vmem:[%s1 + $0x14] sm:$0xf]
  %v22 = vld [vmem:[%s1 + $0x18] sm:$0xf]
  %v23 = vld [vmem:[%s1 + $0x1c] sm:$0xf]
  %v24 = vld [vmem:[%s1 + $0x20] sm:$0xf]
  %v25 = vld [vmem:[%s1 + $0x24] sm:$0xf]
  %v26 = vld [vmem:[%s1 + $0x28] sm:$0xf]
  %v27 = vld [vmem:[%s1 + $0x2c] sm:$0xf]
  %v28 = vld [vmem:[%s1 + $0x30] sm:$0xf]
  %v29 = vld [vmem:[%s1 + $0x34] sm:$0xf]
  %v30 = vld [vmem:[%s1 + $0x38] sm:$0xf]
  %v31 = vld [vmem:[%s1 + $0x3c] sm:$0xf]
  %v32 = vld [vmem:[%s2] sm:$0x1]
  %v34 = vlaneseq
  %v35 = vshrl.u32 %v34, 7
  %v36 = vsub.s32 0, %v35
  %v37 = vrot.slane %v32, %v36
  %v55 = vunpack.c.l.b16 %v16
  %v56 = vunpack.c.l.b16 %v17
  %v57 = vunpack.c.l.b16 %v18
  %v58 = vunpack.c.l.b16 %v19
  %v59 = vunpack.c.l.b16 %v20
  %v60 = vunpack.c.l.b16 %v21
  %v61 = vunpack.c.l.b16 %v22
  %v62 = vunpack.c.l.b16 %v23
  %v63 = vunpack.c.l.b16 %v24
  %v64 = vunpack.c.l.b16 %v25
  %v65 = vunpack.c.l.b16 %v26
  %v66 = vunpack.c.l.b16 %v27
  %v67 = vunpack.c.l.b16 %v28
  %v68 = vunpack.c.l.b16 %v29
  %v69 = vunpack.c.l.b16 %v30
  %v70 = vunpack.c.l.b16 %v31
  %v71 = vpack.c.b16 %v56, %v55
  %v72 = vpack.c.b16 %v58, %v57
  %v73 = vpack.c.b16 %v60, %v59
  %v74 = vpack.c.b16 %v62, %v61
  %v75 = vpack.c.b16 %v64, %v63
  %v76 = vpack.c.b16 %v66, %v65
  %v77 = vpack.c.b16 %v68, %v67
  %v78 = vpack.c.b16 %v70, %v69
  %87 = vmatprep.subr.bf16.mxu0 0
  %88 = vmatpush1.bf16.msra.mxu0 %v71
  %89 = vmatprep.subr.bf16.mxu0 0
  %90 = vmatpush1.bf16.msra.mxu0 %v72
  %91 = vmatprep.subr.bf16.mxu0 0
  %92 = vmatpush1.bf16.msra.mxu0 %v73
  %93 = vmatprep.subr.bf16.mxu0 0
  %94 = vmatpush1.bf16.msra.mxu0 %v74
  %95 = vmatprep.subr.bf16.mxu0 0
  %96 = vmatpush1.bf16.msra.mxu0 %v75
  %97 = vmatprep.subr.bf16.mxu0 0
  %98 = vmatpush1.bf16.msra.mxu0 %v76
  %99 = vmatprep.subr.bf16.mxu0 0
  %100 = vmatpush1.bf16.msra.mxu0 %v77
  %101 = vmatprep.subr.bf16.mxu0 0
  %102 = vmatpush1.bf16.msra.mxu0 %v78
  %103 = vmatprep.subr.bf16.mxu0 0
  %104 = vmatpush1.bf16.msra.mxu0 0
  %105 = vmatprep.subr.bf16.mxu0 0
  %106 = vmatpush1.bf16.msra.mxu0 0
  %107 = vmatprep.subr.bf16.mxu0 0
  %108 = vmatpush1.bf16.msra.mxu0 0
  %109 = vmatprep.subr.bf16.mxu0 0
  %110 = vmatpush1.bf16.msra.mxu0 0
  %111 = vmatprep.subr.bf16.mxu0 0
  %112 = vmatpush1.bf16.msra.mxu0 0
  %113 = vmatprep.subr.bf16.mxu0 0
  %114 = vmatpush1.bf16.msra.mxu0 0
  %115 = vmatprep.subr.bf16.mxu0 0
  %116 = vmatpush1.bf16.msra.mxu0 0
  %117 = vmatprep.subr.bf16.mxu0 0
  %118 = vmatpush1.bf16.msra.mxu0 0
  %119 = vmatprep.mubr.bf16.mxu0 0
  %120 = vmatmul.mubr.bf16.gmra.mrb[0].mxu0 %v15
  %v121 = vpop.f32.mrb[0].mxu0
  %v122 = vadd.f32 %v37, %v121
  %v123 = vpop.f32.mrb[0].mxu0
  %v124 = vpop.f32.mrb[0].mxu0
  %v125 = vpop.f32.mrb[0].mxu0
  %126 = vdwg.mxu0
  %vm127 = vcmask 785408
  %128 = vst.msk [vmem:[%s3] sm:$0xff] %vm127, %v122
  // Predicated region
  $region14: #{_forward_impl.16} parent=0 // pred_check
    _
  $region15: #{_forward_impl.16} parent=0 // pred_check_branch
    %130 = sbr.rel (0) target = $region17
  $region16: #{_forward_impl.16} parent=0 // pred_region
    _
  $region17: #{_forward_impl.16} parent=0 // pred_fallthru
    _
  // Predicated region
  $region18: #{_forward_impl.16} parent=0 // pred_check
    _
  $region19: #{_forward_impl.16} parent=0 // pred_check_branch
    %132 = sbr.rel (0) target = $region21
  $region20: #{_forward_impl.16} parent=0 // pred_region
    _
  $region21: #{_forward_impl.16} parent=0 // pred_fallthru
    _

// kernel: _forward_impl.17
$region0: #{_forward_impl.17}
  #allocation0 [shape = 'u32[]', space=smem, size = 0x4, offset = 0x4, fixed_abs, tag = 'smem constant byte address 0x4 - core index']
  #allocation1 [shape = 'u32[144,128]{1,0:T(1,128)}', space=vmem, size = 0x12000, scoped, tag = 'internal scratch']
  %s0 = inlined_call_operand.vmem [shape: f32[4,2,96], index: 0, kind: input, shape index: {}]
  %s1 = inlined_call_operand.vmem [shape: f32[16,48], index: 1, kind: input, shape index: {}]
  %s2 = inlined_call_operand.vmem [shape: f32[16,48], index: 2, kind: input, shape index: {}]
  %s3 = inlined_call_operand.vmem [shape: f32[1,48], index: 3, kind: input, shape index: {}]
  %s4 = inlined_call_operand.vmem [shape: f32[1,48], index: 4, kind: input, shape index: {}]
  %s5 = inlined_call_operand.vmem [shape: bf16[4,2,16], index: 5, kind: output, shape index: {0}]
  %s6 = inlined_call_operand.vmem [shape: bf16[4,2,16], index: 6, kind: output, shape index: {1}]
  %s7 = inlined_call_operand.hbm [shape: f32[2,2,16], index: 7, kind: output, shape index: {2}]
  %8 = xla_tuple %s5, %s6, %s7
  %s9 = sld [smem:[#allocation0]]
  $region53: #{_forward_impl.17} parent=0
    _
  %s11 = ssub.s32 1, %s9
  %s12 = scalar_select 0, %s11, %s9
  $region1: #{_forward_impl.17} parent=0
    #allocation2 [shape = 'u8[2048]{0}', space=vmem, size = 0x800, scoped, tag = 'output window, operand 2, single buffered']
    #allocation3 [shape = 's32[1]{0}', space=sflag, size = 0x4, scoped, tag = 'scoped memory for _forward_impl.17']
    %13 = vsyncpa [#allocation3], 0
    // Predicated region
    $region2: #{_forward_impl.17} parent=1 // pred_check
      _
    $region3: #{_forward_impl.17} parent=1 // pred_check_branch
      %15 = sbr.rel (0) target = $region5
    $region4: #{_forward_impl.17} parent=1 // pred_region
      _
    $region5: #{_forward_impl.17} parent=1 // pred_fallthru
      _
    // Predicated region
    $region6: #{_forward_impl.17} parent=1 // pred_check
      _
    $region7: #{_forward_impl.17} parent=1 // pred_check_branch
      %17 = sbr.rel (0) target = $region9
    $region8: #{_forward_impl.17} parent=1 // pred_region
      _
    $region9: #{_forward_impl.17} parent=1 // pred_fallthru
      _
    // Predicated region
    $region10: #{_forward_impl.17} parent=1 // pred_check
      _
    $region11: #{_forward_impl.17} parent=1 // pred_check_branch
      %19 = sbr.rel (0) target = $region13
    $region12: #{_forward_impl.17} parent=1 // pred_region
      _
    $region13: #{_forward_impl.17} parent=1 // pred_fallthru
      _
    // Predicated region
    $region14: #{_forward_impl.17} parent=1 // pred_check
      _
    $region15: #{_forward_impl.17} parent=1 // pred_check_branch
      %21 = sbr.rel (0) target = $region17
    $region16: #{_forward_impl.17} parent=1 // pred_region
      _
    $region17: #{_forward_impl.17} parent=1 // pred_fallthru
      _
    // Predicated region
    $region18: #{_forward_impl.17} parent=1 // pred_check
      _
    $region19: #{_forward_impl.17} parent=1 // pred_check_branch
      %23 = sbr.rel (0) target = $region21
    $region20: #{_forward_impl.17} parent=1 // pred_region
      _
    $region21: #{_forward_impl.17} parent=1 // pred_fallthru
      _
    loop: start=0, step=1, limit=4
    $region22: #{_forward_impl.17} parent=1 // loop_pre_header
      _
    $region23: #{_forward_impl.17} parent=1 // loop_header
      %s25 = sphi 0, %s29
      %p26 = scmp.ge.s32.totalorder %s25, 4
      %v30 = vphi 0.0, %v233
      %v31 = vphi 0.0, %v262
    $region24: #{_forward_impl.17} parent=1 // loop_header_branch
      %28 = sbr.rel (%p26) target = $region28
    $region25: #{_forward_impl.17} parent=1 // loop_body
      %s32 = smul.u32 %s25, 2
      %s33 = scalar_lea.vmem %s0, %s32
      %v34 = vld [vmem:[%s33] sm:$0x3]
      %s35 = ssub.s32 3, %s25
      %s36 = smul.u32 %s35, 2
      %s37 = scalar_lea.vmem %s0, %s36
      %v38 = vld [vmem:[%s37] sm:$0x3]
      %v39 = vld [vmem:[%s1] sm:$0xff]
      %v40 = vld [vmem:[%s1 + $0x8] sm:$0xff]
      %v41 = vld [vmem:[%s3] sm:$0x1]
      %v43 = vlaneseq
      %v44 = vshrl.u32 %v43, 7
      %v45 = vsub.s32 0, %v44
      %v46 = vrot.slane %v41, %v45
      %49 = vrot.lane.b32.xlu0 %v30, 112
      %v50 = vpop.permute.xlu0 %49
      %vm51 = vcmask 130048
      %v52 = vsel %vm51, %v50, 0
      %54 = vmatprep.subr.mxu0 0.0
      %55 = vmatpush1.msra.mxu0 %v39
      %56 = vmatprep.subr.mxu0 0.0
      %57 = vmatpush1.msra.mxu0 %v40
      %58 = vmatprep.subr.mxu0 0.0
      %59 = vmatpush1.msra.mxu0 0.0
      %60 = vmatprep.subr.mxu0 0.0
      %61 = vmatpush1.msra.mxu0 0.0
      %62 = vmatprep.subr.mxu0 0.0
      %63 = vmatpush1.msra.mxu0 0.0
      %64 = vmatprep.subr.mxu0 0.0
      %65 = vmatpush1.msra.mxu0 0.0
      %66 = vmatprep.subr.mxu0 0.0
      %67 = vmatpush1.msra.mxu0 0.0
      %68 = vmatprep.subr.mxu0 0.0
      %69 = vmatpush1.msra.mxu0 0.0
      %70 = vmatprep.subr.mxu0 0.0
      %71 = vmatpush1.msra.mxu0 0.0
      %72 = vmatprep.subr.mxu0 0.0
      %73 = vmatpush1.msra.mxu0 0.0
      %74 = vmatprep.subr.mxu0 0.0
      %75 = vmatpush1.msra.mxu0 0.0
      %76 = vmatprep.subr.mxu0 0.0
      %77 = vmatpush1.msra.mxu0 0.0
      %78 = vmatprep.subr.mxu0 0.0
      %79 = vmatpush1.msra.mxu0 0.0
      %80 = vmatprep.subr.mxu0 0.0
      %81 = vmatpush1.msra.mxu0 0.0
      %82 = vmatprep.subr.mxu0 0.0
      %83 = vmatpush1.msra.mxu0 0.0
      %84 = vmatprep.subr.mxu0 0.0
      %85 = vmatpush1.msra.mxu0 0.0
      %86 = vmatprep.subr.mxu0 0.0
      %87 = vmatpush1.msra.mxu0 0.0
      %88 = vmatprep.subr.mxu0 0.0
      %89 = vmatpush1.msra.mxu0 0.0
      %90 = vmatprep.subr.mxu0 0.0
      %91 = vmatpush1.msra.mxu0 0.0
      %92 = vmatprep.subr.mxu0 0.0
      %93 = vmatpush1.msra.mxu0 0.0
      %94 = vmatprep.subr.mxu0 0.0
      %95 = vmatpush1.msra.mxu0 0.0
      %96 = vmatprep.subr.mxu0 0.0
      %97 = vmatpush1.msra.mxu0 0.0
      %98 = vmatprep.subr.mxu0 0.0
      %99 = vmatpush1.msra.mxu0 0.0
      %100 = vmatprep.subr.mxu0 0.0
      %101 = vmatpush1.msra.mxu0 0.0
      %102 = vmatprep.subr.mxu0 0.0
      %103 = vmatpush1.msra.mxu0 0.0
      %104 = vmatprep.subr.mxu0 0.0
      %105 = vmatpush1.msra.mxu0 0.0
      %106 = vmatprep.subr.mxu0 0.0
      %107 = vmatpush1.msra.mxu0 0.0
      %108 = vmatprep.subr.mxu0 0.0
      %109 = vmatpush1.msra.mxu0 0.0
      %110 = vmatprep.subr.mxu0 0.0
      %111 = vmatpush1.msra.mxu0 0.0
      %112 = vmatprep.subr.mxu0 0.0
      %113 = vmatpush1.msra.mxu0 0.0
      %114 = vmatprep.subr.mxu0 0.0
      %115 = vmatpush1.msra.mxu0 0.0
      %116 = vmatprep.subr.mxu0 0.0
      %117 = vmatpush1.msra.mxu0 0.0
      %118 = vmatprep.mubr.f32.mxu0 0.0
      %119 = vmatmul.mubr.f32.gmra.mrb[0].mxu0 %v52
      %v120 = vpop.f32.mrb[0].mxu0
      %v121 = vadd.f32 %v46, %v120
      %v122 = vpop.f32.mrb[0].mxu0
      %123 = vdwg.mxu0
      %v124 = vld [vmem:[%s2] sm:$0xff]
      %v125 = vld [vmem:[%s2 + $0x8] sm:$0xff]
      %v126 = vld [vmem:[%s4] sm:$0x1]
      %v128 = vlaneseq
      %v129 = vshrl.u32 %v128, 7
      %v130 = vsub.s32 0, %v129
      %v131 = vrot.slane %v126, %v130
      %134 = vrot.lane.b32.xlu0 %v31, 64
      %v135 = vpop.permute.xlu0 %134
      %v136 = vsel %vm51, %v135, 0
      %138 = vmatprep.subr.mxu0 0.0
      %139 = vmatpush1.msra.mxu0 %v124
      %140 = vmatprep.subr.mxu0 0.0
      %141 = vmatpush1.msra.mxu0 %v125
      %142 = vmatprep.subr.mxu0 0.0
      %143 = vmatpush1.msra.mxu0 0.0
      %144 = vmatprep.subr.mxu0 0.0
      %145 = vmatpush1.msra.mxu0 0.0
      %146 = vmatprep.subr.mxu0 0.0
      %147 = vmatpush1.msra.mxu0 0.0
      %148 = vmatprep.subr.mxu0 0.0
      %149 = vmatpush1.msra.mxu0 0.0
      %150 = vmatprep.subr.mxu0 0.0
      %151 = vmatpush1.msra.mxu0 0.0
      %152 = vmatprep.subr.mxu0 0.0
      %153 = vmatpush1.msra.mxu0 0.0
      %154 = vmatprep.subr.mxu0 0.0
      %155 = vmatpush1.msra.mxu0 0.0
      %156 = vmatprep.subr.mxu0 0.0
      %157 = vmatpush1.msra.mxu0 0.0
      %158 = vmatprep.subr.mxu0 0.0
      %159 = vmatpush1.msra.mxu0 0.0
      %160 = vmatprep.subr.mxu0 0.0
      %161 = vmatpush1.msra.mxu0 0.0
      %162 = vmatprep.subr.mxu0 0.0
      %163 = vmatpush1.msra.mxu0 0.0
      %164 = vmatprep.subr.mxu0 0.0
      %165 = vmatpush1.msra.mxu0 0.0
      %166 = vmatprep.subr.mxu0 0.0
      %167 = vmatpush1.msra.mxu0 0.0
      %168 = vmatprep.subr.mxu0 0.0
      %169 = vmatpush1.msra.mxu0 0.0
      %170 = vmatprep.subr.mxu0 0.0
      %171 = vmatpush1.msra.mxu0 0.0
      %172 = vmatprep.subr.mxu0 0.0
      %173 = vmatpush1.msra.mxu0 0.0
      %174 = vmatprep.subr.mxu0 0.0
      %175 = vmatpush1.msra.mxu0 0.0
      %176 = vmatprep.subr.mxu0 0.0
      %177 = vmatpush1.msra.mxu0 0.0
      %178 = vmatprep.subr.mxu0 0.0
      %179 = vmatpush1.msra.mxu0 0.0
      %180 = vmatprep.subr.mxu0 0.0
      %181 = vmatpush1.msra.mxu0 0.0
      %182 = vmatprep.subr.mxu0 0.0
      %183 = vmatpush1.msra.mxu0 0.0
      %184 = vmatprep.subr.mxu0 0.0
      %185 = vmatpush1.msra.mxu0 0.0
      %186 = vmatprep.subr.mxu0 0.0
      %187 = vmatpush1.msra.mxu0 0.0
      %188 = vmatprep.subr.mxu0 0.0
      %189 = vmatpush1.msra.mxu0 0.0
      %190 = vmatprep.subr.mxu0 0.0
      %191 = vmatpush1.msra.mxu0 0.0
      %192 = vmatprep.subr.mxu0 0.0
      %193 = vmatpush1.msra.mxu0 0.0
      %194 = vmatprep.subr.mxu0 0.0
      %195 = vmatpush1.msra.mxu0 0.0
      %196 = vmatprep.subr.mxu0 0.0
      %197 = vmatpush1.msra.mxu0 0.0
      %198 = vmatprep.subr.mxu0 0.0
      %199 = vmatpush1.msra.mxu0 0.0
      %200 = vmatprep.subr.mxu0 0.0
      %201 = vmatpush1.msra.mxu0 0.0
      %202 = vmatprep.mubr.f32.mxu0 0.0
      %203 = vmatmul.mubr.f32.gmra.mrb[0].mxu0 %v136
      %v204 = vpop.f32.mrb[0].mxu0
      %v205 = vadd.f32 %v131, %v204
      %v206 = vpop.f32.mrb[0].mxu0
      %207 = vdwg.mxu0
      %v208 = vadd.f32 %v34, %v121
      %v209 = vxor.u32 %v208, 2147483648
      %v210 = vmul.f32 %v209, 1.442695
      %v211 = vpow.pop %v210
      %v212 = vadd.f32 %v211, 1.0
      %v213 = vrcp.pop %v212
      %v214 = vmul.f32 1.0, %v213
      %216 = vrot.lane.b32.xlu0 %v121, 96
      %v217 = vpop.permute.xlu0 %216
      %v219 = vmul.f32 %v214, %v217
      %221 = vrot.lane.b32.xlu0 %v219, 32
      %v222 = vpop.permute.xlu0 %221
      %v224 = vadd.f32 %v34, %v222
      %v225 = vtanh.pop %v224
      %v226 = vsub.f32 1.0, %v214
      %228 = vrot.lane.b32.xlu0 %v225, 112
      %v229 = vpop.permute.xlu0 %228
      %v231 = vmul.f32 %v226, %v229
      %v232 = vmul.f32 %v214, %v30
      %v233 = vadd.f32 %v231, %v232
      %235 = vrot.lane.b32.xlu0 %v205, 48
      %v236 = vpop.permute.xlu0 %235
      %v238 = vadd.f32 %v38, %v236
      %v239 = vxor.u32 %v238, 2147483648
      %v240 = vmul.f32 %v239, 1.442695
      %v241 = vpow.pop %v240
      %v242 = vadd.f32 %v241, 1.0
      %v243 = vrcp.pop %v242
      %v244 = vmul.f32 1.0, %v243
      %245 = vrot.lane.b32.xlu0 %v205, 16
      %v246 = vpop.permute.xlu0 %245
      %v248 = vmul.f32 %v244, %v246
      %250 = vrot.lane.b32.xlu0 %v248, 32
      %v251 = vpop.permute.xlu0 %250
      %v253 = vadd.f32 %v38, %v251
      %v254 = vtanh.pop %v253
      %v255 = vsub.f32 1.0, %v244
      %257 = vrot.lane.b32.xlu0 %v254, 112
      %v258 = vpop.permute.xlu0 %257
      %v260 = vmul.f32 %v255, %v258
      %v261 = vmul.f32 %v244, %v31
      %v262 = vadd.f32 %v260, %v261
      %v263 = vpack.c.bf16 %v233, %v233
      %v266 = vunpack.c.l.s4 1966171168
      %v267 = vunpack.c.0.s8 %v266
      %v268 = vlaneseq
      %v269 = vshrl.u32 %v268, 7
      %v270 = vsub.s32 %v267, %v269
      %v271 = vrot.slane %v263, %v270
      %v273 = vunpack.c.l.s4 1966171168
      %v274 = vunpack.c.0.s8 %v273
      %v275 = vlaneseq
      %v276 = vshrl.u32 %v275, 7
      %v277 = vsub.s32 %v274, %v276
      %v278 = vrot.slane %v271, %v277
      %279 = vrot.lane.b32.xlu0 %v278, 112
      %v280 = vpop.permute.xlu0 %279
      %s282 = scalar_lea.vmem %s5, %s25
      %vm283 = vcmask 122880
      %284 = vst.msk [vmem:[%s282] sm:$0x1] %vm283, %v280
      %v285 = vpack.c.bf16 %v262, %v262
      %v288 = vunpack.c.l.s4 1966171168
      %v289 = vunpack.c.0.s8 %v288
      %v290 = vlaneseq
      %v291 = vshrl.u32 %v290, 7
      %v292 = vsub.s32 %v289, %v291
      %v293 = vrot.slane %v285, %v292
      %v295 = vunpack.c.l.s4 1966171168
      %v296 = vunpack.c.0.s8 %v295
      %v297 = vlaneseq
      %v298 = vshrl.u32 %v297, 7
      %v299 = vsub.s32 %v296, %v298
      %v300 = vrot.slane %v293, %v299
      %301 = vrot.lane.b32.xlu0 %v300, 64
      %v302 = vpop.permute.xlu0 %301
      %s304 = scalar_lea.vmem %s6, %s35
      %305 = vst.msk [vmem:[%s304] sm:$0x1] %vm283, %v302
    $region26: #{_forward_impl.17} parent=1 // loop_footer
      %s29 = sadd.s32 1, %s25
    $region27: #{_forward_impl.17} parent=1 // loop_footer_branch
      %24 = sbr.rel target = $region23
    $region28: #{_forward_impl.17} parent=1 // loop_exit
      _
    %307 = vrot.lane.b32.xlu0 %v30, 112
    %v308 = vpop.permute.xlu0 %307
    %vm310 = vcmask 123904
    %311 = vst.msk [vmem:[#allocation2] sm:$0x3] %vm310, %v308
    %313 = vrot.lane.b32.xlu0 %v31, 64
    %v314 = vpop.permute.xlu0 %313
    %s316 = scalar_lea.vmem [#allocation2], 2
    %317 = vst.msk [vmem:[%s316] sm:$0x3] %vm310, %v314
    // Predicated region
    $region29: #{_forward_impl.17} parent=1 // pred_check
      _
    $region30: #{_forward_impl.17} parent=1 // pred_check_branch
      %319 = sbr.rel (0) target = $region32
    $region31: #{_forward_impl.17} parent=1 // pred_region
      _
    $region32: #{_forward_impl.17} parent=1 // pred_fallthru
      _
    // Predicated region
    $region33: #{_forward_impl.17} parent=1 // pred_check
      _
    $region34: #{_forward_impl.17} parent=1 // pred_check_branch
      %321 = sbr.rel (0) target = $region36
    $region35: #{_forward_impl.17} parent=1 // pred_region
      _
    $region36: #{_forward_impl.17} parent=1 // pred_fallthru
      _
    // Predicated region
    $region37: #{_forward_impl.17} parent=1 // pred_check
      _
    $region38: #{_forward_impl.17} parent=1 // pred_check_branch
      %323 = sbr.rel (0) target = $region40
    $region39: #{_forward_impl.17} parent=1 // pred_region
      %s325 = ssub.s32 64, 64
      %326 = vsyncadd [#allocation3], %s325
      %s327 = sshll.u32 [#allocation2], 4
      %s328 = int_to_ptr.vmem [resolvable:$true] %s327
      %333 = dma.vmem_to_hbm [thread:$0]  %s328, 64, %s7, [#allocation3], 32, 32, 2
    $region40: #{_forward_impl.17} parent=1 // pred_fallthru
      _
    // Predicated region
    $region41: #{_forward_impl.17} parent=1 // pred_check
      _
    $region42: #{_forward_impl.17} parent=1 // pred_check_branch
      %335 = sbr.rel (0) target = $region44
    $region43: #{_forward_impl.17} parent=1 // pred_region
      _
    $region44: #{_forward_impl.17} parent=1 // pred_fallthru
      _
    // Predicated region
    $region45: #{_forward_impl.17} parent=1 // pred_check
      _
    $region46: #{_forward_impl.17} parent=1 // pred_check_branch
      %337 = sbr.rel (0) target = $region48
    $region47: #{_forward_impl.17} parent=1 // pred_region
      _
    $region48: #{_forward_impl.17} parent=1 // pred_fallthru
      _
    // Predicated region
    $region49: #{_forward_impl.17} parent=1 // pred_check
      _
    $region50: #{_forward_impl.17} parent=1 // pred_check_branch
      %339 = sbr.rel (0) target = $region52
    $region51: #{_forward_impl.17} parent=1 // pred_region
      %340 = dma.done [#allocation3], 64
    $region52: #{_forward_impl.17} parent=1 // pred_fallthru
      _
    %341 = vsyncpa [#allocation3], 1

// kernel: _forward_impl.18
$region0: #{_forward_impl.18}
  #allocation0 [shape = 'u32[]', space=smem, size = 0x4, offset = 0x4, fixed_abs, tag = 'smem constant byte address 0x4 - core index']
  #allocation1 [shape = 'u32[144,128]{1,0:T(1,128)}', space=vmem, size = 0x12000, scoped, tag = 'internal scratch']
  %s0 = inlined_call_operand.vmem [shape: bf16[8,16], index: 0, kind: input, shape index: {}]
  %s1 = inlined_call_operand.vmem [shape: bf16[8,16], index: 1, kind: input, shape index: {}]
  %s2 = inlined_call_operand.vmem [shape: bf16[16,96], index: 2, kind: input, shape index: {}]
  %s3 = inlined_call_operand.vmem [shape: bf16[16,96], index: 3, kind: input, shape index: {}]
  %s4 = inlined_call_operand.vmem [shape: f32[1,96], index: 4, kind: input, shape index: {}]
  %s5 = inlined_call_operand.vmem [shape: f32[8,96], index: 5, kind: output, shape index: {}]
  %s6 = sld [smem:[#allocation0]]
  $region30: #{_forward_impl.18} parent=0
    _
  %s8 = ssub.s32 1, %s6
  %s9 = scalar_select 0, %s8, %s6
  // Predicated region
  $region2: #{_forward_impl.18} parent=0 // pred_check
    _
  $region3: #{_forward_impl.18} parent=0 // pred_check_branch
    %11 = sbr.rel (0) target = $region5
  $region4: #{_forward_impl.18} parent=0 // pred_region
    _
  $region5: #{_forward_impl.18} parent=0 // pred_fallthru
    _
  // Predicated region
  $region6: #{_forward_impl.18} parent=0 // pred_check
    _
  $region7: #{_forward_impl.18} parent=0 // pred_check_branch
    %13 = sbr.rel (0) target = $region9
  $region8: #{_forward_impl.18} parent=0 // pred_region
    _
  $region9: #{_forward_impl.18} parent=0 // pred_fallthru
    _
  // Predicated region
  $region10: #{_forward_impl.18} parent=0 // pred_check
    _
  $region11: #{_forward_impl.18} parent=0 // pred_check_branch
    %15 = sbr.rel (0) target = $region13
  $region12: #{_forward_impl.18} parent=0 // pred_region
    _
  $region13: #{_forward_impl.18} parent=0 // pred_fallthru
    _
  // Predicated region
  $region14: #{_forward_impl.18} parent=0 // pred_check
    _
  $region15: #{_forward_impl.18} parent=0 // pred_check_branch
    %17 = sbr.rel (0) target = $region17
  $region16: #{_forward_impl.18} parent=0 // pred_region
    _
  $region17: #{_forward_impl.18} parent=0 // pred_fallthru
    _
  // Predicated region
  $region18: #{_forward_impl.18} parent=0 // pred_check
    _
  $region19: #{_forward_impl.18} parent=0 // pred_check_branch
    %19 = sbr.rel (0) target = $region21
  $region20: #{_forward_impl.18} parent=0 // pred_region
    _
  $region21: #{_forward_impl.18} parent=0 // pred_fallthru
    _
  %v21 = vld [vmem:[%s0] sm:$0xf]
  %v22 = vld [vmem:[%s2] sm:$0xf]
  %v23 = vld [vmem:[%s2 + $0x4] sm:$0xf]
  %v24 = vld [vmem:[%s1] sm:$0xf]
  %v25 = vld [vmem:[%s3] sm:$0xf]
  %v26 = vld [vmem:[%s3 + $0x4] sm:$0xf]
  %v29 = vunpack.c.l.b16 %v25
  %v30 = vunpack.c.l.b16 %v26
  %v31 = vpack.c.b16 %v30, %v29
  %vm33 = vcmask 130048
  %v35 = vsel %vm33, %v24, 0
  %37 = vmatprep.subr.bf16.mxu0 0
  %38 = vmatpush1.bf16.msra.mxu0 %v31
  %39 = vmatprep.subr.bf16.mxu0 0
  %40 = vmatpush1.bf16.msra.mxu0 0
  %41 = vmatprep.subr.bf16.mxu0 0
  %42 = vmatpush1.bf16.msra.mxu0 0
  %43 = vmatprep.subr.bf16.mxu0 0
  %44 = vmatpush1.bf16.msra.mxu0 0
  %45 = vmatprep.subr.bf16.mxu0 0
  %46 = vmatpush1.bf16.msra.mxu0 0
  %47 = vmatprep.subr.bf16.mxu0 0
  %48 = vmatpush1.bf16.msra.mxu0 0
  %49 = vmatprep.subr.bf16.mxu0 0
  %50 = vmatpush1.bf16.msra.mxu0 0
  %51 = vmatprep.subr.bf16.mxu0 0
  %52 = vmatpush1.bf16.msra.mxu0 0
  %53 = vmatprep.subr.bf16.mxu0 0
  %54 = vmatpush1.bf16.msra.mxu0 0
  %55 = vmatprep.subr.bf16.mxu0 0
  %56 = vmatpush1.bf16.msra.mxu0 0
  %57 = vmatprep.subr.bf16.mxu0 0
  %58 = vmatpush1.bf16.msra.mxu0 0
  %59 = vmatprep.subr.bf16.mxu0 0
  %60 = vmatpush1.bf16.msra.mxu0 0
  %61 = vmatprep.subr.bf16.mxu0 0
  %62 = vmatpush1.bf16.msra.mxu0 0
  %63 = vmatprep.subr.bf16.mxu0 0
  %64 = vmatpush1.bf16.msra.mxu0 0
  %65 = vmatprep.subr.bf16.mxu0 0
  %66 = vmatpush1.bf16.msra.mxu0 0
  %67 = vmatprep.subr.bf16.mxu0 0
  %68 = vmatpush1.bf16.msra.mxu0 0
  %69 = vmatprep.mubr.bf16.mxu0 0
  %70 = vmatmul.mubr.bf16.gmra.mrb[0].mxu0 %v35
  %v71 = vpop.f32.mrb[0].mxu0
  %v72 = vadd.f32 0.0, %v71
  %v73 = vpop.f32.mrb[0].mxu0
  %v74 = vpop.f32.mrb[0].mxu0
  %v75 = vpop.f32.mrb[0].mxu0
  %76 = vdwg.mxu0
  %v79 = vunpack.c.l.b16 %v22
  %v80 = vunpack.c.l.b16 %v23
  %v81 = vpack.c.b16 %v80, %v79
  %v84 = vsel %vm33, %v21, 0
  %86 = vmatprep.subr.bf16.mxu0 0
  %87 = vmatpush1.bf16.msra.mxu0 %v81
  %88 = vmatprep.subr.bf16.mxu0 0
  %89 = vmatpush1.bf16.msra.mxu0 0
  %90 = vmatprep.subr.bf16.mxu0 0
  %91 = vmatpush1.bf16.msra.mxu0 0
  %92 = vmatprep.subr.bf16.mxu0 0
  %93 = vmatpush1.bf16.msra.mxu0 0
  %94 = vmatprep.subr.bf16.mxu0 0
  %95 = vmatpush1.bf16.msra.mxu0 0
  %96 = vmatprep.subr.bf16.mxu0 0
  %97 = vmatpush1.bf16.msra.mxu0 0
  %98 = vmatprep.subr.bf16.mxu0 0
  %99 = vmatpush1.bf16.msra.mxu0 0
  %100 = vmatprep.subr.bf16.mxu0 0
  %101 = vmatpush1.bf16.msra.mxu0 0
  %102 = vmatprep.subr.bf16.mxu0 0
  %103 = vmatpush1.bf16.msra.mxu0 0
  %104 = vmatprep.subr.bf16.mxu0 0
  %105 = vmatpush1.bf16.msra.mxu0 0
  %106 = vmatprep.subr.bf16.mxu0 0
  %107 = vmatpush1.bf16.msra.mxu0 0
  %108 = vmatprep.subr.bf16.mxu0 0
  %109 = vmatpush1.bf16.msra.mxu0 0
  %110 = vmatprep.subr.bf16.mxu0 0
  %111 = vmatpush1.bf16.msra.mxu0 0
  %112 = vmatprep.subr.bf16.mxu0 0
  %113 = vmatpush1.bf16.msra.mxu0 0
  %114 = vmatprep.subr.bf16.mxu0 0
  %115 = vmatpush1.bf16.msra.mxu0 0
  %116 = vmatprep.subr.bf16.mxu0 0
  %117 = vmatpush1.bf16.msra.mxu0 0
  %118 = vmatprep.mubr.bf16.mxu0 0
  %119 = vmatmul.mubr.bf16.gmra.mrb[0].mxu0 %v84
  %v120 = vpop.f32.mrb[0].mxu0
  %v121 = vadd.f32 %v72, %v120
  %v122 = vpop.f32.mrb[0].mxu0
  %v123 = vpop.f32.mrb[0].mxu0
  %v124 = vpop.f32.mrb[0].mxu0
  %125 = vdwg.mxu0
  %v126 = vld [vmem:[%s4] sm:$0x1]
  %v128 = vlaneseq
  %v129 = vshrl.u32 %v128, 7
  %v130 = vsub.s32 0, %v129
  %v131 = vrot.slane %v126, %v130
  %v133 = vadd.f32 %v121, %v131
  %vm134 = vcmask 785408
  %135 = vst.msk [vmem:[%s5] sm:$0xff] %vm134, %v133
  // Predicated region
  $region22: #{_forward_impl.18} parent=0 // pred_check
    _
  $region23: #{_forward_impl.18} parent=0 // pred_check_branch
    %137 = sbr.rel (0) target = $region25
  $region24: #{_forward_impl.18} parent=0 // pred_region
    _
  $region25: #{_forward_impl.18} parent=0 // pred_fallthru
    _
  // Predicated region
  $region26: #{_forward_impl.18} parent=0 // pred_check
    _
  $region27: #{_forward_impl.18} parent=0 // pred_check_branch
    %139 = sbr.rel (0) target = $region29
  $region28: #{_forward_impl.18} parent=0 // pred_region
    _
  $region29: #{_forward_impl.18} parent=0 // pred_fallthru
    _

// kernel: _forward_impl.19
$region0: #{_forward_impl.19}
  #allocation0 [shape = 'u32[]', space=smem, size = 0x4, offset = 0x4, fixed_abs, tag = 'smem constant byte address 0x4 - core index']
  #allocation1 [shape = 'u32[144,128]{1,0:T(1,128)}', space=vmem, size = 0x12000, scoped, tag = 'internal scratch']
  %s0 = inlined_call_operand.vmem [shape: f32[4,2,96], index: 0, kind: input, shape index: {}]
  %s1 = inlined_call_operand.vmem [shape: f32[16,48], index: 1, kind: input, shape index: {}]
  %s2 = inlined_call_operand.vmem [shape: f32[16,48], index: 2, kind: input, shape index: {}]
  %s3 = inlined_call_operand.vmem [shape: f32[1,48], index: 3, kind: input, shape index: {}]
  %s4 = inlined_call_operand.vmem [shape: f32[1,48], index: 4, kind: input, shape index: {}]
  %s5 = inlined_call_operand.vmem [shape: f32[4,2,16], index: 5, kind: output, shape index: {0}]
  %s6 = inlined_call_operand.vmem [shape: f32[4,2,16], index: 6, kind: output, shape index: {1}]
  %s7 = inlined_call_operand.vmem [shape: f32[2,2,16], index: 7, kind: output, shape index: {2}]
  %8 = xla_tuple %s5, %s6, %s7
  %s9 = sld [smem:[#allocation0]]
  $region53: #{_forward_impl.19} parent=0
    _
  %s11 = ssub.s32 1, %s9
  %s12 = scalar_select 0, %s11, %s9
  // Predicated region
  $region2: #{_forward_impl.19} parent=0 // pred_check
    _
  $region3: #{_forward_impl.19} parent=0 // pred_check_branch
    %14 = sbr.rel (0) target = $region5
  $region4: #{_forward_impl.19} parent=0 // pred_region
    _
  $region5: #{_forward_impl.19} parent=0 // pred_fallthru
    _
  // Predicated region
  $region6: #{_forward_impl.19} parent=0 // pred_check
    _
  $region7: #{_forward_impl.19} parent=0 // pred_check_branch
    %16 = sbr.rel (0) target = $region9
  $region8: #{_forward_impl.19} parent=0 // pred_region
    _
  $region9: #{_forward_impl.19} parent=0 // pred_fallthru
    _
  // Predicated region
  $region10: #{_forward_impl.19} parent=0 // pred_check
    _
  $region11: #{_forward_impl.19} parent=0 // pred_check_branch
    %18 = sbr.rel (0) target = $region13
  $region12: #{_forward_impl.19} parent=0 // pred_region
    _
  $region13: #{_forward_impl.19} parent=0 // pred_fallthru
    _
  // Predicated region
  $region14: #{_forward_impl.19} parent=0 // pred_check
    _
  $region15: #{_forward_impl.19} parent=0 // pred_check_branch
    %20 = sbr.rel (0) target = $region17
  $region16: #{_forward_impl.19} parent=0 // pred_region
    _
  $region17: #{_forward_impl.19} parent=0 // pred_fallthru
    _
  // Predicated region
  $region18: #{_forward_impl.19} parent=0 // pred_check
    _
  $region19: #{_forward_impl.19} parent=0 // pred_check_branch
    %22 = sbr.rel (0) target = $region21
  $region20: #{_forward_impl.19} parent=0 // pred_region
    _
  $region21: #{_forward_impl.19} parent=0 // pred_fallthru
    _
  loop: start=0, step=1, limit=4
  $region22: #{_forward_impl.19} parent=0 // loop_pre_header
    _
  $region23: #{_forward_impl.19} parent=0 // loop_header
    %s24 = sphi 0, %s28
    %p25 = scmp.ge.s32.totalorder %s24, 4
    %v29 = vphi 0.0, %v232
    %v30 = vphi 0.0, %v261
  $region24: #{_forward_impl.19} parent=0 // loop_header_branch
    %27 = sbr.rel (%p25) target = $region28
  $region25: #{_forward_impl.19} parent=0 // loop_body
    %s31 = smul.u32 %s24, 2
    %s32 = scalar_lea.vmem %s0, %s31
    %v33 = vld [vmem:[%s32] sm:$0x3]
    %s34 = ssub.s32 3, %s24
    %s35 = smul.u32 %s34, 2
    %s36 = scalar_lea.vmem %s0, %s35
    %v37 = vld [vmem:[%s36] sm:$0x3]
    %v38 = vld [vmem:[%s1] sm:$0xff]
    %v39 = vld [vmem:[%s1 + $0x8] sm:$0xff]
    %v40 = vld [vmem:[%s3] sm:$0x1]
    %v42 = vlaneseq
    %v43 = vshrl.u32 %v42, 7
    %v44 = vsub.s32 0, %v43
    %v45 = vrot.slane %v40, %v44
    %48 = vrot.lane.b32.xlu0 %v29, 112
    %v49 = vpop.permute.xlu0 %48
    %vm50 = vcmask 130048
    %v51 = vsel %vm50, %v49, 0
    %53 = vmatprep.subr.mxu0 0.0
    %54 = vmatpush1.msra.mxu0 %v38
    %55 = vmatprep.subr.mxu0 0.0
    %56 = vmatpush1.msra.mxu0 %v39
    %57 = vmatprep.subr.mxu0 0.0
    %58 = vmatpush1.msra.mxu0 0.0
    %59 = vmatprep.subr.mxu0 0.0
    %60 = vmatpush1.msra.mxu0 0.0
    %61 = vmatprep.subr.mxu0 0.0
    %62 = vmatpush1.msra.mxu0 0.0
    %63 = vmatprep.subr.mxu0 0.0
    %64 = vmatpush1.msra.mxu0 0.0
    %65 = vmatprep.subr.mxu0 0.0
    %66 = vmatpush1.msra.mxu0 0.0
    %67 = vmatprep.subr.mxu0 0.0
    %68 = vmatpush1.msra.mxu0 0.0
    %69 = vmatprep.subr.mxu0 0.0
    %70 = vmatpush1.msra.mxu0 0.0
    %71 = vmatprep.subr.mxu0 0.0
    %72 = vmatpush1.msra.mxu0 0.0
    %73 = vmatprep.subr.mxu0 0.0
    %74 = vmatpush1.msra.mxu0 0.0
    %75 = vmatprep.subr.mxu0 0.0
    %76 = vmatpush1.msra.mxu0 0.0
    %77 = vmatprep.subr.mxu0 0.0
    %78 = vmatpush1.msra.mxu0 0.0
    %79 = vmatprep.subr.mxu0 0.0
    %80 = vmatpush1.msra.mxu0 0.0
    %81 = vmatprep.subr.mxu0 0.0
    %82 = vmatpush1.msra.mxu0 0.0
    %83 = vmatprep.subr.mxu0 0.0
    %84 = vmatpush1.msra.mxu0 0.0
    %85 = vmatprep.subr.mxu0 0.0
    %86 = vmatpush1.msra.mxu0 0.0
    %87 = vmatprep.subr.mxu0 0.0
    %88 = vmatpush1.msra.mxu0 0.0
    %89 = vmatprep.subr.mxu0 0.0
    %90 = vmatpush1.msra.mxu0 0.0
    %91 = vmatprep.subr.mxu0 0.0
    %92 = vmatpush1.msra.mxu0 0.0
    %93 = vmatprep.subr.mxu0 0.0
    %94 = vmatpush1.msra.mxu0 0.0
    %95 = vmatprep.subr.mxu0 0.0
    %96 = vmatpush1.msra.mxu0 0.0
    %97 = vmatprep.subr.mxu0 0.0
    %98 = vmatpush1.msra.mxu0 0.0
    %99 = vmatprep.subr.mxu0 0.0
    %100 = vmatpush1.msra.mxu0 0.0
    %101 = vmatprep.subr.mxu0 0.0
    %102 = vmatpush1.msra.mxu0 0.0
    %103 = vmatprep.subr.mxu0 0.0
    %104 = vmatpush1.msra.mxu0 0.0
    %105 = vmatprep.subr.mxu0 0.0
    %106 = vmatpush1.msra.mxu0 0.0
    %107 = vmatprep.subr.mxu0 0.0
    %108 = vmatpush1.msra.mxu0 0.0
    %109 = vmatprep.subr.mxu0 0.0
    %110 = vmatpush1.msra.mxu0 0.0
    %111 = vmatprep.subr.mxu0 0.0
    %112 = vmatpush1.msra.mxu0 0.0
    %113 = vmatprep.subr.mxu0 0.0
    %114 = vmatpush1.msra.mxu0 0.0
    %115 = vmatprep.subr.mxu0 0.0
    %116 = vmatpush1.msra.mxu0 0.0
    %117 = vmatprep.mubr.f32.mxu0 0.0
    %118 = vmatmul.mubr.f32.gmra.mrb[0].mxu0 %v51
    %v119 = vpop.f32.mrb[0].mxu0
    %v120 = vadd.f32 %v45, %v119
    %v121 = vpop.f32.mrb[0].mxu0
    %122 = vdwg.mxu0
    %v123 = vld [vmem:[%s2] sm:$0xff]
    %v124 = vld [vmem:[%s2 + $0x8] sm:$0xff]
    %v125 = vld [vmem:[%s4] sm:$0x1]
    %v127 = vlaneseq
    %v128 = vshrl.u32 %v127, 7
    %v129 = vsub.s32 0, %v128
    %v130 = vrot.slane %v125, %v129
    %133 = vrot.lane.b32.xlu0 %v30, 64
    %v134 = vpop.permute.xlu0 %133
    %v135 = vsel %vm50, %v134, 0
    %137 = vmatprep.subr.mxu0 0.0
    %138 = vmatpush1.msra.mxu0 %v123
    %139 = vmatprep.subr.mxu0 0.0
    %140 = vmatpush1.msra.mxu0 %v124
    %141 = vmatprep.subr.mxu0 0.0
    %142 = vmatpush1.msra.mxu0 0.0
    %143 = vmatprep.subr.mxu0 0.0
    %144 = vmatpush1.msra.mxu0 0.0
    %145 = vmatprep.subr.mxu0 0.0
    %146 = vmatpush1.msra.mxu0 0.0
    %147 = vmatprep.subr.mxu0 0.0
    %148 = vmatpush1.msra.mxu0 0.0
    %149 = vmatprep.subr.mxu0 0.0
    %150 = vmatpush1.msra.mxu0 0.0
    %151 = vmatprep.subr.mxu0 0.0
    %152 = vmatpush1.msra.mxu0 0.0
    %153 = vmatprep.subr.mxu0 0.0
    %154 = vmatpush1.msra.mxu0 0.0
    %155 = vmatprep.subr.mxu0 0.0
    %156 = vmatpush1.msra.mxu0 0.0
    %157 = vmatprep.subr.mxu0 0.0
    %158 = vmatpush1.msra.mxu0 0.0
    %159 = vmatprep.subr.mxu0 0.0
    %160 = vmatpush1.msra.mxu0 0.0
    %161 = vmatprep.subr.mxu0 0.0
    %162 = vmatpush1.msra.mxu0 0.0
    %163 = vmatprep.subr.mxu0 0.0
    %164 = vmatpush1.msra.mxu0 0.0
    %165 = vmatprep.subr.mxu0 0.0
    %166 = vmatpush1.msra.mxu0 0.0
    %167 = vmatprep.subr.mxu0 0.0
    %168 = vmatpush1.msra.mxu0 0.0
    %169 = vmatprep.subr.mxu0 0.0
    %170 = vmatpush1.msra.mxu0 0.0
    %171 = vmatprep.subr.mxu0 0.0
    %172 = vmatpush1.msra.mxu0 0.0
    %173 = vmatprep.subr.mxu0 0.0
    %174 = vmatpush1.msra.mxu0 0.0
    %175 = vmatprep.subr.mxu0 0.0
    %176 = vmatpush1.msra.mxu0 0.0
    %177 = vmatprep.subr.mxu0 0.0
    %178 = vmatpush1.msra.mxu0 0.0
    %179 = vmatprep.subr.mxu0 0.0
    %180 = vmatpush1.msra.mxu0 0.0
    %181 = vmatprep.subr.mxu0 0.0
    %182 = vmatpush1.msra.mxu0 0.0
    %183 = vmatprep.subr.mxu0 0.0
    %184 = vmatpush1.msra.mxu0 0.0
    %185 = vmatprep.subr.mxu0 0.0
    %186 = vmatpush1.msra.mxu0 0.0
    %187 = vmatprep.subr.mxu0 0.0
    %188 = vmatpush1.msra.mxu0 0.0
    %189 = vmatprep.subr.mxu0 0.0
    %190 = vmatpush1.msra.mxu0 0.0
    %191 = vmatprep.subr.mxu0 0.0
    %192 = vmatpush1.msra.mxu0 0.0
    %193 = vmatprep.subr.mxu0 0.0
    %194 = vmatpush1.msra.mxu0 0.0
    %195 = vmatprep.subr.mxu0 0.0
    %196 = vmatpush1.msra.mxu0 0.0
    %197 = vmatprep.subr.mxu0 0.0
    %198 = vmatpush1.msra.mxu0 0.0
    %199 = vmatprep.subr.mxu0 0.0
    %200 = vmatpush1.msra.mxu0 0.0
    %201 = vmatprep.mubr.f32.mxu0 0.0
    %202 = vmatmul.mubr.f32.gmra.mrb[0].mxu0 %v135
    %v203 = vpop.f32.mrb[0].mxu0
    %v204 = vadd.f32 %v130, %v203
    %v205 = vpop.f32.mrb[0].mxu0
    %206 = vdwg.mxu0
    %v207 = vadd.f32 %v33, %v120
    %v208 = vxor.u32 %v207, 2147483648
    %v209 = vmul.f32 %v208, 1.442695
    %v210 = vpow.pop %v209
    %v211 = vadd.f32 %v210, 1.0
    %v212 = vrcp.pop %v211
    %v213 = vmul.f32 1.0, %v212
    %215 = vrot.lane.b32.xlu0 %v120, 96
    %v216 = vpop.permute.xlu0 %215
    %v218 = vmul.f32 %v213, %v216
    %220 = vrot.lane.b32.xlu0 %v218, 32
    %v221 = vpop.permute.xlu0 %220
    %v223 = vadd.f32 %v33, %v221
    %v224 = vtanh.pop %v223
    %v225 = vsub.f32 1.0, %v213
    %227 = vrot.lane.b32.xlu0 %v224, 112
    %v228 = vpop.permute.xlu0 %227
    %v230 = vmul.f32 %v225, %v228
    %v231 = vmul.f32 %v213, %v29
    %v232 = vadd.f32 %v230, %v231
    %234 = vrot.lane.b32.xlu0 %v204, 48
    %v235 = vpop.permute.xlu0 %234
    %v237 = vadd.f32 %v37, %v235
    %v238 = vxor.u32 %v237, 2147483648
    %v239 = vmul.f32 %v238, 1.442695
    %v240 = vpow.pop %v239
    %v241 = vadd.f32 %v240, 1.0
    %v242 = vrcp.pop %v241
    %v243 = vmul.f32 1.0, %v242
    %244 = vrot.lane.b32.xlu0 %v204, 16
    %v245 = vpop.permute.xlu0 %244
    %v247 = vmul.f32 %v243, %v245
    %249 = vrot.lane.b32.xlu0 %v247, 32
    %v250 = vpop.permute.xlu0 %249
    %v252 = vadd.f32 %v37, %v250
    %v253 = vtanh.pop %v252
    %v254 = vsub.f32 1.0, %v243
    %256 = vrot.lane.b32.xlu0 %v253, 112
    %v257 = vpop.permute.xlu0 %256
    %v259 = vmul.f32 %v254, %v257
    %v260 = vmul.f32 %v243, %v30
    %v261 = vadd.f32 %v259, %v260
    %263 = vrot.lane.b32.xlu0 %v232, 112
    %v264 = vpop.permute.xlu0 %263
    %s266 = scalar_lea.vmem %s5, %s31
    %vm267 = vcmask 123904
    %268 = vst.msk [vmem:[%s266] sm:$0x3] %vm267, %v264
    %270 = vrot.lane.b32.xlu0 %v261, 64
    %v271 = vpop.permute.xlu0 %270
    %s273 = scalar_lea.vmem %s6, %s35
    %274 = vst.msk [vmem:[%s273] sm:$0x3] %vm267, %v271
  $region26: #{_forward_impl.19} parent=0 // loop_footer
    %s28 = sadd.s32 1, %s24
  $region27: #{_forward_impl.19} parent=0 // loop_footer_branch
    %23 = sbr.rel target = $region23
  $region28: #{_forward_impl.19} parent=0 // loop_exit
    _
  %276 = vrot.lane.b32.xlu0 %v29, 112
  %v277 = vpop.permute.xlu0 %276
  %vm279 = vcmask 123904
  %280 = vst.msk [vmem:[%s7] sm:$0x3] %vm279, %v277
  %282 = vrot.lane.b32.xlu0 %v30, 64
  %v283 = vpop.permute.xlu0 %282
  %s285 = scalar_lea.vmem %s7, 2
  %286 = vst.msk [vmem:[%s285] sm:$0x3] %vm279, %v283
  // Predicated region
  $region29: #{_forward_impl.19} parent=0 // pred_check
    _
  $region30: #{_forward_impl.19} parent=0 // pred_check_branch
    %288 = sbr.rel (0) target = $region32
  $region31: #{_forward_impl.19} parent=0 // pred_region
    _
  $region32: #{_forward_impl.19} parent=0 // pred_fallthru
    _
  // Predicated region
  $region33: #{_forward_impl.19} parent=0 // pred_check
    _
  $region34: #{_forward_impl.19} parent=0 // pred_check_branch
    %290 = sbr.rel (0) target = $region36
  $region35: #{_forward_impl.19} parent=0 // pred_region
    _
  $region36: #{_forward_impl.19} parent=0 // pred_fallthru
    _
  // Predicated region
  $region37: #{_forward_impl.19} parent=0 // pred_check
    _
  $region38: #{_forward_impl.19} parent=0 // pred_check_branch
    %292 = sbr.rel (0) target = $region40
  $region39: #{_forward_impl.19} parent=0 // pred_region
    _
  $region40: #{_forward_impl.19} parent=0 // pred_fallthru
    _
  // Predicated region
  $region41: #{_forward_impl.19} parent=0 // pred_check
    _
  $region42: #{_forward_impl.19} parent=0 // pred_check_branch
    %294 = sbr.rel (0) target = $region44
  $region43: #{_forward_impl.19} parent=0 // pred_region
    _
  $region44: #{_forward_impl.19} parent=0 // pred_fallthru
    _
  // Predicated region
  $region45: #{_forward_impl.19} parent=0 // pred_check
    _
  $region46: #{_forward_impl.19} parent=0 // pred_check_branch
    %296 = sbr.rel (0) target = $region48
  $region47: #{_forward_impl.19} parent=0 // pred_region
    _
  $region48: #{_forward_impl.19} parent=0 // pred_fallthru
    _
  // Predicated region
  $region49: #{_forward_impl.19} parent=0 // pred_check
    _
  $region50: #{_forward_impl.19} parent=0 // pred_check_branch
    %298 = sbr.rel (0) target = $region52
  $region51: #{_forward_impl.19} parent=0 // pred_region
    _
  $region52: #{_forward_impl.19} parent=0 // pred_fallthru
    _

</llo_original>
